<compile_context>
chip_gen: v7x
topology: tpu7x:2x2x1
jax: 0.10.0
libtpu: 0.0.40
codegen_flags: <defaults>
</compile_context>

<pallas_src>
import functools

import jax
import jax.numpy as jnp
from jax.experimental import pallas as pl
from jax.experimental.pallas import tpu as pltpu


# ---------------------------------------------------------------------------
# Small helpers
# ---------------------------------------------------------------------------
def _round_up(x, m):
    return ((x + m - 1) // m) * m


def _pick_tile(total, pref, align):
    """Tile size (multiple of `align`, <= pref) and padded total (mult of tile)."""
    t = _round_up(total, align)
    if t > pref:
        t = pref
    return t, _round_up(total, t)


def _pick_div_tile(total, pref, align):
    """Largest multiple of `align` that divides round_up(total, align), <= pref."""
    t = _round_up(total, align)
    if t <= pref:
        return t
    best = align
    d = align
    while d <= pref:
        if t % d == 0:
            best = d
        d += align
    return best


# ---------------------------------------------------------------------------
# Pallas kernels
# ---------------------------------------------------------------------------
def _matmul_bias_relu_kernel(p_ref, w_ref, b_ref, o_ref, acc_ref):
    """One (tm, tn) output tile, accumulating over the K grid axis (axis 2)."""
    @pl.when(pl.program_id(2) == 0)
    def _():
        acc_ref[...] = jnp.zeros_like(acc_ref)

    acc_ref[...] += jnp.dot(p_ref[...], w_ref[...],
                            preferred_element_type=jnp.float32)

    @pl.when(pl.program_id(2) == pl.num_programs(2) - 1)
    def _():
        # BN scale is pre-folded into the weights; only bias + ReLU here (f32).
        o_ref[...] = jnp.maximum(acc_ref[...] + b_ref[...], 0.0).astype(o_ref.dtype)


def _maxpool_kernel(cols_ref, o_ref, *, k, stride, hp):
    # cols_ref block: (1, k*hp, stride, OW, tc) where
    #   cols[0, dj*hp + hq, hr, m, c] == x[img, hq*stride + hr, m*stride + dj, c]
    # o_ref block:   (1, OH, OW, tc)
    # The 9 taps are read with contiguous slices / integer indexing only (no
    # strided sublane loads) and reduced with elementwise max on the VPU.
    oh = o_ref.shape[1]
    acc = None
    for dj in range(k):
        for di in range(k):
            q, r = divmod(di, stride)
            row0 = dj * hp + q
            tap = cols_ref[0, row0:row0 + oh, r]      # (OH, OW, tc)
            acc = tap if acc is None else jnp.maximum(acc, tap)
    o_ref[0] = acc


# ---------------------------------------------------------------------------
# Tiled matmul + bias + ReLU wrapper (patches already K-padded / bf16)
# ---------------------------------------------------------------------------
def _matmul_bias_relu(p, w, bias, out_dtype):
    """p: (M, K) bf16, w: (K, N_pad) bf16, bias: (1, N_pad) f32 -> (M, N_pad)."""
    m, k = p.shape
    k_w, n_pad = w.shape
    assert k == k_w, (k, k_w)

    tm, m_pad = _pick_tile(m, 512, 16)        # 16-row align for bf16 sublane pack
    tk = _pick_div_tile(k, 2048, 128)         # divides K -> no patch re-pad
    tn = _pick_div_tile(n_pad, 512, 128)

    if p.dtype != jnp.bfloat16:
        p = p.astype(jnp.bfloat16)
    if m_pad != m:
        p = jnp.pad(p, ((0, m_pad - m), (0, 0)))

    grid = (m_pad // tm, n_pad // tn, k // tk)
    out = pl.pallas_call(
        _matmul_bias_relu_kernel,
        out_shape=jax.ShapeDtypeStruct((m_pad, n_pad), out_dtype),
        grid_spec=pltpu.PrefetchScalarGridSpec(
            num_scalar_prefetch=0,
            grid=grid,
            in_specs=[
                pl.BlockSpec((tm, tk), lambda i, j, kk: (i, kk)),
                pl.BlockSpec((tk, tn), lambda i, j, kk: (kk, j)),
                pl.BlockSpec((1, tn), lambda i, j, kk: (0, j)),
            ],
            out_specs=pl.BlockSpec((tm, tn), lambda i, j, kk: (i, j)),
            scratch_shapes=[pltpu.VMEM((tm, tn), jnp.float32)],
        ),
        compiler_params=pltpu.CompilerParams(
            dimension_semantics=("parallel", "parallel", "arbitrary"),
            vmem_limit_bytes=48 * 1024 * 1024,   # safe on v7x (64 MiB) and v5e/v6e
        ),
    )(p, w, bias)
    return out[:m] if m_pad != m else out


# ---------------------------------------------------------------------------
# Glue: im2col patch extraction (static unrolled slicing, NHWC)
# ---------------------------------------------------------------------------
def _extract_patches(x, kh, kw, stride, pad):
    """x: (N, H, W, C) -> (N, oh, ow, kh*kw, C) in x.dtype (bf16 for conv path)."""
    if pad > 0:
        x = jnp.pad(x, ((0, 0), (pad, pad), (pad, pad), (0, 0)))
    n, h, w, c = x.shape
    oh = (h - kh) // stride + 1
    ow = (w - kw) // stride + 1
    taps = []
    for i in range(kh):
        for j in range(kw):
            taps.append(x[:, i:i + stride * oh:stride, j:j + stride * ow:stride, :])
    return jnp.stack(taps, axis=3), (n, oh, ow)


# ---------------------------------------------------------------------------
# Conv(+folded BN)+ReLU on channel-padded bf16 NHWC activations
# ---------------------------------------------------------------------------
def conv_bn_relu(xp, cp, stride, pad, out_dtype):
    """xp: (N,H,W,Cin_pad) bf16; cp: prepped weight dict. Returns padded-Cout NHWC."""
    kh, kw = cp["kh"], cp["kw"]
    cin_p = cp["cin_pad"]
    assert xp.shape[-1] == cin_p, (xp.shape, cin_p)
    n = xp.shape[0]
    if kh == 1 and kw == 1 and stride == 1 and pad == 0:
        _, oh, ow, _ = xp.shape
        patches = xp.reshape(n * oh * ow, cin_p)       # 1x1: no im2col, free reshape
    else:
        # TODO(synk): fold the kh*kw taps into the matmul K grid axis (shifted-window
        # input index_map) to eliminate this bf16 patch materialization entirely.
        taps, (n, oh, ow) = _extract_patches(xp, kh, kw, stride, pad)
        patches = taps.reshape(n * oh * ow, kh * kw * cin_p)
    out = _matmul_bias_relu(patches, cp["w"], cp["b"], out_dtype)
    return out.reshape(n, oh, ow, cp["cout_pad"])


# ---------------------------------------------------------------------------
# MaxPool2d(k, stride, padding=0) — direct-ish Pallas kernel per (image, C-tile)
# ---------------------------------------------------------------------------
def maxpool2d(x, k, stride):
    """x: (N,H,W,C) NHWC (f32 passthrough of the block input)."""
    n, h, w, c = x.shape
    oh = (h - k) // stride + 1
    ow = (w - k) // stride + 1

    # Pre-slice the k column phases (strided W reads) in XLA so the kernel only
    # needs contiguous slices; the H stride is folded into a static sub-axis.
    # ~1.5x of x in HBM instead of the previous 9x patch tensor + transpose.
    # TODO(synk): read overlapping (H, W) windows directly from x inside the kernel
    # (sublane-strided loads) to remove this last materialization as well.
    cols = jnp.stack(
        [x[:, :, dj:dj + (ow - 1) * stride + 1:stride, :] for dj in range(k)],
        axis=1)                                        # (N, k, H, OW, C)
    hp = -(-h // stride)                               # ceil(H / stride)
    if hp * stride != h:
        cols = jnp.pad(cols, ((0, 0), (0, 0), (0, hp * stride - h), (0, 0), (0, 0)))
    cols = cols.reshape(n, k * hp, stride, ow, c)      # contiguous reshape

    if c % 128 == 0:
        tc = _pick_div_tile(c, 512, 128)               # lane-dense channel tiles
    else:
        tc = c                                         # full-dim block (small/odd C)

    kern = functools.partial(_maxpool_kernel, k=k, stride=stride, hp=hp)
    out = pl.pallas_call(
        kern,
        out_shape=jax.ShapeDtypeStruct((n, oh, ow, c), x.dtype),
        grid_spec=pltpu.PrefetchScalarGridSpec(
            num_scalar_prefetch=0,
            grid=(n, c // tc),
            in_specs=[pl.BlockSpec((1, k * hp, stride, ow, tc),
                                   lambda b, cc: (b, 0, 0, 0, cc))],
            out_specs=pl.BlockSpec((1, oh, ow, tc), lambda b, cc: (b, 0, 0, cc)),
        ),
        compiler_params=pltpu.CompilerParams(
            dimension_semantics=("parallel", "parallel"),
            vmem_limit_bytes=32 * 1024 * 1024,
        ),
    )(cols)
    return out


# ---------------------------------------------------------------------------
# Parameter construction with BN folded + kernel-ready (padded, bf16) weights
# ---------------------------------------------------------------------------
def _init_basic_conv(key, cin, cout, k):
    k1, k2, k3, k4, k5 = jax.random.split(key, 5)
    w = 0.1 * jax.random.normal(k1, (cout, cin, k, k), jnp.float32)
    gamma = 1.0 + 0.1 * jax.random.normal(k2, (cout,), jnp.float32)
    beta = 0.1 * jax.random.normal(k3, (cout,), jnp.float32)
    running_mean = 0.1 * jax.random.normal(k4, (cout,), jnp.float32)
    running_var = 1.0 + jnp.abs(0.1 * jax.random.normal(k5, (cout,), jnp.float32))
    eps = 0.001
    scale = gamma / jnp.sqrt(running_var + eps)
    bias = beta - running_mean * scale
    # Fold BN scale into the conv weights (inference; done in f32 before bf16 cast).
    w = w * scale[:, None, None, None]
    return {"w": w, "bias": bias}


def _prep_conv(p, cin_pad):
    """Folded (Cout,Cin,KH,KW) weight -> (KH*KW*Cin_pad, Cout_pad) bf16 + f32 bias."""
    w, bias = p["w"], p["bias"]
    cout, cin, kh, kw = w.shape
    cout_p = _round_up(cout, 128)
    wt = jnp.transpose(w, (2, 3, 1, 0))                          # (KH,KW,Cin,Cout)
    wt = jnp.pad(wt, ((0, 0), (0, 0), (0, cin_pad - cin), (0, cout_p - cout)))
    wt = wt.reshape(kh * kw * cin_pad, cout_p).astype(jnp.bfloat16)
    b = jnp.pad(bias, (0, cout_p - cout)).reshape(1, cout_p).astype(jnp.float32)
    return {"w": wt, "b": b, "kh": kh, "kw": kw,
            "cin_pad": cin_pad, "cout": cout, "cout_pad": cout_p}


def init_reduction_res_b(key, in_dim, conv3_r_a, conv3_a, conv3_r_b, conv3_b,
                         conv5_r, conv5_1, conv5):
    keys = jax.random.split(key, 7)
    raw = {
        "a1": _init_basic_conv(keys[0], in_dim, conv3_r_a, 1),
        "a2": _init_basic_conv(keys[1], conv3_r_a, conv3_a, 3),
        "b1": _init_basic_conv(keys[2], in_dim, conv3_r_b, 1),
        "b2": _init_basic_conv(keys[3], conv3_r_b, conv3_b, 3),
        "c1": _init_basic_conv(keys[4], in_dim, conv5_r, 1),
        "c2": _init_basic_conv(keys[5], conv5_r, conv5_1, 3),
        "c3": _init_basic_conv(keys[6], conv5_1, conv5, 3),
    }
    cin_p = _round_up(in_dim, 128)
    a1, b1, c1 = (_prep_conv(raw[n], cin_p) for n in ("a1", "b1", "c1"))
    a2 = _prep_conv(raw["a2"], a1["cout_pad"])
    b2 = _prep_conv(raw["b2"], b1["cout_pad"])
    c2 = _prep_conv(raw["c2"], c1["cout_pad"])
    c3 = _prep_conv(raw["c3"], c2["cout_pad"])
    return {
        "cin": in_dim, "cin_pad": cin_p,
        # Fused 1x1 (a1 | b1 | c1): one weight, per-branch 128-aligned columns.
        "fused_w": jnp.concatenate([a1["w"], b1["w"], c1["w"]], axis=1),
        "fused_b": jnp.concatenate([a1["b"], b1["b"], c1["b"]], axis=1),
        "fused_splits": (a1["cout_pad"], b1["cout_pad"], c1["cout_pad"]),
        "a2": a2, "b2": b2, "c2": c2, "c3": c3,
    }


# ---------------------------------------------------------------------------
# Forward pass (matches _Reduction_Res_B.forward)
# ---------------------------------------------------------------------------
def reduction_res_b_forward(x_nchw, params, stride):
    x = jnp.transpose(x_nchw, (0, 2, 3, 1))                      # NCHW -> NHWC f32
    n, h, w, cin = x.shape
    cin_p = params["cin_pad"]
    xb = jnp.pad(x, ((0, 0), (0, 0), (0, 0), (0, cin_p - cin))).astype(jnp.bfloat16)

    # Fused 1x1 reductions (a1, b1, c1): one MXU pass over x, bf16 output.  The
    # per-branch column slices are 128-aligned and already channel-padded for the
    # downstream 3x3 convs (no re-pad).
    # TODO(synk): emit the three branch tensors as separate lane-dense outputs of
    # the fused kernel (multi-output out_specs) to drop these column-slice copies.
    flat = xb.reshape(n * h * w, cin_p)
    y = _matmul_bias_relu(flat, params["fused_w"], params["fused_b"],
                          out_dtype=jnp.bfloat16)
    outs, off = [], 0
    for cpad in params["fused_splits"]:
        outs.append(y[:, off:off + cpad].reshape(n, h, w, cpad))
        off += cpad
    a_r, b_r, c_r = outs

    # conv3_branch_a / _b: 1x1 -> 3x3 s=stride p0 (f32 out, feeds final concat)
    a = conv_bn_relu(a_r, params["a2"], stride, 0, out_dtype=jnp.float32)
    b = conv_bn_relu(b_r, params["b2"], stride, 0, out_dtype=jnp.float32)
    # conv5_branch: 1x1 -> 3x3 s1 p1 (bf16 intermediate) -> 3x3 s=stride p0 (f32)
    c = conv_bn_relu(c_r, params["c2"], 1, 1, out_dtype=jnp.bfloat16)
    c = conv_bn_relu(c, params["c3"], stride, 0, out_dtype=jnp.float32)
    # pool_branch: MaxPool2d(3, stride, 0) — exact f32 max over the raw input.
    p = maxpool2d(x, 3, stride)

    out = jnp.concatenate([
        a[..., :params["a2"]["cout"]],
        b[..., :params["b2"]["cout"]],
        c[..., :params["c3"]["cout"]],
        p,
    ], axis=-1)
    return jnp.transpose(out, (0, 3, 1, 2))                      # NHWC -> NCHW


# ---------------------------------------------------------------------------
if __name__ == "__main__":
    key = jax.random.PRNGKey(0)
    k_in, k_par = jax.random.split(key)

    # Small module config consistent with the PyTorch __init__ signature
    in_dim, conv3_r_a, conv3_a = 4, 8, 8
    conv3_r_b, conv3_b = 8, 8
    conv5_r, conv5_1, conv5 = 8, 8, 8
    stride = 2

    x = jax.random.normal(k_in, (2, in_dim, 16, 16), jnp.float32)  # NCHW
    params = init_reduction_res_b(k_par, in_dim, conv3_r_a, conv3_a,
                                  conv3_r_b, conv3_b, conv5_r, conv5_1, conv5)

    fwd = jax.jit(lambda xin: reduction_res_b_forward(xin, params, stride))
    out = fwd(x)
    jax.block_until_ready(out)

    # Output spatial for 16x16 input, k=3, stride=2, pad=0 -> 7x7;
    # channels = conv3_a + conv3_b + conv5 + in_dim = 8+8+8+4 = 28
    expected = (2, conv3_a + conv3_b + conv5 + in_dim, 7, 7)
    assert out.shape == expected, f"shape {out.shape} != {expected}"
    assert bool(jnp.all(jnp.isfinite(out)))

    print("KERNEL_OK")
</pallas_src>

<mosaic_0001>
module attributes {stable_mosaic.version = 11 : i64} {
  func.func @_matmul_bias_relu_kernel(%arg0: i32, %arg1: i32, %arg2: i32, %arg3: memref<512x128xbf16, #tpu.memory_space<vmem>>, %arg4: memref<128x384xbf16, #tpu.memory_space<vmem>>, %arg5: memref<1x384xf32, #tpu.memory_space<vmem>>, %arg6: memref<512x384xbf16, #tpu.memory_space<vmem>>, %arg7: memref<512x384xf32, #tpu.memory_space<vmem>>) attributes {dimension_semantics = [#tpu.dimension_semantics<parallel>, #tpu.dimension_semantics<parallel>, #tpu.dimension_semantics<arbitrary>], iteration_bounds = array<i64: 1, 1, 1>, scalar_prefetch = 0 : i64, scratch_operands = 1 : i64, tpu.core_type = #tpu.core_type<tc>, window_params = [{transform_indices = @transform_0, window_bounds = array<i64: 512, 128>}, {transform_indices = @transform_1, window_bounds = array<i64: 128, 384>}, {transform_indices = @transform_2, window_bounds = array<i64: 1, 384>}, {transform_indices = @transform_3, window_bounds = array<i64: 512, 384>}]} {
    %c0_i32 = arith.constant 0 : i32
    %0 = arith.cmpi eq, %arg2, %c0_i32 : i32
    %1 = arith.extui %0 : i1 to i32
    %c0_i32_0 = arith.constant 0 : i32
    %2 = arith.cmpi ne, %1, %c0_i32_0 : i32
    scf.if %2 {
      %cst_10 = arith.constant 0.000000e+00 : f32
      %12 = vector.broadcast %cst_10 : f32 to vector<512x384xf32>
      %c0_11 = arith.constant 0 : index
      %c0_12 = arith.constant 0 : index
      %13 = vector.load %arg7[%c0_11, %c0_12] : memref<512x384xf32, #tpu.memory_space<vmem>>, vector<512x384xf32>
      tpu.vector_store %arg7[%c0_11, %c0_12], %12 {strides = array<i32>} : memref<512x384xf32, #tpu.memory_space<vmem>>, vector<512x384xf32>,
    } else {
    }
    %c0 = arith.constant 0 : index
    %c0_1 = arith.constant 0 : index
    %3 = vector.load %arg7[%c0, %c0_1] : memref<512x384xf32, #tpu.memory_space<vmem>>, vector<512x384xf32>
    %c0_2 = arith.constant 0 : index
    %c0_3 = arith.constant 0 : index
    %4 = vector.load %arg3[%c0_2, %c0_3] : memref<512x128xbf16, #tpu.memory_space<vmem>>, vector<512x128xbf16>
    %c0_4 = arith.constant 0 : index
    %c0_5 = arith.constant 0 : index
    %5 = vector.load %arg4[%c0_4, %c0_5] : memref<128x384xbf16, #tpu.memory_space<vmem>>, vector<128x384xbf16>
    %cst = arith.constant dense<0.000000e+00> : vector<512x384xf32>
    %6 = tpu.matmul %4, %5, %cst {dimension_numbers = #tpu.dot_dimension_numbers<[1], [0], [0], [1], [0, 0, 1, 1], [], []>} : vector<512x128xbf16>, vector<128x384xbf16>, vector<512x384xf32> -> vector<512x384xf32>
    %7 = arith.addf %3, %6 : vector<512x384xf32>
    %c0_6 = arith.constant 0 : index
    %c0_7 = arith.constant 0 : index
    %8 = vector.load %arg7[%c0_6, %c0_7] : memref<512x384xf32, #tpu.memory_space<vmem>>, vector<512x384xf32>
    tpu.vector_store %arg7[%c0_6, %c0_7], %7 {strides = array<i32>} : memref<512x384xf32, #tpu.memory_space<vmem>>, vector<512x384xf32>,
    %c0_i32_8 = arith.constant 0 : i32
    %9 = arith.cmpi eq, %arg2, %c0_i32_8 : i32
    %10 = arith.extui %9 : i1 to i32
    %c0_i32_9 = arith.constant 0 : i32
    %11 = arith.cmpi ne, %10, %c0_i32_9 : i32
    scf.if %11 {
      %c0_10 = arith.constant 0 : index
      %c0_11 = arith.constant 0 : index
      %12 = vector.load %arg7[%c0_10, %c0_11] : memref<512x384xf32, #tpu.memory_space<vmem>>, vector<512x384xf32>
      %c0_12 = arith.constant 0 : index
      %c0_13 = arith.constant 0 : index
      %13 = vector.load %arg5[%c0_12, %c0_13] : memref<1x384xf32, #tpu.memory_space<vmem>>, vector<1x384xf32>
      %14 = vector.broadcast %13 : vector<1x384xf32> to vector<512x384xf32>
      %15 = arith.addf %12, %14 : vector<512x384xf32>
      %cst_14 = arith.constant 0.000000e+00 : f32
      %16 = vector.broadcast %cst_14 : f32 to vector<512x384xf32>
      %17 = arith.maximumf %15, %16 : vector<512x384xf32>
      %18 = arith.truncf %17 : vector<512x384xf32> to vector<512x384xbf16>
      %c0_15 = arith.constant 0 : index
      %c0_16 = arith.constant 0 : index
      %19 = vector.load %arg6[%c0_15, %c0_16] : memref<512x384xbf16, #tpu.memory_space<vmem>>, vector<512x384xbf16>
      tpu.vector_store %arg6[%c0_15, %c0_16], %18 {strides = array<i32>} : memref<512x384xbf16, #tpu.memory_space<vmem>>, vector<512x384xbf16>,
    } else {
    }
    return
  }
  func.func @transform_0(%arg0: i32, %arg1: i32, %arg2: i32) -> (i32, i32) {
    %c0_i32 = arith.constant 0 : i32
    return %arg0, %arg2 : i32, i32
  }
  func.func @transform_1(%arg0: i32, %arg1: i32, %arg2: i32) -> (i32, i32) {
    %c0_i32 = arith.constant 0 : i32
    return %arg2, %arg1 : i32, i32
  }
  func.func @transform_2(%arg0: i32, %arg1: i32, %arg2: i32) -> (i32, i32) {
    %c0_i32 = arith.constant 0 : i32
    %c0_i32_0 = arith.constant 0 : i32
    return %c0_i32, %arg1 : i32, i32
  }
  func.func @transform_3(%arg0: i32, %arg1: i32, %arg2: i32) -> (i32, i32) {
    %c0_i32 = arith.constant 0 : i32
    return %arg0, %arg1 : i32, i32
  }
}

module attributes {stable_mosaic.version = 11 : i64} {
  func.func @_maxpool_kernel(%arg0: i32, %arg1: i32, %arg2: memref<1x24x2x7x4xf32, #tpu.memory_space<vmem>>, %arg3: memref<1x7x7x4xf32, #tpu.memory_space<vmem>>) attributes {dimension_semantics = [#tpu.dimension_semantics<parallel>, #tpu.dimension_semantics<parallel>], iteration_bounds = array<i64: 2, 1>, scalar_prefetch = 0 : i64, scratch_operands = 0 : i64, tpu.core_type = #tpu.core_type<tc>, window_params = [{transform_indices = @transform_0, window_bounds = array<i64: 1, 24, 2, 7, 4>}, {transform_indices = @transform_1, window_bounds = array<i64: 1, 7, 7, 4>}]} {
    %c0 = arith.constant 0 : index
    %c0_0 = arith.constant 0 : index
    %c0_1 = arith.constant 0 : index
    %c0_2 = arith.constant 0 : index
    %c0_3 = arith.constant 0 : index
    %0 = vector.load %arg2[%c0, %c0_0, %c0_1, %c0_2, %c0_3] : memref<1x24x2x7x4xf32, #tpu.memory_space<vmem>>, vector<1x7x1x7x4xf32>
    %1 = vector.shape_cast %0 : vector<1x7x1x7x4xf32> to vector<7x7x4xf32>
    %c0_4 = arith.constant 0 : index
    %c0_5 = arith.constant 0 : index
    %c1 = arith.constant 1 : index
    %c0_6 = arith.constant 0 : index
    %c0_7 = arith.constant 0 : index
    %2 = vector.load %arg2[%c0_4, %c0_5, %c1, %c0_6, %c0_7] : memref<1x24x2x7x4xf32, #tpu.memory_space<vmem>>, vector<1x7x1x7x4xf32>
    %3 = vector.shape_cast %2 : vector<1x7x1x7x4xf32> to vector<7x7x4xf32>
    %4 = arith.maximumf %1, %3 : vector<7x7x4xf32>
    %c0_8 = arith.constant 0 : index
    %c1_9 = arith.constant 1 : index
    %c0_10 = arith.constant 0 : index
    %c0_11 = arith.constant 0 : index
    %c0_12 = arith.constant 0 : index
    %5 = vector.load %arg2[%c0_8, %c1_9, %c0_10, %c0_11, %c0_12] : memref<1x24x2x7x4xf32, #tpu.memory_space<vmem>>, vector<1x7x1x7x4xf32>
    %6 = vector.shape_cast %5 : vector<1x7x1x7x4xf32> to vector<7x7x4xf32>
    %7 = arith.maximumf %4, %6 : vector<7x7x4xf32>
    %c0_13 = arith.constant 0 : index
    %c8 = arith.constant 8 : index
    %c0_14 = arith.constant 0 : index
    %c0_15 = arith.constant 0 : index
    %c0_16 = arith.constant 0 : index
    %8 = vector.load %arg2[%c0_13, %c8, %c0_14, %c0_15, %c0_16] : memref<1x24x2x7x4xf32, #tpu.memory_space<vmem>>, vector<1x7x1x7x4xf32>
    %9 = vector.shape_cast %8 : vector<1x7x1x7x4xf32> to vector<7x7x4xf32>
    %10 = arith.maximumf %7, %9 : vector<7x7x4xf32>
    %c0_17 = arith.constant 0 : index
    %c8_18 = arith.constant 8 : index
    %c1_19 = arith.constant 1 : index
    %c0_20 = arith.constant 0 : index
    %c0_21 = arith.constant 0 : index
    %11 = vector.load %arg2[%c0_17, %c8_18, %c1_19, %c0_20, %c0_21] : memref<1x24x2x7x4xf32, #tpu.memory_space<vmem>>, vector<1x7x1x7x4xf32>
    %12 = vector.shape_cast %11 : vector<1x7x1x7x4xf32> to vector<7x7x4xf32>
    %13 = arith.maximumf %10, %12 : vector<7x7x4xf32>
    %c0_22 = arith.constant 0 : index
    %c9 = arith.constant 9 : index
    %c0_23 = arith.constant 0 : index
    %c0_24 = arith.constant 0 : index
    %c0_25 = arith.constant 0 : index
    %14 = vector.load %arg2[%c0_22, %c9, %c0_23, %c0_24, %c0_25] : memref<1x24x2x7x4xf32, #tpu.memory_space<vmem>>, vector<1x7x1x7x4xf32>
    %15 = vector.shape_cast %14 : vector<1x7x1x7x4xf32> to vector<7x7x4xf32>
    %16 = arith.maximumf %13, %15 : vector<7x7x4xf32>
    %c0_26 = arith.constant 0 : index
    %c16 = arith.constant 16 : index
    %c0_27 = arith.constant 0 : index
    %c0_28 = arith.constant 0 : index
    %c0_29 = arith.constant 0 : index
    %17 = vector.load %arg2[%c0_26, %c16, %c0_27, %c0_28, %c0_29] : memref<1x24x2x7x4xf32, #tpu.memory_space<vmem>>, vector<1x7x1x7x4xf32>
    %18 = vector.shape_cast %17 : vector<1x7x1x7x4xf32> to vector<7x7x4xf32>
    %19 = arith.maximumf %16, %18 : vector<7x7x4xf32>
    %c0_30 = arith.constant 0 : index
    %c16_31 = arith.constant 16 : index
    %c1_32 = arith.constant 1 : index
    %c0_33 = arith.constant 0 : index
    %c0_34 = arith.constant 0 : index
    %20 = vector.load %arg2[%c0_30, %c16_31, %c1_32, %c0_33, %c0_34] : memref<1x24x2x7x4xf32, #tpu.memory_space<vmem>>, vector<1x7x1x7x4xf32>
    %21 = vector.shape_cast %20 : vector<1x7x1x7x4xf32> to vector<7x7x4xf32>
    %22 = arith.maximumf %19, %21 : vector<7x7x4xf32>
    %c0_35 = arith.constant 0 : index
    %c17 = arith.constant 17 : index
    %c0_36 = arith.constant 0 : index
    %c0_37 = arith.constant 0 : index
    %c0_38 = arith.constant 0 : index
    %23 = vector.load %arg2[%c0_35, %c17, %c0_36, %c0_37, %c0_38] : memref<1x24x2x7x4xf32, #tpu.memory_space<vmem>>, vector<1x7x1x7x4xf32>
    %24 = vector.shape_cast %23 : vector<1x7x1x7x4xf32> to vector<7x7x4xf32>
    %25 = arith.maximumf %22, %24 : vector<7x7x4xf32>
    %c0_39 = arith.constant 0 : index
    %c0_40 = arith.constant 0 : index
    %c0_41 = arith.constant 0 : index
    %c0_42 = arith.constant 0 : index
    %26 = vector.load %arg3[%c0_39, %c0_40, %c0_41, %c0_42] : memref<1x7x7x4xf32, #tpu.memory_space<vmem>>, vector<1x7x7x4xf32>
    %27 = vector.shape_cast %26 : vector<1x7x7x4xf32> to vector<7x7x4xf32>
    %28 = vector.shape_cast %25 : vector<7x7x4xf32> to vector<1x7x7x4xf32>
    tpu.vector_store %arg3[%c0_39, %c0_40, %c0_41, %c0_42], %28 {strides = array<i32>} : memref<1x7x7x4xf32, #tpu.memory_space<vmem>>, vector<1x7x7x4xf32>,
    return
  }
  func.func @transform_0(%arg0: i32, %arg1: i32) -> (i32, i32, i32, i32, i32) {
    %c0_i32 = arith.constant 0 : i32
    %c0_i32_0 = arith.constant 0 : i32
    %c0_i32_1 = arith.constant 0 : i32
    %c0_i32_2 = arith.constant 0 : i32
    return %arg0, %c0_i32, %c0_i32_0, %c0_i32_1, %arg1 : i32, i32, i32, i32, i32
  }
  func.func @transform_1(%arg0: i32, %arg1: i32) -> (i32, i32, i32, i32) {
    %c0_i32 = arith.constant 0 : i32
    %c0_i32_0 = arith.constant 0 : i32
    %c0_i32_1 = arith.constant 0 : i32
    return %arg0, %c0_i32, %c0_i32_0, %arg1 : i32, i32, i32, i32
  }
}

module attributes {stable_mosaic.version = 11 : i64} {
  func.func @_matmul_bias_relu_kernel(%arg0: i32, %arg1: i32, %arg2: i32, %arg3: memref<112x1152xbf16, #tpu.memory_space<vmem>>, %arg4: memref<1152x128xbf16, #tpu.memory_space<vmem>>, %arg5: memref<1x128xf32, #tpu.memory_space<vmem>>, %arg6: memref<112x128xf32, #tpu.memory_space<vmem>>, %arg7: memref<112x128xf32, #tpu.memory_space<vmem>>) attributes {dimension_semantics = [#tpu.dimension_semantics<parallel>, #tpu.dimension_semantics<parallel>, #tpu.dimension_semantics<arbitrary>], iteration_bounds = array<i64: 1, 1, 1>, scalar_prefetch = 0 : i64, scratch_operands = 1 : i64, tpu.core_type = #tpu.core_type<tc>, window_params = [{transform_indices = @transform_0, window_bounds = array<i64: 112, 1152>}, {transform_indices = @transform_1, window_bounds = array<i64: 1152, 128>}, {transform_indices = @transform_2, window_bounds = array<i64: 1, 128>}, {transform_indices = @transform_3, window_bounds = array<i64: 112, 128>}]} {
    %c0_i32 = arith.constant 0 : i32
    %0 = arith.cmpi eq, %arg2, %c0_i32 : i32
    %1 = arith.extui %0 : i1 to i32
    %c0_i32_0 = arith.constant 0 : i32
    %2 = arith.cmpi ne, %1, %c0_i32_0 : i32
    scf.if %2 {
      %cst_10 = arith.constant 0.000000e+00 : f32
      %12 = vector.broadcast %cst_10 : f32 to vector<112x128xf32>
      %c0_11 = arith.constant 0 : index
      %c0_12 = arith.constant 0 : index
      %13 = vector.load %arg7[%c0_11, %c0_12] : memref<112x128xf32, #tpu.memory_space<vmem>>, vector<112x128xf32>
      tpu.vector_store %arg7[%c0_11, %c0_12], %12 {strides = array<i32>} : memref<112x128xf32, #tpu.memory_space<vmem>>, vector<112x128xf32>,
    } else {
    }
    %c0 = arith.constant 0 : index
    %c0_1 = arith.constant 0 : index
    %3 = vector.load %arg7[%c0, %c0_1] : memref<112x128xf32, #tpu.memory_space<vmem>>, vector<112x128xf32>
    %c0_2 = arith.constant 0 : index
    %c0_3 = arith.constant 0 : index
    %4 = vector.load %arg3[%c0_2, %c0_3] : memref<112x1152xbf16, #tpu.memory_space<vmem>>, vector<112x1152xbf16>
    %c0_4 = arith.constant 0 : index
    %c0_5 = arith.constant 0 : index
    %5 = vector.load %arg4[%c0_4, %c0_5] : memref<1152x128xbf16, #tpu.memory_space<vmem>>, vector<1152x128xbf16>
    %cst = arith.constant dense<0.000000e+00> : vector<112x128xf32>
    %6 = tpu.matmul %4, %5, %cst {dimension_numbers = #tpu.dot_dimension_numbers<[1], [0], [0], [1], [0, 0, 1, 1], [], []>} : vector<112x1152xbf16>, vector<1152x128xbf16>, vector<112x128xf32> -> vector<112x128xf32>
    %7 = arith.addf %3, %6 : vector<112x128xf32>
    %c0_6 = arith.constant 0 : index
    %c0_7 = arith.constant 0 : index
    %8 = vector.load %arg7[%c0_6, %c0_7] : memref<112x128xf32, #tpu.memory_space<vmem>>, vector<112x128xf32>
    tpu.vector_store %arg7[%c0_6, %c0_7], %7 {strides = array<i32>} : memref<112x128xf32, #tpu.memory_space<vmem>>, vector<112x128xf32>,
    %c0_i32_8 = arith.constant 0 : i32
    %9 = arith.cmpi eq, %arg2, %c0_i32_8 : i32
    %10 = arith.extui %9 : i1 to i32
    %c0_i32_9 = arith.constant 0 : i32
    %11 = arith.cmpi ne, %10, %c0_i32_9 : i32
    scf.if %11 {
      %c0_10 = arith.constant 0 : index
      %c0_11 = arith.constant 0 : index
      %12 = vector.load %arg7[%c0_10, %c0_11] : memref<112x128xf32, #tpu.memory_space<vmem>>, vector<112x128xf32>
      %c0_12 = arith.constant 0 : index
      %c0_13 = arith.constant 0 : index
      %13 = vector.load %arg5[%c0_12, %c0_13] : memref<1x128xf32, #tpu.memory_space<vmem>>, vector<1x128xf32>
      %14 = vector.broadcast %13 : vector<1x128xf32> to vector<112x128xf32>
      %15 = arith.addf %12, %14 : vector<112x128xf32>
      %cst_14 = arith.constant 0.000000e+00 : f32
      %16 = vector.broadcast %cst_14 : f32 to vector<112x128xf32>
      %17 = arith.maximumf %15, %16 : vector<112x128xf32>
      %c0_15 = arith.constant 0 : index
      %c0_16 = arith.constant 0 : index
      %18 = vector.load %arg6[%c0_15, %c0_16] : memref<112x128xf32, #tpu.memory_space<vmem>>, vector<112x128xf32>
      tpu.vector_store %arg6[%c0_15, %c0_16], %17 {strides = array<i32>} : memref<112x128xf32, #tpu.memory_space<vmem>>, vector<112x128xf32>,
    } else {
    }
    return
  }
  func.func @transform_0(%arg0: i32, %arg1: i32, %arg2: i32) -> (i32, i32) {
    %c0_i32 = arith.constant 0 : i32
    return %arg0, %arg2 : i32, i32
  }
  func.func @transform_1(%arg0: i32, %arg1: i32, %arg2: i32) -> (i32, i32) {
    %c0_i32 = arith.constant 0 : i32
    return %arg2, %arg1 : i32, i32
  }
  func.func @transform_2(%arg0: i32, %arg1: i32, %arg2: i32) -> (i32, i32) {
    %c0_i32 = arith.constant 0 : i32
    %c0_i32_0 = arith.constant 0 : i32
    return %c0_i32, %arg1 : i32, i32
  }
  func.func @transform_3(%arg0: i32, %arg1: i32, %arg2: i32) -> (i32, i32) {
    %c0_i32 = arith.constant 0 : i32
    return %arg0, %arg1 : i32, i32
  }
}

module attributes {stable_mosaic.version = 11 : i64} {
  func.func @_matmul_bias_relu_kernel(%arg0: i32, %arg1: i32, %arg2: i32, %arg3: memref<512x1152xbf16, #tpu.memory_space<vmem>>, %arg4: memref<1152x128xbf16, #tpu.memory_space<vmem>>, %arg5: memref<1x128xf32, #tpu.memory_space<vmem>>, %arg6: memref<512x128xbf16, #tpu.memory_space<vmem>>, %arg7: memref<512x128xf32, #tpu.memory_space<vmem>>) attributes {dimension_semantics = [#tpu.dimension_semantics<parallel>, #tpu.dimension_semantics<parallel>, #tpu.dimension_semantics<arbitrary>], iteration_bounds = array<i64: 1, 1, 1>, scalar_prefetch = 0 : i64, scratch_operands = 1 : i64, tpu.core_type = #tpu.core_type<tc>, window_params = [{transform_indices = @transform_0, window_bounds = array<i64: 512, 1152>}, {transform_indices = @transform_1, window_bounds = array<i64: 1152, 128>}, {transform_indices = @transform_2, window_bounds = array<i64: 1, 128>}, {transform_indices = @transform_3, window_bounds = array<i64: 512, 128>}]} {
    %c0_i32 = arith.constant 0 : i32
    %0 = arith.cmpi eq, %arg2, %c0_i32 : i32
    %1 = arith.extui %0 : i1 to i32
    %c0_i32_0 = arith.constant 0 : i32
    %2 = arith.cmpi ne, %1, %c0_i32_0 : i32
    scf.if %2 {
      %cst_10 = arith.constant 0.000000e+00 : f32
      %12 = vector.broadcast %cst_10 : f32 to vector<512x128xf32>
      %c0_11 = arith.constant 0 : index
      %c0_12 = arith.constant 0 : index
      %13 = vector.load %arg7[%c0_11, %c0_12] : memref<512x128xf32, #tpu.memory_space<vmem>>, vector<512x128xf32>
      tpu.vector_store %arg7[%c0_11, %c0_12], %12 {strides = array<i32>} : memref<512x128xf32, #tpu.memory_space<vmem>>, vector<512x128xf32>,
    } else {
    }
    %c0 = arith.constant 0 : index
    %c0_1 = arith.constant 0 : index
    %3 = vector.load %arg7[%c0, %c0_1] : memref<512x128xf32, #tpu.memory_space<vmem>>, vector<512x128xf32>
    %c0_2 = arith.constant 0 : index
    %c0_3 = arith.constant 0 : index
    %4 = vector.load %arg3[%c0_2, %c0_3] : memref<512x1152xbf16, #tpu.memory_space<vmem>>, vector<512x1152xbf16>
    %c0_4 = arith.constant 0 : index
    %c0_5 = arith.constant 0 : index
    %5 = vector.load %arg4[%c0_4, %c0_5] : memref<1152x128xbf16, #tpu.memory_space<vmem>>, vector<1152x128xbf16>
    %cst = arith.constant dense<0.000000e+00> : vector<512x128xf32>
    %6 = tpu.matmul %4, %5, %cst {dimension_numbers = #tpu.dot_dimension_numbers<[1], [0], [0], [1], [0, 0, 1, 1], [], []>} : vector<512x1152xbf16>, vector<1152x128xbf16>, vector<512x128xf32> -> vector<512x128xf32>
    %7 = arith.addf %3, %6 : vector<512x128xf32>
    %c0_6 = arith.constant 0 : index
    %c0_7 = arith.constant 0 : index
    %8 = vector.load %arg7[%c0_6, %c0_7] : memref<512x128xf32, #tpu.memory_space<vmem>>, vector<512x128xf32>
    tpu.vector_store %arg7[%c0_6, %c0_7], %7 {strides = array<i32>} : memref<512x128xf32, #tpu.memory_space<vmem>>, vector<512x128xf32>,
    %c0_i32_8 = arith.constant 0 : i32
    %9 = arith.cmpi eq, %arg2, %c0_i32_8 : i32
    %10 = arith.extui %9 : i1 to i32
    %c0_i32_9 = arith.constant 0 : i32
    %11 = arith.cmpi ne, %10, %c0_i32_9 : i32
    scf.if %11 {
      %c0_10 = arith.constant 0 : index
      %c0_11 = arith.constant 0 : index
      %12 = vector.load %arg7[%c0_10, %c0_11] : memref<512x128xf32, #tpu.memory_space<vmem>>, vector<512x128xf32>
      %c0_12 = arith.constant 0 : index
      %c0_13 = arith.constant 0 : index
      %13 = vector.load %arg5[%c0_12, %c0_13] : memref<1x128xf32, #tpu.memory_space<vmem>>, vector<1x128xf32>
      %14 = vector.broadcast %13 : vector<1x128xf32> to vector<512x128xf32>
      %15 = arith.addf %12, %14 : vector<512x128xf32>
      %cst_14 = arith.constant 0.000000e+00 : f32
      %16 = vector.broadcast %cst_14 : f32 to vector<512x128xf32>
      %17 = arith.maximumf %15, %16 : vector<512x128xf32>
      %18 = arith.truncf %17 : vector<512x128xf32> to vector<512x128xbf16>
      %c0_15 = arith.constant 0 : index
      %c0_16 = arith.constant 0 : index
      %19 = vector.load %arg6[%c0_15, %c0_16] : memref<512x128xbf16, #tpu.memory_space<vmem>>, vector<512x128xbf16>
      tpu.vector_store %arg6[%c0_15, %c0_16], %18 {strides = array<i32>} : memref<512x128xbf16, #tpu.memory_space<vmem>>, vector<512x128xbf16>,
    } else {
    }
    return
  }
  func.func @transform_0(%arg0: i32, %arg1: i32, %arg2: i32) -> (i32, i32) {
    %c0_i32 = arith.constant 0 : i32
    return %arg0, %arg2 : i32, i32
  }
  func.func @transform_1(%arg0: i32, %arg1: i32, %arg2: i32) -> (i32, i32) {
    %c0_i32 = arith.constant 0 : i32
    return %arg2, %arg1 : i32, i32
  }
  func.func @transform_2(%arg0: i32, %arg1: i32, %arg2: i32) -> (i32, i32) {
    %c0_i32 = arith.constant 0 : i32
    %c0_i32_0 = arith.constant 0 : i32
    return %c0_i32, %arg1 : i32, i32
  }
  func.func @transform_3(%arg0: i32, %arg1: i32, %arg2: i32) -> (i32, i32) {
    %c0_i32 = arith.constant 0 : i32
    return %arg0, %arg1 : i32, i32
  }
}

</mosaic_0001>

<llo_original>
// kernel: _lambda_.11
$region0: #{_lambda_.11}
  #allocation0 [shape = 'u32[]', space=smem, size = 0x4, offset = 0x4, fixed_abs, tag = 'smem constant byte address 0x4 - core index']
  #allocation1 [shape = 'u32[144,128]{1,0:T(1,128)}', space=vmem, size = 0x12000, scoped, tag = 'internal scratch']
  %s0 = inlined_call_operand.vmem [shape: f32[2,24,2,7,4], index: 0, kind: input, shape index: {}]
  %s1 = inlined_call_operand.vmem [shape: f32[2,7,7,4], index: 1, kind: output, shape index: {}]
  %s2 = sld [smem:[#allocation0]]
  $region37: #{_lambda_.11} parent=0
    _
  %s4 = ssub.s32 1, %s2
  %s5 = scalar_select 0, %s4, %s2
  loop: start=0, step=1, limit=4
  $region2: #{_lambda_.11} parent=0 // loop_pre_header
    _
  $region3: #{_lambda_.11} parent=0 // loop_header
    %s7 = sphi 0, %s11
    %p8 = scmp.ge.s32.totalorder %s7, 4
    %s14 = sphi 0, %s26
    %s15 = sphi 0, %s22
    %s16 = sphi 0, %s14
    %s17 = sphi 0, %s15
    %s18 = sphi 0, %s16
    %s19 = sphi 0, %s17
    %s31 = sphi 0, %s33
    %s34 = sphi 0, %s31
    %s35 = sphi 0, %s34
    %s51 = sphi 0, %s35
    %s59 = sphi 0, %s61
    %s62 = sphi 0, %s59
    %s63 = sphi 0, %s62
    %s79 = sphi 0, %s63
  $region4: #{_lambda_.11} parent=0 // loop_header_branch
    %10 = sbr.rel (%p8) target = $region8
  $region5: #{_lambda_.11} parent=0 // loop_body
    %s12 = ssub.s32 %s7, 1
    %s13 = ssub.s32 %s7, 2
    %s20 = sadd.s32 1, %s15
    %p21 = scmp.ge.s32.totalorder %s20, 1
    %s22 = scalar_select %p21, 0, %s20
    %s23 = sadd.s32 1, %s14
    %s24 = scalar_select %p21, %s23, %s14
    %p25 = scmp.ge.s32.totalorder %s24, 2
    %s26 = scalar_select %p25, 0, %s24
    %s27 = ssub.s32 %s14, %s26
    %s28 = ssub.s32 %s15, %s22
    %s29 = sor.u32 %s27, %s28
    %p30 = scmp.eq.s32.totalorder %s29, 0
    %s32 = sadd.s32 %s31, 1
    %s33 = scalar_select %p30, %s31, %s32
    %p36 = pneg %p30
    %p37 = scmp.eq.s32.totalorder %s7, 1
    %p38 = por %p36, %p37
    %p39 = scmp.ne.s32.totalorder %s31, %s34
    %p40 = scmp.eq.s32.totalorder %s7, 0
    %p41 = por %p39, %p40
    %p42 = scmp.ne.s32.totalorder %s31, %s34
    %p43 = scmp.eq.s32.totalorder %s12, 1
    %p44 = por %p42, %p43
    %p45 = scmp.ne.s32.totalorder %s34, %s35
    %p46 = scmp.eq.s32.totalorder %s12, 0
    %p47 = por %p45, %p46
    %p48 = scmp.ne.s32.totalorder %s34, %s35
    %p49 = scmp.eq.s32.totalorder %s13, 1
    %p50 = por %p48, %p49
    %p52 = scmp.ne.s32.totalorder %s35, %s51
    %p53 = scmp.eq.s32.totalorder %s13, 0
    %p54 = por %p52, %p53
    %s55 = ssub.s32 %s14, %s26
    %s56 = ssub.s32 %s15, %s22
    %s57 = sor.u32 %s55, %s56
    %p58 = scmp.eq.s32.totalorder %s57, 0
    %s60 = sadd.s32 %s59, 1
    %s61 = scalar_select %p58, %s59, %s60
    %p64 = pneg %p58
    %p65 = scmp.eq.s32.totalorder %s7, 1
    %p66 = por %p64, %p65
    %p67 = scmp.ne.s32.totalorder %s59, %s62
    %p68 = scmp.eq.s32.totalorder %s7, 0
    %p69 = por %p67, %p68
    %p70 = scmp.ne.s32.totalorder %s59, %s62
    %p71 = scmp.eq.s32.totalorder %s12, 1
    %p72 = por %p70, %p71
    %p73 = scmp.ne.s32.totalorder %s62, %s63
    %p74 = scmp.eq.s32.totalorder %s12, 0
    %p75 = por %p73, %p74
    %p76 = scmp.ne.s32.totalorder %s62, %s63
    %p77 = scmp.eq.s32.totalorder %s13, 1
    %p78 = por %p76, %p77
    %p80 = scmp.ne.s32.totalorder %s63, %s79
    %p81 = scmp.eq.s32.totalorder %s13, 0
    %p82 = por %p80, %p81
    %p83 = scmp.le.s32.totalorder 1, %s7
    %p84 = scmp.lt.s32.totalorder %s7, 3
    %p85 = pnand %p83, %p84
    %p86 = pneg %p85
    // Predicated region
    $region9: #{_lambda_.11} parent=5 // pred_check
      _
    $region10: #{_lambda_.11} parent=5 // pred_check_branch
      %88 = sbr.rel (%p85) target = $region12
    $region11: #{_lambda_.11} parent=5 // pred_region
      %s89 = ssub.s32 %s7, 1
    $region12: #{_lambda_.11} parent=5 // pred_fallthru
      _
    %p90 = scmp.lt.s32.totalorder %s7, 2
    // Predicated region
    $region13: #{_lambda_.11} parent=5 // pred_check
      %p91 = pneg %p90
    $region14: #{_lambda_.11} parent=5 // pred_check_branch
      %93 = sbr.rel (%p91) target = $region16
    $region15: #{_lambda_.11} parent=5 // pred_region
      // Predicated region
      $region17: #{_lambda_.11} parent=15 // pred_check
        %p94 = pneg %p41
      $region18: #{_lambda_.11} parent=15 // pred_check_branch
        %96 = sbr.rel (%p94) target = $region20
      $region19: #{_lambda_.11} parent=15 // pred_region
        %p97 = scmp.lt.s32.totalorder %s14, 1
        %s98 = scalar_select %p97, %s14, 1
        %p99 = scmp.lt.s32.totalorder %s15, 0
        %s100 = scalar_select %p99, %s15, 0
        %s101 = smul.addr %s98, 48
        %s102 = sadd.s32 %s100, %s101
        %s103 = smul.addr %s102, 8
        %s104 = scalar_lea.vmem %s0, %s103
      $region20: #{_lambda_.11} parent=15 // pred_fallthru
        _
    $region16: #{_lambda_.11} parent=5 // pred_fallthru
      _
    %p105 = scmp.le.s32.totalorder 1, %s7
    %p106 = scmp.lt.s32.totalorder %s7, 3
    %p107 = pnand %p105, %p106
    %p108 = pneg %p107
    // Predicated region
    $region21: #{_lambda_.11} parent=5 // pred_check
      _
    $region22: #{_lambda_.11} parent=5 // pred_check_branch
      %110 = sbr.rel (%p107) target = $region24
    $region23: #{_lambda_.11} parent=5 // pred_region
      %s111 = ssub.s32 %s7, 1
      %p112 = scmp.lt.s32.totalorder %s16, 1
      %s113 = scalar_select %p112, %s16, 1
      %p114 = scmp.lt.s32.totalorder %s17, 0
      %s115 = scalar_select %p114, %s17, 0
      %s116 = smul.addr %s113, 48
      %s117 = sadd.s32 %s115, %s116
      %s118 = smul.addr %s117, 8
      %s119 = scalar_lea.vmem %s0, %s118
      %p120 = pneg %p47
      %p121 = pneg %p44
      %p122 = pneg %p75
      %p123 = pneg %p72
      %p124 = scmp.lt.s32.totalorder %s16, 1
      %s125 = scalar_select %p124, %s16, 1
      %p126 = scmp.lt.s32.totalorder %s17, 0
      %s127 = scalar_select %p126, %s17, 0
      %s128 = smul.addr %s125, 7
      %s129 = sadd.s32 %s127, %s128
      %s130 = smul.addr %s129, 8
      %s131 = scalar_lea.vmem %s1, %s130
      %p132 = scmp.lt.s32.totalorder %s16, 1
      %s133 = scalar_select %p132, %s16, 1
      %p134 = scmp.lt.s32.totalorder %s17, 0
      %s135 = scalar_select %p134, %s17, 0
      %s136 = smul.addr %s133, 48
      %s137 = sadd.s32 %s135, %s136
      %s138 = smul.addr %s137, 8
      %s139 = scalar_lea.vmem %s0, %s138
      %p140 = scmp.lt.s32.totalorder %s16, 1
      %s141 = scalar_select %p140, %s16, 1
      %p142 = scmp.lt.s32.totalorder %s17, 0
      %s143 = scalar_select %p142, %s17, 0
      %s144 = smul.addr %s141, 7
      %s145 = sadd.s32 %s143, %s144
      %s146 = smul.addr %s145, 8
      %s147 = scalar_lea.vmem %s1, %s146
      %v148 = vld [vmem:[%s139] sm:$0x7f]
      %v149 = vld [vmem:[%s139 + $0x10] sm:$0x7f]
      %v150 = vld [vmem:[%s139 + $0x20] sm:$0x7f]
      %v151 = vld [vmem:[%s139 + $0x30] sm:$0x7f]
      %v152 = vld [vmem:[%s139 + $0x40] sm:$0x7f]
      %v153 = vld [vmem:[%s139 + $0x50] sm:$0x7f]
      %v154 = vld [vmem:[%s139 + $0x60] sm:$0x7f]
      %s155 = scalar_lea.vmem %s139, 8
      %v156 = vld [vmem:[%s155] sm:$0x7f]
      %v157 = vld [vmem:[%s155 + $0x10] sm:$0x7f]
      %v158 = vld [vmem:[%s155 + $0x20] sm:$0x7f]
      %v159 = vld [vmem:[%s155 + $0x30] sm:$0x7f]
      %v160 = vld [vmem:[%s155 + $0x40] sm:$0x7f]
      %v161 = vld [vmem:[%s155 + $0x50] sm:$0x7f]
      %v162 = vld [vmem:[%s155 + $0x60] sm:$0x7f]
      %v163 = vmax.f32 %v148, %v156
      %v164 = vmax.f32 %v149, %v157
      %v165 = vmax.f32 %v150, %v158
      %v166 = vmax.f32 %v151, %v159
      %v167 = vmax.f32 %v152, %v160
      %v168 = vmax.f32 %v153, %v161
      %v169 = vmax.f32 %v154, %v162
      %s170 = scalar_lea.vmem %s139, 16
      %v171 = vld [vmem:[%s170] sm:$0x7f]
      %v172 = vld [vmem:[%s170 + $0x10] sm:$0x7f]
      %v173 = vld [vmem:[%s170 + $0x20] sm:$0x7f]
      %v174 = vld [vmem:[%s170 + $0x30] sm:$0x7f]
      %v175 = vld [vmem:[%s170 + $0x40] sm:$0x7f]
      %v176 = vld [vmem:[%s170 + $0x50] sm:$0x7f]
      %v177 = vld [vmem:[%s170 + $0x60] sm:$0x7f]
      %v178 = vmax.f32 %v163, %v171
      %v179 = vmax.f32 %v164, %v172
      %v180 = vmax.f32 %v165, %v173
      %v181 = vmax.f32 %v166, %v174
      %v182 = vmax.f32 %v167, %v175
      %v183 = vmax.f32 %v168, %v176
      %v184 = vmax.f32 %v169, %v177
      %s185 = scalar_lea.vmem %s139, 128
      %v186 = vld [vmem:[%s185] sm:$0x7f]
      %v187 = vld [vmem:[%s185 + $0x10] sm:$0x7f]
      %v188 = vld [vmem:[%s185 + $0x20] sm:$0x7f]
      %v189 = vld [vmem:[%s185 + $0x30] sm:$0x7f]
      %v190 = vld [vmem:[%s185 + $0x40] sm:$0x7f]
      %v191 = vld [vmem:[%s185 + $0x50] sm:$0x7f]
      %v192 = vld [vmem:[%s185 + $0x60] sm:$0x7f]
      %v193 = vmax.f32 %v178, %v186
      %v194 = vmax.f32 %v179, %v187
      %v195 = vmax.f32 %v180, %v188
      %v196 = vmax.f32 %v181, %v189
      %v197 = vmax.f32 %v182, %v190
      %v198 = vmax.f32 %v183, %v191
      %v199 = vmax.f32 %v184, %v192
      %s200 = scalar_lea.vmem %s139, 136
      %v201 = vld [vmem:[%s200] sm:$0x7f]
      %v202 = vld [vmem:[%s200 + $0x10] sm:$0x7f]
      %v203 = vld [vmem:[%s200 + $0x20] sm:$0x7f]
      %v204 = vld [vmem:[%s200 + $0x30] sm:$0x7f]
      %v205 = vld [vmem:[%s200 + $0x40] sm:$0x7f]
      %v206 = vld [vmem:[%s200 + $0x50] sm:$0x7f]
      %v207 = vld [vmem:[%s200 + $0x60] sm:$0x7f]
      %v208 = vmax.f32 %v193, %v201
      %v209 = vmax.f32 %v194, %v202
      %v210 = vmax.f32 %v195, %v203
      %v211 = vmax.f32 %v196, %v204
      %v212 = vmax.f32 %v197, %v205
      %v213 = vmax.f32 %v198, %v206
      %v214 = vmax.f32 %v199, %v207
      %s215 = scalar_lea.vmem %s139, 144
      %v216 = vld [vmem:[%s215] sm:$0x7f]
      %v217 = vld [vmem:[%s215 + $0x10] sm:$0x7f]
      %v218 = vld [vmem:[%s215 + $0x20] sm:$0x7f]
      %v219 = vld [vmem:[%s215 + $0x30] sm:$0x7f]
      %v220 = vld [vmem:[%s215 + $0x40] sm:$0x7f]
      %v221 = vld [vmem:[%s215 + $0x50] sm:$0x7f]
      %v222 = vld [vmem:[%s215 + $0x60] sm:$0x7f]
      %v223 = vmax.f32 %v208, %v216
      %v224 = vmax.f32 %v209, %v217
      %v225 = vmax.f32 %v210, %v218
      %v226 = vmax.f32 %v211, %v219
      %v227 = vmax.f32 %v212, %v220
      %v228 = vmax.f32 %v213, %v221
      %v229 = vmax.f32 %v214, %v222
      %s230 = scalar_lea.vmem %s139, 256
      %v231 = vld [vmem:[%s230] sm:$0x7f]
      %v232 = vld [vmem:[%s230 + $0x10] sm:$0x7f]
      %v233 = vld [vmem:[%s230 + $0x20] sm:$0x7f]
      %v234 = vld [vmem:[%s230 + $0x30] sm:$0x7f]
      %v235 = vld [vmem:[%s230 + $0x40] sm:$0x7f]
      %v236 = vld [vmem:[%s230 + $0x50] sm:$0x7f]
      %v237 = vld [vmem:[%s230 + $0x60] sm:$0x7f]
      %v238 = vmax.f32 %v223, %v231
      %v239 = vmax.f32 %v224, %v232
      %v240 = vmax.f32 %v225, %v233
      %v241 = vmax.f32 %v226, %v234
      %v242 = vmax.f32 %v227, %v235
      %v243 = vmax.f32 %v228, %v236
      %v244 = vmax.f32 %v229, %v237
      %s245 = scalar_lea.vmem %s139, 264
      %v246 = vld [vmem:[%s245] sm:$0x7f]
      %v247 = vld [vmem:[%s245 + $0x10] sm:$0x7f]
      %v248 = vld [vmem:[%s245 + $0x20] sm:$0x7f]
      %v249 = vld [vmem:[%s245 + $0x30] sm:$0x7f]
      %v250 = vld [vmem:[%s245 + $0x40] sm:$0x7f]
      %v251 = vld [vmem:[%s245 + $0x50] sm:$0x7f]
      %v252 = vld [vmem:[%s245 + $0x60] sm:$0x7f]
      %v253 = vmax.f32 %v238, %v246
      %v254 = vmax.f32 %v239, %v247
      %v255 = vmax.f32 %v240, %v248
      %v256 = vmax.f32 %v241, %v249
      %v257 = vmax.f32 %v242, %v250
      %v258 = vmax.f32 %v243, %v251
      %v259 = vmax.f32 %v244, %v252
      %s260 = scalar_lea.vmem %s139, 272
      %v261 = vld [vmem:[%s260] sm:$0x7f]
      %v262 = vld [vmem:[%s260 + $0x10] sm:$0x7f]
      %v263 = vld [vmem:[%s260 + $0x20] sm:$0x7f]
      %v264 = vld [vmem:[%s260 + $0x30] sm:$0x7f]
      %v265 = vld [vmem:[%s260 + $0x40] sm:$0x7f]
      %v266 = vld [vmem:[%s260 + $0x50] sm:$0x7f]
      %v267 = vld [vmem:[%s260 + $0x60] sm:$0x7f]
      %v268 = vmax.f32 %v253, %v261
      %v269 = vmax.f32 %v254, %v262
      %v270 = vmax.f32 %v255, %v263
      %v271 = vmax.f32 %v256, %v264
      %v272 = vmax.f32 %v257, %v265
      %v273 = vmax.f32 %v258, %v266
      %v274 = vmax.f32 %v259, %v267
      %vm275 = vcmask 30720
      %276 = vst.msk [vmem:[%s147] sm:$0x7f] %vm275, %v268
      %277 = vst.msk [vmem:[%s147 + $0x8] sm:$0x7f] %vm275, %v269
      %278 = vst.msk [vmem:[%s147 + $0x10] sm:$0x7f] %vm275, %v270
      %279 = vst.msk [vmem:[%s147 + $0x18] sm:$0x7f] %vm275, %v271
      %280 = vst.msk [vmem:[%s147 + $0x20] sm:$0x7f] %vm275, %v272
      %281 = vst.msk [vmem:[%s147 + $0x28] sm:$0x7f] %vm275, %v273
      %282 = vst.msk [vmem:[%s147 + $0x30] sm:$0x7f] %vm275, %v274
      %p283 = scmp.lt.s32.totalorder %s16, 1
      %s284 = scalar_select %p283, %s16, 1
      %p285 = scmp.lt.s32.totalorder %s17, 0
      %s286 = scalar_select %p285, %s17, 0
      %s287 = smul.addr %s284, 7
      %s288 = sadd.s32 %s286, %s287
      %s289 = smul.addr %s288, 8
      %s290 = scalar_lea.vmem %s1, %s289
      // Predicated region
      $region25: #{_lambda_.11} parent=23 // pred_check
        %p291 = pneg %p72
      $region26: #{_lambda_.11} parent=23 // pred_check_branch
        %293 = sbr.rel (%p291) target = $region28
      $region27: #{_lambda_.11} parent=23 // pred_region
        _
      $region28: #{_lambda_.11} parent=23 // pred_fallthru
        _
    $region24: #{_lambda_.11} parent=5 // pred_fallthru
      _
    %p294 = scmp.le.s32.totalorder 2, %s7
    // Predicated region
    $region29: #{_lambda_.11} parent=5 // pred_check
      %p295 = pneg %p294
    $region30: #{_lambda_.11} parent=5 // pred_check_branch
      %297 = sbr.rel (%p295) target = $region32
    $region31: #{_lambda_.11} parent=5 // pred_region
      %s298 = ssub.s32 %s7, 2
      // Predicated region
      $region33: #{_lambda_.11} parent=31 // pred_check
        %p299 = pneg %p78
      $region34: #{_lambda_.11} parent=31 // pred_check_branch
        %301 = sbr.rel (%p299) target = $region36
      $region35: #{_lambda_.11} parent=31 // pred_region
        %p302 = scmp.lt.s32.totalorder %s18, 1
        %s303 = scalar_select %p302, %s18, 1
        %p304 = scmp.lt.s32.totalorder %s19, 0
        %s305 = scalar_select %p304, %s19, 0
        %s306 = smul.addr %s303, 7
        %s307 = sadd.s32 %s305, %s306
        %s308 = smul.addr %s307, 8
        %s309 = scalar_lea.vmem %s1, %s308
      $region36: #{_lambda_.11} parent=31 // pred_fallthru
        _
    $region32: #{_lambda_.11} parent=5 // pred_fallthru
      _
  $region6: #{_lambda_.11} parent=0 // loop_footer
    %s11 = sadd.s32 1, %s7
  $region7: #{_lambda_.11} parent=0 // loop_footer_branch
    %6 = sbr.rel target = $region3
  $region8: #{_lambda_.11} parent=0 // loop_exit
    _

// kernel: _lambda_.6
$region0: #{_lambda_.6}
  #allocation0 [shape = 'u32[]', space=smem, size = 0x4, offset = 0x4, fixed_abs, tag = 'smem constant byte address 0x4 - core index']
  #allocation1 [shape = 'u32[144,128]{1,0:T(1,128)}', space=vmem, size = 0x12000, scoped, tag = 'internal scratch']
  #allocation2 [shape = 'f32[512,384]{1,0:T(8,128)}', space=vmem, size = 0xc0000, scoped, tag = 'scratch operand']
  %s0 = inlined_call_operand.vmem [shape: bf16[512,128], index: 0, kind: input, shape index: {}]
  %s1 = inlined_call_operand.vmem [shape: bf16[128,384], index: 1, kind: input, shape index: {}]
  %s2 = inlined_call_operand.vmem [shape: f32[1,384], index: 2, kind: input, shape index: {}]
  %s3 = inlined_call_operand.vmem [shape: bf16[512,384], index: 3, kind: output, shape index: {}]
  %s4 = sld [smem:[#allocation0]]
  $region30: #{_lambda_.6} parent=0
    _
  %s6 = ssub.s32 1, %s4
  %s7 = scalar_select 0, %s6, %s4
  // Predicated region
  $region2: #{_lambda_.6} parent=0 // pred_check
    _
  $region3: #{_lambda_.6} parent=0 // pred_check_branch
    %9 = sbr.rel (0) target = $region5
  $region4: #{_lambda_.6} parent=0 // pred_region
    _
  $region5: #{_lambda_.6} parent=0 // pred_fallthru
    _
  // Predicated region
  $region6: #{_lambda_.6} parent=0 // pred_check
    _
  $region7: #{_lambda_.6} parent=0 // pred_check_branch
    %11 = sbr.rel (0) target = $region9
  $region8: #{_lambda_.6} parent=0 // pred_region
    _
  $region9: #{_lambda_.6} parent=0 // pred_fallthru
    _
  // Predicated region
  $region10: #{_lambda_.6} parent=0 // pred_check
    _
  $region11: #{_lambda_.6} parent=0 // pred_check_branch
    %13 = sbr.rel (0) target = $region13
  $region12: #{_lambda_.6} parent=0 // pred_region
    _
  $region13: #{_lambda_.6} parent=0 // pred_fallthru
    _
  %p15 = scmp.eq.s32.totalorder 0, 0
  // Predicated region
  $region14: #{_lambda_.6} parent=0 // pred_check
    %p16 = pneg %p15
  $region15: #{_lambda_.6} parent=0 // pred_check_branch
    %18 = sbr.rel (%p16) target = $region17
  $region16: #{_lambda_.6} parent=0 // pred_region
    %19 = vst [vmem:[#allocation2] sm:$0xff] 0.0
    %20 = vst [vmem:[#allocation2 + $0x8] sm:$0xff] 0.0
    %21 = vst [vmem:[#allocation2 + $0x10] sm:$0xff] 0.0
    %22 = vst [vmem:[#allocation2 + $0x18] sm:$0xff] 0.0
    %23 = vst [vmem:[#allocation2 + $0x20] sm:$0xff] 0.0
    %24 = vst [vmem:[#allocation2 + $0x28] sm:$0xff] 0.0
    %25 = vst [vmem:[#allocation2 + $0x30] sm:$0xff] 0.0
    %26 = vst [vmem:[#allocation2 + $0x38] sm:$0xff] 0.0
    %27 = vst [vmem:[#allocation2 + $0x40] sm:$0xff] 0.0
    %28 = vst [vmem:[#allocation2 + $0x48] sm:$0xff] 0.0
    %29 = vst [vmem:[#allocation2 + $0x50] sm:$0xff] 0.0
    %30 = vst [vmem:[#allocation2 + $0x58] sm:$0xff] 0.0
    %31 = vst [vmem:[#allocation2 + $0x60] sm:$0xff] 0.0
    %32 = vst [vmem:[#allocation2 + $0x68] sm:$0xff] 0.0
    %33 = vst [vmem:[#allocation2 + $0x70] sm:$0xff] 0.0
    %34 = vst [vmem:[#allocation2 + $0x78] sm:$0xff] 0.0
    %35 = vst [vmem:[#allocation2 + $0x80] sm:$0xff] 0.0
    %36 = vst [vmem:[#allocation2 + $0x88] sm:$0xff] 0.0
    %37 = vst [vmem:[#allocation2 + $0x90] sm:$0xff] 0.0
    %38 = vst [vmem:[#allocation2 + $0x98] sm:$0xff] 0.0
    %39 = vst [vmem:[#allocation2 + $0xa0] sm:$0xff] 0.0
    %40 = vst [vmem:[#allocation2 + $0xa8] sm:$0xff] 0.0
    %41 = vst [vmem:[#allocation2 + $0xb0] sm:$0xff] 0.0
    %42 = vst [vmem:[#allocation2 + $0xb8] sm:$0xff] 0.0
    %43 = vst [vmem:[#allocation2 + $0xc0] sm:$0xff] 0.0
    %44 = vst [vmem:[#allocation2 + $0xc8] sm:$0xff] 0.0
    %45 = vst [vmem:[#allocation2 + $0xd0] sm:$0xff] 0.0
    %46 = vst [vmem:[#allocation2 + $0xd8] sm:$0xff] 0.0
    %47 = vst [vmem:[#allocation2 + $0xe0] sm:$0xff] 0.0
    %48 = vst [vmem:[#allocation2 + $0xe8] sm:$0xff] 0.0
    %49 = vst [vmem:[#allocation2 + $0xf0] sm:$0xff] 0.0
    %50 = vst [vmem:[#allocation2 + $0xf8] sm:$0xff] 0.0
    %51 = vst [vmem:[#allocation2 + $0x100] sm:$0xff] 0.0
    %52 = vst [vmem:[#allocation2 + $0x108] sm:$0xff] 0.0
    %53 = vst [vmem:[#allocation2 + $0x110] sm:$0xff] 0.0
    %54 = vst [vmem:[#allocation2 + $0x118] sm:$0xff] 0.0
    %55 = vst [vmem:[#allocation2 + $0x120] sm:$0xff] 0.0
    %56 = vst [vmem:[#allocation2 + $0x128] sm:$0xff] 0.0
    %57 = vst [vmem:[#allocation2 + $0x130] sm:$0xff] 0.0
    %58 = vst [vmem:[#allocation2 + $0x138] sm:$0xff] 0.0
    %59 = vst [vmem:[#allocation2 + $0x140] sm:$0xff] 0.0
    %60 = vst [vmem:[#allocation2 + $0x148] sm:$0xff] 0.0
    %61 = vst [vmem:[#allocation2 + $0x150] sm:$0xff] 0.0
    %62 = vst [vmem:[#allocation2 + $0x158] sm:$0xff] 0.0
    %63 = vst [vmem:[#allocation2 + $0x160] sm:$0xff] 0.0
    %64 = vst [vmem:[#allocation2 + $0x168] sm:$0xff] 0.0
    %65 = vst [vmem:[#allocation2 + $0x170] sm:$0xff] 0.0
    %66 = vst [vmem:[#allocation2 + $0x178] sm:$0xff] 0.0
    %67 = vst [vmem:[#allocation2 + $0x180] sm:$0xff] 0.0
    %68 = vst [vmem:[#allocation2 + $0x188] sm:$0xff] 0.0
    %69 = vst [vmem:[#allocation2 + $0x190] sm:$0xff] 0.0
    %70 = vst [vmem:[#allocation2 + $0x198] sm:$0xff] 0.0
    %71 = vst [vmem:[#allocation2 + $0x1a0] sm:$0xff] 0.0
    %72 = vst [vmem:[#allocation2 + $0x1a8] sm:$0xff] 0.0
    %73 = vst [vmem:[#allocation2 + $0x1b0] sm:$0xff] 0.0
    %74 = vst [vmem:[#allocation2 + $0x1b8] sm:$0xff] 0.0
    %75 = vst [vmem:[#allocation2 + $0x1c0] sm:$0xff] 0.0
    %76 = vst [vmem:[#allocation2 + $0x1c8] sm:$0xff] 0.0
    %77 = vst [vmem:[#allocation2 + $0x1d0] sm:$0xff] 0.0
    %78 = vst [vmem:[#allocation2 + $0x1d8] sm:$0xff] 0.0
    %79 = vst [vmem:[#allocation2 + $0x1e0] sm:$0xff] 0.0
    %80 = vst [vmem:[#allocation2 + $0x1e8] sm:$0xff] 0.0
    %81 = vst [vmem:[#allocation2 + $0x1f0] sm:$0xff] 0.0
    %82 = vst [vmem:[#allocation2 + $0x1f8] sm:$0xff] 0.0
    %83 = vst [vmem:[#allocation2 + $0x200] sm:$0xff] 0.0
    %84 = vst [vmem:[#allocation2 + $0x208] sm:$0xff] 0.0
    %85 = vst [vmem:[#allocation2 + $0x210] sm:$0xff] 0.0
    %86 = vst [vmem:[#allocation2 + $0x218] sm:$0xff] 0.0
    %87 = vst [vmem:[#allocation2 + $0x220] sm:$0xff] 0.0
    %88 = vst [vmem:[#allocation2 + $0x228] sm:$0xff] 0.0
    %89 = vst [vmem:[#allocation2 + $0x230] sm:$0xff] 0.0
    %90 = vst [vmem:[#allocation2 + $0x238] sm:$0xff] 0.0
    %91 = vst [vmem:[#allocation2 + $0x240] sm:$0xff] 0.0
    %92 = vst [vmem:[#allocation2 + $0x248] sm:$0xff] 0.0
    %93 = vst [vmem:[#allocation2 + $0x250] sm:$0xff] 0.0
    %94 = vst [vmem:[#allocation2 + $0x258] sm:$0xff] 0.0
    %95 = vst [vmem:[#allocation2 + $0x260] sm:$0xff] 0.0
    %96 = vst [vmem:[#allocation2 + $0x268] sm:$0xff] 0.0
    %97 = vst [vmem:[#allocation2 + $0x270] sm:$0xff] 0.0
    %98 = vst [vmem:[#allocation2 + $0x278] sm:$0xff] 0.0
    %99 = vst [vmem:[#allocation2 + $0x280] sm:$0xff] 0.0
    %100 = vst [vmem:[#allocation2 + $0x288] sm:$0xff] 0.0
    %101 = vst [vmem:[#allocation2 + $0x290] sm:$0xff] 0.0
    %102 = vst [vmem:[#allocation2 + $0x298] sm:$0xff] 0.0
    %103 = vst [vmem:[#allocation2 + $0x2a0] sm:$0xff] 0.0
    %104 = vst [vmem:[#allocation2 + $0x2a8] sm:$0xff] 0.0
    %105 = vst [vmem:[#allocation2 + $0x2b0] sm:$0xff] 0.0
    %106 = vst [vmem:[#allocation2 + $0x2b8] sm:$0xff] 0.0
    %107 = vst [vmem:[#allocation2 + $0x2c0] sm:$0xff] 0.0
    %108 = vst [vmem:[#allocation2 + $0x2c8] sm:$0xff] 0.0
    %109 = vst [vmem:[#allocation2 + $0x2d0] sm:$0xff] 0.0
    %110 = vst [vmem:[#allocation2 + $0x2d8] sm:$0xff] 0.0
    %111 = vst [vmem:[#allocation2 + $0x2e0] sm:$0xff] 0.0
    %112 = vst [vmem:[#allocation2 + $0x2e8] sm:$0xff] 0.0
    %113 = vst [vmem:[#allocation2 + $0x2f0] sm:$0xff] 0.0
    %114 = vst [vmem:[#allocation2 + $0x2f8] sm:$0xff] 0.0
    %115 = vst [vmem:[#allocation2 + $0x300] sm:$0xff] 0.0
    %116 = vst [vmem:[#allocation2 + $0x308] sm:$0xff] 0.0
    %117 = vst [vmem:[#allocation2 + $0x310] sm:$0xff] 0.0
    %118 = vst [vmem:[#allocation2 + $0x318] sm:$0xff] 0.0
    %119 = vst [vmem:[#allocation2 + $0x320] sm:$0xff] 0.0
    %120 = vst [vmem:[#allocation2 + $0x328] sm:$0xff] 0.0
    %121 = vst [vmem:[#allocation2 + $0x330] sm:$0xff] 0.0
    %122 = vst [vmem:[#allocation2 + $0x338] sm:$0xff] 0.0
    %123 = vst [vmem:[#allocation2 + $0x340] sm:$0xff] 0.0
    %124 = vst [vmem:[#allocation2 + $0x348] sm:$0xff] 0.0
    %125 = vst [vmem:[#allocation2 + $0x350] sm:$0xff] 0.0
    %126 = vst [vmem:[#allocation2 + $0x358] sm:$0xff] 0.0
    %127 = vst [vmem:[#allocation2 + $0x360] sm:$0xff] 0.0
    %128 = vst [vmem:[#allocation2 + $0x368] sm:$0xff] 0.0
    %129 = vst [vmem:[#allocation2 + $0x370] sm:$0xff] 0.0
    %130 = vst [vmem:[#allocation2 + $0x378] sm:$0xff] 0.0
    %131 = vst [vmem:[#allocation2 + $0x380] sm:$0xff] 0.0
    %132 = vst [vmem:[#allocation2 + $0x388] sm:$0xff] 0.0
    %133 = vst [vmem:[#allocation2 + $0x390] sm:$0xff] 0.0
    %134 = vst [vmem:[#allocation2 + $0x398] sm:$0xff] 0.0
    %135 = vst [vmem:[#allocation2 + $0x3a0] sm:$0xff] 0.0
    %136 = vst [vmem:[#allocation2 + $0x3a8] sm:$0xff] 0.0
    %137 = vst [vmem:[#allocation2 + $0x3b0] sm:$0xff] 0.0
    %138 = vst [vmem:[#allocation2 + $0x3b8] sm:$0xff] 0.0
    %139 = vst [vmem:[#allocation2 + $0x3c0] sm:$0xff] 0.0
    %140 = vst [vmem:[#allocation2 + $0x3c8] sm:$0xff] 0.0
    %141 = vst [vmem:[#allocation2 + $0x3d0] sm:$0xff] 0.0
    %142 = vst [vmem:[#allocation2 + $0x3d8] sm:$0xff] 0.0
    %143 = vst [vmem:[#allocation2 + $0x3e0] sm:$0xff] 0.0
    %144 = vst [vmem:[#allocation2 + $0x3e8] sm:$0xff] 0.0
    %145 = vst [vmem:[#allocation2 + $0x3f0] sm:$0xff] 0.0
    %146 = vst [vmem:[#allocation2 + $0x3f8] sm:$0xff] 0.0
    %147 = vst [vmem:[#allocation2 + $0x400] sm:$0xff] 0.0
    %148 = vst [vmem:[#allocation2 + $0x408] sm:$0xff] 0.0
    %149 = vst [vmem:[#allocation2 + $0x410] sm:$0xff] 0.0
    %150 = vst [vmem:[#allocation2 + $0x418] sm:$0xff] 0.0
    %151 = vst [vmem:[#allocation2 + $0x420] sm:$0xff] 0.0
    %152 = vst [vmem:[#allocation2 + $0x428] sm:$0xff] 0.0
    %153 = vst [vmem:[#allocation2 + $0x430] sm:$0xff] 0.0
    %154 = vst [vmem:[#allocation2 + $0x438] sm:$0xff] 0.0
    %155 = vst [vmem:[#allocation2 + $0x440] sm:$0xff] 0.0
    %156 = vst [vmem:[#allocation2 + $0x448] sm:$0xff] 0.0
    %157 = vst [vmem:[#allocation2 + $0x450] sm:$0xff] 0.0
    %158 = vst [vmem:[#allocation2 + $0x458] sm:$0xff] 0.0
    %159 = vst [vmem:[#allocation2 + $0x460] sm:$0xff] 0.0
    %160 = vst [vmem:[#allocation2 + $0x468] sm:$0xff] 0.0
    %161 = vst [vmem:[#allocation2 + $0x470] sm:$0xff] 0.0
    %162 = vst [vmem:[#allocation2 + $0x478] sm:$0xff] 0.0
    %163 = vst [vmem:[#allocation2 + $0x480] sm:$0xff] 0.0
    %164 = vst [vmem:[#allocation2 + $0x488] sm:$0xff] 0.0
    %165 = vst [vmem:[#allocation2 + $0x490] sm:$0xff] 0.0
    %166 = vst [vmem:[#allocation2 + $0x498] sm:$0xff] 0.0
    %167 = vst [vmem:[#allocation2 + $0x4a0] sm:$0xff] 0.0
    %168 = vst [vmem:[#allocation2 + $0x4a8] sm:$0xff] 0.0
    %169 = vst [vmem:[#allocation2 + $0x4b0] sm:$0xff] 0.0
    %170 = vst [vmem:[#allocation2 + $0x4b8] sm:$0xff] 0.0
    %171 = vst [vmem:[#allocation2 + $0x4c0] sm:$0xff] 0.0
    %172 = vst [vmem:[#allocation2 + $0x4c8] sm:$0xff] 0.0
    %173 = vst [vmem:[#allocation2 + $0x4d0] sm:$0xff] 0.0
    %174 = vst [vmem:[#allocation2 + $0x4d8] sm:$0xff] 0.0
    %175 = vst [vmem:[#allocation2 + $0x4e0] sm:$0xff] 0.0
    %176 = vst [vmem:[#allocation2 + $0x4e8] sm:$0xff] 0.0
    %177 = vst [vmem:[#allocation2 + $0x4f0] sm:$0xff] 0.0
    %178 = vst [vmem:[#allocation2 + $0x4f8] sm:$0xff] 0.0
    %179 = vst [vmem:[#allocation2 + $0x500] sm:$0xff] 0.0
    %180 = vst [vmem:[#allocation2 + $0x508] sm:$0xff] 0.0
    %181 = vst [vmem:[#allocation2 + $0x510] sm:$0xff] 0.0
    %182 = vst [vmem:[#allocation2 + $0x518] sm:$0xff] 0.0
    %183 = vst [vmem:[#allocation2 + $0x520] sm:$0xff] 0.0
    %184 = vst [vmem:[#allocation2 + $0x528] sm:$0xff] 0.0
    %185 = vst [vmem:[#allocation2 + $0x530] sm:$0xff] 0.0
    %186 = vst [vmem:[#allocation2 + $0x538] sm:$0xff] 0.0
    %187 = vst [vmem:[#allocation2 + $0x540] sm:$0xff] 0.0
    %188 = vst [vmem:[#allocation2 + $0x548] sm:$0xff] 0.0
    %189 = vst [vmem:[#allocation2 + $0x550] sm:$0xff] 0.0
    %190 = vst [vmem:[#allocation2 + $0x558] sm:$0xff] 0.0
    %191 = vst [vmem:[#allocation2 + $0x560] sm:$0xff] 0.0
    %192 = vst [vmem:[#allocation2 + $0x568] sm:$0xff] 0.0
    %193 = vst [vmem:[#allocation2 + $0x570] sm:$0xff] 0.0
    %194 = vst [vmem:[#allocation2 + $0x578] sm:$0xff] 0.0
    %195 = vst [vmem:[#allocation2 + $0x580] sm:$0xff] 0.0
    %196 = vst [vmem:[#allocation2 + $0x588] sm:$0xff] 0.0
    %197 = vst [vmem:[#allocation2 + $0x590] sm:$0xff] 0.0
    %198 = vst [vmem:[#allocation2 + $0x598] sm:$0xff] 0.0
    %199 = vst [vmem:[#allocation2 + $0x5a0] sm:$0xff] 0.0
    %200 = vst [vmem:[#allocation2 + $0x5a8] sm:$0xff] 0.0
    %201 = vst [vmem:[#allocation2 + $0x5b0] sm:$0xff] 0.0
    %202 = vst [vmem:[#allocation2 + $0x5b8] sm:$0xff] 0.0
    %203 = vst [vmem:[#allocation2 + $0x5c0] sm:$0xff] 0.0
    %204 = vst [vmem:[#allocation2 + $0x5c8] sm:$0xff] 0.0
    %205 = vst [vmem:[#allocation2 + $0x5d0] sm:$0xff] 0.0
    %206 = vst [vmem:[#allocation2 + $0x5d8] sm:$0xff] 0.0
    %207 = vst [vmem:[#allocation2 + $0x5e0] sm:$0xff] 0.0
    %208 = vst [vmem:[#allocation2 + $0x5e8] sm:$0xff] 0.0
    %209 = vst [vmem:[#allocation2 + $0x5f0] sm:$0xff] 0.0
    %210 = vst [vmem:[#allocation2 + $0x5f8] sm:$0xff] 0.0
  $region17: #{_lambda_.6} parent=0 // pred_fallthru
    _
  %v211 = vld [vmem:[#allocation2] sm:$0xff]
  %v212 = vld [vmem:[#allocation2 + $0x8] sm:$0xff]
  %v213 = vld [vmem:[#allocation2 + $0x10] sm:$0xff]
  %v214 = vld [vmem:[#allocation2 + $0x18] sm:$0xff]
  %v215 = vld [vmem:[#allocation2 + $0x20] sm:$0xff]
  %v216 = vld [vmem:[#allocation2 + $0x28] sm:$0xff]
  %v217 = vld [vmem:[#allocation2 + $0x30] sm:$0xff]
  %v218 = vld [vmem:[#allocation2 + $0x38] sm:$0xff]
  %v219 = vld [vmem:[#allocation2 + $0x40] sm:$0xff]
  %v220 = vld [vmem:[#allocation2 + $0x48] sm:$0xff]
  %v221 = vld [vmem:[#allocation2 + $0x50] sm:$0xff]
  %v222 = vld [vmem:[#allocation2 + $0x58] sm:$0xff]
  %v223 = vld [vmem:[#allocation2 + $0x60] sm:$0xff]
  %v224 = vld [vmem:[#allocation2 + $0x68] sm:$0xff]
  %v225 = vld [vmem:[#allocation2 + $0x70] sm:$0xff]
  %v226 = vld [vmem:[#allocation2 + $0x78] sm:$0xff]
  %v227 = vld [vmem:[#allocation2 + $0x80] sm:$0xff]
  %v228 = vld [vmem:[#allocation2 + $0x88] sm:$0xff]
  %v229 = vld [vmem:[#allocation2 + $0x90] sm:$0xff]
  %v230 = vld [vmem:[#allocation2 + $0x98] sm:$0xff]
  %v231 = vld [vmem:[#allocation2 + $0xa0] sm:$0xff]
  %v232 = vld [vmem:[#allocation2 + $0xa8] sm:$0xff]
  %v233 = vld [vmem:[#allocation2 + $0xb0] sm:$0xff]
  %v234 = vld [vmem:[#allocation2 + $0xb8] sm:$0xff]
  %v235 = vld [vmem:[#allocation2 + $0xc0] sm:$0xff]
  %v236 = vld [vmem:[#allocation2 + $0xc8] sm:$0xff]
  %v237 = vld [vmem:[#allocation2 + $0xd0] sm:$0xff]
  %v238 = vld [vmem:[#allocation2 + $0xd8] sm:$0xff]
  %v239 = vld [vmem:[#allocation2 + $0xe0] sm:$0xff]
  %v240 = vld [vmem:[#allocation2 + $0xe8] sm:$0xff]
  %v241 = vld [vmem:[#allocation2 + $0xf0] sm:$0xff]
  %v242 = vld [vmem:[#allocation2 + $0xf8] sm:$0xff]
  %v243 = vld [vmem:[#allocation2 + $0x100] sm:$0xff]
  %v244 = vld [vmem:[#allocation2 + $0x108] sm:$0xff]
  %v245 = vld [vmem:[#allocation2 + $0x110] sm:$0xff]
  %v246 = vld [vmem:[#allocation2 + $0x118] sm:$0xff]
  %v247 = vld [vmem:[#allocation2 + $0x120] sm:$0xff]
  %v248 = vld [vmem:[#allocation2 + $0x128] sm:$0xff]
  %v249 = vld [vmem:[#allocation2 + $0x130] sm:$0xff]
  %v250 = vld [vmem:[#allocation2 + $0x138] sm:$0xff]
  %v251 = vld [vmem:[#allocation2 + $0x140] sm:$0xff]
  %v252 = vld [vmem:[#allocation2 + $0x148] sm:$0xff]
  %v253 = vld [vmem:[#allocation2 + $0x150] sm:$0xff]
  %v254 = vld [vmem:[#allocation2 + $0x158] sm:$0xff]
  %v255 = vld [vmem:[#allocation2 + $0x160] sm:$0xff]
  %v256 = vld [vmem:[#allocation2 + $0x168] sm:$0xff]
  %v257 = vld [vmem:[#allocation2 + $0x170] sm:$0xff]
  %v258 = vld [vmem:[#allocation2 + $0x178] sm:$0xff]
  %v259 = vld [vmem:[#allocation2 + $0x180] sm:$0xff]
  %v260 = vld [vmem:[#allocation2 + $0x188] sm:$0xff]
  %v261 = vld [vmem:[#allocation2 + $0x190] sm:$0xff]
  %v262 = vld [vmem:[#allocation2 + $0x198] sm:$0xff]
  %v263 = vld [vmem:[#allocation2 + $0x1a0] sm:$0xff]
  %v264 = vld [vmem:[#allocation2 + $0x1a8] sm:$0xff]
  %v265 = vld [vmem:[#allocation2 + $0x1b0] sm:$0xff]
  %v266 = vld [vmem:[#allocation2 + $0x1b8] sm:$0xff]
  %v267 = vld [vmem:[#allocation2 + $0x1c0] sm:$0xff]
  %v268 = vld [vmem:[#allocation2 + $0x1c8] sm:$0xff]
  %v269 = vld [vmem:[#allocation2 + $0x1d0] sm:$0xff]
  %v270 = vld [vmem:[#allocation2 + $0x1d8] sm:$0xff]
  %v271 = vld [vmem:[#allocation2 + $0x1e0] sm:$0xff]
  %v272 = vld [vmem:[#allocation2 + $0x1e8] sm:$0xff]
  %v273 = vld [vmem:[#allocation2 + $0x1f0] sm:$0xff]
  %v274 = vld [vmem:[#allocation2 + $0x1f8] sm:$0xff]
  %v275 = vld [vmem:[#allocation2 + $0x200] sm:$0xff]
  %v276 = vld [vmem:[#allocation2 + $0x208] sm:$0xff]
  %v277 = vld [vmem:[#allocation2 + $0x210] sm:$0xff]
  %v278 = vld [vmem:[#allocation2 + $0x218] sm:$0xff]
  %v279 = vld [vmem:[#allocation2 + $0x220] sm:$0xff]
  %v280 = vld [vmem:[#allocation2 + $0x228] sm:$0xff]
  %v281 = vld [vmem:[#allocation2 + $0x230] sm:$0xff]
  %v282 = vld [vmem:[#allocation2 + $0x238] sm:$0xff]
  %v283 = vld [vmem:[#allocation2 + $0x240] sm:$0xff]
  %v284 = vld [vmem:[#allocation2 + $0x248] sm:$0xff]
  %v285 = vld [vmem:[#allocation2 + $0x250] sm:$0xff]
  %v286 = vld [vmem:[#allocation2 + $0x258] sm:$0xff]
  %v287 = vld [vmem:[#allocation2 + $0x260] sm:$0xff]
  %v288 = vld [vmem:[#allocation2 + $0x268] sm:$0xff]
  %v289 = vld [vmem:[#allocation2 + $0x270] sm:$0xff]
  %v290 = vld [vmem:[#allocation2 + $0x278] sm:$0xff]
  %v291 = vld [vmem:[#allocation2 + $0x280] sm:$0xff]
  %v292 = vld [vmem:[#allocation2 + $0x288] sm:$0xff]
  %v293 = vld [vmem:[#allocation2 + $0x290] sm:$0xff]
  %v294 = vld [vmem:[#allocation2 + $0x298] sm:$0xff]
  %v295 = vld [vmem:[#allocation2 + $0x2a0] sm:$0xff]
  %v296 = vld [vmem:[#allocation2 + $0x2a8] sm:$0xff]
  %v297 = vld [vmem:[#allocation2 + $0x2b0] sm:$0xff]
  %v298 = vld [vmem:[#allocation2 + $0x2b8] sm:$0xff]
  %v299 = vld [vmem:[#allocation2 + $0x2c0] sm:$0xff]
  %v300 = vld [vmem:[#allocation2 + $0x2c8] sm:$0xff]
  %v301 = vld [vmem:[#allocation2 + $0x2d0] sm:$0xff]
  %v302 = vld [vmem:[#allocation2 + $0x2d8] sm:$0xff]
  %v303 = vld [vmem:[#allocation2 + $0x2e0] sm:$0xff]
  %v304 = vld [vmem:[#allocation2 + $0x2e8] sm:$0xff]
  %v305 = vld [vmem:[#allocation2 + $0x2f0] sm:$0xff]
  %v306 = vld [vmem:[#allocation2 + $0x2f8] sm:$0xff]
  %v307 = vld [vmem:[#allocation2 + $0x300] sm:$0xff]
  %v308 = vld [vmem:[#allocation2 + $0x308] sm:$0xff]
  %v309 = vld [vmem:[#allocation2 + $0x310] sm:$0xff]
  %v310 = vld [vmem:[#allocation2 + $0x318] sm:$0xff]
  %v311 = vld [vmem:[#allocation2 + $0x320] sm:$0xff]
  %v312 = vld [vmem:[#allocation2 + $0x328] sm:$0xff]
  %v313 = vld [vmem:[#allocation2 + $0x330] sm:$0xff]
  %v314 = vld [vmem:[#allocation2 + $0x338] sm:$0xff]
  %v315 = vld [vmem:[#allocation2 + $0x340] sm:$0xff]
  %v316 = vld [vmem:[#allocation2 + $0x348] sm:$0xff]
  %v317 = vld [vmem:[#allocation2 + $0x350] sm:$0xff]
  %v318 = vld [vmem:[#allocation2 + $0x358] sm:$0xff]
  %v319 = vld [vmem:[#allocation2 + $0x360] sm:$0xff]
  %v320 = vld [vmem:[#allocation2 + $0x368] sm:$0xff]
  %v321 = vld [vmem:[#allocation2 + $0x370] sm:$0xff]
  %v322 = vld [vmem:[#allocation2 + $0x378] sm:$0xff]
  %v323 = vld [vmem:[#allocation2 + $0x380] sm:$0xff]
  %v324 = vld [vmem:[#allocation2 + $0x388] sm:$0xff]
  %v325 = vld [vmem:[#allocation2 + $0x390] sm:$0xff]
  %v326 = vld [vmem:[#allocation2 + $0x398] sm:$0xff]
  %v327 = vld [vmem:[#allocation2 + $0x3a0] sm:$0xff]
  %v328 = vld [vmem:[#allocation2 + $0x3a8] sm:$0xff]
  %v329 = vld [vmem:[#allocation2 + $0x3b0] sm:$0xff]
  %v330 = vld [vmem:[#allocation2 + $0x3b8] sm:$0xff]
  %v331 = vld [vmem:[#allocation2 + $0x3c0] sm:$0xff]
  %v332 = vld [vmem:[#allocation2 + $0x3c8] sm:$0xff]
  %v333 = vld [vmem:[#allocation2 + $0x3d0] sm:$0xff]
  %v334 = vld [vmem:[#allocation2 + $0x3d8] sm:$0xff]
  %v335 = vld [vmem:[#allocation2 + $0x3e0] sm:$0xff]
  %v336 = vld [vmem:[#allocation2 + $0x3e8] sm:$0xff]
  %v337 = vld [vmem:[#allocation2 + $0x3f0] sm:$0xff]
  %v338 = vld [vmem:[#allocation2 + $0x3f8] sm:$0xff]
  %v339 = vld [vmem:[#allocation2 + $0x400] sm:$0xff]
  %v340 = vld [vmem:[#allocation2 + $0x408] sm:$0xff]
  %v341 = vld [vmem:[#allocation2 + $0x410] sm:$0xff]
  %v342 = vld [vmem:[#allocation2 + $0x418] sm:$0xff]
  %v343 = vld [vmem:[#allocation2 + $0x420] sm:$0xff]
  %v344 = vld [vmem:[#allocation2 + $0x428] sm:$0xff]
  %v345 = vld [vmem:[#allocation2 + $0x430] sm:$0xff]
  %v346 = vld [vmem:[#allocation2 + $0x438] sm:$0xff]
  %v347 = vld [vmem:[#allocation2 + $0x440] sm:$0xff]
  %v348 = vld [vmem:[#allocation2 + $0x448] sm:$0xff]
  %v349 = vld [vmem:[#allocation2 + $0x450] sm:$0xff]
  %v350 = vld [vmem:[#allocation2 + $0x458] sm:$0xff]
  %v351 = vld [vmem:[#allocation2 + $0x460] sm:$0xff]
  %v352 = vld [vmem:[#allocation2 + $0x468] sm:$0xff]
  %v353 = vld [vmem:[#allocation2 + $0x470] sm:$0xff]
  %v354 = vld [vmem:[#allocation2 + $0x478] sm:$0xff]
  %v355 = vld [vmem:[#allocation2 + $0x480] sm:$0xff]
  %v356 = vld [vmem:[#allocation2 + $0x488] sm:$0xff]
  %v357 = vld [vmem:[#allocation2 + $0x490] sm:$0xff]
  %v358 = vld [vmem:[#allocation2 + $0x498] sm:$0xff]
  %v359 = vld [vmem:[#allocation2 + $0x4a0] sm:$0xff]
  %v360 = vld [vmem:[#allocation2 + $0x4a8] sm:$0xff]
  %v361 = vld [vmem:[#allocation2 + $0x4b0] sm:$0xff]
  %v362 = vld [vmem:[#allocation2 + $0x4b8] sm:$0xff]
  %v363 = vld [vmem:[#allocation2 + $0x4c0] sm:$0xff]
  %v364 = vld [vmem:[#allocation2 + $0x4c8] sm:$0xff]
  %v365 = vld [vmem:[#allocation2 + $0x4d0] sm:$0xff]
  %v366 = vld [vmem:[#allocation2 + $0x4d8] sm:$0xff]
  %v367 = vld [vmem:[#allocation2 + $0x4e0] sm:$0xff]
  %v368 = vld [vmem:[#allocation2 + $0x4e8] sm:$0xff]
  %v369 = vld [vmem:[#allocation2 + $0x4f0] sm:$0xff]
  %v370 = vld [vmem:[#allocation2 + $0x4f8] sm:$0xff]
  %v371 = vld [vmem:[#allocation2 + $0x500] sm:$0xff]
  %v372 = vld [vmem:[#allocation2 + $0x508] sm:$0xff]
  %v373 = vld [vmem:[#allocation2 + $0x510] sm:$0xff]
  %v374 = vld [vmem:[#allocation2 + $0x518] sm:$0xff]
  %v375 = vld [vmem:[#allocation2 + $0x520] sm:$0xff]
  %v376 = vld [vmem:[#allocation2 + $0x528] sm:$0xff]
  %v377 = vld [vmem:[#allocation2 + $0x530] sm:$0xff]
  %v378 = vld [vmem:[#allocation2 + $0x538] sm:$0xff]
  %v379 = vld [vmem:[#allocation2 + $0x540] sm:$0xff]
  %v380 = vld [vmem:[#allocation2 + $0x548] sm:$0xff]
  %v381 = vld [vmem:[#allocation2 + $0x550] sm:$0xff]
  %v382 = vld [vmem:[#allocation2 + $0x558] sm:$0xff]
  %v383 = vld [vmem:[#allocation2 + $0x560] sm:$0xff]
  %v384 = vld [vmem:[#allocation2 + $0x568] sm:$0xff]
  %v385 = vld [vmem:[#allocation2 + $0x570] sm:$0xff]
  %v386 = vld [vmem:[#allocation2 + $0x578] sm:$0xff]
  %v387 = vld [vmem:[#allocation2 + $0x580] sm:$0xff]
  %v388 = vld [vmem:[#allocation2 + $0x588] sm:$0xff]
  %v389 = vld [vmem:[#allocation2 + $0x590] sm:$0xff]
  %v390 = vld [vmem:[#allocation2 + $0x598] sm:$0xff]
  %v391 = vld [vmem:[#allocation2 + $0x5a0] sm:$0xff]
  %v392 = vld [vmem:[#allocation2 + $0x5a8] sm:$0xff]
  %v393 = vld [vmem:[#allocation2 + $0x5b0] sm:$0xff]
  %v394 = vld [vmem:[#allocation2 + $0x5b8] sm:$0xff]
  %v395 = vld [vmem:[#allocation2 + $0x5c0] sm:$0xff]
  %v396 = vld [vmem:[#allocation2 + $0x5c8] sm:$0xff]
  %v397 = vld [vmem:[#allocation2 + $0x5d0] sm:$0xff]
  %v398 = vld [vmem:[#allocation2 + $0x5d8] sm:$0xff]
  %v399 = vld [vmem:[#allocation2 + $0x5e0] sm:$0xff]
  %v400 = vld [vmem:[#allocation2 + $0x5e8] sm:$0xff]
  %v401 = vld [vmem:[#allocation2 + $0x5f0] sm:$0xff]
  %v402 = vld [vmem:[#allocation2 + $0x5f8] sm:$0xff]
  %v403 = vld [vmem:[%s0] sm:$0xf]
  %v404 = vld [vmem:[%s0 + $0x4] sm:$0xf]
  %v405 = vld [vmem:[%s0 + $0x8] sm:$0xf]
  %v406 = vld [vmem:[%s0 + $0xc] sm:$0xf]
  %v407 = vld [vmem:[%s0 + $0x10] sm:$0xf]
  %v408 = vld [vmem:[%s0 + $0x14] sm:$0xf]
  %v409 = vld [vmem:[%s0 + $0x18] sm:$0xf]
  %v410 = vld [vmem:[%s0 + $0x1c] sm:$0xf]
  %v411 = vld [vmem:[%s0 + $0x20] sm:$0xf]
  %v412 = vld [vmem:[%s0 + $0x24] sm:$0xf]
  %v413 = vld [vmem:[%s0 + $0x28] sm:$0xf]
  %v414 = vld [vmem:[%s0 + $0x2c] sm:$0xf]
  %v415 = vld [vmem:[%s0 + $0x30] sm:$0xf]
  %v416 = vld [vmem:[%s0 + $0x34] sm:$0xf]
  %v417 = vld [vmem:[%s0 + $0x38] sm:$0xf]
  %v418 = vld [vmem:[%s0 + $0x3c] sm:$0xf]
  %v419 = vld [vmem:[%s0 + $0x40] sm:$0xf]
  %v420 = vld [vmem:[%s0 + $0x44] sm:$0xf]
  %v421 = vld [vmem:[%s0 + $0x48] sm:$0xf]
  %v422 = vld [vmem:[%s0 + $0x4c] sm:$0xf]
  %v423 = vld [vmem:[%s0 + $0x50] sm:$0xf]
  %v424 = vld [vmem:[%s0 + $0x54] sm:$0xf]
  %v425 = vld [vmem:[%s0 + $0x58] sm:$0xf]
  %v426 = vld [vmem:[%s0 + $0x5c] sm:$0xf]
  %v427 = vld [vmem:[%s0 + $0x60] sm:$0xf]
  %v428 = vld [vmem:[%s0 + $0x64] sm:$0xf]
  %v429 = vld [vmem:[%s0 + $0x68] sm:$0xf]
  %v430 = vld [vmem:[%s0 + $0x6c] sm:$0xf]
  %v431 = vld [vmem:[%s0 + $0x70] sm:$0xf]
  %v432 = vld [vmem:[%s0 + $0x74] sm:$0xf]
  %v433 = vld [vmem:[%s0 + $0x78] sm:$0xf]
  %v434 = vld [vmem:[%s0 + $0x7c] sm:$0xf]
  %v435 = vld [vmem:[%s0 + $0x80] sm:$0xf]
  %v436 = vld [vmem:[%s0 + $0x84] sm:$0xf]
  %v437 = vld [vmem:[%s0 + $0x88] sm:$0xf]
  %v438 = vld [vmem:[%s0 + $0x8c] sm:$0xf]
  %v439 = vld [vmem:[%s0 + $0x90] sm:$0xf]
  %v440 = vld [vmem:[%s0 + $0x94] sm:$0xf]
  %v441 = vld [vmem:[%s0 + $0x98] sm:$0xf]
  %v442 = vld [vmem:[%s0 + $0x9c] sm:$0xf]
  %v443 = vld [vmem:[%s0 + $0xa0] sm:$0xf]
  %v444 = vld [vmem:[%s0 + $0xa4] sm:$0xf]
  %v445 = vld [vmem:[%s0 + $0xa8] sm:$0xf]
  %v446 = vld [vmem:[%s0 + $0xac] sm:$0xf]
  %v447 = vld [vmem:[%s0 + $0xb0] sm:$0xf]
  %v448 = vld [vmem:[%s0 + $0xb4] sm:$0xf]
  %v449 = vld [vmem:[%s0 + $0xb8] sm:$0xf]
  %v450 = vld [vmem:[%s0 + $0xbc] sm:$0xf]
  %v451 = vld [vmem:[%s0 + $0xc0] sm:$0xf]
  %v452 = vld [vmem:[%s0 + $0xc4] sm:$0xf]
  %v453 = vld [vmem:[%s0 + $0xc8] sm:$0xf]
  %v454 = vld [vmem:[%s0 + $0xcc] sm:$0xf]
  %v455 = vld [vmem:[%s0 + $0xd0] sm:$0xf]
  %v456 = vld [vmem:[%s0 + $0xd4] sm:$0xf]
  %v457 = vld [vmem:[%s0 + $0xd8] sm:$0xf]
  %v458 = vld [vmem:[%s0 + $0xdc] sm:$0xf]
  %v459 = vld [vmem:[%s0 + $0xe0] sm:$0xf]
  %v460 = vld [vmem:[%s0 + $0xe4] sm:$0xf]
  %v461 = vld [vmem:[%s0 + $0xe8] sm:$0xf]
  %v462 = vld [vmem:[%s0 + $0xec] sm:$0xf]
  %v463 = vld [vmem:[%s0 + $0xf0] sm:$0xf]
  %v464 = vld [vmem:[%s0 + $0xf4] sm:$0xf]
  %v465 = vld [vmem:[%s0 + $0xf8] sm:$0xf]
  %v466 = vld [vmem:[%s0 + $0xfc] sm:$0xf]
  %v467 = vld [vmem:[%s1] sm:$0xff]
  %v468 = vld [vmem:[%s1 + $0x8] sm:$0xf]
  %v469 = vld [vmem:[%s1 + $0xc] sm:$0xff]
  %v470 = vld [vmem:[%s1 + $0x14] sm:$0xf]
  %v471 = vld [vmem:[%s1 + $0x18] sm:$0xff]
  %v472 = vld [vmem:[%s1 + $0x20] sm:$0xf]
  %v473 = vld [vmem:[%s1 + $0x24] sm:$0xff]
  %v474 = vld [vmem:[%s1 + $0x2c] sm:$0xf]
  %v475 = vld [vmem:[%s1 + $0x30] sm:$0xff]
  %v476 = vld [vmem:[%s1 + $0x38] sm:$0xf]
  %v477 = vld [vmem:[%s1 + $0x3c] sm:$0xff]
  %v478 = vld [vmem:[%s1 + $0x44] sm:$0xf]
  %v479 = vld [vmem:[%s1 + $0x48] sm:$0xff]
  %v480 = vld [vmem:[%s1 + $0x50] sm:$0xf]
  %v481 = vld [vmem:[%s1 + $0x54] sm:$0xff]
  %v482 = vld [vmem:[%s1 + $0x5c] sm:$0xf]
  %v483 = vld [vmem:[%s1 + $0x60] sm:$0xff]
  %v484 = vld [vmem:[%s1 + $0x68] sm:$0xf]
  %v485 = vld [vmem:[%s1 + $0x6c] sm:$0xff]
  %v486 = vld [vmem:[%s1 + $0x74] sm:$0xf]
  %v487 = vld [vmem:[%s1 + $0x78] sm:$0xff]
  %v488 = vld [vmem:[%s1 + $0x80] sm:$0xf]
  %v489 = vld [vmem:[%s1 + $0x84] sm:$0xff]
  %v490 = vld [vmem:[%s1 + $0x8c] sm:$0xf]
  %v491 = vld [vmem:[%s1 + $0x90] sm:$0xff]
  %v492 = vld [vmem:[%s1 + $0x98] sm:$0xf]
  %v493 = vld [vmem:[%s1 + $0x9c] sm:$0xff]
  %v494 = vld [vmem:[%s1 + $0xa4] sm:$0xf]
  %v495 = vld [vmem:[%s1 + $0xa8] sm:$0xff]
  %v496 = vld [vmem:[%s1 + $0xb0] sm:$0xf]
  %v497 = vld [vmem:[%s1 + $0xb4] sm:$0xff]
  %v498 = vld [vmem:[%s1 + $0xbc] sm:$0xf]
  %v563 = vunpack.c.l.b16 %v403
  %v564 = vunpack.c.l.b16 %v404
  %v565 = vunpack.c.l.b16 %v405
  %v566 = vunpack.c.l.b16 %v406
  %v567 = vunpack.c.l.b16 %v407
  %v568 = vunpack.c.l.b16 %v408
  %v569 = vunpack.c.l.b16 %v409
  %v570 = vunpack.c.l.b16 %v410
  %v571 = vunpack.c.l.b16 %v411
  %v572 = vunpack.c.l.b16 %v412
  %v573 = vunpack.c.l.b16 %v413
  %v574 = vunpack.c.l.b16 %v414
  %v575 = vunpack.c.l.b16 %v415
  %v576 = vunpack.c.l.b16 %v416
  %v577 = vunpack.c.l.b16 %v417
  %v578 = vunpack.c.l.b16 %v418
  %v579 = vunpack.c.l.b16 %v419
  %v580 = vunpack.c.l.b16 %v420
  %v581 = vunpack.c.l.b16 %v421
  %v582 = vunpack.c.l.b16 %v422
  %v583 = vunpack.c.l.b16 %v423
  %v584 = vunpack.c.l.b16 %v424
  %v585 = vunpack.c.l.b16 %v425
  %v586 = vunpack.c.l.b16 %v426
  %v587 = vunpack.c.l.b16 %v427
  %v588 = vunpack.c.l.b16 %v428
  %v589 = vunpack.c.l.b16 %v429
  %v590 = vunpack.c.l.b16 %v430
  %v591 = vunpack.c.l.b16 %v431
  %v592 = vunpack.c.l.b16 %v432
  %v593 = vunpack.c.l.b16 %v433
  %v594 = vunpack.c.l.b16 %v434
  %v595 = vunpack.c.l.b16 %v435
  %v596 = vunpack.c.l.b16 %v436
  %v597 = vunpack.c.l.b16 %v437
  %v598 = vunpack.c.l.b16 %v438
  %v599 = vunpack.c.l.b16 %v439
  %v600 = vunpack.c.l.b16 %v440
  %v601 = vunpack.c.l.b16 %v441
  %v602 = vunpack.c.l.b16 %v442
  %v603 = vunpack.c.l.b16 %v443
  %v604 = vunpack.c.l.b16 %v444
  %v605 = vunpack.c.l.b16 %v445
  %v606 = vunpack.c.l.b16 %v446
  %v607 = vunpack.c.l.b16 %v447
  %v608 = vunpack.c.l.b16 %v448
  %v609 = vunpack.c.l.b16 %v449
  %v610 = vunpack.c.l.b16 %v450
  %v611 = vunpack.c.l.b16 %v451
  %v612 = vunpack.c.l.b16 %v452
  %v613 = vunpack.c.l.b16 %v453
  %v614 = vunpack.c.l.b16 %v454
  %v615 = vunpack.c.l.b16 %v455
  %v616 = vunpack.c.l.b16 %v456
  %v617 = vunpack.c.l.b16 %v457
  %v618 = vunpack.c.l.b16 %v458
  %v619 = vunpack.c.l.b16 %v459
  %v620 = vunpack.c.l.b16 %v460
  %v621 = vunpack.c.l.b16 %v461
  %v622 = vunpack.c.l.b16 %v462
  %v623 = vunpack.c.l.b16 %v463
  %v624 = vunpack.c.l.b16 %v464
  %v625 = vunpack.c.l.b16 %v465
  %v626 = vunpack.c.l.b16 %v466
  %v627 = vpack.c.b16 %v564, %v563
  %v628 = vpack.c.b16 %v566, %v565
  %v629 = vpack.c.b16 %v568, %v567
  %v630 = vpack.c.b16 %v570, %v569
  %v631 = vpack.c.b16 %v572, %v571
  %v632 = vpack.c.b16 %v574, %v573
  %v633 = vpack.c.b16 %v576, %v575
  %v634 = vpack.c.b16 %v578, %v577
  %v635 = vpack.c.b16 %v580, %v579
  %v636 = vpack.c.b16 %v582, %v581
  %v637 = vpack.c.b16 %v584, %v583
  %v638 = vpack.c.b16 %v586, %v585
  %v639 = vpack.c.b16 %v588, %v587
  %v640 = vpack.c.b16 %v590, %v589
  %v641 = vpack.c.b16 %v592, %v591
  %v642 = vpack.c.b16 %v594, %v593
  %v643 = vpack.c.b16 %v596, %v595
  %v644 = vpack.c.b16 %v598, %v597
  %v645 = vpack.c.b16 %v600, %v599
  %v646 = vpack.c.b16 %v602, %v601
  %v647 = vpack.c.b16 %v604, %v603
  %v648 = vpack.c.b16 %v606, %v605
  %v649 = vpack.c.b16 %v608, %v607
  %v650 = vpack.c.b16 %v610, %v609
  %v651 = vpack.c.b16 %v612, %v611
  %v652 = vpack.c.b16 %v614, %v613
  %v653 = vpack.c.b16 %v616, %v615
  %v654 = vpack.c.b16 %v618, %v617
  %v655 = vpack.c.b16 %v620, %v619
  %v656 = vpack.c.b16 %v622, %v621
  %v657 = vpack.c.b16 %v624, %v623
  %v658 = vpack.c.b16 %v626, %v625
  %v723 = vunpack.c.l.b16 %v467
  %v724 = vunpack.c.h.b16 %v467
  %v725 = vunpack.c.l.b16 %v468
  %v726 = vunpack.c.l.b16 %v469
  %v727 = vunpack.c.h.b16 %v469
  %v728 = vunpack.c.l.b16 %v470
  %v729 = vunpack.c.l.b16 %v471
  %v730 = vunpack.c.h.b16 %v471
  %v731 = vunpack.c.l.b16 %v472
  %v732 = vunpack.c.l.b16 %v473
  %v733 = vunpack.c.h.b16 %v473
  %v734 = vunpack.c.l.b16 %v474
  %v735 = vunpack.c.l.b16 %v475
  %v736 = vunpack.c.h.b16 %v475
  %v737 = vunpack.c.l.b16 %v476
  %v738 = vunpack.c.l.b16 %v477
  %v739 = vunpack.c.h.b16 %v477
  %v740 = vunpack.c.l.b16 %v478
  %v741 = vunpack.c.l.b16 %v479
  %v742 = vunpack.c.h.b16 %v479
  %v743 = vunpack.c.l.b16 %v480
  %v744 = vunpack.c.l.b16 %v481
  %v745 = vunpack.c.h.b16 %v481
  %v746 = vunpack.c.l.b16 %v482
  %v747 = vunpack.c.l.b16 %v483
  %v748 = vunpack.c.h.b16 %v483
  %v749 = vunpack.c.l.b16 %v484
  %v750 = vunpack.c.l.b16 %v485
  %v751 = vunpack.c.h.b16 %v485
  %v752 = vunpack.c.l.b16 %v486
  %v753 = vunpack.c.l.b16 %v487
  %v754 = vunpack.c.h.b16 %v487
  %v755 = vunpack.c.l.b16 %v488
  %v756 = vunpack.c.l.b16 %v489
  %v757 = vunpack.c.h.b16 %v489
  %v758 = vunpack.c.l.b16 %v490
  %v759 = vunpack.c.l.b16 %v491
  %v760 = vunpack.c.h.b16 %v491
  %v761 = vunpack.c.l.b16 %v492
  %v762 = vunpack.c.l.b16 %v493
  %v763 = vunpack.c.h.b16 %v493
  %v764 = vunpack.c.l.b16 %v494
  %v765 = vunpack.c.l.b16 %v495
  %v766 = vunpack.c.h.b16 %v495
  %v767 = vunpack.c.l.b16 %v496
  %v768 = vunpack.c.l.b16 %v497
  %v769 = vunpack.c.h.b16 %v497
  %v770 = vunpack.c.l.b16 %v498
  %v771 = vpack.c.b16 %v726, %v723
  %v772 = vpack.c.b16 %v727, %v724
  %v773 = vpack.c.b16 %v728, %v725
  %v774 = vpack.c.b16 %v732, %v729
  %v775 = vpack.c.b16 %v733, %v730
  %v776 = vpack.c.b16 %v734, %v731
  %v777 = vpack.c.b16 %v738, %v735
  %v778 = vpack.c.b16 %v739, %v736
  %v779 = vpack.c.b16 %v740, %v737
  %v780 = vpack.c.b16 %v744, %v741
  %v781 = vpack.c.b16 %v745, %v742
  %v782 = vpack.c.b16 %v746, %v743
  %v783 = vpack.c.b16 %v750, %v747
  %v784 = vpack.c.b16 %v751, %v748
  %v785 = vpack.c.b16 %v752, %v749
  %v786 = vpack.c.b16 %v756, %v753
  %v787 = vpack.c.b16 %v757, %v754
  %v788 = vpack.c.b16 %v758, %v755
  %v789 = vpack.c.b16 %v762, %v759
  %v790 = vpack.c.b16 %v763, %v760
  %v791 = vpack.c.b16 %v764, %v761
  %v792 = vpack.c.b16 %v768, %v765
  %v793 = vpack.c.b16 %v769, %v766
  %v794 = vpack.c.b16 %v770, %v767
  %819 = vmatprep.subr.bf16.mxu0 %v772
  %820 = vmatpush1.bf16.msra.mxu0 %v771
  %821 = vmatprep.subr.bf16.mxu0 %v775
  %822 = vmatpush1.bf16.msra.mxu0 %v774
  %823 = vmatprep.subr.bf16.mxu0 %v778
  %824 = vmatpush1.bf16.msra.mxu0 %v777
  %825 = vmatprep.subr.bf16.mxu0 %v781
  %826 = vmatpush1.bf16.msra.mxu0 %v780
  %827 = vmatprep.subr.bf16.mxu0 %v784
  %828 = vmatpush1.bf16.msra.mxu0 %v783
  %829 = vmatprep.subr.bf16.mxu0 %v787
  %830 = vmatpush1.bf16.msra.mxu0 %v786
  %831 = vmatprep.subr.bf16.mxu0 %v790
  %832 = vmatpush1.bf16.msra.mxu0 %v789
  %833 = vmatprep.subr.bf16.mxu0 %v793
  %834 = vmatpush1.bf16.msra.mxu0 %v792
  %835 = vmatprep.subr.bf16.mxu0 0
  %836 = vmatpush1.bf16.msra.mxu0 0
  %837 = vmatprep.subr.bf16.mxu0 0
  %838 = vmatpush1.bf16.msra.mxu0 0
  %839 = vmatprep.subr.bf16.mxu0 0
  %840 = vmatpush1.bf16.msra.mxu0 0
  %841 = vmatprep.subr.bf16.mxu0 0
  %842 = vmatpush1.bf16.msra.mxu0 0
  %843 = vmatprep.subr.bf16.mxu0 0
  %844 = vmatpush1.bf16.msra.mxu0 0
  %845 = vmatprep.subr.bf16.mxu0 0
  %846 = vmatpush1.bf16.msra.mxu0 0
  %847 = vmatprep.subr.bf16.mxu0 0
  %848 = vmatpush1.bf16.msra.mxu0 0
  %849 = vmatprep.subr.bf16.mxu0 0
  %850 = vmatpush1.bf16.msra.mxu0 0
  %851 = vmatprep.mubr.bf16.mxu0 0
  %852 = vmatmul.mubr.bf16.gmra.mrb[0].mxu0 %v627
  %v853 = vpop.f32.mrb[0].mxu0
  %v854 = vadd.f32 0.0, %v853
  %v855 = vpop.f32.mrb[0].mxu0
  %v856 = vadd.f32 0.0, %v855
  %v857 = vpop.f32.mrb[0].mxu0
  %v858 = vadd.f32 0.0, %v857
  %v859 = vpop.f32.mrb[0].mxu0
  %v860 = vadd.f32 0.0, %v859
  %861 = vmatprep.mubr.bf16.mxu0 0
  %862 = vmatmul.mubr.bf16.gmra.mrb[0].mxu0 %v628
  %v863 = vpop.f32.mrb[0].mxu0
  %v864 = vadd.f32 0.0, %v863
  %v865 = vpop.f32.mrb[0].mxu0
  %v866 = vadd.f32 0.0, %v865
  %v867 = vpop.f32.mrb[0].mxu0
  %v868 = vadd.f32 0.0, %v867
  %v869 = vpop.f32.mrb[0].mxu0
  %v870 = vadd.f32 0.0, %v869
  %871 = vmatprep.mubr.bf16.mxu0 0
  %872 = vmatmul.mubr.bf16.gmra.mrb[0].mxu0 %v629
  %v873 = vpop.f32.mrb[0].mxu0
  %v874 = vadd.f32 0.0, %v873
  %v875 = vpop.f32.mrb[0].mxu0
  %v876 = vadd.f32 0.0, %v875
  %v877 = vpop.f32.mrb[0].mxu0
  %v878 = vadd.f32 0.0, %v877
  %v879 = vpop.f32.mrb[0].mxu0
  %v880 = vadd.f32 0.0, %v879
  %881 = vmatprep.mubr.bf16.mxu0 0
  %882 = vmatmul.mubr.bf16.gmra.mrb[0].mxu0 %v630
  %v883 = vpop.f32.mrb[0].mxu0
  %v884 = vadd.f32 0.0, %v883
  %v885 = vpop.f32.mrb[0].mxu0
  %v886 = vadd.f32 0.0, %v885
  %v887 = vpop.f32.mrb[0].mxu0
  %v888 = vadd.f32 0.0, %v887
  %v889 = vpop.f32.mrb[0].mxu0
  %v890 = vadd.f32 0.0, %v889
  %891 = vmatprep.mubr.bf16.mxu0 0
  %892 = vmatmul.mubr.bf16.gmra.mrb[0].mxu0 %v631
  %v893 = vpop.f32.mrb[0].mxu0
  %v894 = vadd.f32 0.0, %v893
  %v895 = vpop.f32.mrb[0].mxu0
  %v896 = vadd.f32 0.0, %v895
  %v897 = vpop.f32.mrb[0].mxu0
  %v898 = vadd.f32 0.0, %v897
  %v899 = vpop.f32.mrb[0].mxu0
  %v900 = vadd.f32 0.0, %v899
  %901 = vmatprep.mubr.bf16.mxu0 0
  %902 = vmatmul.mubr.bf16.gmra.mrb[0].mxu0 %v632
  %v903 = vpop.f32.mrb[0].mxu0
  %v904 = vadd.f32 0.0, %v903
  %v905 = vpop.f32.mrb[0].mxu0
  %v906 = vadd.f32 0.0, %v905
  %v907 = vpop.f32.mrb[0].mxu0
  %v908 = vadd.f32 0.0, %v907
  %v909 = vpop.f32.mrb[0].mxu0
  %v910 = vadd.f32 0.0, %v909
  %911 = vmatprep.mubr.bf16.mxu0 0
  %912 = vmatmul.mubr.bf16.gmra.mrb[0].mxu0 %v633
  %v913 = vpop.f32.mrb[0].mxu0
  %v914 = vadd.f32 0.0, %v913
  %v915 = vpop.f32.mrb[0].mxu0
  %v916 = vadd.f32 0.0, %v915
  %v917 = vpop.f32.mrb[0].mxu0
  %v918 = vadd.f32 0.0, %v917
  %v919 = vpop.f32.mrb[0].mxu0
  %v920 = vadd.f32 0.0, %v919
  %921 = vmatprep.mubr.bf16.mxu0 0
  %922 = vmatmul.mubr.bf16.gmra.mrb[0].mxu0 %v634
  %v923 = vpop.f32.mrb[0].mxu0
  %v924 = vadd.f32 0.0, %v923
  %v925 = vpop.f32.mrb[0].mxu0
  %v926 = vadd.f32 0.0, %v925
  %v927 = vpop.f32.mrb[0].mxu0
  %v928 = vadd.f32 0.0, %v927
  %v929 = vpop.f32.mrb[0].mxu0
  %v930 = vadd.f32 0.0, %v929
  %931 = vmatprep.mubr.bf16.mxu0 0
  %932 = vmatmul.mubr.bf16.gmra.mrb[0].mxu0 %v635
  %v933 = vpop.f32.mrb[0].mxu0
  %v934 = vadd.f32 0.0, %v933
  %v935 = vpop.f32.mrb[0].mxu0
  %v936 = vadd.f32 0.0, %v935
  %v937 = vpop.f32.mrb[0].mxu0
  %v938 = vadd.f32 0.0, %v937
  %v939 = vpop.f32.mrb[0].mxu0
  %v940 = vadd.f32 0.0, %v939
  %941 = vmatprep.mubr.bf16.mxu0 0
  %942 = vmatmul.mubr.bf16.gmra.mrb[0].mxu0 %v636
  %v943 = vpop.f32.mrb[0].mxu0
  %v944 = vadd.f32 0.0, %v943
  %v945 = vpop.f32.mrb[0].mxu0
  %v946 = vadd.f32 0.0, %v945
  %v947 = vpop.f32.mrb[0].mxu0
  %v948 = vadd.f32 0.0, %v947
  %v949 = vpop.f32.mrb[0].mxu0
  %v950 = vadd.f32 0.0, %v949
  %951 = vmatprep.mubr.bf16.mxu0 0
  %952 = vmatmul.mubr.bf16.gmra.mrb[0].mxu0 %v637
  %v953 = vpop.f32.mrb[0].mxu0
  %v954 = vadd.f32 0.0, %v953
  %v955 = vpop.f32.mrb[0].mxu0
  %v956 = vadd.f32 0.0, %v955
  %v957 = vpop.f32.mrb[0].mxu0
  %v958 = vadd.f32 0.0, %v957
  %v959 = vpop.f32.mrb[0].mxu0
  %v960 = vadd.f32 0.0, %v959
  %961 = vmatprep.mubr.bf16.mxu0 0
  %962 = vmatmul.mubr.bf16.gmra.mrb[0].mxu0 %v638
  %v963 = vpop.f32.mrb[0].mxu0
  %v964 = vadd.f32 0.0, %v963
  %v965 = vpop.f32.mrb[0].mxu0
  %v966 = vadd.f32 0.0, %v965
  %v967 = vpop.f32.mrb[0].mxu0
  %v968 = vadd.f32 0.0, %v967
  %v969 = vpop.f32.mrb[0].mxu0
  %v970 = vadd.f32 0.0, %v969
  %971 = vmatprep.mubr.bf16.mxu0 0
  %972 = vmatmul.mubr.bf16.gmra.mrb[0].mxu0 %v639
  %v973 = vpop.f32.mrb[0].mxu0
  %v974 = vadd.f32 0.0, %v973
  %v975 = vpop.f32.mrb[0].mxu0
  %v976 = vadd.f32 0.0, %v975
  %v977 = vpop.f32.mrb[0].mxu0
  %v978 = vadd.f32 0.0, %v977
  %v979 = vpop.f32.mrb[0].mxu0
  %v980 = vadd.f32 0.0, %v979
  %981 = vmatprep.mubr.bf16.mxu0 0
  %982 = vmatmul.mubr.bf16.gmra.mrb[0].mxu0 %v640
  %v983 = vpop.f32.mrb[0].mxu0
  %v984 = vadd.f32 0.0, %v983
  %v985 = vpop.f32.mrb[0].mxu0
  %v986 = vadd.f32 0.0, %v985
  %v987 = vpop.f32.mrb[0].mxu0
  %v988 = vadd.f32 0.0, %v987
  %v989 = vpop.f32.mrb[0].mxu0
  %v990 = vadd.f32 0.0, %v989
  %991 = vmatprep.mubr.bf16.mxu0 0
  %992 = vmatmul.mubr.bf16.gmra.mrb[0].mxu0 %v641
  %v993 = vpop.f32.mrb[0].mxu0
  %v994 = vadd.f32 0.0, %v993
  %v995 = vpop.f32.mrb[0].mxu0
  %v996 = vadd.f32 0.0, %v995
  %v997 = vpop.f32.mrb[0].mxu0
  %v998 = vadd.f32 0.0, %v997
  %v999 = vpop.f32.mrb[0].mxu0
  %v1000 = vadd.f32 0.0, %v999
  %1001 = vmatprep.mubr.bf16.mxu0 0
  %1002 = vmatmul.mubr.bf16.gmra.mrb[0].mxu0 %v642
  %v1003 = vpop.f32.mrb[0].mxu0
  %v1004 = vadd.f32 0.0, %v1003
  %v1005 = vpop.f32.mrb[0].mxu0
  %v1006 = vadd.f32 0.0, %v1005
  %v1007 = vpop.f32.mrb[0].mxu0
  %v1008 = vadd.f32 0.0, %v1007
  %v1009 = vpop.f32.mrb[0].mxu0
  %v1010 = vadd.f32 0.0, %v1009
  %1011 = vmatprep.mubr.bf16.mxu0 0
  %1012 = vmatmul.mubr.bf16.gmra.mrb[0].mxu0 %v643
  %v1013 = vpop.f32.mrb[0].mxu0
  %v1014 = vadd.f32 0.0, %v1013
  %v1015 = vpop.f32.mrb[0].mxu0
  %v1016 = vadd.f32 0.0, %v1015
  %v1017 = vpop.f32.mrb[0].mxu0
  %v1018 = vadd.f32 0.0, %v1017
  %v1019 = vpop.f32.mrb[0].mxu0
  %v1020 = vadd.f32 0.0, %v1019
  %1021 = vmatprep.mubr.bf16.mxu0 0
  %1022 = vmatmul.mubr.bf16.gmra.mrb[0].mxu0 %v644
  %v1023 = vpop.f32.mrb[0].mxu0
  %v1024 = vadd.f32 0.0, %v1023
  %v1025 = vpop.f32.mrb[0].mxu0
  %v1026 = vadd.f32 0.0, %v1025
  %v1027 = vpop.f32.mrb[0].mxu0
  %v1028 = vadd.f32 0.0, %v1027
  %v1029 = vpop.f32.mrb[0].mxu0
  %v1030 = vadd.f32 0.0, %v1029
  %1031 = vmatprep.mubr.bf16.mxu0 0
  %1032 = vmatmul.mubr.bf16.gmra.mrb[0].mxu0 %v645
  %v1033 = vpop.f32.mrb[0].mxu0
  %v1034 = vadd.f32 0.0, %v1033
  %v1035 = vpop.f32.mrb[0].mxu0
  %v1036 = vadd.f32 0.0, %v1035
  %v1037 = vpop.f32.mrb[0].mxu0
  %v1038 = vadd.f32 0.0, %v1037
  %v1039 = vpop.f32.mrb[0].mxu0
  %v1040 = vadd.f32 0.0, %v1039
  %1041 = vmatprep.mubr.bf16.mxu0 0
  %1042 = vmatmul.mubr.bf16.gmra.mrb[0].mxu0 %v646
  %v1043 = vpop.f32.mrb[0].mxu0
  %v1044 = vadd.f32 0.0, %v1043
  %v1045 = vpop.f32.mrb[0].mxu0
  %v1046 = vadd.f32 0.0, %v1045
  %v1047 = vpop.f32.mrb[0].mxu0
  %v1048 = vadd.f32 0.0, %v1047
  %v1049 = vpop.f32.mrb[0].mxu0
  %v1050 = vadd.f32 0.0, %v1049
  %1051 = vmatprep.mubr.bf16.mxu0 0
  %1052 = vmatmul.mubr.bf16.gmra.mrb[0].mxu0 %v647
  %v1053 = vpop.f32.mrb[0].mxu0
  %v1054 = vadd.f32 0.0, %v1053
  %v1055 = vpop.f32.mrb[0].mxu0
  %v1056 = vadd.f32 0.0, %v1055
  %v1057 = vpop.f32.mrb[0].mxu0
  %v1058 = vadd.f32 0.0, %v1057
  %v1059 = vpop.f32.mrb[0].mxu0
  %v1060 = vadd.f32 0.0, %v1059
  %1061 = vmatprep.mubr.bf16.mxu0 0
  %1062 = vmatmul.mubr.bf16.gmra.mrb[0].mxu0 %v648
  %v1063 = vpop.f32.mrb[0].mxu0
  %v1064 = vadd.f32 0.0, %v1063
  %v1065 = vpop.f32.mrb[0].mxu0
  %v1066 = vadd.f32 0.0, %v1065
  %v1067 = vpop.f32.mrb[0].mxu0
  %v1068 = vadd.f32 0.0, %v1067
  %v1069 = vpop.f32.mrb[0].mxu0
  %v1070 = vadd.f32 0.0, %v1069
  %1071 = vmatprep.mubr.bf16.mxu0 0
  %1072 = vmatmul.mubr.bf16.gmra.mrb[0].mxu0 %v649
  %v1073 = vpop.f32.mrb[0].mxu0
  %v1074 = vadd.f32 0.0, %v1073
  %v1075 = vpop.f32.mrb[0].mxu0
  %v1076 = vadd.f32 0.0, %v1075
  %v1077 = vpop.f32.mrb[0].mxu0
  %v1078 = vadd.f32 0.0, %v1077
  %v1079 = vpop.f32.mrb[0].mxu0
  %v1080 = vadd.f32 0.0, %v1079
  %1081 = vmatprep.mubr.bf16.mxu0 0
  %1082 = vmatmul.mubr.bf16.gmra.mrb[0].mxu0 %v650
  %v1083 = vpop.f32.mrb[0].mxu0
  %v1084 = vadd.f32 0.0, %v1083
  %v1085 = vpop.f32.mrb[0].mxu0
  %v1086 = vadd.f32 0.0, %v1085
  %v1087 = vpop.f32.mrb[0].mxu0
  %v1088 = vadd.f32 0.0, %v1087
  %v1089 = vpop.f32.mrb[0].mxu0
  %v1090 = vadd.f32 0.0, %v1089
  %1091 = vmatprep.mubr.bf16.mxu0 0
  %1092 = vmatmul.mubr.bf16.gmra.mrb[0].mxu0 %v651
  %v1093 = vpop.f32.mrb[0].mxu0
  %v1094 = vadd.f32 0.0, %v1093
  %v1095 = vpop.f32.mrb[0].mxu0
  %v1096 = vadd.f32 0.0, %v1095
  %v1097 = vpop.f32.mrb[0].mxu0
  %v1098 = vadd.f32 0.0, %v1097
  %v1099 = vpop.f32.mrb[0].mxu0
  %v1100 = vadd.f32 0.0, %v1099
  %1101 = vmatprep.mubr.bf16.mxu0 0
  %1102 = vmatmul.mubr.bf16.gmra.mrb[0].mxu0 %v652
  %v1103 = vpop.f32.mrb[0].mxu0
  %v1104 = vadd.f32 0.0, %v1103
  %v1105 = vpop.f32.mrb[0].mxu0
  %v1106 = vadd.f32 0.0, %v1105
  %v1107 = vpop.f32.mrb[0].mxu0
  %v1108 = vadd.f32 0.0, %v1107
  %v1109 = vpop.f32.mrb[0].mxu0
  %v1110 = vadd.f32 0.0, %v1109
  %1111 = vmatprep.mubr.bf16.mxu0 0
  %1112 = vmatmul.mubr.bf16.gmra.mrb[0].mxu0 %v653
  %v1113 = vpop.f32.mrb[0].mxu0
  %v1114 = vadd.f32 0.0, %v1113
  %v1115 = vpop.f32.mrb[0].mxu0
  %v1116 = vadd.f32 0.0, %v1115
  %v1117 = vpop.f32.mrb[0].mxu0
  %v1118 = vadd.f32 0.0, %v1117
  %v1119 = vpop.f32.mrb[0].mxu0
  %v1120 = vadd.f32 0.0, %v1119
  %1121 = vmatprep.mubr.bf16.mxu0 0
  %1122 = vmatmul.mubr.bf16.gmra.mrb[0].mxu0 %v654
  %v1123 = vpop.f32.mrb[0].mxu0
  %v1124 = vadd.f32 0.0, %v1123
  %v1125 = vpop.f32.mrb[0].mxu0
  %v1126 = vadd.f32 0.0, %v1125
  %v1127 = vpop.f32.mrb[0].mxu0
  %v1128 = vadd.f32 0.0, %v1127
  %v1129 = vpop.f32.mrb[0].mxu0
  %v1130 = vadd.f32 0.0, %v1129
  %1131 = vmatprep.mubr.bf16.mxu0 0
  %1132 = vmatmul.mubr.bf16.gmra.mrb[0].mxu0 %v655
  %v1133 = vpop.f32.mrb[0].mxu0
  %v1134 = vadd.f32 0.0, %v1133
  %v1135 = vpop.f32.mrb[0].mxu0
  %v1136 = vadd.f32 0.0, %v1135
  %v1137 = vpop.f32.mrb[0].mxu0
  %v1138 = vadd.f32 0.0, %v1137
  %v1139 = vpop.f32.mrb[0].mxu0
  %v1140 = vadd.f32 0.0, %v1139
  %1141 = vmatprep.mubr.bf16.mxu0 0
  %1142 = vmatmul.mubr.bf16.gmra.mrb[0].mxu0 %v656
  %v1143 = vpop.f32.mrb[0].mxu0
  %v1144 = vadd.f32 0.0, %v1143
  %v1145 = vpop.f32.mrb[0].mxu0
  %v1146 = vadd.f32 0.0, %v1145
  %v1147 = vpop.f32.mrb[0].mxu0
  %v1148 = vadd.f32 0.0, %v1147
  %v1149 = vpop.f32.mrb[0].mxu0
  %v1150 = vadd.f32 0.0, %v1149
  %1151 = vmatprep.mubr.bf16.mxu0 0
  %1152 = vmatmul.mubr.bf16.gmra.mrb[0].mxu0 %v657
  %v1153 = vpop.f32.mrb[0].mxu0
  %v1154 = vadd.f32 0.0, %v1153
  %v1155 = vpop.f32.mrb[0].mxu0
  %v1156 = vadd.f32 0.0, %v1155
  %v1157 = vpop.f32.mrb[0].mxu0
  %v1158 = vadd.f32 0.0, %v1157
  %v1159 = vpop.f32.mrb[0].mxu0
  %v1160 = vadd.f32 0.0, %v1159
  %1161 = vmatprep.mubr.bf16.mxu0 0
  %1162 = vmatmul.mubr.bf16.gmra.mrb[0].mxu0 %v658
  %v1163 = vpop.f32.mrb[0].mxu0
  %v1164 = vadd.f32 0.0, %v1163
  %v1165 = vpop.f32.mrb[0].mxu0
  %v1166 = vadd.f32 0.0, %v1165
  %v1167 = vpop.f32.mrb[0].mxu0
  %v1168 = vadd.f32 0.0, %v1167
  %v1169 = vpop.f32.mrb[0].mxu0
  %v1170 = vadd.f32 0.0, %v1169
  %1171 = vdwg.mxu0
  %1172 = vmatprep.subr.bf16.mxu0 0
  %1173 = vmatpush1.bf16.msra.mxu0 %v773
  %1174 = vmatprep.subr.bf16.mxu0 0
  %1175 = vmatpush1.bf16.msra.mxu0 %v776
  %1176 = vmatprep.subr.bf16.mxu0 0
  %1177 = vmatpush1.bf16.msra.mxu0 %v779
  %1178 = vmatprep.subr.bf16.mxu0 0
  %1179 = vmatpush1.bf16.msra.mxu0 %v782
  %1180 = vmatprep.subr.bf16.mxu0 0
  %1181 = vmatpush1.bf16.msra.mxu0 %v785
  %1182 = vmatprep.subr.bf16.mxu0 0
  %1183 = vmatpush1.bf16.msra.mxu0 %v788
  %1184 = vmatprep.subr.bf16.mxu0 0
  %1185 = vmatpush1.bf16.msra.mxu0 %v791
  %1186 = vmatprep.subr.bf16.mxu0 0
  %1187 = vmatpush1.bf16.msra.mxu0 %v794
  %1188 = vmatprep.subr.bf16.mxu0 0
  %1189 = vmatpush1.bf16.msra.mxu0 0
  %1190 = vmatprep.subr.bf16.mxu0 0
  %1191 = vmatpush1.bf16.msra.mxu0 0
  %1192 = vmatprep.subr.bf16.mxu0 0
  %1193 = vmatpush1.bf16.msra.mxu0 0
  %1194 = vmatprep.subr.bf16.mxu0 0
  %1195 = vmatpush1.bf16.msra.mxu0 0
  %1196 = vmatprep.subr.bf16.mxu0 0
  %1197 = vmatpush1.bf16.msra.mxu0 0
  %1198 = vmatprep.subr.bf16.mxu0 0
  %1199 = vmatpush1.bf16.msra.mxu0 0
  %1200 = vmatprep.subr.bf16.mxu0 0
  %1201 = vmatpush1.bf16.msra.mxu0 0
  %1202 = vmatprep.subr.bf16.mxu0 0
  %1203 = vmatpush1.bf16.msra.mxu0 0
  %1204 = vmatprep.mubr.bf16.mxu0 0
  %1205 = vmatmul.mubr.bf16.gmra.mrb[0].mxu0 %v627
  %v1206 = vpop.f32.mrb[0].mxu0
  %v1207 = vadd.f32 0.0, %v1206
  %v1208 = vpop.f32.mrb[0].mxu0
  %v1209 = vpop.f32.mrb[0].mxu0
  %v1210 = vadd.f32 0.0, %v1209
  %v1211 = vpop.f32.mrb[0].mxu0
  %1212 = vmatprep.mubr.bf16.mxu0 0
  %1213 = vmatmul.mubr.bf16.gmra.mrb[0].mxu0 %v628
  %v1214 = vpop.f32.mrb[0].mxu0
  %v1215 = vadd.f32 0.0, %v1214
  %v1216 = vpop.f32.mrb[0].mxu0
  %v1217 = vpop.f32.mrb[0].mxu0
  %v1218 = vadd.f32 0.0, %v1217
  %v1219 = vpop.f32.mrb[0].mxu0
  %1220 = vmatprep.mubr.bf16.mxu0 0
  %1221 = vmatmul.mubr.bf16.gmra.mrb[0].mxu0 %v629
  %v1222 = vpop.f32.mrb[0].mxu0
  %v1223 = vadd.f32 0.0, %v1222
  %v1224 = vpop.f32.mrb[0].mxu0
  %v1225 = vpop.f32.mrb[0].mxu0
  %v1226 = vadd.f32 0.0, %v1225
  %v1227 = vpop.f32.mrb[0].mxu0
  %1228 = vmatprep.mubr.bf16.mxu0 0
  %1229 = vmatmul.mubr.bf16.gmra.mrb[0].mxu0 %v630
  %v1230 = vpop.f32.mrb[0].mxu0
  %v1231 = vadd.f32 0.0, %v1230
  %v1232 = vpop.f32.mrb[0].mxu0
  %v1233 = vpop.f32.mrb[0].mxu0
  %v1234 = vadd.f32 0.0, %v1233
  %v1235 = vpop.f32.mrb[0].mxu0
  %1236 = vmatprep.mubr.bf16.mxu0 0
  %1237 = vmatmul.mubr.bf16.gmra.mrb[0].mxu0 %v631
  %v1238 = vpop.f32.mrb[0].mxu0
  %v1239 = vadd.f32 0.0, %v1238
  %v1240 = vpop.f32.mrb[0].mxu0
  %v1241 = vpop.f32.mrb[0].mxu0
  %v1242 = vadd.f32 0.0, %v1241
  %v1243 = vpop.f32.mrb[0].mxu0
  %1244 = vmatprep.mubr.bf16.mxu0 0
  %1245 = vmatmul.mubr.bf16.gmra.mrb[0].mxu0 %v632
  %v1246 = vpop.f32.mrb[0].mxu0
  %v1247 = vadd.f32 0.0, %v1246
  %v1248 = vpop.f32.mrb[0].mxu0
  %v1249 = vpop.f32.mrb[0].mxu0
  %v1250 = vadd.f32 0.0, %v1249
  %v1251 = vpop.f32.mrb[0].mxu0
  %1252 = vmatprep.mubr.bf16.mxu0 0
  %1253 = vmatmul.mubr.bf16.gmra.mrb[0].mxu0 %v633
  %v1254 = vpop.f32.mrb[0].mxu0
  %v1255 = vadd.f32 0.0, %v1254
  %v1256 = vpop.f32.mrb[0].mxu0
  %v1257 = vpop.f32.mrb[0].mxu0
  %v1258 = vadd.f32 0.0, %v1257
  %v1259 = vpop.f32.mrb[0].mxu0
  %1260 = vmatprep.mubr.bf16.mxu0 0
  %1261 = vmatmul.mubr.bf16.gmra.mrb[0].mxu0 %v634
  %v1262 = vpop.f32.mrb[0].mxu0
  %v1263 = vadd.f32 0.0, %v1262
  %v1264 = vpop.f32.mrb[0].mxu0
  %v1265 = vpop.f32.mrb[0].mxu0
  %v1266 = vadd.f32 0.0, %v1265
  %v1267 = vpop.f32.mrb[0].mxu0
  %1268 = vmatprep.mubr.bf16.mxu0 0
  %1269 = vmatmul.mubr.bf16.gmra.mrb[0].mxu0 %v635
  %v1270 = vpop.f32.mrb[0].mxu0
  %v1271 = vadd.f32 0.0, %v1270
  %v1272 = vpop.f32.mrb[0].mxu0
  %v1273 = vpop.f32.mrb[0].mxu0
  %v1274 = vadd.f32 0.0, %v1273
  %v1275 = vpop.f32.mrb[0].mxu0
  %1276 = vmatprep.mubr.bf16.mxu0 0
  %1277 = vmatmul.mubr.bf16.gmra.mrb[0].mxu0 %v636
  %v1278 = vpop.f32.mrb[0].mxu0
  %v1279 = vadd.f32 0.0, %v1278
  %v1280 = vpop.f32.mrb[0].mxu0
  %v1281 = vpop.f32.mrb[0].mxu0
  %v1282 = vadd.f32 0.0, %v1281
  %v1283 = vpop.f32.mrb[0].mxu0
  %1284 = vmatprep.mubr.bf16.mxu0 0
  %1285 = vmatmul.mubr.bf16.gmra.mrb[0].mxu0 %v637
  %v1286 = vpop.f32.mrb[0].mxu0
  %v1287 = vadd.f32 0.0, %v1286
  %v1288 = vpop.f32.mrb[0].mxu0
  %v1289 = vpop.f32.mrb[0].mxu0
  %v1290 = vadd.f32 0.0, %v1289
  %v1291 = vpop.f32.mrb[0].mxu0
  %1292 = vmatprep.mubr.bf16.mxu0 0
  %1293 = vmatmul.mubr.bf16.gmra.mrb[0].mxu0 %v638
  %v1294 = vpop.f32.mrb[0].mxu0
  %v1295 = vadd.f32 0.0, %v1294
  %v1296 = vpop.f32.mrb[0].mxu0
  %v1297 = vpop.f32.mrb[0].mxu0
  %v1298 = vadd.f32 0.0, %v1297
  %v1299 = vpop.f32.mrb[0].mxu0
  %1300 = vmatprep.mubr.bf16.mxu0 0
  %1301 = vmatmul.mubr.bf16.gmra.mrb[0].mxu0 %v639
  %v1302 = vpop.f32.mrb[0].mxu0
  %v1303 = vadd.f32 0.0, %v1302
  %v1304 = vpop.f32.mrb[0].mxu0
  %v1305 = vpop.f32.mrb[0].mxu0
  %v1306 = vadd.f32 0.0, %v1305
  %v1307 = vpop.f32.mrb[0].mxu0
  %1308 = vmatprep.mubr.bf16.mxu0 0
  %1309 = vmatmul.mubr.bf16.gmra.mrb[0].mxu0 %v640
  %v1310 = vpop.f32.mrb[0].mxu0
  %v1311 = vadd.f32 0.0, %v1310
  %v1312 = vpop.f32.mrb[0].mxu0
  %v1313 = vpop.f32.mrb[0].mxu0
  %v1314 = vadd.f32 0.0, %v1313
  %v1315 = vpop.f32.mrb[0].mxu0
  %1316 = vmatprep.mubr.bf16.mxu0 0
  %1317 = vmatmul.mubr.bf16.gmra.mrb[0].mxu0 %v641
  %v1318 = vpop.f32.mrb[0].mxu0
  %v1319 = vadd.f32 0.0, %v1318
  %v1320 = vpop.f32.mrb[0].mxu0
  %v1321 = vpop.f32.mrb[0].mxu0
  %v1322 = vadd.f32 0.0, %v1321
  %v1323 = vpop.f32.mrb[0].mxu0
  %1324 = vmatprep.mubr.bf16.mxu0 0
  %1325 = vmatmul.mubr.bf16.gmra.mrb[0].mxu0 %v642
  %v1326 = vpop.f32.mrb[0].mxu0
  %v1327 = vadd.f32 0.0, %v1326
  %v1328 = vpop.f32.mrb[0].mxu0
  %v1329 = vpop.f32.mrb[0].mxu0
  %v1330 = vadd.f32 0.0, %v1329
  %v1331 = vpop.f32.mrb[0].mxu0
  %1332 = vmatprep.mubr.bf16.mxu0 0
  %1333 = vmatmul.mubr.bf16.gmra.mrb[0].mxu0 %v643
  %v1334 = vpop.f32.mrb[0].mxu0
  %v1335 = vadd.f32 0.0, %v1334
  %v1336 = vpop.f32.mrb[0].mxu0
  %v1337 = vpop.f32.mrb[0].mxu0
  %v1338 = vadd.f32 0.0, %v1337
  %v1339 = vpop.f32.mrb[0].mxu0
  %1340 = vmatprep.mubr.bf16.mxu0 0
  %1341 = vmatmul.mubr.bf16.gmra.mrb[0].mxu0 %v644
  %v1342 = vpop.f32.mrb[0].mxu0
  %v1343 = vadd.f32 0.0, %v1342
  %v1344 = vpop.f32.mrb[0].mxu0
  %v1345 = vpop.f32.mrb[0].mxu0
  %v1346 = vadd.f32 0.0, %v1345
  %v1347 = vpop.f32.mrb[0].mxu0
  %1348 = vmatprep.mubr.bf16.mxu0 0
  %1349 = vmatmul.mubr.bf16.gmra.mrb[0].mxu0 %v645
  %v1350 = vpop.f32.mrb[0].mxu0
  %v1351 = vadd.f32 0.0, %v1350
  %v1352 = vpop.f32.mrb[0].mxu0
  %v1353 = vpop.f32.mrb[0].mxu0
  %v1354 = vadd.f32 0.0, %v1353
  %v1355 = vpop.f32.mrb[0].mxu0
  %1356 = vmatprep.mubr.bf16.mxu0 0
  %1357 = vmatmul.mubr.bf16.gmra.mrb[0].mxu0 %v646
  %v1358 = vpop.f32.mrb[0].mxu0
  %v1359 = vadd.f32 0.0, %v1358
  %v1360 = vpop.f32.mrb[0].mxu0
  %v1361 = vpop.f32.mrb[0].mxu0
  %v1362 = vadd.f32 0.0, %v1361
  %v1363 = vpop.f32.mrb[0].mxu0
  %1364 = vmatprep.mubr.bf16.mxu0 0
  %1365 = vmatmul.mubr.bf16.gmra.mrb[0].mxu0 %v647
  %v1366 = vpop.f32.mrb[0].mxu0
  %v1367 = vadd.f32 0.0, %v1366
  %v1368 = vpop.f32.mrb[0].mxu0
  %v1369 = vpop.f32.mrb[0].mxu0
  %v1370 = vadd.f32 0.0, %v1369
  %v1371 = vpop.f32.mrb[0].mxu0
  %1372 = vmatprep.mubr.bf16.mxu0 0
  %1373 = vmatmul.mubr.bf16.gmra.mrb[0].mxu0 %v648
  %v1374 = vpop.f32.mrb[0].mxu0
  %v1375 = vadd.f32 0.0, %v1374
  %v1376 = vpop.f32.mrb[0].mxu0
  %v1377 = vpop.f32.mrb[0].mxu0
  %v1378 = vadd.f32 0.0, %v1377
  %v1379 = vpop.f32.mrb[0].mxu0
  %1380 = vmatprep.mubr.bf16.mxu0 0
  %1381 = vmatmul.mubr.bf16.gmra.mrb[0].mxu0 %v649
  %v1382 = vpop.f32.mrb[0].mxu0
  %v1383 = vadd.f32 0.0, %v1382
  %v1384 = vpop.f32.mrb[0].mxu0
  %v1385 = vpop.f32.mrb[0].mxu0
  %v1386 = vadd.f32 0.0, %v1385
  %v1387 = vpop.f32.mrb[0].mxu0
  %1388 = vmatprep.mubr.bf16.mxu0 0
  %1389 = vmatmul.mubr.bf16.gmra.mrb[0].mxu0 %v650
  %v1390 = vpop.f32.mrb[0].mxu0
  %v1391 = vadd.f32 0.0, %v1390
  %v1392 = vpop.f32.mrb[0].mxu0
  %v1393 = vpop.f32.mrb[0].mxu0
  %v1394 = vadd.f32 0.0, %v1393
  %v1395 = vpop.f32.mrb[0].mxu0
  %1396 = vmatprep.mubr.bf16.mxu0 0
  %1397 = vmatmul.mubr.bf16.gmra.mrb[0].mxu0 %v651
  %v1398 = vpop.f32.mrb[0].mxu0
  %v1399 = vadd.f32 0.0, %v1398
  %v1400 = vpop.f32.mrb[0].mxu0
  %v1401 = vpop.f32.mrb[0].mxu0
  %v1402 = vadd.f32 0.0, %v1401
  %v1403 = vpop.f32.mrb[0].mxu0
  %1404 = vmatprep.mubr.bf16.mxu0 0
  %1405 = vmatmul.mubr.bf16.gmra.mrb[0].mxu0 %v652
  %v1406 = vpop.f32.mrb[0].mxu0
  %v1407 = vadd.f32 0.0, %v1406
  %v1408 = vpop.f32.mrb[0].mxu0
  %v1409 = vpop.f32.mrb[0].mxu0
  %v1410 = vadd.f32 0.0, %v1409
  %v1411 = vpop.f32.mrb[0].mxu0
  %1412 = vmatprep.mubr.bf16.mxu0 0
  %1413 = vmatmul.mubr.bf16.gmra.mrb[0].mxu0 %v653
  %v1414 = vpop.f32.mrb[0].mxu0
  %v1415 = vadd.f32 0.0, %v1414
  %v1416 = vpop.f32.mrb[0].mxu0
  %v1417 = vpop.f32.mrb[0].mxu0
  %v1418 = vadd.f32 0.0, %v1417
  %v1419 = vpop.f32.mrb[0].mxu0
  %1420 = vmatprep.mubr.bf16.mxu0 0
  %1421 = vmatmul.mubr.bf16.gmra.mrb[0].mxu0 %v654
  %v1422 = vpop.f32.mrb[0].mxu0
  %v1423 = vadd.f32 0.0, %v1422
  %v1424 = vpop.f32.mrb[0].mxu0
  %v1425 = vpop.f32.mrb[0].mxu0
  %v1426 = vadd.f32 0.0, %v1425
  %v1427 = vpop.f32.mrb[0].mxu0
  %1428 = vmatprep.mubr.bf16.mxu0 0
  %1429 = vmatmul.mubr.bf16.gmra.mrb[0].mxu0 %v655
  %v1430 = vpop.f32.mrb[0].mxu0
  %v1431 = vadd.f32 0.0, %v1430
  %v1432 = vpop.f32.mrb[0].mxu0
  %v1433 = vpop.f32.mrb[0].mxu0
  %v1434 = vadd.f32 0.0, %v1433
  %v1435 = vpop.f32.mrb[0].mxu0
  %1436 = vmatprep.mubr.bf16.mxu0 0
  %1437 = vmatmul.mubr.bf16.gmra.mrb[0].mxu0 %v656
  %v1438 = vpop.f32.mrb[0].mxu0
  %v1439 = vadd.f32 0.0, %v1438
  %v1440 = vpop.f32.mrb[0].mxu0
  %v1441 = vpop.f32.mrb[0].mxu0
  %v1442 = vadd.f32 0.0, %v1441
  %v1443 = vpop.f32.mrb[0].mxu0
  %1444 = vmatprep.mubr.bf16.mxu0 0
  %1445 = vmatmul.mubr.bf16.gmra.mrb[0].mxu0 %v657
  %v1446 = vpop.f32.mrb[0].mxu0
  %v1447 = vadd.f32 0.0, %v1446
  %v1448 = vpop.f32.mrb[0].mxu0
  %v1449 = vpop.f32.mrb[0].mxu0
  %v1450 = vadd.f32 0.0, %v1449
  %v1451 = vpop.f32.mrb[0].mxu0
  %1452 = vmatprep.mubr.bf16.mxu0 0
  %1453 = vmatmul.mubr.bf16.gmra.mrb[0].mxu0 %v658
  %v1454 = vpop.f32.mrb[0].mxu0
  %v1455 = vadd.f32 0.0, %v1454
  %v1456 = vpop.f32.mrb[0].mxu0
  %v1457 = vpop.f32.mrb[0].mxu0
  %v1458 = vadd.f32 0.0, %v1457
  %v1459 = vpop.f32.mrb[0].mxu0
  %1460 = vdwg.mxu0
  %v1461 = vadd.f32 %v211, %v854
  %v1462 = vadd.f32 %v212, %v856
  %v1463 = vadd.f32 %v213, %v1207
  %v1464 = vadd.f32 %v214, %v858
  %v1465 = vadd.f32 %v215, %v860
  %v1466 = vadd.f32 %v216, %v1210
  %v1467 = vadd.f32 %v217, %v864
  %v1468 = vadd.f32 %v218, %v866
  %v1469 = vadd.f32 %v219, %v1215
  %v1470 = vadd.f32 %v220, %v868
  %v1471 = vadd.f32 %v221, %v870
  %v1472 = vadd.f32 %v222, %v1218
  %v1473 = vadd.f32 %v223, %v874
  %v1474 = vadd.f32 %v224, %v876
  %v1475 = vadd.f32 %v225, %v1223
  %v1476 = vadd.f32 %v226, %v878
  %v1477 = vadd.f32 %v227, %v880
  %v1478 = vadd.f32 %v228, %v1226
  %v1479 = vadd.f32 %v229, %v884
  %v1480 = vadd.f32 %v230, %v886
  %v1481 = vadd.f32 %v231, %v1231
  %v1482 = vadd.f32 %v232, %v888
  %v1483 = vadd.f32 %v233, %v890
  %v1484 = vadd.f32 %v234, %v1234
  %v1485 = vadd.f32 %v235, %v894
  %v1486 = vadd.f32 %v236, %v896
  %v1487 = vadd.f32 %v237, %v1239
  %v1488 = vadd.f32 %v238, %v898
  %v1489 = vadd.f32 %v239, %v900
  %v1490 = vadd.f32 %v240, %v1242
  %v1491 = vadd.f32 %v241, %v904
  %v1492 = vadd.f32 %v242, %v906
  %v1493 = vadd.f32 %v243, %v1247
  %v1494 = vadd.f32 %v244, %v908
  %v1495 = vadd.f32 %v245, %v910
  %v1496 = vadd.f32 %v246, %v1250
  %v1497 = vadd.f32 %v247, %v914
  %v1498 = vadd.f32 %v248, %v916
  %v1499 = vadd.f32 %v249, %v1255
  %v1500 = vadd.f32 %v250, %v918
  %v1501 = vadd.f32 %v251, %v920
  %v1502 = vadd.f32 %v252, %v1258
  %v1503 = vadd.f32 %v253, %v924
  %v1504 = vadd.f32 %v254, %v926
  %v1505 = vadd.f32 %v255, %v1263
  %v1506 = vadd.f32 %v256, %v928
  %v1507 = vadd.f32 %v257, %v930
  %v1508 = vadd.f32 %v258, %v1266
  %v1509 = vadd.f32 %v259, %v934
  %v1510 = vadd.f32 %v260, %v936
  %v1511 = vadd.f32 %v261, %v1271
  %v1512 = vadd.f32 %v262, %v938
  %v1513 = vadd.f32 %v263, %v940
  %v1514 = vadd.f32 %v264, %v1274
  %v1515 = vadd.f32 %v265, %v944
  %v1516 = vadd.f32 %v266, %v946
  %v1517 = vadd.f32 %v267, %v1279
  %v1518 = vadd.f32 %v268, %v948
  %v1519 = vadd.f32 %v269, %v950
  %v1520 = vadd.f32 %v270, %v1282
  %v1521 = vadd.f32 %v271, %v954
  %v1522 = vadd.f32 %v272, %v956
  %v1523 = vadd.f32 %v273, %v1287
  %v1524 = vadd.f32 %v274, %v958
  %v1525 = vadd.f32 %v275, %v960
  %v1526 = vadd.f32 %v276, %v1290
  %v1527 = vadd.f32 %v277, %v964
  %v1528 = vadd.f32 %v278, %v966
  %v1529 = vadd.f32 %v279, %v1295
  %v1530 = vadd.f32 %v280, %v968
  %v1531 = vadd.f32 %v281, %v970
  %v1532 = vadd.f32 %v282, %v1298
  %v1533 = vadd.f32 %v283, %v974
  %v1534 = vadd.f32 %v284, %v976
  %v1535 = vadd.f32 %v285, %v1303
  %v1536 = vadd.f32 %v286, %v978
  %v1537 = vadd.f32 %v287, %v980
  %v1538 = vadd.f32 %v288, %v1306
  %v1539 = vadd.f32 %v289, %v984
  %v1540 = vadd.f32 %v290, %v986
  %v1541 = vadd.f32 %v291, %v1311
  %v1542 = vadd.f32 %v292, %v988
  %v1543 = vadd.f32 %v293, %v990
  %v1544 = vadd.f32 %v294, %v1314
  %v1545 = vadd.f32 %v295, %v994
  %v1546 = vadd.f32 %v296, %v996
  %v1547 = vadd.f32 %v297, %v1319
  %v1548 = vadd.f32 %v298, %v998
  %v1549 = vadd.f32 %v299, %v1000
  %v1550 = vadd.f32 %v300, %v1322
  %v1551 = vadd.f32 %v301, %v1004
  %v1552 = vadd.f32 %v302, %v1006
  %v1553 = vadd.f32 %v303, %v1327
  %v1554 = vadd.f32 %v304, %v1008
  %v1555 = vadd.f32 %v305, %v1010
  %v1556 = vadd.f32 %v306, %v1330
  %v1557 = vadd.f32 %v307, %v1014
  %v1558 = vadd.f32 %v308, %v1016
  %v1559 = vadd.f32 %v309, %v1335
  %v1560 = vadd.f32 %v310, %v1018
  %v1561 = vadd.f32 %v311, %v1020
  %v1562 = vadd.f32 %v312, %v1338
  %v1563 = vadd.f32 %v313, %v1024
  %v1564 = vadd.f32 %v314, %v1026
  %v1565 = vadd.f32 %v315, %v1343
  %v1566 = vadd.f32 %v316, %v1028
  %v1567 = vadd.f32 %v317, %v1030
  %v1568 = vadd.f32 %v318, %v1346
  %v1569 = vadd.f32 %v319, %v1034
  %v1570 = vadd.f32 %v320, %v1036
  %v1571 = vadd.f32 %v321, %v1351
  %v1572 = vadd.f32 %v322, %v1038
  %v1573 = vadd.f32 %v323, %v1040
  %v1574 = vadd.f32 %v324, %v1354
  %v1575 = vadd.f32 %v325, %v1044
  %v1576 = vadd.f32 %v326, %v1046
  %v1577 = vadd.f32 %v327, %v1359
  %v1578 = vadd.f32 %v328, %v1048
  %v1579 = vadd.f32 %v329, %v1050
  %v1580 = vadd.f32 %v330, %v1362
  %v1581 = vadd.f32 %v331, %v1054
  %v1582 = vadd.f32 %v332, %v1056
  %v1583 = vadd.f32 %v333, %v1367
  %v1584 = vadd.f32 %v334, %v1058
  %v1585 = vadd.f32 %v335, %v1060
  %v1586 = vadd.f32 %v336, %v1370
  %v1587 = vadd.f32 %v337, %v1064
  %v1588 = vadd.f32 %v338, %v1066
  %v1589 = vadd.f32 %v339, %v1375
  %v1590 = vadd.f32 %v340, %v1068
  %v1591 = vadd.f32 %v341, %v1070
  %v1592 = vadd.f32 %v342, %v1378
  %v1593 = vadd.f32 %v343, %v1074
  %v1594 = vadd.f32 %v344, %v1076
  %v1595 = vadd.f32 %v345, %v1383
  %v1596 = vadd.f32 %v346, %v1078
  %v1597 = vadd.f32 %v347, %v1080
  %v1598 = vadd.f32 %v348, %v1386
  %v1599 = vadd.f32 %v349, %v1084
  %v1600 = vadd.f32 %v350, %v1086
  %v1601 = vadd.f32 %v351, %v1391
  %v1602 = vadd.f32 %v352, %v1088
  %v1603 = vadd.f32 %v353, %v1090
  %v1604 = vadd.f32 %v354, %v1394
  %v1605 = vadd.f32 %v355, %v1094
  %v1606 = vadd.f32 %v356, %v1096
  %v1607 = vadd.f32 %v357, %v1399
  %v1608 = vadd.f32 %v358, %v1098
  %v1609 = vadd.f32 %v359, %v1100
  %v1610 = vadd.f32 %v360, %v1402
  %v1611 = vadd.f32 %v361, %v1104
  %v1612 = vadd.f32 %v362, %v1106
  %v1613 = vadd.f32 %v363, %v1407
  %v1614 = vadd.f32 %v364, %v1108
  %v1615 = vadd.f32 %v365, %v1110
  %v1616 = vadd.f32 %v366, %v1410
  %v1617 = vadd.f32 %v367, %v1114
  %v1618 = vadd.f32 %v368, %v1116
  %v1619 = vadd.f32 %v369, %v1415
  %v1620 = vadd.f32 %v370, %v1118
  %v1621 = vadd.f32 %v371, %v1120
  %v1622 = vadd.f32 %v372, %v1418
  %v1623 = vadd.f32 %v373, %v1124
  %v1624 = vadd.f32 %v374, %v1126
  %v1625 = vadd.f32 %v375, %v1423
  %v1626 = vadd.f32 %v376, %v1128
  %v1627 = vadd.f32 %v377, %v1130
  %v1628 = vadd.f32 %v378, %v1426
  %v1629 = vadd.f32 %v379, %v1134
  %v1630 = vadd.f32 %v380, %v1136
  %v1631 = vadd.f32 %v381, %v1431
  %v1632 = vadd.f32 %v382, %v1138
  %v1633 = vadd.f32 %v383, %v1140
  %v1634 = vadd.f32 %v384, %v1434
  %v1635 = vadd.f32 %v385, %v1144
  %v1636 = vadd.f32 %v386, %v1146
  %v1637 = vadd.f32 %v387, %v1439
  %v1638 = vadd.f32 %v388, %v1148
  %v1639 = vadd.f32 %v389, %v1150
  %v1640 = vadd.f32 %v390, %v1442
  %v1641 = vadd.f32 %v391, %v1154
  %v1642 = vadd.f32 %v392, %v1156
  %v1643 = vadd.f32 %v393, %v1447
  %v1644 = vadd.f32 %v394, %v1158
  %v1645 = vadd.f32 %v395, %v1160
  %v1646 = vadd.f32 %v396, %v1450
  %v1647 = vadd.f32 %v397, %v1164
  %v1648 = vadd.f32 %v398, %v1166
  %v1649 = vadd.f32 %v399, %v1455
  %v1650 = vadd.f32 %v400, %v1168
  %v1651 = vadd.f32 %v401, %v1170
  %v1652 = vadd.f32 %v402, %v1458
  %1653 = vst [vmem:[#allocation2] sm:$0xff] %v1461
  %1654 = vst [vmem:[#allocation2 + $0x8] sm:$0xff] %v1462
  %1655 = vst [vmem:[#allocation2 + $0x10] sm:$0xff] %v1463
  %1656 = vst [vmem:[#allocation2 + $0x18] sm:$0xff] %v1464
  %1657 = vst [vmem:[#allocation2 + $0x20] sm:$0xff] %v1465
  %1658 = vst [vmem:[#allocation2 + $0x28] sm:$0xff] %v1466
  %1659 = vst [vmem:[#allocation2 + $0x30] sm:$0xff] %v1467
  %1660 = vst [vmem:[#allocation2 + $0x38] sm:$0xff] %v1468
  %1661 = vst [vmem:[#allocation2 + $0x40] sm:$0xff] %v1469
  %1662 = vst [vmem:[#allocation2 + $0x48] sm:$0xff] %v1470
  %1663 = vst [vmem:[#allocation2 + $0x50] sm:$0xff] %v1471
  %1664 = vst [vmem:[#allocation2 + $0x58] sm:$0xff] %v1472
  %1665 = vst [vmem:[#allocation2 + $0x60] sm:$0xff] %v1473
  %1666 = vst [vmem:[#allocation2 + $0x68] sm:$0xff] %v1474
  %1667 = vst [vmem:[#allocation2 + $0x70] sm:$0xff] %v1475
  %1668 = vst [vmem:[#allocation2 + $0x78] sm:$0xff] %v1476
  %1669 = vst [vmem:[#allocation2 + $0x80] sm:$0xff] %v1477
  %1670 = vst [vmem:[#allocation2 + $0x88] sm:$0xff] %v1478
  %1671 = vst [vmem:[#allocation2 + $0x90] sm:$0xff] %v1479
  %1672 = vst [vmem:[#allocation2 + $0x98] sm:$0xff] %v1480
  %1673 = vst [vmem:[#allocation2 + $0xa0] sm:$0xff] %v1481
  %1674 = vst [vmem:[#allocation2 + $0xa8] sm:$0xff] %v1482
  %1675 = vst [vmem:[#allocation2 + $0xb0] sm:$0xff] %v1483
  %1676 = vst [vmem:[#allocation2 + $0xb8] sm:$0xff] %v1484
  %1677 = vst [vmem:[#allocation2 + $0xc0] sm:$0xff] %v1485
  %1678 = vst [vmem:[#allocation2 + $0xc8] sm:$0xff] %v1486
  %1679 = vst [vmem:[#allocation2 + $0xd0] sm:$0xff] %v1487
  %1680 = vst [vmem:[#allocation2 + $0xd8] sm:$0xff] %v1488
  %1681 = vst [vmem:[#allocation2 + $0xe0] sm:$0xff] %v1489
  %1682 = vst [vmem:[#allocation2 + $0xe8] sm:$0xff] %v1490
  %1683 = vst [vmem:[#allocation2 + $0xf0] sm:$0xff] %v1491
  %1684 = vst [vmem:[#allocation2 + $0xf8] sm:$0xff] %v1492
  %1685 = vst [vmem:[#allocation2 + $0x100] sm:$0xff] %v1493
  %1686 = vst [vmem:[#allocation2 + $0x108] sm:$0xff] %v1494
  %1687 = vst [vmem:[#allocation2 + $0x110] sm:$0xff] %v1495
  %1688 = vst [vmem:[#allocation2 + $0x118] sm:$0xff] %v1496
  %1689 = vst [vmem:[#allocation2 + $0x120] sm:$0xff] %v1497
  %1690 = vst [vmem:[#allocation2 + $0x128] sm:$0xff] %v1498
  %1691 = vst [vmem:[#allocation2 + $0x130] sm:$0xff] %v1499
  %1692 = vst [vmem:[#allocation2 + $0x138] sm:$0xff] %v1500
  %1693 = vst [vmem:[#allocation2 + $0x140] sm:$0xff] %v1501
  %1694 = vst [vmem:[#allocation2 + $0x148] sm:$0xff] %v1502
  %1695 = vst [vmem:[#allocation2 + $0x150] sm:$0xff] %v1503
  %1696 = vst [vmem:[#allocation2 + $0x158] sm:$0xff] %v1504
  %1697 = vst [vmem:[#allocation2 + $0x160] sm:$0xff] %v1505
  %1698 = vst [vmem:[#allocation2 + $0x168] sm:$0xff] %v1506
  %1699 = vst [vmem:[#allocation2 + $0x170] sm:$0xff] %v1507
  %1700 = vst [vmem:[#allocation2 + $0x178] sm:$0xff] %v1508
  %1701 = vst [vmem:[#allocation2 + $0x180] sm:$0xff] %v1509
  %1702 = vst [vmem:[#allocation2 + $0x188] sm:$0xff] %v1510
  %1703 = vst [vmem:[#allocation2 + $0x190] sm:$0xff] %v1511
  %1704 = vst [vmem:[#allocation2 + $0x198] sm:$0xff] %v1512
  %1705 = vst [vmem:[#allocation2 + $0x1a0] sm:$0xff] %v1513
  %1706 = vst [vmem:[#allocation2 + $0x1a8] sm:$0xff] %v1514
  %1707 = vst [vmem:[#allocation2 + $0x1b0] sm:$0xff] %v1515
  %1708 = vst [vmem:[#allocation2 + $0x1b8] sm:$0xff] %v1516
  %1709 = vst [vmem:[#allocation2 + $0x1c0] sm:$0xff] %v1517
  %1710 = vst [vmem:[#allocation2 + $0x1c8] sm:$0xff] %v1518
  %1711 = vst [vmem:[#allocation2 + $0x1d0] sm:$0xff] %v1519
  %1712 = vst [vmem:[#allocation2 + $0x1d8] sm:$0xff] %v1520
  %1713 = vst [vmem:[#allocation2 + $0x1e0] sm:$0xff] %v1521
  %1714 = vst [vmem:[#allocation2 + $0x1e8] sm:$0xff] %v1522
  %1715 = vst [vmem:[#allocation2 + $0x1f0] sm:$0xff] %v1523
  %1716 = vst [vmem:[#allocation2 + $0x1f8] sm:$0xff] %v1524
  %1717 = vst [vmem:[#allocation2 + $0x200] sm:$0xff] %v1525
  %1718 = vst [vmem:[#allocation2 + $0x208] sm:$0xff] %v1526
  %1719 = vst [vmem:[#allocation2 + $0x210] sm:$0xff] %v1527
  %1720 = vst [vmem:[#allocation2 + $0x218] sm:$0xff] %v1528
  %1721 = vst [vmem:[#allocation2 + $0x220] sm:$0xff] %v1529
  %1722 = vst [vmem:[#allocation2 + $0x228] sm:$0xff] %v1530
  %1723 = vst [vmem:[#allocation2 + $0x230] sm:$0xff] %v1531
  %1724 = vst [vmem:[#allocation2 + $0x238] sm:$0xff] %v1532
  %1725 = vst [vmem:[#allocation2 + $0x240] sm:$0xff] %v1533
  %1726 = vst [vmem:[#allocation2 + $0x248] sm:$0xff] %v1534
  %1727 = vst [vmem:[#allocation2 + $0x250] sm:$0xff] %v1535
  %1728 = vst [vmem:[#allocation2 + $0x258] sm:$0xff] %v1536
  %1729 = vst [vmem:[#allocation2 + $0x260] sm:$0xff] %v1537
  %1730 = vst [vmem:[#allocation2 + $0x268] sm:$0xff] %v1538
  %1731 = vst [vmem:[#allocation2 + $0x270] sm:$0xff] %v1539
  %1732 = vst [vmem:[#allocation2 + $0x278] sm:$0xff] %v1540
  %1733 = vst [vmem:[#allocation2 + $0x280] sm:$0xff] %v1541
  %1734 = vst [vmem:[#allocation2 + $0x288] sm:$0xff] %v1542
  %1735 = vst [vmem:[#allocation2 + $0x290] sm:$0xff] %v1543
  %1736 = vst [vmem:[#allocation2 + $0x298] sm:$0xff] %v1544
  %1737 = vst [vmem:[#allocation2 + $0x2a0] sm:$0xff] %v1545
  %1738 = vst [vmem:[#allocation2 + $0x2a8] sm:$0xff] %v1546
  %1739 = vst [vmem:[#allocation2 + $0x2b0] sm:$0xff] %v1547
  %1740 = vst [vmem:[#allocation2 + $0x2b8] sm:$0xff] %v1548
  %1741 = vst [vmem:[#allocation2 + $0x2c0] sm:$0xff] %v1549
  %1742 = vst [vmem:[#allocation2 + $0x2c8] sm:$0xff] %v1550
  %1743 = vst [vmem:[#allocation2 + $0x2d0] sm:$0xff] %v1551
  %1744 = vst [vmem:[#allocation2 + $0x2d8] sm:$0xff] %v1552
  %1745 = vst [vmem:[#allocation2 + $0x2e0] sm:$0xff] %v1553
  %1746 = vst [vmem:[#allocation2 + $0x2e8] sm:$0xff] %v1554
  %1747 = vst [vmem:[#allocation2 + $0x2f0] sm:$0xff] %v1555
  %1748 = vst [vmem:[#allocation2 + $0x2f8] sm:$0xff] %v1556
  %1749 = vst [vmem:[#allocation2 + $0x300] sm:$0xff] %v1557
  %1750 = vst [vmem:[#allocation2 + $0x308] sm:$0xff] %v1558
  %1751 = vst [vmem:[#allocation2 + $0x310] sm:$0xff] %v1559
  %1752 = vst [vmem:[#allocation2 + $0x318] sm:$0xff] %v1560
  %1753 = vst [vmem:[#allocation2 + $0x320] sm:$0xff] %v1561
  %1754 = vst [vmem:[#allocation2 + $0x328] sm:$0xff] %v1562
  %1755 = vst [vmem:[#allocation2 + $0x330] sm:$0xff] %v1563
  %1756 = vst [vmem:[#allocation2 + $0x338] sm:$0xff] %v1564
  %1757 = vst [vmem:[#allocation2 + $0x340] sm:$0xff] %v1565
  %1758 = vst [vmem:[#allocation2 + $0x348] sm:$0xff] %v1566
  %1759 = vst [vmem:[#allocation2 + $0x350] sm:$0xff] %v1567
  %1760 = vst [vmem:[#allocation2 + $0x358] sm:$0xff] %v1568
  %1761 = vst [vmem:[#allocation2 + $0x360] sm:$0xff] %v1569
  %1762 = vst [vmem:[#allocation2 + $0x368] sm:$0xff] %v1570
  %1763 = vst [vmem:[#allocation2 + $0x370] sm:$0xff] %v1571
  %1764 = vst [vmem:[#allocation2 + $0x378] sm:$0xff] %v1572
  %1765 = vst [vmem:[#allocation2 + $0x380] sm:$0xff] %v1573
  %1766 = vst [vmem:[#allocation2 + $0x388] sm:$0xff] %v1574
  %1767 = vst [vmem:[#allocation2 + $0x390] sm:$0xff] %v1575
  %1768 = vst [vmem:[#allocation2 + $0x398] sm:$0xff] %v1576
  %1769 = vst [vmem:[#allocation2 + $0x3a0] sm:$0xff] %v1577
  %1770 = vst [vmem:[#allocation2 + $0x3a8] sm:$0xff] %v1578
  %1771 = vst [vmem:[#allocation2 + $0x3b0] sm:$0xff] %v1579
  %1772 = vst [vmem:[#allocation2 + $0x3b8] sm:$0xff] %v1580
  %1773 = vst [vmem:[#allocation2 + $0x3c0] sm:$0xff] %v1581
  %1774 = vst [vmem:[#allocation2 + $0x3c8] sm:$0xff] %v1582
  %1775 = vst [vmem:[#allocation2 + $0x3d0] sm:$0xff] %v1583
  %1776 = vst [vmem:[#allocation2 + $0x3d8] sm:$0xff] %v1584
  %1777 = vst [vmem:[#allocation2 + $0x3e0] sm:$0xff] %v1585
  %1778 = vst [vmem:[#allocation2 + $0x3e8] sm:$0xff] %v1586
  %1779 = vst [vmem:[#allocation2 + $0x3f0] sm:$0xff] %v1587
  %1780 = vst [vmem:[#allocation2 + $0x3f8] sm:$0xff] %v1588
  %1781 = vst [vmem:[#allocation2 + $0x400] sm:$0xff] %v1589
  %1782 = vst [vmem:[#allocation2 + $0x408] sm:$0xff] %v1590
  %1783 = vst [vmem:[#allocation2 + $0x410] sm:$0xff] %v1591
  %1784 = vst [vmem:[#allocation2 + $0x418] sm:$0xff] %v1592
  %1785 = vst [vmem:[#allocation2 + $0x420] sm:$0xff] %v1593
  %1786 = vst [vmem:[#allocation2 + $0x428] sm:$0xff] %v1594
  %1787 = vst [vmem:[#allocation2 + $0x430] sm:$0xff] %v1595
  %1788 = vst [vmem:[#allocation2 + $0x438] sm:$0xff] %v1596
  %1789 = vst [vmem:[#allocation2 + $0x440] sm:$0xff] %v1597
  %1790 = vst [vmem:[#allocation2 + $0x448] sm:$0xff] %v1598
  %1791 = vst [vmem:[#allocation2 + $0x450] sm:$0xff] %v1599
  %1792 = vst [vmem:[#allocation2 + $0x458] sm:$0xff] %v1600
  %1793 = vst [vmem:[#allocation2 + $0x460] sm:$0xff] %v1601
  %1794 = vst [vmem:[#allocation2 + $0x468] sm:$0xff] %v1602
  %1795 = vst [vmem:[#allocation2 + $0x470] sm:$0xff] %v1603
  %1796 = vst [vmem:[#allocation2 + $0x478] sm:$0xff] %v1604
  %1797 = vst [vmem:[#allocation2 + $0x480] sm:$0xff] %v1605
  %1798 = vst [vmem:[#allocation2 + $0x488] sm:$0xff] %v1606
  %1799 = vst [vmem:[#allocation2 + $0x490] sm:$0xff] %v1607
  %1800 = vst [vmem:[#allocation2 + $0x498] sm:$0xff] %v1608
  %1801 = vst [vmem:[#allocation2 + $0x4a0] sm:$0xff] %v1609
  %1802 = vst [vmem:[#allocation2 + $0x4a8] sm:$0xff] %v1610
  %1803 = vst [vmem:[#allocation2 + $0x4b0] sm:$0xff] %v1611
  %1804 = vst [vmem:[#allocation2 + $0x4b8] sm:$0xff] %v1612
  %1805 = vst [vmem:[#allocation2 + $0x4c0] sm:$0xff] %v1613
  %1806 = vst [vmem:[#allocation2 + $0x4c8] sm:$0xff] %v1614
  %1807 = vst [vmem:[#allocation2 + $0x4d0] sm:$0xff] %v1615
  %1808 = vst [vmem:[#allocation2 + $0x4d8] sm:$0xff] %v1616
  %1809 = vst [vmem:[#allocation2 + $0x4e0] sm:$0xff] %v1617
  %1810 = vst [vmem:[#allocation2 + $0x4e8] sm:$0xff] %v1618
  %1811 = vst [vmem:[#allocation2 + $0x4f0] sm:$0xff] %v1619
  %1812 = vst [vmem:[#allocation2 + $0x4f8] sm:$0xff] %v1620
  %1813 = vst [vmem:[#allocation2 + $0x500] sm:$0xff] %v1621
  %1814 = vst [vmem:[#allocation2 + $0x508] sm:$0xff] %v1622
  %1815 = vst [vmem:[#allocation2 + $0x510] sm:$0xff] %v1623
  %1816 = vst [vmem:[#allocation2 + $0x518] sm:$0xff] %v1624
  %1817 = vst [vmem:[#allocation2 + $0x520] sm:$0xff] %v1625
  %1818 = vst [vmem:[#allocation2 + $0x528] sm:$0xff] %v1626
  %1819 = vst [vmem:[#allocation2 + $0x530] sm:$0xff] %v1627
  %1820 = vst [vmem:[#allocation2 + $0x538] sm:$0xff] %v1628
  %1821 = vst [vmem:[#allocation2 + $0x540] sm:$0xff] %v1629
  %1822 = vst [vmem:[#allocation2 + $0x548] sm:$0xff] %v1630
  %1823 = vst [vmem:[#allocation2 + $0x550] sm:$0xff] %v1631
  %1824 = vst [vmem:[#allocation2 + $0x558] sm:$0xff] %v1632
  %1825 = vst [vmem:[#allocation2 + $0x560] sm:$0xff] %v1633
  %1826 = vst [vmem:[#allocation2 + $0x568] sm:$0xff] %v1634
  %1827 = vst [vmem:[#allocation2 + $0x570] sm:$0xff] %v1635
  %1828 = vst [vmem:[#allocation2 + $0x578] sm:$0xff] %v1636
  %1829 = vst [vmem:[#allocation2 + $0x580] sm:$0xff] %v1637
  %1830 = vst [vmem:[#allocation2 + $0x588] sm:$0xff] %v1638
  %1831 = vst [vmem:[#allocation2 + $0x590] sm:$0xff] %v1639
  %1832 = vst [vmem:[#allocation2 + $0x598] sm:$0xff] %v1640
  %1833 = vst [vmem:[#allocation2 + $0x5a0] sm:$0xff] %v1641
  %1834 = vst [vmem:[#allocation2 + $0x5a8] sm:$0xff] %v1642
  %1835 = vst [vmem:[#allocation2 + $0x5b0] sm:$0xff] %v1643
  %1836 = vst [vmem:[#allocation2 + $0x5b8] sm:$0xff] %v1644
  %1837 = vst [vmem:[#allocation2 + $0x5c0] sm:$0xff] %v1645
  %1838 = vst [vmem:[#allocation2 + $0x5c8] sm:$0xff] %v1646
  %1839 = vst [vmem:[#allocation2 + $0x5d0] sm:$0xff] %v1647
  %1840 = vst [vmem:[#allocation2 + $0x5d8] sm:$0xff] %v1648
  %1841 = vst [vmem:[#allocation2 + $0x5e0] sm:$0xff] %v1649
  %1842 = vst [vmem:[#allocation2 + $0x5e8] sm:$0xff] %v1650
  %1843 = vst [vmem:[#allocation2 + $0x5f0] sm:$0xff] %v1651
  %1844 = vst [vmem:[#allocation2 + $0x5f8] sm:$0xff] %v1652
  // Predicated region
  $region18: #{_lambda_.6} parent=0 // pred_check
    %p1845 = pneg %p15
  $region19: #{_lambda_.6} parent=0 // pred_check_branch
    %1847 = sbr.rel (%p1845) target = $region21
  $region20: #{_lambda_.6} parent=0 // pred_region
    %v1848 = vld [vmem:[#allocation2] sm:$0xff]
    %v1849 = vld [vmem:[#allocation2 + $0x8] sm:$0xff]
    %v1850 = vld [vmem:[#allocation2 + $0x10] sm:$0xff]
    %v1851 = vld [vmem:[#allocation2 + $0x18] sm:$0xff]
    %v1852 = vld [vmem:[#allocation2 + $0x20] sm:$0xff]
    %v1853 = vld [vmem:[#allocation2 + $0x28] sm:$0xff]
    %v1854 = vld [vmem:[#allocation2 + $0x30] sm:$0xff]
    %v1855 = vld [vmem:[#allocation2 + $0x38] sm:$0xff]
    %v1856 = vld [vmem:[#allocation2 + $0x40] sm:$0xff]
    %v1857 = vld [vmem:[#allocation2 + $0x48] sm:$0xff]
    %v1858 = vld [vmem:[#allocation2 + $0x50] sm:$0xff]
    %v1859 = vld [vmem:[#allocation2 + $0x58] sm:$0xff]
    %v1860 = vld [vmem:[#allocation2 + $0x60] sm:$0xff]
    %v1861 = vld [vmem:[#allocation2 + $0x68] sm:$0xff]
    %v1862 = vld [vmem:[#allocation2 + $0x70] sm:$0xff]
    %v1863 = vld [vmem:[#allocation2 + $0x78] sm:$0xff]
    %v1864 = vld [vmem:[#allocation2 + $0x80] sm:$0xff]
    %v1865 = vld [vmem:[#allocation2 + $0x88] sm:$0xff]
    %v1866 = vld [vmem:[#allocation2 + $0x90] sm:$0xff]
    %v1867 = vld [vmem:[#allocation2 + $0x98] sm:$0xff]
    %v1868 = vld [vmem:[#allocation2 + $0xa0] sm:$0xff]
    %v1869 = vld [vmem:[#allocation2 + $0xa8] sm:$0xff]
    %v1870 = vld [vmem:[#allocation2 + $0xb0] sm:$0xff]
    %v1871 = vld [vmem:[#allocation2 + $0xb8] sm:$0xff]
    %v1872 = vld [vmem:[#allocation2 + $0xc0] sm:$0xff]
    %v1873 = vld [vmem:[#allocation2 + $0xc8] sm:$0xff]
    %v1874 = vld [vmem:[#allocation2 + $0xd0] sm:$0xff]
    %v1875 = vld [vmem:[#allocation2 + $0xd8] sm:$0xff]
    %v1876 = vld [vmem:[#allocation2 + $0xe0] sm:$0xff]
    %v1877 = vld [vmem:[#allocation2 + $0xe8] sm:$0xff]
    %v1878 = vld [vmem:[#allocation2 + $0xf0] sm:$0xff]
    %v1879 = vld [vmem:[#allocation2 + $0xf8] sm:$0xff]
    %v1880 = vld [vmem:[#allocation2 + $0x100] sm:$0xff]
    %v1881 = vld [vmem:[#allocation2 + $0x108] sm:$0xff]
    %v1882 = vld [vmem:[#allocation2 + $0x110] sm:$0xff]
    %v1883 = vld [vmem:[#allocation2 + $0x118] sm:$0xff]
    %v1884 = vld [vmem:[#allocation2 + $0x120] sm:$0xff]
    %v1885 = vld [vmem:[#allocation2 + $0x128] sm:$0xff]
    %v1886 = vld [vmem:[#allocation2 + $0x130] sm:$0xff]
    %v1887 = vld [vmem:[#allocation2 + $0x138] sm:$0xff]
    %v1888 = vld [vmem:[#allocation2 + $0x140] sm:$0xff]
    %v1889 = vld [vmem:[#allocation2 + $0x148] sm:$0xff]
    %v1890 = vld [vmem:[#allocation2 + $0x150] sm:$0xff]
    %v1891 = vld [vmem:[#allocation2 + $0x158] sm:$0xff]
    %v1892 = vld [vmem:[#allocation2 + $0x160] sm:$0xff]
    %v1893 = vld [vmem:[#allocation2 + $0x168] sm:$0xff]
    %v1894 = vld [vmem:[#allocation2 + $0x170] sm:$0xff]
    %v1895 = vld [vmem:[#allocation2 + $0x178] sm:$0xff]
    %v1896 = vld [vmem:[#allocation2 + $0x180] sm:$0xff]
    %v1897 = vld [vmem:[#allocation2 + $0x188] sm:$0xff]
    %v1898 = vld [vmem:[#allocation2 + $0x190] sm:$0xff]
    %v1899 = vld [vmem:[#allocation2 + $0x198] sm:$0xff]
    %v1900 = vld [vmem:[#allocation2 + $0x1a0] sm:$0xff]
    %v1901 = vld [vmem:[#allocation2 + $0x1a8] sm:$0xff]
    %v1902 = vld [vmem:[#allocation2 + $0x1b0] sm:$0xff]
    %v1903 = vld [vmem:[#allocation2 + $0x1b8] sm:$0xff]
    %v1904 = vld [vmem:[#allocation2 + $0x1c0] sm:$0xff]
    %v1905 = vld [vmem:[#allocation2 + $0x1c8] sm:$0xff]
    %v1906 = vld [vmem:[#allocation2 + $0x1d0] sm:$0xff]
    %v1907 = vld [vmem:[#allocation2 + $0x1d8] sm:$0xff]
    %v1908 = vld [vmem:[#allocation2 + $0x1e0] sm:$0xff]
    %v1909 = vld [vmem:[#allocation2 + $0x1e8] sm:$0xff]
    %v1910 = vld [vmem:[#allocation2 + $0x1f0] sm:$0xff]
    %v1911 = vld [vmem:[#allocation2 + $0x1f8] sm:$0xff]
    %v1912 = vld [vmem:[#allocation2 + $0x200] sm:$0xff]
    %v1913 = vld [vmem:[#allocation2 + $0x208] sm:$0xff]
    %v1914 = vld [vmem:[#allocation2 + $0x210] sm:$0xff]
    %v1915 = vld [vmem:[#allocation2 + $0x218] sm:$0xff]
    %v1916 = vld [vmem:[#allocation2 + $0x220] sm:$0xff]
    %v1917 = vld [vmem:[#allocation2 + $0x228] sm:$0xff]
    %v1918 = vld [vmem:[#allocation2 + $0x230] sm:$0xff]
    %v1919 = vld [vmem:[#allocation2 + $0x238] sm:$0xff]
    %v1920 = vld [vmem:[#allocation2 + $0x240] sm:$0xff]
    %v1921 = vld [vmem:[#allocation2 + $0x248] sm:$0xff]
    %v1922 = vld [vmem:[#allocation2 + $0x250] sm:$0xff]
    %v1923 = vld [vmem:[#allocation2 + $0x258] sm:$0xff]
    %v1924 = vld [vmem:[#allocation2 + $0x260] sm:$0xff]
    %v1925 = vld [vmem:[#allocation2 + $0x268] sm:$0xff]
    %v1926 = vld [vmem:[#allocation2 + $0x270] sm:$0xff]
    %v1927 = vld [vmem:[#allocation2 + $0x278] sm:$0xff]
    %v1928 = vld [vmem:[#allocation2 + $0x280] sm:$0xff]
    %v1929 = vld [vmem:[#allocation2 + $0x288] sm:$0xff]
    %v1930 = vld [vmem:[#allocation2 + $0x290] sm:$0xff]
    %v1931 = vld [vmem:[#allocation2 + $0x298] sm:$0xff]
    %v1932 = vld [vmem:[#allocation2 + $0x2a0] sm:$0xff]
    %v1933 = vld [vmem:[#allocation2 + $0x2a8] sm:$0xff]
    %v1934 = vld [vmem:[#allocation2 + $0x2b0] sm:$0xff]
    %v1935 = vld [vmem:[#allocation2 + $0x2b8] sm:$0xff]
    %v1936 = vld [vmem:[#allocation2 + $0x2c0] sm:$0xff]
    %v1937 = vld [vmem:[#allocation2 + $0x2c8] sm:$0xff]
    %v1938 = vld [vmem:[#allocation2 + $0x2d0] sm:$0xff]
    %v1939 = vld [vmem:[#allocation2 + $0x2d8] sm:$0xff]
    %v1940 = vld [vmem:[#allocation2 + $0x2e0] sm:$0xff]
    %v1941 = vld [vmem:[#allocation2 + $0x2e8] sm:$0xff]
    %v1942 = vld [vmem:[#allocation2 + $0x2f0] sm:$0xff]
    %v1943 = vld [vmem:[#allocation2 + $0x2f8] sm:$0xff]
    %v1944 = vld [vmem:[#allocation2 + $0x300] sm:$0xff]
    %v1945 = vld [vmem:[#allocation2 + $0x308] sm:$0xff]
    %v1946 = vld [vmem:[#allocation2 + $0x310] sm:$0xff]
    %v1947 = vld [vmem:[#allocation2 + $0x318] sm:$0xff]
    %v1948 = vld [vmem:[#allocation2 + $0x320] sm:$0xff]
    %v1949 = vld [vmem:[#allocation2 + $0x328] sm:$0xff]
    %v1950 = vld [vmem:[#allocation2 + $0x330] sm:$0xff]
    %v1951 = vld [vmem:[#allocation2 + $0x338] sm:$0xff]
    %v1952 = vld [vmem:[#allocation2 + $0x340] sm:$0xff]
    %v1953 = vld [vmem:[#allocation2 + $0x348] sm:$0xff]
    %v1954 = vld [vmem:[#allocation2 + $0x350] sm:$0xff]
    %v1955 = vld [vmem:[#allocation2 + $0x358] sm:$0xff]
    %v1956 = vld [vmem:[#allocation2 + $0x360] sm:$0xff]
    %v1957 = vld [vmem:[#allocation2 + $0x368] sm:$0xff]
    %v1958 = vld [vmem:[#allocation2 + $0x370] sm:$0xff]
    %v1959 = vld [vmem:[#allocation2 + $0x378] sm:$0xff]
    %v1960 = vld [vmem:[#allocation2 + $0x380] sm:$0xff]
    %v1961 = vld [vmem:[#allocation2 + $0x388] sm:$0xff]
    %v1962 = vld [vmem:[#allocation2 + $0x390] sm:$0xff]
    %v1963 = vld [vmem:[#allocation2 + $0x398] sm:$0xff]
    %v1964 = vld [vmem:[#allocation2 + $0x3a0] sm:$0xff]
    %v1965 = vld [vmem:[#allocation2 + $0x3a8] sm:$0xff]
    %v1966 = vld [vmem:[#allocation2 + $0x3b0] sm:$0xff]
    %v1967 = vld [vmem:[#allocation2 + $0x3b8] sm:$0xff]
    %v1968 = vld [vmem:[#allocation2 + $0x3c0] sm:$0xff]
    %v1969 = vld [vmem:[#allocation2 + $0x3c8] sm:$0xff]
    %v1970 = vld [vmem:[#allocation2 + $0x3d0] sm:$0xff]
    %v1971 = vld [vmem:[#allocation2 + $0x3d8] sm:$0xff]
    %v1972 = vld [vmem:[#allocation2 + $0x3e0] sm:$0xff]
    %v1973 = vld [vmem:[#allocation2 + $0x3e8] sm:$0xff]
    %v1974 = vld [vmem:[#allocation2 + $0x3f0] sm:$0xff]
    %v1975 = vld [vmem:[#allocation2 + $0x3f8] sm:$0xff]
    %v1976 = vld [vmem:[#allocation2 + $0x400] sm:$0xff]
    %v1977 = vld [vmem:[#allocation2 + $0x408] sm:$0xff]
    %v1978 = vld [vmem:[#allocation2 + $0x410] sm:$0xff]
    %v1979 = vld [vmem:[#allocation2 + $0x418] sm:$0xff]
    %v1980 = vld [vmem:[#allocation2 + $0x420] sm:$0xff]
    %v1981 = vld [vmem:[#allocation2 + $0x428] sm:$0xff]
    %v1982 = vld [vmem:[#allocation2 + $0x430] sm:$0xff]
    %v1983 = vld [vmem:[#allocation2 + $0x438] sm:$0xff]
    %v1984 = vld [vmem:[#allocation2 + $0x440] sm:$0xff]
    %v1985 = vld [vmem:[#allocation2 + $0x448] sm:$0xff]
    %v1986 = vld [vmem:[#allocation2 + $0x450] sm:$0xff]
    %v1987 = vld [vmem:[#allocation2 + $0x458] sm:$0xff]
    %v1988 = vld [vmem:[#allocation2 + $0x460] sm:$0xff]
    %v1989 = vld [vmem:[#allocation2 + $0x468] sm:$0xff]
    %v1990 = vld [vmem:[#allocation2 + $0x470] sm:$0xff]
    %v1991 = vld [vmem:[#allocation2 + $0x478] sm:$0xff]
    %v1992 = vld [vmem:[#allocation2 + $0x480] sm:$0xff]
    %v1993 = vld [vmem:[#allocation2 + $0x488] sm:$0xff]
    %v1994 = vld [vmem:[#allocation2 + $0x490] sm:$0xff]
    %v1995 = vld [vmem:[#allocation2 + $0x498] sm:$0xff]
    %v1996 = vld [vmem:[#allocation2 + $0x4a0] sm:$0xff]
    %v1997 = vld [vmem:[#allocation2 + $0x4a8] sm:$0xff]
    %v1998 = vld [vmem:[#allocation2 + $0x4b0] sm:$0xff]
    %v1999 = vld [vmem:[#allocation2 + $0x4b8] sm:$0xff]
    %v2000 = vld [vmem:[#allocation2 + $0x4c0] sm:$0xff]
    %v2001 = vld [vmem:[#allocation2 + $0x4c8] sm:$0xff]
    %v2002 = vld [vmem:[#allocation2 + $0x4d0] sm:$0xff]
    %v2003 = vld [vmem:[#allocation2 + $0x4d8] sm:$0xff]
    %v2004 = vld [vmem:[#allocation2 + $0x4e0] sm:$0xff]
    %v2005 = vld [vmem:[#allocation2 + $0x4e8] sm:$0xff]
    %v2006 = vld [vmem:[#allocation2 + $0x4f0] sm:$0xff]
    %v2007 = vld [vmem:[#allocation2 + $0x4f8] sm:$0xff]
    %v2008 = vld [vmem:[#allocation2 + $0x500] sm:$0xff]
    %v2009 = vld [vmem:[#allocation2 + $0x508] sm:$0xff]
    %v2010 = vld [vmem:[#allocation2 + $0x510] sm:$0xff]
    %v2011 = vld [vmem:[#allocation2 + $0x518] sm:$0xff]
    %v2012 = vld [vmem:[#allocation2 + $0x520] sm:$0xff]
    %v2013 = vld [vmem:[#allocation2 + $0x528] sm:$0xff]
    %v2014 = vld [vmem:[#allocation2 + $0x530] sm:$0xff]
    %v2015 = vld [vmem:[#allocation2 + $0x538] sm:$0xff]
    %v2016 = vld [vmem:[#allocation2 + $0x540] sm:$0xff]
    %v2017 = vld [vmem:[#allocation2 + $0x548] sm:$0xff]
    %v2018 = vld [vmem:[#allocation2 + $0x550] sm:$0xff]
    %v2019 = vld [vmem:[#allocation2 + $0x558] sm:$0xff]
    %v2020 = vld [vmem:[#allocation2 + $0x560] sm:$0xff]
    %v2021 = vld [vmem:[#allocation2 + $0x568] sm:$0xff]
    %v2022 = vld [vmem:[#allocation2 + $0x570] sm:$0xff]
    %v2023 = vld [vmem:[#allocation2 + $0x578] sm:$0xff]
    %v2024 = vld [vmem:[#allocation2 + $0x580] sm:$0xff]
    %v2025 = vld [vmem:[#allocation2 + $0x588] sm:$0xff]
    %v2026 = vld [vmem:[#allocation2 + $0x590] sm:$0xff]
    %v2027 = vld [vmem:[#allocation2 + $0x598] sm:$0xff]
    %v2028 = vld [vmem:[#allocation2 + $0x5a0] sm:$0xff]
    %v2029 = vld [vmem:[#allocation2 + $0x5a8] sm:$0xff]
    %v2030 = vld [vmem:[#allocation2 + $0x5b0] sm:$0xff]
    %v2031 = vld [vmem:[#allocation2 + $0x5b8] sm:$0xff]
    %v2032 = vld [vmem:[#allocation2 + $0x5c0] sm:$0xff]
    %v2033 = vld [vmem:[#allocation2 + $0x5c8] sm:$0xff]
    %v2034 = vld [vmem:[#allocation2 + $0x5d0] sm:$0xff]
    %v2035 = vld [vmem:[#allocation2 + $0x5d8] sm:$0xff]
    %v2036 = vld [vmem:[#allocation2 + $0x5e0] sm:$0xff]
    %v2037 = vld [vmem:[#allocation2 + $0x5e8] sm:$0xff]
    %v2038 = vld [vmem:[#allocation2 + $0x5f0] sm:$0xff]
    %v2039 = vld [vmem:[#allocation2 + $0x5f8] sm:$0xff]
    %v2040 = vld [vmem:[%s2] sm:$0x7]
    %v2042 = vlaneseq
    %v2043 = vshrl.u32 %v2042, 7
    %v2044 = vsub.s32 0, %v2043
    %v2045 = vrot.slane %v2040, %v2044
    %v2046 = vlaneseq
    %v2047 = vshrl.u32 %v2046, 7
    %v2048 = vsub.s32 1, %v2047
    %v2049 = vrot.slane %v2040, %v2048
    %v2050 = vlaneseq
    %v2051 = vshrl.u32 %v2050, 7
    %v2052 = vsub.s32 2, %v2051
    %v2053 = vrot.slane %v2040, %v2052
    %v2057 = vadd.f32 %v1848, %v2045
    %v2058 = vadd.f32 %v1849, %v2049
    %v2059 = vadd.f32 %v1850, %v2053
    %v2060 = vadd.f32 %v1851, %v2045
    %v2061 = vadd.f32 %v1852, %v2049
    %v2062 = vadd.f32 %v1853, %v2053
    %v2063 = vadd.f32 %v1854, %v2045
    %v2064 = vadd.f32 %v1855, %v2049
    %v2065 = vadd.f32 %v1856, %v2053
    %v2066 = vadd.f32 %v1857, %v2045
    %v2067 = vadd.f32 %v1858, %v2049
    %v2068 = vadd.f32 %v1859, %v2053
    %v2069 = vadd.f32 %v1860, %v2045
    %v2070 = vadd.f32 %v1861, %v2049
    %v2071 = vadd.f32 %v1862, %v2053
    %v2072 = vadd.f32 %v1863, %v2045
    %v2073 = vadd.f32 %v1864, %v2049
    %v2074 = vadd.f32 %v1865, %v2053
    %v2075 = vadd.f32 %v1866, %v2045
    %v2076 = vadd.f32 %v1867, %v2049
    %v2077 = vadd.f32 %v1868, %v2053
    %v2078 = vadd.f32 %v1869, %v2045
    %v2079 = vadd.f32 %v1870, %v2049
    %v2080 = vadd.f32 %v1871, %v2053
    %v2081 = vadd.f32 %v1872, %v2045
    %v2082 = vadd.f32 %v1873, %v2049
    %v2083 = vadd.f32 %v1874, %v2053
    %v2084 = vadd.f32 %v1875, %v2045
    %v2085 = vadd.f32 %v1876, %v2049
    %v2086 = vadd.f32 %v1877, %v2053
    %v2087 = vadd.f32 %v1878, %v2045
    %v2088 = vadd.f32 %v1879, %v2049
    %v2089 = vadd.f32 %v1880, %v2053
    %v2090 = vadd.f32 %v1881, %v2045
    %v2091 = vadd.f32 %v1882, %v2049
    %v2092 = vadd.f32 %v1883, %v2053
    %v2093 = vadd.f32 %v1884, %v2045
    %v2094 = vadd.f32 %v1885, %v2049
    %v2095 = vadd.f32 %v1886, %v2053
    %v2096 = vadd.f32 %v1887, %v2045
    %v2097 = vadd.f32 %v1888, %v2049
    %v2098 = vadd.f32 %v1889, %v2053
    %v2099 = vadd.f32 %v1890, %v2045
    %v2100 = vadd.f32 %v1891, %v2049
    %v2101 = vadd.f32 %v1892, %v2053
    %v2102 = vadd.f32 %v1893, %v2045
    %v2103 = vadd.f32 %v1894, %v2049
    %v2104 = vadd.f32 %v1895, %v2053
    %v2105 = vadd.f32 %v1896, %v2045
    %v2106 = vadd.f32 %v1897, %v2049
    %v2107 = vadd.f32 %v1898, %v2053
    %v2108 = vadd.f32 %v1899, %v2045
    %v2109 = vadd.f32 %v1900, %v2049
    %v2110 = vadd.f32 %v1901, %v2053
    %v2111 = vadd.f32 %v1902, %v2045
    %v2112 = vadd.f32 %v1903, %v2049
    %v2113 = vadd.f32 %v1904, %v2053
    %v2114 = vadd.f32 %v1905, %v2045
    %v2115 = vadd.f32 %v1906, %v2049
    %v2116 = vadd.f32 %v1907, %v2053
    %v2117 = vadd.f32 %v1908, %v2045
    %v2118 = vadd.f32 %v1909, %v2049
    %v2119 = vadd.f32 %v1910, %v2053
    %v2120 = vadd.f32 %v1911, %v2045
    %v2121 = vadd.f32 %v1912, %v2049
    %v2122 = vadd.f32 %v1913, %v2053
    %v2123 = vadd.f32 %v1914, %v2045
    %v2124 = vadd.f32 %v1915, %v2049
    %v2125 = vadd.f32 %v1916, %v2053
    %v2126 = vadd.f32 %v1917, %v2045
    %v2127 = vadd.f32 %v1918, %v2049
    %v2128 = vadd.f32 %v1919, %v2053
    %v2129 = vadd.f32 %v1920, %v2045
    %v2130 = vadd.f32 %v1921, %v2049
    %v2131 = vadd.f32 %v1922, %v2053
    %v2132 = vadd.f32 %v1923, %v2045
    %v2133 = vadd.f32 %v1924, %v2049
    %v2134 = vadd.f32 %v1925, %v2053
    %v2135 = vadd.f32 %v1926, %v2045
    %v2136 = vadd.f32 %v1927, %v2049
    %v2137 = vadd.f32 %v1928, %v2053
    %v2138 = vadd.f32 %v1929, %v2045
    %v2139 = vadd.f32 %v1930, %v2049
    %v2140 = vadd.f32 %v1931, %v2053
    %v2141 = vadd.f32 %v1932, %v2045
    %v2142 = vadd.f32 %v1933, %v2049
    %v2143 = vadd.f32 %v1934, %v2053
    %v2144 = vadd.f32 %v1935, %v2045
    %v2145 = vadd.f32 %v1936, %v2049
    %v2146 = vadd.f32 %v1937, %v2053
    %v2147 = vadd.f32 %v1938, %v2045
    %v2148 = vadd.f32 %v1939, %v2049
    %v2149 = vadd.f32 %v1940, %v2053
    %v2150 = vadd.f32 %v1941, %v2045
    %v2151 = vadd.f32 %v1942, %v2049
    %v2152 = vadd.f32 %v1943, %v2053
    %v2153 = vadd.f32 %v1944, %v2045
    %v2154 = vadd.f32 %v1945, %v2049
    %v2155 = vadd.f32 %v1946, %v2053
    %v2156 = vadd.f32 %v1947, %v2045
    %v2157 = vadd.f32 %v1948, %v2049
    %v2158 = vadd.f32 %v1949, %v2053
    %v2159 = vadd.f32 %v1950, %v2045
    %v2160 = vadd.f32 %v1951, %v2049
    %v2161 = vadd.f32 %v1952, %v2053
    %v2162 = vadd.f32 %v1953, %v2045
    %v2163 = vadd.f32 %v1954, %v2049
    %v2164 = vadd.f32 %v1955, %v2053
    %v2165 = vadd.f32 %v1956, %v2045
    %v2166 = vadd.f32 %v1957, %v2049
    %v2167 = vadd.f32 %v1958, %v2053
    %v2168 = vadd.f32 %v1959, %v2045
    %v2169 = vadd.f32 %v1960, %v2049
    %v2170 = vadd.f32 %v1961, %v2053
    %v2171 = vadd.f32 %v1962, %v2045
    %v2172 = vadd.f32 %v1963, %v2049
    %v2173 = vadd.f32 %v1964, %v2053
    %v2174 = vadd.f32 %v1965, %v2045
    %v2175 = vadd.f32 %v1966, %v2049
    %v2176 = vadd.f32 %v1967, %v2053
    %v2177 = vadd.f32 %v1968, %v2045
    %v2178 = vadd.f32 %v1969, %v2049
    %v2179 = vadd.f32 %v1970, %v2053
    %v2180 = vadd.f32 %v1971, %v2045
    %v2181 = vadd.f32 %v1972, %v2049
    %v2182 = vadd.f32 %v1973, %v2053
    %v2183 = vadd.f32 %v1974, %v2045
    %v2184 = vadd.f32 %v1975, %v2049
    %v2185 = vadd.f32 %v1976, %v2053
    %v2186 = vadd.f32 %v1977, %v2045
    %v2187 = vadd.f32 %v1978, %v2049
    %v2188 = vadd.f32 %v1979, %v2053
    %v2189 = vadd.f32 %v1980, %v2045
    %v2190 = vadd.f32 %v1981, %v2049
    %v2191 = vadd.f32 %v1982, %v2053
    %v2192 = vadd.f32 %v1983, %v2045
    %v2193 = vadd.f32 %v1984, %v2049
    %v2194 = vadd.f32 %v1985, %v2053
    %v2195 = vadd.f32 %v1986, %v2045
    %v2196 = vadd.f32 %v1987, %v2049
    %v2197 = vadd.f32 %v1988, %v2053
    %v2198 = vadd.f32 %v1989, %v2045
    %v2199 = vadd.f32 %v1990, %v2049
    %v2200 = vadd.f32 %v1991, %v2053
    %v2201 = vadd.f32 %v1992, %v2045
    %v2202 = vadd.f32 %v1993, %v2049
    %v2203 = vadd.f32 %v1994, %v2053
    %v2204 = vadd.f32 %v1995, %v2045
    %v2205 = vadd.f32 %v1996, %v2049
    %v2206 = vadd.f32 %v1997, %v2053
    %v2207 = vadd.f32 %v1998, %v2045
    %v2208 = vadd.f32 %v1999, %v2049
    %v2209 = vadd.f32 %v2000, %v2053
    %v2210 = vadd.f32 %v2001, %v2045
    %v2211 = vadd.f32 %v2002, %v2049
    %v2212 = vadd.f32 %v2003, %v2053
    %v2213 = vadd.f32 %v2004, %v2045
    %v2214 = vadd.f32 %v2005, %v2049
    %v2215 = vadd.f32 %v2006, %v2053
    %v2216 = vadd.f32 %v2007, %v2045
    %v2217 = vadd.f32 %v2008, %v2049
    %v2218 = vadd.f32 %v2009, %v2053
    %v2219 = vadd.f32 %v2010, %v2045
    %v2220 = vadd.f32 %v2011, %v2049
    %v2221 = vadd.f32 %v2012, %v2053
    %v2222 = vadd.f32 %v2013, %v2045
    %v2223 = vadd.f32 %v2014, %v2049
    %v2224 = vadd.f32 %v2015, %v2053
    %v2225 = vadd.f32 %v2016, %v2045
    %v2226 = vadd.f32 %v2017, %v2049
    %v2227 = vadd.f32 %v2018, %v2053
    %v2228 = vadd.f32 %v2019, %v2045
    %v2229 = vadd.f32 %v2020, %v2049
    %v2230 = vadd.f32 %v2021, %v2053
    %v2231 = vadd.f32 %v2022, %v2045
    %v2232 = vadd.f32 %v2023, %v2049
    %v2233 = vadd.f32 %v2024, %v2053
    %v2234 = vadd.f32 %v2025, %v2045
    %v2235 = vadd.f32 %v2026, %v2049
    %v2236 = vadd.f32 %v2027, %v2053
    %v2237 = vadd.f32 %v2028, %v2045
    %v2238 = vadd.f32 %v2029, %v2049
    %v2239 = vadd.f32 %v2030, %v2053
    %v2240 = vadd.f32 %v2031, %v2045
    %v2241 = vadd.f32 %v2032, %v2049
    %v2242 = vadd.f32 %v2033, %v2053
    %v2243 = vadd.f32 %v2034, %v2045
    %v2244 = vadd.f32 %v2035, %v2049
    %v2245 = vadd.f32 %v2036, %v2053
    %v2246 = vadd.f32 %v2037, %v2045
    %v2247 = vadd.f32 %v2038, %v2049
    %v2248 = vadd.f32 %v2039, %v2053
    %v2249 = vmax.f32 %v2057, 0.0
    %v2250 = vmax.f32 %v2058, 0.0
    %v2251 = vmax.f32 %v2059, 0.0
    %v2252 = vmax.f32 %v2060, 0.0
    %v2253 = vmax.f32 %v2061, 0.0
    %v2254 = vmax.f32 %v2062, 0.0
    %v2255 = vmax.f32 %v2063, 0.0
    %v2256 = vmax.f32 %v2064, 0.0
    %v2257 = vmax.f32 %v2065, 0.0
    %v2258 = vmax.f32 %v2066, 0.0
    %v2259 = vmax.f32 %v2067, 0.0
    %v2260 = vmax.f32 %v2068, 0.0
    %v2261 = vmax.f32 %v2069, 0.0
    %v2262 = vmax.f32 %v2070, 0.0
    %v2263 = vmax.f32 %v2071, 0.0
    %v2264 = vmax.f32 %v2072, 0.0
    %v2265 = vmax.f32 %v2073, 0.0
    %v2266 = vmax.f32 %v2074, 0.0
    %v2267 = vmax.f32 %v2075, 0.0
    %v2268 = vmax.f32 %v2076, 0.0
    %v2269 = vmax.f32 %v2077, 0.0
    %v2270 = vmax.f32 %v2078, 0.0
    %v2271 = vmax.f32 %v2079, 0.0
    %v2272 = vmax.f32 %v2080, 0.0
    %v2273 = vmax.f32 %v2081, 0.0
    %v2274 = vmax.f32 %v2082, 0.0
    %v2275 = vmax.f32 %v2083, 0.0
    %v2276 = vmax.f32 %v2084, 0.0
    %v2277 = vmax.f32 %v2085, 0.0
    %v2278 = vmax.f32 %v2086, 0.0
    %v2279 = vmax.f32 %v2087, 0.0
    %v2280 = vmax.f32 %v2088, 0.0
    %v2281 = vmax.f32 %v2089, 0.0
    %v2282 = vmax.f32 %v2090, 0.0
    %v2283 = vmax.f32 %v2091, 0.0
    %v2284 = vmax.f32 %v2092, 0.0
    %v2285 = vmax.f32 %v2093, 0.0
    %v2286 = vmax.f32 %v2094, 0.0
    %v2287 = vmax.f32 %v2095, 0.0
    %v2288 = vmax.f32 %v2096, 0.0
    %v2289 = vmax.f32 %v2097, 0.0
    %v2290 = vmax.f32 %v2098, 0.0
    %v2291 = vmax.f32 %v2099, 0.0
    %v2292 = vmax.f32 %v2100, 0.0
    %v2293 = vmax.f32 %v2101, 0.0
    %v2294 = vmax.f32 %v2102, 0.0
    %v2295 = vmax.f32 %v2103, 0.0
    %v2296 = vmax.f32 %v2104, 0.0
    %v2297 = vmax.f32 %v2105, 0.0
    %v2298 = vmax.f32 %v2106, 0.0
    %v2299 = vmax.f32 %v2107, 0.0
    %v2300 = vmax.f32 %v2108, 0.0
    %v2301 = vmax.f32 %v2109, 0.0
    %v2302 = vmax.f32 %v2110, 0.0
    %v2303 = vmax.f32 %v2111, 0.0
    %v2304 = vmax.f32 %v2112, 0.0
    %v2305 = vmax.f32 %v2113, 0.0
    %v2306 = vmax.f32 %v2114, 0.0
    %v2307 = vmax.f32 %v2115, 0.0
    %v2308 = vmax.f32 %v2116, 0.0
    %v2309 = vmax.f32 %v2117, 0.0
    %v2310 = vmax.f32 %v2118, 0.0
    %v2311 = vmax.f32 %v2119, 0.0
    %v2312 = vmax.f32 %v2120, 0.0
    %v2313 = vmax.f32 %v2121, 0.0
    %v2314 = vmax.f32 %v2122, 0.0
    %v2315 = vmax.f32 %v2123, 0.0
    %v2316 = vmax.f32 %v2124, 0.0
    %v2317 = vmax.f32 %v2125, 0.0
    %v2318 = vmax.f32 %v2126, 0.0
    %v2319 = vmax.f32 %v2127, 0.0
    %v2320 = vmax.f32 %v2128, 0.0
    %v2321 = vmax.f32 %v2129, 0.0
    %v2322 = vmax.f32 %v2130, 0.0
    %v2323 = vmax.f32 %v2131, 0.0
    %v2324 = vmax.f32 %v2132, 0.0
    %v2325 = vmax.f32 %v2133, 0.0
    %v2326 = vmax.f32 %v2134, 0.0
    %v2327 = vmax.f32 %v2135, 0.0
    %v2328 = vmax.f32 %v2136, 0.0
    %v2329 = vmax.f32 %v2137, 0.0
    %v2330 = vmax.f32 %v2138, 0.0
    %v2331 = vmax.f32 %v2139, 0.0
    %v2332 = vmax.f32 %v2140, 0.0
    %v2333 = vmax.f32 %v2141, 0.0
    %v2334 = vmax.f32 %v2142, 0.0
    %v2335 = vmax.f32 %v2143, 0.0
    %v2336 = vmax.f32 %v2144, 0.0
    %v2337 = vmax.f32 %v2145, 0.0
    %v2338 = vmax.f32 %v2146, 0.0
    %v2339 = vmax.f32 %v2147, 0.0
    %v2340 = vmax.f32 %v2148, 0.0
    %v2341 = vmax.f32 %v2149, 0.0
    %v2342 = vmax.f32 %v2150, 0.0
    %v2343 = vmax.f32 %v2151, 0.0
    %v2344 = vmax.f32 %v2152, 0.0
    %v2345 = vmax.f32 %v2153, 0.0
    %v2346 = vmax.f32 %v2154, 0.0
    %v2347 = vmax.f32 %v2155, 0.0
    %v2348 = vmax.f32 %v2156, 0.0
    %v2349 = vmax.f32 %v2157, 0.0
    %v2350 = vmax.f32 %v2158, 0.0
    %v2351 = vmax.f32 %v2159, 0.0
    %v2352 = vmax.f32 %v2160, 0.0
    %v2353 = vmax.f32 %v2161, 0.0
    %v2354 = vmax.f32 %v2162, 0.0
    %v2355 = vmax.f32 %v2163, 0.0
    %v2356 = vmax.f32 %v2164, 0.0
    %v2357 = vmax.f32 %v2165, 0.0
    %v2358 = vmax.f32 %v2166, 0.0
    %v2359 = vmax.f32 %v2167, 0.0
    %v2360 = vmax.f32 %v2168, 0.0
    %v2361 = vmax.f32 %v2169, 0.0
    %v2362 = vmax.f32 %v2170, 0.0
    %v2363 = vmax.f32 %v2171, 0.0
    %v2364 = vmax.f32 %v2172, 0.0
    %v2365 = vmax.f32 %v2173, 0.0
    %v2366 = vmax.f32 %v2174, 0.0
    %v2367 = vmax.f32 %v2175, 0.0
    %v2368 = vmax.f32 %v2176, 0.0
    %v2369 = vmax.f32 %v2177, 0.0
    %v2370 = vmax.f32 %v2178, 0.0
    %v2371 = vmax.f32 %v2179, 0.0
    %v2372 = vmax.f32 %v2180, 0.0
    %v2373 = vmax.f32 %v2181, 0.0
    %v2374 = vmax.f32 %v2182, 0.0
    %v2375 = vmax.f32 %v2183, 0.0
    %v2376 = vmax.f32 %v2184, 0.0
    %v2377 = vmax.f32 %v2185, 0.0
    %v2378 = vmax.f32 %v2186, 0.0
    %v2379 = vmax.f32 %v2187, 0.0
    %v2380 = vmax.f32 %v2188, 0.0
    %v2381 = vmax.f32 %v2189, 0.0
    %v2382 = vmax.f32 %v2190, 0.0
    %v2383 = vmax.f32 %v2191, 0.0
    %v2384 = vmax.f32 %v2192, 0.0
    %v2385 = vmax.f32 %v2193, 0.0
    %v2386 = vmax.f32 %v2194, 0.0
    %v2387 = vmax.f32 %v2195, 0.0
    %v2388 = vmax.f32 %v2196, 0.0
    %v2389 = vmax.f32 %v2197, 0.0
    %v2390 = vmax.f32 %v2198, 0.0
    %v2391 = vmax.f32 %v2199, 0.0
    %v2392 = vmax.f32 %v2200, 0.0
    %v2393 = vmax.f32 %v2201, 0.0
    %v2394 = vmax.f32 %v2202, 0.0
    %v2395 = vmax.f32 %v2203, 0.0
    %v2396 = vmax.f32 %v2204, 0.0
    %v2397 = vmax.f32 %v2205, 0.0
    %v2398 = vmax.f32 %v2206, 0.0
    %v2399 = vmax.f32 %v2207, 0.0
    %v2400 = vmax.f32 %v2208, 0.0
    %v2401 = vmax.f32 %v2209, 0.0
    %v2402 = vmax.f32 %v2210, 0.0
    %v2403 = vmax.f32 %v2211, 0.0
    %v2404 = vmax.f32 %v2212, 0.0
    %v2405 = vmax.f32 %v2213, 0.0
    %v2406 = vmax.f32 %v2214, 0.0
    %v2407 = vmax.f32 %v2215, 0.0
    %v2408 = vmax.f32 %v2216, 0.0
    %v2409 = vmax.f32 %v2217, 0.0
    %v2410 = vmax.f32 %v2218, 0.0
    %v2411 = vmax.f32 %v2219, 0.0
    %v2412 = vmax.f32 %v2220, 0.0
    %v2413 = vmax.f32 %v2221, 0.0
    %v2414 = vmax.f32 %v2222, 0.0
    %v2415 = vmax.f32 %v2223, 0.0
    %v2416 = vmax.f32 %v2224, 0.0
    %v2417 = vmax.f32 %v2225, 0.0
    %v2418 = vmax.f32 %v2226, 0.0
    %v2419 = vmax.f32 %v2227, 0.0
    %v2420 = vmax.f32 %v2228, 0.0
    %v2421 = vmax.f32 %v2229, 0.0
    %v2422 = vmax.f32 %v2230, 0.0
    %v2423 = vmax.f32 %v2231, 0.0
    %v2424 = vmax.f32 %v2232, 0.0
    %v2425 = vmax.f32 %v2233, 0.0
    %v2426 = vmax.f32 %v2234, 0.0
    %v2427 = vmax.f32 %v2235, 0.0
    %v2428 = vmax.f32 %v2236, 0.0
    %v2429 = vmax.f32 %v2237, 0.0
    %v2430 = vmax.f32 %v2238, 0.0
    %v2431 = vmax.f32 %v2239, 0.0
    %v2432 = vmax.f32 %v2240, 0.0
    %v2433 = vmax.f32 %v2241, 0.0
    %v2434 = vmax.f32 %v2242, 0.0
    %v2435 = vmax.f32 %v2243, 0.0
    %v2436 = vmax.f32 %v2244, 0.0
    %v2437 = vmax.f32 %v2245, 0.0
    %v2438 = vmax.f32 %v2246, 0.0
    %v2439 = vmax.f32 %v2247, 0.0
    %v2440 = vmax.f32 %v2248, 0.0
    %v2441 = vpack.c.bf16 %v2252, %v2249
    %v2442 = vpack.c.bf16 %v2253, %v2250
    %v2443 = vpack.c.bf16 %v2254, %v2251
    %v2444 = vpack.c.bf16 %v2258, %v2255
    %v2445 = vpack.c.bf16 %v2259, %v2256
    %v2446 = vpack.c.bf16 %v2260, %v2257
    %v2447 = vpack.c.bf16 %v2264, %v2261
    %v2448 = vpack.c.bf16 %v2265, %v2262
    %v2449 = vpack.c.bf16 %v2266, %v2263
    %v2450 = vpack.c.bf16 %v2270, %v2267
    %v2451 = vpack.c.bf16 %v2271, %v2268
    %v2452 = vpack.c.bf16 %v2272, %v2269
    %v2453 = vpack.c.bf16 %v2276, %v2273
    %v2454 = vpack.c.bf16 %v2277, %v2274
    %v2455 = vpack.c.bf16 %v2278, %v2275
    %v2456 = vpack.c.bf16 %v2282, %v2279
    %v2457 = vpack.c.bf16 %v2283, %v2280
    %v2458 = vpack.c.bf16 %v2284, %v2281
    %v2459 = vpack.c.bf16 %v2288, %v2285
    %v2460 = vpack.c.bf16 %v2289, %v2286
    %v2461 = vpack.c.bf16 %v2290, %v2287
    %v2462 = vpack.c.bf16 %v2294, %v2291
    %v2463 = vpack.c.bf16 %v2295, %v2292
    %v2464 = vpack.c.bf16 %v2296, %v2293
    %v2465 = vpack.c.bf16 %v2300, %v2297
    %v2466 = vpack.c.bf16 %v2301, %v2298
    %v2467 = vpack.c.bf16 %v2302, %v2299
    %v2468 = vpack.c.bf16 %v2306, %v2303
    %v2469 = vpack.c.bf16 %v2307, %v2304
    %v2470 = vpack.c.bf16 %v2308, %v2305
    %v2471 = vpack.c.bf16 %v2312, %v2309
    %v2472 = vpack.c.bf16 %v2313, %v2310
    %v2473 = vpack.c.bf16 %v2314, %v2311
    %v2474 = vpack.c.bf16 %v2318, %v2315
    %v2475 = vpack.c.bf16 %v2319, %v2316
    %v2476 = vpack.c.bf16 %v2320, %v2317
    %v2477 = vpack.c.bf16 %v2324, %v2321
    %v2478 = vpack.c.bf16 %v2325, %v2322
    %v2479 = vpack.c.bf16 %v2326, %v2323
    %v2480 = vpack.c.bf16 %v2330, %v2327
    %v2481 = vpack.c.bf16 %v2331, %v2328
    %v2482 = vpack.c.bf16 %v2332, %v2329
    %v2483 = vpack.c.bf16 %v2336, %v2333
    %v2484 = vpack.c.bf16 %v2337, %v2334
    %v2485 = vpack.c.bf16 %v2338, %v2335
    %v2486 = vpack.c.bf16 %v2342, %v2339
    %v2487 = vpack.c.bf16 %v2343, %v2340
    %v2488 = vpack.c.bf16 %v2344, %v2341
    %v2489 = vpack.c.bf16 %v2348, %v2345
    %v2490 = vpack.c.bf16 %v2349, %v2346
    %v2491 = vpack.c.bf16 %v2350, %v2347
    %v2492 = vpack.c.bf16 %v2354, %v2351
    %v2493 = vpack.c.bf16 %v2355, %v2352
    %v2494 = vpack.c.bf16 %v2356, %v2353
    %v2495 = vpack.c.bf16 %v2360, %v2357
    %v2496 = vpack.c.bf16 %v2361, %v2358
    %v2497 = vpack.c.bf16 %v2362, %v2359
    %v2498 = vpack.c.bf16 %v2366, %v2363
    %v2499 = vpack.c.bf16 %v2367, %v2364
    %v2500 = vpack.c.bf16 %v2368, %v2365
    %v2501 = vpack.c.bf16 %v2372, %v2369
    %v2502 = vpack.c.bf16 %v2373, %v2370
    %v2503 = vpack.c.bf16 %v2374, %v2371
    %v2504 = vpack.c.bf16 %v2378, %v2375
    %v2505 = vpack.c.bf16 %v2379, %v2376
    %v2506 = vpack.c.bf16 %v2380, %v2377
    %v2507 = vpack.c.bf16 %v2384, %v2381
    %v2508 = vpack.c.bf16 %v2385, %v2382
    %v2509 = vpack.c.bf16 %v2386, %v2383
    %v2510 = vpack.c.bf16 %v2390, %v2387
    %v2511 = vpack.c.bf16 %v2391, %v2388
    %v2512 = vpack.c.bf16 %v2392, %v2389
    %v2513 = vpack.c.bf16 %v2396, %v2393
    %v2514 = vpack.c.bf16 %v2397, %v2394
    %v2515 = vpack.c.bf16 %v2398, %v2395
    %v2516 = vpack.c.bf16 %v2402, %v2399
    %v2517 = vpack.c.bf16 %v2403, %v2400
    %v2518 = vpack.c.bf16 %v2404, %v2401
    %v2519 = vpack.c.bf16 %v2408, %v2405
    %v2520 = vpack.c.bf16 %v2409, %v2406
    %v2521 = vpack.c.bf16 %v2410, %v2407
    %v2522 = vpack.c.bf16 %v2414, %v2411
    %v2523 = vpack.c.bf16 %v2415, %v2412
    %v2524 = vpack.c.bf16 %v2416, %v2413
    %v2525 = vpack.c.bf16 %v2420, %v2417
    %v2526 = vpack.c.bf16 %v2421, %v2418
    %v2527 = vpack.c.bf16 %v2422, %v2419
    %v2528 = vpack.c.bf16 %v2426, %v2423
    %v2529 = vpack.c.bf16 %v2427, %v2424
    %v2530 = vpack.c.bf16 %v2428, %v2425
    %v2531 = vpack.c.bf16 %v2432, %v2429
    %v2532 = vpack.c.bf16 %v2433, %v2430
    %v2533 = vpack.c.bf16 %v2434, %v2431
    %v2534 = vpack.c.bf16 %v2438, %v2435
    %v2535 = vpack.c.bf16 %v2439, %v2436
    %v2536 = vpack.c.bf16 %v2440, %v2437
    %v2633 = vunpack.c.l.b16 %v2441
    %v2634 = vunpack.c.l.b16 %v2442
    %v2635 = vunpack.c.l.b16 %v2443
    %v2636 = vunpack.c.h.b16 %v2441
    %v2637 = vunpack.c.h.b16 %v2442
    %v2638 = vunpack.c.h.b16 %v2443
    %v2639 = vunpack.c.l.b16 %v2444
    %v2640 = vunpack.c.l.b16 %v2445
    %v2641 = vunpack.c.l.b16 %v2446
    %v2642 = vunpack.c.h.b16 %v2444
    %v2643 = vunpack.c.h.b16 %v2445
    %v2644 = vunpack.c.h.b16 %v2446
    %v2645 = vunpack.c.l.b16 %v2447
    %v2646 = vunpack.c.l.b16 %v2448
    %v2647 = vunpack.c.l.b16 %v2449
    %v2648 = vunpack.c.h.b16 %v2447
    %v2649 = vunpack.c.h.b16 %v2448
    %v2650 = vunpack.c.h.b16 %v2449
    %v2651 = vunpack.c.l.b16 %v2450
    %v2652 = vunpack.c.l.b16 %v2451
    %v2653 = vunpack.c.l.b16 %v2452
    %v2654 = vunpack.c.h.b16 %v2450
    %v2655 = vunpack.c.h.b16 %v2451
    %v2656 = vunpack.c.h.b16 %v2452
    %v2657 = vunpack.c.l.b16 %v2453
    %v2658 = vunpack.c.l.b16 %v2454
    %v2659 = vunpack.c.l.b16 %v2455
    %v2660 = vunpack.c.h.b16 %v2453
    %v2661 = vunpack.c.h.b16 %v2454
    %v2662 = vunpack.c.h.b16 %v2455
    %v2663 = vunpack.c.l.b16 %v2456
    %v2664 = vunpack.c.l.b16 %v2457
    %v2665 = vunpack.c.l.b16 %v2458
    %v2666 = vunpack.c.h.b16 %v2456
    %v2667 = vunpack.c.h.b16 %v2457
    %v2668 = vunpack.c.h.b16 %v2458
    %v2669 = vunpack.c.l.b16 %v2459
    %v2670 = vunpack.c.l.b16 %v2460
    %v2671 = vunpack.c.l.b16 %v2461
    %v2672 = vunpack.c.h.b16 %v2459
    %v2673 = vunpack.c.h.b16 %v2460
    %v2674 = vunpack.c.h.b16 %v2461
    %v2675 = vunpack.c.l.b16 %v2462
    %v2676 = vunpack.c.l.b16 %v2463
    %v2677 = vunpack.c.l.b16 %v2464
    %v2678 = vunpack.c.h.b16 %v2462
    %v2679 = vunpack.c.h.b16 %v2463
    %v2680 = vunpack.c.h.b16 %v2464
    %v2681 = vunpack.c.l.b16 %v2465
    %v2682 = vunpack.c.l.b16 %v2466
    %v2683 = vunpack.c.l.b16 %v2467
    %v2684 = vunpack.c.h.b16 %v2465
    %v2685 = vunpack.c.h.b16 %v2466
    %v2686 = vunpack.c.h.b16 %v2467
    %v2687 = vunpack.c.l.b16 %v2468
    %v2688 = vunpack.c.l.b16 %v2469
    %v2689 = vunpack.c.l.b16 %v2470
    %v2690 = vunpack.c.h.b16 %v2468
    %v2691 = vunpack.c.h.b16 %v2469
    %v2692 = vunpack.c.h.b16 %v2470
    %v2693 = vunpack.c.l.b16 %v2471
    %v2694 = vunpack.c.l.b16 %v2472
    %v2695 = vunpack.c.l.b16 %v2473
    %v2696 = vunpack.c.h.b16 %v2471
    %v2697 = vunpack.c.h.b16 %v2472
    %v2698 = vunpack.c.h.b16 %v2473
    %v2699 = vunpack.c.l.b16 %v2474
    %v2700 = vunpack.c.l.b16 %v2475
    %v2701 = vunpack.c.l.b16 %v2476
    %v2702 = vunpack.c.h.b16 %v2474
    %v2703 = vunpack.c.h.b16 %v2475
    %v2704 = vunpack.c.h.b16 %v2476
    %v2705 = vunpack.c.l.b16 %v2477
    %v2706 = vunpack.c.l.b16 %v2478
    %v2707 = vunpack.c.l.b16 %v2479
    %v2708 = vunpack.c.h.b16 %v2477
    %v2709 = vunpack.c.h.b16 %v2478
    %v2710 = vunpack.c.h.b16 %v2479
    %v2711 = vunpack.c.l.b16 %v2480
    %v2712 = vunpack.c.l.b16 %v2481
    %v2713 = vunpack.c.l.b16 %v2482
    %v2714 = vunpack.c.h.b16 %v2480
    %v2715 = vunpack.c.h.b16 %v2481
    %v2716 = vunpack.c.h.b16 %v2482
    %v2717 = vunpack.c.l.b16 %v2483
    %v2718 = vunpack.c.l.b16 %v2484
    %v2719 = vunpack.c.l.b16 %v2485
    %v2720 = vunpack.c.h.b16 %v2483
    %v2721 = vunpack.c.h.b16 %v2484
    %v2722 = vunpack.c.h.b16 %v2485
    %v2723 = vunpack.c.l.b16 %v2486
    %v2724 = vunpack.c.l.b16 %v2487
    %v2725 = vunpack.c.l.b16 %v2488
    %v2726 = vunpack.c.h.b16 %v2486
    %v2727 = vunpack.c.h.b16 %v2487
    %v2728 = vunpack.c.h.b16 %v2488
    %v2729 = vunpack.c.l.b16 %v2489
    %v2730 = vunpack.c.l.b16 %v2490
    %v2731 = vunpack.c.l.b16 %v2491
    %v2732 = vunpack.c.h.b16 %v2489
    %v2733 = vunpack.c.h.b16 %v2490
    %v2734 = vunpack.c.h.b16 %v2491
    %v2735 = vunpack.c.l.b16 %v2492
    %v2736 = vunpack.c.l.b16 %v2493
    %v2737 = vunpack.c.l.b16 %v2494
    %v2738 = vunpack.c.h.b16 %v2492
    %v2739 = vunpack.c.h.b16 %v2493
    %v2740 = vunpack.c.h.b16 %v2494
    %v2741 = vunpack.c.l.b16 %v2495
    %v2742 = vunpack.c.l.b16 %v2496
    %v2743 = vunpack.c.l.b16 %v2497
    %v2744 = vunpack.c.h.b16 %v2495
    %v2745 = vunpack.c.h.b16 %v2496
    %v2746 = vunpack.c.h.b16 %v2497
    %v2747 = vunpack.c.l.b16 %v2498
    %v2748 = vunpack.c.l.b16 %v2499
    %v2749 = vunpack.c.l.b16 %v2500
    %v2750 = vunpack.c.h.b16 %v2498
    %v2751 = vunpack.c.h.b16 %v2499
    %v2752 = vunpack.c.h.b16 %v2500
    %v2753 = vunpack.c.l.b16 %v2501
    %v2754 = vunpack.c.l.b16 %v2502
    %v2755 = vunpack.c.l.b16 %v2503
    %v2756 = vunpack.c.h.b16 %v2501
    %v2757 = vunpack.c.h.b16 %v2502
    %v2758 = vunpack.c.h.b16 %v2503
    %v2759 = vunpack.c.l.b16 %v2504
    %v2760 = vunpack.c.l.b16 %v2505
    %v2761 = vunpack.c.l.b16 %v2506
    %v2762 = vunpack.c.h.b16 %v2504
    %v2763 = vunpack.c.h.b16 %v2505
    %v2764 = vunpack.c.h.b16 %v2506
    %v2765 = vunpack.c.l.b16 %v2507
    %v2766 = vunpack.c.l.b16 %v2508
    %v2767 = vunpack.c.l.b16 %v2509
    %v2768 = vunpack.c.h.b16 %v2507
    %v2769 = vunpack.c.h.b16 %v2508
    %v2770 = vunpack.c.h.b16 %v2509
    %v2771 = vunpack.c.l.b16 %v2510
    %v2772 = vunpack.c.l.b16 %v2511
    %v2773 = vunpack.c.l.b16 %v2512
    %v2774 = vunpack.c.h.b16 %v2510
    %v2775 = vunpack.c.h.b16 %v2511
    %v2776 = vunpack.c.h.b16 %v2512
    %v2777 = vunpack.c.l.b16 %v2513
    %v2778 = vunpack.c.l.b16 %v2514
    %v2779 = vunpack.c.l.b16 %v2515
    %v2780 = vunpack.c.h.b16 %v2513
    %v2781 = vunpack.c.h.b16 %v2514
    %v2782 = vunpack.c.h.b16 %v2515
    %v2783 = vunpack.c.l.b16 %v2516
    %v2784 = vunpack.c.l.b16 %v2517
    %v2785 = vunpack.c.l.b16 %v2518
    %v2786 = vunpack.c.h.b16 %v2516
    %v2787 = vunpack.c.h.b16 %v2517
    %v2788 = vunpack.c.h.b16 %v2518
    %v2789 = vunpack.c.l.b16 %v2519
    %v2790 = vunpack.c.l.b16 %v2520
    %v2791 = vunpack.c.l.b16 %v2521
    %v2792 = vunpack.c.h.b16 %v2519
    %v2793 = vunpack.c.h.b16 %v2520
    %v2794 = vunpack.c.h.b16 %v2521
    %v2795 = vunpack.c.l.b16 %v2522
    %v2796 = vunpack.c.l.b16 %v2523
    %v2797 = vunpack.c.l.b16 %v2524
    %v2798 = vunpack.c.h.b16 %v2522
    %v2799 = vunpack.c.h.b16 %v2523
    %v2800 = vunpack.c.h.b16 %v2524
    %v2801 = vunpack.c.l.b16 %v2525
    %v2802 = vunpack.c.l.b16 %v2526
    %v2803 = vunpack.c.l.b16 %v2527
    %v2804 = vunpack.c.h.b16 %v2525
    %v2805 = vunpack.c.h.b16 %v2526
    %v2806 = vunpack.c.h.b16 %v2527
    %v2807 = vunpack.c.l.b16 %v2528
    %v2808 = vunpack.c.l.b16 %v2529
    %v2809 = vunpack.c.l.b16 %v2530
    %v2810 = vunpack.c.h.b16 %v2528
    %v2811 = vunpack.c.h.b16 %v2529
    %v2812 = vunpack.c.h.b16 %v2530
    %v2813 = vunpack.c.l.b16 %v2531
    %v2814 = vunpack.c.l.b16 %v2532
    %v2815 = vunpack.c.l.b16 %v2533
    %v2816 = vunpack.c.h.b16 %v2531
    %v2817 = vunpack.c.h.b16 %v2532
    %v2818 = vunpack.c.h.b16 %v2533
    %v2819 = vunpack.c.l.b16 %v2534
    %v2820 = vunpack.c.l.b16 %v2535
    %v2821 = vunpack.c.l.b16 %v2536
    %v2822 = vunpack.c.h.b16 %v2534
    %v2823 = vunpack.c.h.b16 %v2535
    %v2824 = vunpack.c.h.b16 %v2536
    %v2825 = vpack.c.b16 %v2634, %v2633
    %v2826 = vpack.c.b16 %v2635, %v2635
    %v2827 = vpack.c.b16 %v2637, %v2636
    %v2828 = vpack.c.b16 %v2638, %v2638
    %v2829 = vpack.c.b16 %v2640, %v2639
    %v2830 = vpack.c.b16 %v2641, %v2641
    %v2831 = vpack.c.b16 %v2643, %v2642
    %v2832 = vpack.c.b16 %v2644, %v2644
    %v2833 = vpack.c.b16 %v2646, %v2645
    %v2834 = vpack.c.b16 %v2647, %v2647
    %v2835 = vpack.c.b16 %v2649, %v2648
    %v2836 = vpack.c.b16 %v2650, %v2650
    %v2837 = vpack.c.b16 %v2652, %v2651
    %v2838 = vpack.c.b16 %v2653, %v2653
    %v2839 = vpack.c.b16 %v2655, %v2654
    %v2840 = vpack.c.b16 %v2656, %v2656
    %v2841 = vpack.c.b16 %v2658, %v2657
    %v2842 = vpack.c.b16 %v2659, %v2659
    %v2843 = vpack.c.b16 %v2661, %v2660
    %v2844 = vpack.c.b16 %v2662, %v2662
    %v2845 = vpack.c.b16 %v2664, %v2663
    %v2846 = vpack.c.b16 %v2665, %v2665
    %v2847 = vpack.c.b16 %v2667, %v2666
    %v2848 = vpack.c.b16 %v2668, %v2668
    %v2849 = vpack.c.b16 %v2670, %v2669
    %v2850 = vpack.c.b16 %v2671, %v2671
    %v2851 = vpack.c.b16 %v2673, %v2672
    %v2852 = vpack.c.b16 %v2674, %v2674
    %v2853 = vpack.c.b16 %v2676, %v2675
    %v2854 = vpack.c.b16 %v2677, %v2677
    %v2855 = vpack.c.b16 %v2679, %v2678
    %v2856 = vpack.c.b16 %v2680, %v2680
    %v2857 = vpack.c.b16 %v2682, %v2681
    %v2858 = vpack.c.b16 %v2683, %v2683
    %v2859 = vpack.c.b16 %v2685, %v2684
    %v2860 = vpack.c.b16 %v2686, %v2686
    %v2861 = vpack.c.b16 %v2688, %v2687
    %v2862 = vpack.c.b16 %v2689, %v2689
    %v2863 = vpack.c.b16 %v2691, %v2690
    %v2864 = vpack.c.b16 %v2692, %v2692
    %v2865 = vpack.c.b16 %v2694, %v2693
    %v2866 = vpack.c.b16 %v2695, %v2695
    %v2867 = vpack.c.b16 %v2697, %v2696
    %v2868 = vpack.c.b16 %v2698, %v2698
    %v2869 = vpack.c.b16 %v2700, %v2699
    %v2870 = vpack.c.b16 %v2701, %v2701
    %v2871 = vpack.c.b16 %v2703, %v2702
    %v2872 = vpack.c.b16 %v2704, %v2704
    %v2873 = vpack.c.b16 %v2706, %v2705
    %v2874 = vpack.c.b16 %v2707, %v2707
    %v2875 = vpack.c.b16 %v2709, %v2708
    %v2876 = vpack.c.b16 %v2710, %v2710
    %v2877 = vpack.c.b16 %v2712, %v2711
    %v2878 = vpack.c.b16 %v2713, %v2713
    %v2879 = vpack.c.b16 %v2715, %v2714
    %v2880 = vpack.c.b16 %v2716, %v2716
    %v2881 = vpack.c.b16 %v2718, %v2717
    %v2882 = vpack.c.b16 %v2719, %v2719
    %v2883 = vpack.c.b16 %v2721, %v2720
    %v2884 = vpack.c.b16 %v2722, %v2722
    %v2885 = vpack.c.b16 %v2724, %v2723
    %v2886 = vpack.c.b16 %v2725, %v2725
    %v2887 = vpack.c.b16 %v2727, %v2726
    %v2888 = vpack.c.b16 %v2728, %v2728
    %v2889 = vpack.c.b16 %v2730, %v2729
    %v2890 = vpack.c.b16 %v2731, %v2731
    %v2891 = vpack.c.b16 %v2733, %v2732
    %v2892 = vpack.c.b16 %v2734, %v2734
    %v2893 = vpack.c.b16 %v2736, %v2735
    %v2894 = vpack.c.b16 %v2737, %v2737
    %v2895 = vpack.c.b16 %v2739, %v2738
    %v2896 = vpack.c.b16 %v2740, %v2740
    %v2897 = vpack.c.b16 %v2742, %v2741
    %v2898 = vpack.c.b16 %v2743, %v2743
    %v2899 = vpack.c.b16 %v2745, %v2744
    %v2900 = vpack.c.b16 %v2746, %v2746
    %v2901 = vpack.c.b16 %v2748, %v2747
    %v2902 = vpack.c.b16 %v2749, %v2749
    %v2903 = vpack.c.b16 %v2751, %v2750
    %v2904 = vpack.c.b16 %v2752, %v2752
    %v2905 = vpack.c.b16 %v2754, %v2753
    %v2906 = vpack.c.b16 %v2755, %v2755
    %v2907 = vpack.c.b16 %v2757, %v2756
    %v2908 = vpack.c.b16 %v2758, %v2758
    %v2909 = vpack.c.b16 %v2760, %v2759
    %v2910 = vpack.c.b16 %v2761, %v2761
    %v2911 = vpack.c.b16 %v2763, %v2762
    %v2912 = vpack.c.b16 %v2764, %v2764
    %v2913 = vpack.c.b16 %v2766, %v2765
    %v2914 = vpack.c.b16 %v2767, %v2767
    %v2915 = vpack.c.b16 %v2769, %v2768
    %v2916 = vpack.c.b16 %v2770, %v2770
    %v2917 = vpack.c.b16 %v2772, %v2771
    %v2918 = vpack.c.b16 %v2773, %v2773
    %v2919 = vpack.c.b16 %v2775, %v2774
    %v2920 = vpack.c.b16 %v2776, %v2776
    %v2921 = vpack.c.b16 %v2778, %v2777
    %v2922 = vpack.c.b16 %v2779, %v2779
    %v2923 = vpack.c.b16 %v2781, %v2780
    %v2924 = vpack.c.b16 %v2782, %v2782
    %v2925 = vpack.c.b16 %v2784, %v2783
    %v2926 = vpack.c.b16 %v2785, %v2785
    %v2927 = vpack.c.b16 %v2787, %v2786
    %v2928 = vpack.c.b16 %v2788, %v2788
    %v2929 = vpack.c.b16 %v2790, %v2789
    %v2930 = vpack.c.b16 %v2791, %v2791
    %v2931 = vpack.c.b16 %v2793, %v2792
    %v2932 = vpack.c.b16 %v2794, %v2794
    %v2933 = vpack.c.b16 %v2796, %v2795
    %v2934 = vpack.c.b16 %v2797, %v2797
    %v2935 = vpack.c.b16 %v2799, %v2798
    %v2936 = vpack.c.b16 %v2800, %v2800
    %v2937 = vpack.c.b16 %v2802, %v2801
    %v2938 = vpack.c.b16 %v2803, %v2803
    %v2939 = vpack.c.b16 %v2805, %v2804
    %v2940 = vpack.c.b16 %v2806, %v2806
    %v2941 = vpack.c.b16 %v2808, %v2807
    %v2942 = vpack.c.b16 %v2809, %v2809
    %v2943 = vpack.c.b16 %v2811, %v2810
    %v2944 = vpack.c.b16 %v2812, %v2812
    %v2945 = vpack.c.b16 %v2814, %v2813
    %v2946 = vpack.c.b16 %v2815, %v2815
    %v2947 = vpack.c.b16 %v2817, %v2816
    %v2948 = vpack.c.b16 %v2818, %v2818
    %v2949 = vpack.c.b16 %v2820, %v2819
    %v2950 = vpack.c.b16 %v2821, %v2821
    %v2951 = vpack.c.b16 %v2823, %v2822
    %v2952 = vpack.c.b16 %v2824, %v2824
    %3081 = vst [vmem:[%s3] sm:$0xff] %v2825
    %3082 = vst [vmem:[%s3 + $0x8] sm:$0xf] %v2826
    %3083 = vst [vmem:[%s3 + $0xc] sm:$0xff] %v2827
    %3084 = vst [vmem:[%s3 + $0x14] sm:$0xf] %v2828
    %3085 = vst [vmem:[%s3 + $0x18] sm:$0xff] %v2829
    %3086 = vst [vmem:[%s3 + $0x20] sm:$0xf] %v2830
    %3087 = vst [vmem:[%s3 + $0x24] sm:$0xff] %v2831
    %3088 = vst [vmem:[%s3 + $0x2c] sm:$0xf] %v2832
    %3089 = vst [vmem:[%s3 + $0x30] sm:$0xff] %v2833
    %3090 = vst [vmem:[%s3 + $0x38] sm:$0xf] %v2834
    %3091 = vst [vmem:[%s3 + $0x3c] sm:$0xff] %v2835
    %3092 = vst [vmem:[%s3 + $0x44] sm:$0xf] %v2836
    %3093 = vst [vmem:[%s3 + $0x48] sm:$0xff] %v2837
    %3094 = vst [vmem:[%s3 + $0x50] sm:$0xf] %v2838
    %3095 = vst [vmem:[%s3 + $0x54] sm:$0xff] %v2839
    %3096 = vst [vmem:[%s3 + $0x5c] sm:$0xf] %v2840
    %3097 = vst [vmem:[%s3 + $0x60] sm:$0xff] %v2841
    %3098 = vst [vmem:[%s3 + $0x68] sm:$0xf] %v2842
    %3099 = vst [vmem:[%s3 + $0x6c] sm:$0xff] %v2843
    %3100 = vst [vmem:[%s3 + $0x74] sm:$0xf] %v2844
    %3101 = vst [vmem:[%s3 + $0x78] sm:$0xff] %v2845
    %3102 = vst [vmem:[%s3 + $0x80] sm:$0xf] %v2846
    %3103 = vst [vmem:[%s3 + $0x84] sm:$0xff] %v2847
    %3104 = vst [vmem:[%s3 + $0x8c] sm:$0xf] %v2848
    %3105 = vst [vmem:[%s3 + $0x90] sm:$0xff] %v2849
    %3106 = vst [vmem:[%s3 + $0x98] sm:$0xf] %v2850
    %3107 = vst [vmem:[%s3 + $0x9c] sm:$0xff] %v2851
    %3108 = vst [vmem:[%s3 + $0xa4] sm:$0xf] %v2852
    %3109 = vst [vmem:[%s3 + $0xa8] sm:$0xff] %v2853
    %3110 = vst [vmem:[%s3 + $0xb0] sm:$0xf] %v2854
    %3111 = vst [vmem:[%s3 + $0xb4] sm:$0xff] %v2855
    %3112 = vst [vmem:[%s3 + $0xbc] sm:$0xf] %v2856
    %3113 = vst [vmem:[%s3 + $0xc0] sm:$0xff] %v2857
    %3114 = vst [vmem:[%s3 + $0xc8] sm:$0xf] %v2858
    %3115 = vst [vmem:[%s3 + $0xcc] sm:$0xff] %v2859
    %3116 = vst [vmem:[%s3 + $0xd4] sm:$0xf] %v2860
    %3117 = vst [vmem:[%s3 + $0xd8] sm:$0xff] %v2861
    %3118 = vst [vmem:[%s3 + $0xe0] sm:$0xf] %v2862
    %3119 = vst [vmem:[%s3 + $0xe4] sm:$0xff] %v2863
    %3120 = vst [vmem:[%s3 + $0xec] sm:$0xf] %v2864
    %3121 = vst [vmem:[%s3 + $0xf0] sm:$0xff] %v2865
    %3122 = vst [vmem:[%s3 + $0xf8] sm:$0xf] %v2866
    %3123 = vst [vmem:[%s3 + $0xfc] sm:$0xff] %v2867
    %3124 = vst [vmem:[%s3 + $0x104] sm:$0xf] %v2868
    %3125 = vst [vmem:[%s3 + $0x108] sm:$0xff] %v2869
    %3126 = vst [vmem:[%s3 + $0x110] sm:$0xf] %v2870
    %3127 = vst [vmem:[%s3 + $0x114] sm:$0xff] %v2871
    %3128 = vst [vmem:[%s3 + $0x11c] sm:$0xf] %v2872
    %3129 = vst [vmem:[%s3 + $0x120] sm:$0xff] %v2873
    %3130 = vst [vmem:[%s3 + $0x128] sm:$0xf] %v2874
    %3131 = vst [vmem:[%s3 + $0x12c] sm:$0xff] %v2875
    %3132 = vst [vmem:[%s3 + $0x134] sm:$0xf] %v2876
    %3133 = vst [vmem:[%s3 + $0x138] sm:$0xff] %v2877
    %3134 = vst [vmem:[%s3 + $0x140] sm:$0xf] %v2878
    %3135 = vst [vmem:[%s3 + $0x144] sm:$0xff] %v2879
    %3136 = vst [vmem:[%s3 + $0x14c] sm:$0xf] %v2880
    %3137 = vst [vmem:[%s3 + $0x150] sm:$0xff] %v2881
    %3138 = vst [vmem:[%s3 + $0x158] sm:$0xf] %v2882
    %3139 = vst [vmem:[%s3 + $0x15c] sm:$0xff] %v2883
    %3140 = vst [vmem:[%s3 + $0x164] sm:$0xf] %v2884
    %3141 = vst [vmem:[%s3 + $0x168] sm:$0xff] %v2885
    %3142 = vst [vmem:[%s3 + $0x170] sm:$0xf] %v2886
    %3143 = vst [vmem:[%s3 + $0x174] sm:$0xff] %v2887
    %3144 = vst [vmem:[%s3 + $0x17c] sm:$0xf] %v2888
    %3145 = vst [vmem:[%s3 + $0x180] sm:$0xff] %v2889
    %3146 = vst [vmem:[%s3 + $0x188] sm:$0xf] %v2890
    %3147 = vst [vmem:[%s3 + $0x18c] sm:$0xff] %v2891
    %3148 = vst [vmem:[%s3 + $0x194] sm:$0xf] %v2892
    %3149 = vst [vmem:[%s3 + $0x198] sm:$0xff] %v2893
    %3150 = vst [vmem:[%s3 + $0x1a0] sm:$0xf] %v2894
    %3151 = vst [vmem:[%s3 + $0x1a4] sm:$0xff] %v2895
    %3152 = vst [vmem:[%s3 + $0x1ac] sm:$0xf] %v2896
    %3153 = vst [vmem:[%s3 + $0x1b0] sm:$0xff] %v2897
    %3154 = vst [vmem:[%s3 + $0x1b8] sm:$0xf] %v2898
    %3155 = vst [vmem:[%s3 + $0x1bc] sm:$0xff] %v2899
    %3156 = vst [vmem:[%s3 + $0x1c4] sm:$0xf] %v2900
    %3157 = vst [vmem:[%s3 + $0x1c8] sm:$0xff] %v2901
    %3158 = vst [vmem:[%s3 + $0x1d0] sm:$0xf] %v2902
    %3159 = vst [vmem:[%s3 + $0x1d4] sm:$0xff] %v2903
    %3160 = vst [vmem:[%s3 + $0x1dc] sm:$0xf] %v2904
    %3161 = vst [vmem:[%s3 + $0x1e0] sm:$0xff] %v2905
    %3162 = vst [vmem:[%s3 + $0x1e8] sm:$0xf] %v2906
    %3163 = vst [vmem:[%s3 + $0x1ec] sm:$0xff] %v2907
    %3164 = vst [vmem:[%s3 + $0x1f4] sm:$0xf] %v2908
    %3165 = vst [vmem:[%s3 + $0x1f8] sm:$0xff] %v2909
    %3166 = vst [vmem:[%s3 + $0x200] sm:$0xf] %v2910
    %3167 = vst [vmem:[%s3 + $0x204] sm:$0xff] %v2911
    %3168 = vst [vmem:[%s3 + $0x20c] sm:$0xf] %v2912
    %3169 = vst [vmem:[%s3 + $0x210] sm:$0xff] %v2913
    %3170 = vst [vmem:[%s3 + $0x218] sm:$0xf] %v2914
    %3171 = vst [vmem:[%s3 + $0x21c] sm:$0xff] %v2915
    %3172 = vst [vmem:[%s3 + $0x224] sm:$0xf] %v2916
    %3173 = vst [vmem:[%s3 + $0x228] sm:$0xff] %v2917
    %3174 = vst [vmem:[%s3 + $0x230] sm:$0xf] %v2918
    %3175 = vst [vmem:[%s3 + $0x234] sm:$0xff] %v2919
    %3176 = vst [vmem:[%s3 + $0x23c] sm:$0xf] %v2920
    %3177 = vst [vmem:[%s3 + $0x240] sm:$0xff] %v2921
    %3178 = vst [vmem:[%s3 + $0x248] sm:$0xf] %v2922
    %3179 = vst [vmem:[%s3 + $0x24c] sm:$0xff] %v2923
    %3180 = vst [vmem:[%s3 + $0x254] sm:$0xf] %v2924
    %3181 = vst [vmem:[%s3 + $0x258] sm:$0xff] %v2925
    %3182 = vst [vmem:[%s3 + $0x260] sm:$0xf] %v2926
    %3183 = vst [vmem:[%s3 + $0x264] sm:$0xff] %v2927
    %3184 = vst [vmem:[%s3 + $0x26c] sm:$0xf] %v2928
    %3185 = vst [vmem:[%s3 + $0x270] sm:$0xff] %v2929
    %3186 = vst [vmem:[%s3 + $0x278] sm:$0xf] %v2930
    %3187 = vst [vmem:[%s3 + $0x27c] sm:$0xff] %v2931
    %3188 = vst [vmem:[%s3 + $0x284] sm:$0xf] %v2932
    %3189 = vst [vmem:[%s3 + $0x288] sm:$0xff] %v2933
    %3190 = vst [vmem:[%s3 + $0x290] sm:$0xf] %v2934
    %3191 = vst [vmem:[%s3 + $0x294] sm:$0xff] %v2935
    %3192 = vst [vmem:[%s3 + $0x29c] sm:$0xf] %v2936
    %3193 = vst [vmem:[%s3 + $0x2a0] sm:$0xff] %v2937
    %3194 = vst [vmem:[%s3 + $0x2a8] sm:$0xf] %v2938
    %3195 = vst [vmem:[%s3 + $0x2ac] sm:$0xff] %v2939
    %3196 = vst [vmem:[%s3 + $0x2b4] sm:$0xf] %v2940
    %3197 = vst [vmem:[%s3 + $0x2b8] sm:$0xff] %v2941
    %3198 = vst [vmem:[%s3 + $0x2c0] sm:$0xf] %v2942
    %3199 = vst [vmem:[%s3 + $0x2c4] sm:$0xff] %v2943
    %3200 = vst [vmem:[%s3 + $0x2cc] sm:$0xf] %v2944
    %3201 = vst [vmem:[%s3 + $0x2d0] sm:$0xff] %v2945
    %3202 = vst [vmem:[%s3 + $0x2d8] sm:$0xf] %v2946
    %3203 = vst [vmem:[%s3 + $0x2dc] sm:$0xff] %v2947
    %3204 = vst [vmem:[%s3 + $0x2e4] sm:$0xf] %v2948
    %3205 = vst [vmem:[%s3 + $0x2e8] sm:$0xff] %v2949
    %3206 = vst [vmem:[%s3 + $0x2f0] sm:$0xf] %v2950
    %3207 = vst [vmem:[%s3 + $0x2f4] sm:$0xff] %v2951
    %3208 = vst [vmem:[%s3 + $0x2fc] sm:$0xf] %v2952
  $region21: #{_lambda_.6} parent=0 // pred_fallthru
    _
  // Predicated region
  $region22: #{_lambda_.6} parent=0 // pred_check
    _
  $region23: #{_lambda_.6} parent=0 // pred_check_branch
    %3210 = sbr.rel (0) target = $region25
  $region24: #{_lambda_.6} parent=0 // pred_region
    _
  $region25: #{_lambda_.6} parent=0 // pred_fallthru
    _
  // Predicated region
  $region26: #{_lambda_.6} parent=0 // pred_check
    _
  $region27: #{_lambda_.6} parent=0 // pred_check_branch
    %3212 = sbr.rel (0) target = $region29
  $region28: #{_lambda_.6} parent=0 // pred_region
    _
  $region29: #{_lambda_.6} parent=0 // pred_fallthru
    _

// kernel: _lambda_.7
$region0: #{_lambda_.7}
  #allocation0 [shape = 'u32[]', space=smem, size = 0x4, offset = 0x4, fixed_abs, tag = 'smem constant byte address 0x4 - core index']
  #allocation1 [shape = 'u32[144,128]{1,0:T(1,128)}', space=vmem, size = 0x12000, scoped, tag = 'internal scratch']
  #allocation2 [shape = 'f32[112,128]{1,0:T(8,128)}', space=vmem, size = 0xe000, scoped, tag = 'scratch operand']
  %s0 = inlined_call_operand.vmem [shape: bf16[112,1152], index: 0, kind: input, shape index: {}]
  %s1 = inlined_call_operand.vmem [shape: bf16[1152,128], index: 1, kind: input, shape index: {}]
  %s2 = inlined_call_operand.vmem [shape: f32[1,128], index: 2, kind: input, shape index: {}]
  %s3 = inlined_call_operand.vmem [shape: f32[112,128], index: 3, kind: output, shape index: {}]
  %s4 = sld [smem:[#allocation0]]
  $region30: #{_lambda_.7} parent=0
    _
  %s6 = ssub.s32 1, %s4
  %s7 = scalar_select 0, %s6, %s4
  // Predicated region
  $region2: #{_lambda_.7} parent=0 // pred_check
    _
  $region3: #{_lambda_.7} parent=0 // pred_check_branch
    %9 = sbr.rel (0) target = $region5
  $region4: #{_lambda_.7} parent=0 // pred_region
    _
  $region5: #{_lambda_.7} parent=0 // pred_fallthru
    _
  // Predicated region
  $region6: #{_lambda_.7} parent=0 // pred_check
    _
  $region7: #{_lambda_.7} parent=0 // pred_check_branch
    %11 = sbr.rel (0) target = $region9
  $region8: #{_lambda_.7} parent=0 // pred_region
    _
  $region9: #{_lambda_.7} parent=0 // pred_fallthru
    _
  // Predicated region
  $region10: #{_lambda_.7} parent=0 // pred_check
    _
  $region11: #{_lambda_.7} parent=0 // pred_check_branch
    %13 = sbr.rel (0) target = $region13
  $region12: #{_lambda_.7} parent=0 // pred_region
    _
  $region13: #{_lambda_.7} parent=0 // pred_fallthru
    _
  %p15 = scmp.eq.s32.totalorder 0, 0
  // Predicated region
  $region14: #{_lambda_.7} parent=0 // pred_check
    %p16 = pneg %p15
  $region15: #{_lambda_.7} parent=0 // pred_check_branch
    %18 = sbr.rel (%p16) target = $region17
  $region16: #{_lambda_.7} parent=0 // pred_region
    %19 = vst [vmem:[#allocation2] sm:$0xff] 0.0
    %20 = vst [vmem:[#allocation2 + $0x8] sm:$0xff] 0.0
    %21 = vst [vmem:[#allocation2 + $0x10] sm:$0xff] 0.0
    %22 = vst [vmem:[#allocation2 + $0x18] sm:$0xff] 0.0
    %23 = vst [vmem:[#allocation2 + $0x20] sm:$0xff] 0.0
    %24 = vst [vmem:[#allocation2 + $0x28] sm:$0xff] 0.0
    %25 = vst [vmem:[#allocation2 + $0x30] sm:$0xff] 0.0
    %26 = vst [vmem:[#allocation2 + $0x38] sm:$0xff] 0.0
    %27 = vst [vmem:[#allocation2 + $0x40] sm:$0xff] 0.0
    %28 = vst [vmem:[#allocation2 + $0x48] sm:$0xff] 0.0
    %29 = vst [vmem:[#allocation2 + $0x50] sm:$0xff] 0.0
    %30 = vst [vmem:[#allocation2 + $0x58] sm:$0xff] 0.0
    %31 = vst [vmem:[#allocation2 + $0x60] sm:$0xff] 0.0
    %32 = vst [vmem:[#allocation2 + $0x68] sm:$0xff] 0.0
  $region17: #{_lambda_.7} parent=0 // pred_fallthru
    _
  %v33 = vld [vmem:[#allocation2] sm:$0xff]
  %v34 = vld [vmem:[#allocation2 + $0x8] sm:$0xff]
  %v35 = vld [vmem:[#allocation2 + $0x10] sm:$0xff]
  %v36 = vld [vmem:[#allocation2 + $0x18] sm:$0xff]
  %v37 = vld [vmem:[#allocation2 + $0x20] sm:$0xff]
  %v38 = vld [vmem:[#allocation2 + $0x28] sm:$0xff]
  %v39 = vld [vmem:[#allocation2 + $0x30] sm:$0xff]
  %v40 = vld [vmem:[#allocation2 + $0x38] sm:$0xff]
  %v41 = vld [vmem:[#allocation2 + $0x40] sm:$0xff]
  %v42 = vld [vmem:[#allocation2 + $0x48] sm:$0xff]
  %v43 = vld [vmem:[#allocation2 + $0x50] sm:$0xff]
  %v44 = vld [vmem:[#allocation2 + $0x58] sm:$0xff]
  %v45 = vld [vmem:[#allocation2 + $0x60] sm:$0xff]
  %v46 = vld [vmem:[#allocation2 + $0x68] sm:$0xff]
  %v47 = vld [vmem:[%s0] sm:$0xff]
  %v48 = vld [vmem:[%s0 + $0x8] sm:$0xff]
  %v49 = vld [vmem:[%s0 + $0x10] sm:$0xff]
  %v50 = vld [vmem:[%s0 + $0x18] sm:$0xff]
  %v51 = vld [vmem:[%s0 + $0x20] sm:$0xf]
  %v52 = vld [vmem:[%s0 + $0x24] sm:$0xff]
  %v53 = vld [vmem:[%s0 + $0x2c] sm:$0xff]
  %v54 = vld [vmem:[%s0 + $0x34] sm:$0xff]
  %v55 = vld [vmem:[%s0 + $0x3c] sm:$0xff]
  %v56 = vld [vmem:[%s0 + $0x44] sm:$0xf]
  %v57 = vld [vmem:[%s0 + $0x48] sm:$0xff]
  %v58 = vld [vmem:[%s0 + $0x50] sm:$0xff]
  %v59 = vld [vmem:[%s0 + $0x58] sm:$0xff]
  %v60 = vld [vmem:[%s0 + $0x60] sm:$0xff]
  %v61 = vld [vmem:[%s0 + $0x68] sm:$0xf]
  %v62 = vld [vmem:[%s0 + $0x6c] sm:$0xff]
  %v63 = vld [vmem:[%s0 + $0x74] sm:$0xff]
  %v64 = vld [vmem:[%s0 + $0x7c] sm:$0xff]
  %v65 = vld [vmem:[%s0 + $0x84] sm:$0xff]
  %v66 = vld [vmem:[%s0 + $0x8c] sm:$0xf]
  %v67 = vld [vmem:[%s0 + $0x90] sm:$0xff]
  %v68 = vld [vmem:[%s0 + $0x98] sm:$0xff]
  %v69 = vld [vmem:[%s0 + $0xa0] sm:$0xff]
  %v70 = vld [vmem:[%s0 + $0xa8] sm:$0xff]
  %v71 = vld [vmem:[%s0 + $0xb0] sm:$0xf]
  %v72 = vld [vmem:[%s0 + $0xb4] sm:$0xff]
  %v73 = vld [vmem:[%s0 + $0xbc] sm:$0xff]
  %v74 = vld [vmem:[%s0 + $0xc4] sm:$0xff]
  %v75 = vld [vmem:[%s0 + $0xcc] sm:$0xff]
  %v76 = vld [vmem:[%s0 + $0xd4] sm:$0xf]
  %v77 = vld [vmem:[%s0 + $0xd8] sm:$0xff]
  %v78 = vld [vmem:[%s0 + $0xe0] sm:$0xff]
  %v79 = vld [vmem:[%s0 + $0xe8] sm:$0xff]
  %v80 = vld [vmem:[%s0 + $0xf0] sm:$0xff]
  %v81 = vld [vmem:[%s0 + $0xf8] sm:$0xf]
  %v82 = vld [vmem:[%s0 + $0xfc] sm:$0xff]
  %v83 = vld [vmem:[%s0 + $0x104] sm:$0xff]
  %v84 = vld [vmem:[%s0 + $0x10c] sm:$0xff]
  %v85 = vld [vmem:[%s0 + $0x114] sm:$0xff]
  %v86 = vld [vmem:[%s0 + $0x11c] sm:$0xf]
  %v87 = vld [vmem:[%s0 + $0x120] sm:$0xff]
  %v88 = vld [vmem:[%s0 + $0x128] sm:$0xff]
  %v89 = vld [vmem:[%s0 + $0x130] sm:$0xff]
  %v90 = vld [vmem:[%s0 + $0x138] sm:$0xff]
  %v91 = vld [vmem:[%s0 + $0x140] sm:$0xf]
  %v92 = vld [vmem:[%s0 + $0x144] sm:$0xff]
  %v93 = vld [vmem:[%s0 + $0x14c] sm:$0xff]
  %v94 = vld [vmem:[%s0 + $0x154] sm:$0xff]
  %v95 = vld [vmem:[%s0 + $0x15c] sm:$0xff]
  %v96 = vld [vmem:[%s0 + $0x164] sm:$0xf]
  %v97 = vld [vmem:[%s0 + $0x168] sm:$0xff]
  %v98 = vld [vmem:[%s0 + $0x170] sm:$0xff]
  %v99 = vld [vmem:[%s0 + $0x178] sm:$0xff]
  %v100 = vld [vmem:[%s0 + $0x180] sm:$0xff]
  %v101 = vld [vmem:[%s0 + $0x188] sm:$0xf]
  %v102 = vld [vmem:[%s0 + $0x18c] sm:$0xff]
  %v103 = vld [vmem:[%s0 + $0x194] sm:$0xff]
  %v104 = vld [vmem:[%s0 + $0x19c] sm:$0xff]
  %v105 = vld [vmem:[%s0 + $0x1a4] sm:$0xff]
  %v106 = vld [vmem:[%s0 + $0x1ac] sm:$0xf]
  %v107 = vld [vmem:[%s0 + $0x1b0] sm:$0xff]
  %v108 = vld [vmem:[%s0 + $0x1b8] sm:$0xff]
  %v109 = vld [vmem:[%s0 + $0x1c0] sm:$0xff]
  %v110 = vld [vmem:[%s0 + $0x1c8] sm:$0xff]
  %v111 = vld [vmem:[%s0 + $0x1d0] sm:$0xf]
  %v112 = vld [vmem:[%s0 + $0x1d4] sm:$0xff]
  %v113 = vld [vmem:[%s0 + $0x1dc] sm:$0xff]
  %v114 = vld [vmem:[%s0 + $0x1e4] sm:$0xff]
  %v115 = vld [vmem:[%s0 + $0x1ec] sm:$0xff]
  %v116 = vld [vmem:[%s0 + $0x1f4] sm:$0xf]
  %v117 = vld [vmem:[%s1] sm:$0xf]
  %v118 = vld [vmem:[%s1 + $0x4] sm:$0xf]
  %v119 = vld [vmem:[%s1 + $0x8] sm:$0xf]
  %v120 = vld [vmem:[%s1 + $0xc] sm:$0xf]
  %v121 = vld [vmem:[%s1 + $0x10] sm:$0xf]
  %v122 = vld [vmem:[%s1 + $0x14] sm:$0xf]
  %v123 = vld [vmem:[%s1 + $0x18] sm:$0xf]
  %v124 = vld [vmem:[%s1 + $0x1c] sm:$0xf]
  %v125 = vld [vmem:[%s1 + $0x20] sm:$0xf]
  %v126 = vld [vmem:[%s1 + $0x24] sm:$0xf]
  %v127 = vld [vmem:[%s1 + $0x28] sm:$0xf]
  %v128 = vld [vmem:[%s1 + $0x2c] sm:$0xf]
  %v129 = vld [vmem:[%s1 + $0x30] sm:$0xf]
  %v130 = vld [vmem:[%s1 + $0x34] sm:$0xf]
  %v131 = vld [vmem:[%s1 + $0x38] sm:$0xf]
  %v132 = vld [vmem:[%s1 + $0x3c] sm:$0xf]
  %v133 = vld [vmem:[%s1 + $0x40] sm:$0xf]
  %v134 = vld [vmem:[%s1 + $0x44] sm:$0xf]
  %v135 = vld [vmem:[%s1 + $0x48] sm:$0xf]
  %v136 = vld [vmem:[%s1 + $0x4c] sm:$0xf]
  %v137 = vld [vmem:[%s1 + $0x50] sm:$0xf]
  %v138 = vld [vmem:[%s1 + $0x54] sm:$0xf]
  %v139 = vld [vmem:[%s1 + $0x58] sm:$0xf]
  %v140 = vld [vmem:[%s1 + $0x5c] sm:$0xf]
  %v141 = vld [vmem:[%s1 + $0x60] sm:$0xf]
  %v142 = vld [vmem:[%s1 + $0x64] sm:$0xf]
  %v143 = vld [vmem:[%s1 + $0x68] sm:$0xf]
  %v144 = vld [vmem:[%s1 + $0x6c] sm:$0xf]
  %v145 = vld [vmem:[%s1 + $0x70] sm:$0xf]
  %v146 = vld [vmem:[%s1 + $0x74] sm:$0xf]
  %v147 = vld [vmem:[%s1 + $0x78] sm:$0xf]
  %v148 = vld [vmem:[%s1 + $0x7c] sm:$0xf]
  %v149 = vld [vmem:[%s1 + $0x80] sm:$0xf]
  %v150 = vld [vmem:[%s1 + $0x84] sm:$0xf]
  %v151 = vld [vmem:[%s1 + $0x88] sm:$0xf]
  %v152 = vld [vmem:[%s1 + $0x8c] sm:$0xf]
  %v153 = vld [vmem:[%s1 + $0x90] sm:$0xf]
  %v154 = vld [vmem:[%s1 + $0x94] sm:$0xf]
  %v155 = vld [vmem:[%s1 + $0x98] sm:$0xf]
  %v156 = vld [vmem:[%s1 + $0x9c] sm:$0xf]
  %v157 = vld [vmem:[%s1 + $0xa0] sm:$0xf]
  %v158 = vld [vmem:[%s1 + $0xa4] sm:$0xf]
  %v159 = vld [vmem:[%s1 + $0xa8] sm:$0xf]
  %v160 = vld [vmem:[%s1 + $0xac] sm:$0xf]
  %v161 = vld [vmem:[%s1 + $0xb0] sm:$0xf]
  %v162 = vld [vmem:[%s1 + $0xb4] sm:$0xf]
  %v163 = vld [vmem:[%s1 + $0xb8] sm:$0xf]
  %v164 = vld [vmem:[%s1 + $0xbc] sm:$0xf]
  %v165 = vld [vmem:[%s1 + $0xc0] sm:$0xf]
  %v166 = vld [vmem:[%s1 + $0xc4] sm:$0xf]
  %v167 = vld [vmem:[%s1 + $0xc8] sm:$0xf]
  %v168 = vld [vmem:[%s1 + $0xcc] sm:$0xf]
  %v169 = vld [vmem:[%s1 + $0xd0] sm:$0xf]
  %v170 = vld [vmem:[%s1 + $0xd4] sm:$0xf]
  %v171 = vld [vmem:[%s1 + $0xd8] sm:$0xf]
  %v172 = vld [vmem:[%s1 + $0xdc] sm:$0xf]
  %v173 = vld [vmem:[%s1 + $0xe0] sm:$0xf]
  %v174 = vld [vmem:[%s1 + $0xe4] sm:$0xf]
  %v175 = vld [vmem:[%s1 + $0xe8] sm:$0xf]
  %v176 = vld [vmem:[%s1 + $0xec] sm:$0xf]
  %v177 = vld [vmem:[%s1 + $0xf0] sm:$0xf]
  %v178 = vld [vmem:[%s1 + $0xf4] sm:$0xf]
  %v179 = vld [vmem:[%s1 + $0xf8] sm:$0xf]
  %v180 = vld [vmem:[%s1 + $0xfc] sm:$0xf]
  %v181 = vld [vmem:[%s1 + $0x100] sm:$0xf]
  %v182 = vld [vmem:[%s1 + $0x104] sm:$0xf]
  %v183 = vld [vmem:[%s1 + $0x108] sm:$0xf]
  %v184 = vld [vmem:[%s1 + $0x10c] sm:$0xf]
  %v185 = vld [vmem:[%s1 + $0x110] sm:$0xf]
  %v186 = vld [vmem:[%s1 + $0x114] sm:$0xf]
  %v187 = vld [vmem:[%s1 + $0x118] sm:$0xf]
  %v188 = vld [vmem:[%s1 + $0x11c] sm:$0xf]
  %v189 = vld [vmem:[%s1 + $0x120] sm:$0xf]
  %v190 = vld [vmem:[%s1 + $0x124] sm:$0xf]
  %v191 = vld [vmem:[%s1 + $0x128] sm:$0xf]
  %v192 = vld [vmem:[%s1 + $0x12c] sm:$0xf]
  %v193 = vld [vmem:[%s1 + $0x130] sm:$0xf]
  %v194 = vld [vmem:[%s1 + $0x134] sm:$0xf]
  %v195 = vld [vmem:[%s1 + $0x138] sm:$0xf]
  %v196 = vld [vmem:[%s1 + $0x13c] sm:$0xf]
  %v197 = vld [vmem:[%s1 + $0x140] sm:$0xf]
  %v198 = vld [vmem:[%s1 + $0x144] sm:$0xf]
  %v199 = vld [vmem:[%s1 + $0x148] sm:$0xf]
  %v200 = vld [vmem:[%s1 + $0x14c] sm:$0xf]
  %v201 = vld [vmem:[%s1 + $0x150] sm:$0xf]
  %v202 = vld [vmem:[%s1 + $0x154] sm:$0xf]
  %v203 = vld [vmem:[%s1 + $0x158] sm:$0xf]
  %v204 = vld [vmem:[%s1 + $0x15c] sm:$0xf]
  %v205 = vld [vmem:[%s1 + $0x160] sm:$0xf]
  %v206 = vld [vmem:[%s1 + $0x164] sm:$0xf]
  %v207 = vld [vmem:[%s1 + $0x168] sm:$0xf]
  %v208 = vld [vmem:[%s1 + $0x16c] sm:$0xf]
  %v209 = vld [vmem:[%s1 + $0x170] sm:$0xf]
  %v210 = vld [vmem:[%s1 + $0x174] sm:$0xf]
  %v211 = vld [vmem:[%s1 + $0x178] sm:$0xf]
  %v212 = vld [vmem:[%s1 + $0x17c] sm:$0xf]
  %v213 = vld [vmem:[%s1 + $0x180] sm:$0xf]
  %v214 = vld [vmem:[%s1 + $0x184] sm:$0xf]
  %v215 = vld [vmem:[%s1 + $0x188] sm:$0xf]
  %v216 = vld [vmem:[%s1 + $0x18c] sm:$0xf]
  %v217 = vld [vmem:[%s1 + $0x190] sm:$0xf]
  %v218 = vld [vmem:[%s1 + $0x194] sm:$0xf]
  %v219 = vld [vmem:[%s1 + $0x198] sm:$0xf]
  %v220 = vld [vmem:[%s1 + $0x19c] sm:$0xf]
  %v221 = vld [vmem:[%s1 + $0x1a0] sm:$0xf]
  %v222 = vld [vmem:[%s1 + $0x1a4] sm:$0xf]
  %v223 = vld [vmem:[%s1 + $0x1a8] sm:$0xf]
  %v224 = vld [vmem:[%s1 + $0x1ac] sm:$0xf]
  %v225 = vld [vmem:[%s1 + $0x1b0] sm:$0xf]
  %v226 = vld [vmem:[%s1 + $0x1b4] sm:$0xf]
  %v227 = vld [vmem:[%s1 + $0x1b8] sm:$0xf]
  %v228 = vld [vmem:[%s1 + $0x1bc] sm:$0xf]
  %v229 = vld [vmem:[%s1 + $0x1c0] sm:$0xf]
  %v230 = vld [vmem:[%s1 + $0x1c4] sm:$0xf]
  %v231 = vld [vmem:[%s1 + $0x1c8] sm:$0xf]
  %v232 = vld [vmem:[%s1 + $0x1cc] sm:$0xf]
  %v233 = vld [vmem:[%s1 + $0x1d0] sm:$0xf]
  %v234 = vld [vmem:[%s1 + $0x1d4] sm:$0xf]
  %v235 = vld [vmem:[%s1 + $0x1d8] sm:$0xf]
  %v236 = vld [vmem:[%s1 + $0x1dc] sm:$0xf]
  %v237 = vld [vmem:[%s1 + $0x1e0] sm:$0xf]
  %v238 = vld [vmem:[%s1 + $0x1e4] sm:$0xf]
  %v239 = vld [vmem:[%s1 + $0x1e8] sm:$0xf]
  %v240 = vld [vmem:[%s1 + $0x1ec] sm:$0xf]
  %v241 = vld [vmem:[%s1 + $0x1f0] sm:$0xf]
  %v242 = vld [vmem:[%s1 + $0x1f4] sm:$0xf]
  %v243 = vld [vmem:[%s1 + $0x1f8] sm:$0xf]
  %v244 = vld [vmem:[%s1 + $0x1fc] sm:$0xf]
  %v245 = vld [vmem:[%s1 + $0x200] sm:$0xf]
  %v246 = vld [vmem:[%s1 + $0x204] sm:$0xf]
  %v247 = vld [vmem:[%s1 + $0x208] sm:$0xf]
  %v248 = vld [vmem:[%s1 + $0x20c] sm:$0xf]
  %v249 = vld [vmem:[%s1 + $0x210] sm:$0xf]
  %v250 = vld [vmem:[%s1 + $0x214] sm:$0xf]
  %v251 = vld [vmem:[%s1 + $0x218] sm:$0xf]
  %v252 = vld [vmem:[%s1 + $0x21c] sm:$0xf]
  %v253 = vld [vmem:[%s1 + $0x220] sm:$0xf]
  %v254 = vld [vmem:[%s1 + $0x224] sm:$0xf]
  %v255 = vld [vmem:[%s1 + $0x228] sm:$0xf]
  %v256 = vld [vmem:[%s1 + $0x22c] sm:$0xf]
  %v257 = vld [vmem:[%s1 + $0x230] sm:$0xf]
  %v258 = vld [vmem:[%s1 + $0x234] sm:$0xf]
  %v259 = vld [vmem:[%s1 + $0x238] sm:$0xf]
  %v260 = vld [vmem:[%s1 + $0x23c] sm:$0xf]
  %v331 = vunpack.c.l.b16 %v47
  %v332 = vunpack.c.h.b16 %v47
  %v333 = vunpack.c.l.b16 %v48
  %v334 = vunpack.c.h.b16 %v48
  %v335 = vunpack.c.l.b16 %v49
  %v336 = vunpack.c.h.b16 %v49
  %v337 = vunpack.c.l.b16 %v50
  %v338 = vunpack.c.h.b16 %v50
  %v339 = vunpack.c.l.b16 %v51
  %v340 = vunpack.c.l.b16 %v52
  %v341 = vunpack.c.h.b16 %v52
  %v342 = vunpack.c.l.b16 %v53
  %v343 = vunpack.c.h.b16 %v53
  %v344 = vunpack.c.l.b16 %v54
  %v345 = vunpack.c.h.b16 %v54
  %v346 = vunpack.c.l.b16 %v55
  %v347 = vunpack.c.h.b16 %v55
  %v348 = vunpack.c.l.b16 %v56
  %v349 = vunpack.c.l.b16 %v57
  %v350 = vunpack.c.h.b16 %v57
  %v351 = vunpack.c.l.b16 %v58
  %v352 = vunpack.c.h.b16 %v58
  %v353 = vunpack.c.l.b16 %v59
  %v354 = vunpack.c.h.b16 %v59
  %v355 = vunpack.c.l.b16 %v60
  %v356 = vunpack.c.h.b16 %v60
  %v357 = vunpack.c.l.b16 %v61
  %v358 = vunpack.c.l.b16 %v62
  %v359 = vunpack.c.h.b16 %v62
  %v360 = vunpack.c.l.b16 %v63
  %v361 = vunpack.c.h.b16 %v63
  %v362 = vunpack.c.l.b16 %v64
  %v363 = vunpack.c.h.b16 %v64
  %v364 = vunpack.c.l.b16 %v65
  %v365 = vunpack.c.h.b16 %v65
  %v366 = vunpack.c.l.b16 %v66
  %v367 = vunpack.c.l.b16 %v67
  %v368 = vunpack.c.h.b16 %v67
  %v369 = vunpack.c.l.b16 %v68
  %v370 = vunpack.c.h.b16 %v68
  %v371 = vunpack.c.l.b16 %v69
  %v372 = vunpack.c.h.b16 %v69
  %v373 = vunpack.c.l.b16 %v70
  %v374 = vunpack.c.h.b16 %v70
  %v375 = vunpack.c.l.b16 %v71
  %v376 = vunpack.c.l.b16 %v72
  %v377 = vunpack.c.h.b16 %v72
  %v378 = vunpack.c.l.b16 %v73
  %v379 = vunpack.c.h.b16 %v73
  %v380 = vunpack.c.l.b16 %v74
  %v381 = vunpack.c.h.b16 %v74
  %v382 = vunpack.c.l.b16 %v75
  %v383 = vunpack.c.h.b16 %v75
  %v384 = vunpack.c.l.b16 %v76
  %v385 = vunpack.c.l.b16 %v77
  %v386 = vunpack.c.h.b16 %v77
  %v387 = vunpack.c.l.b16 %v78
  %v388 = vunpack.c.h.b16 %v78
  %v389 = vunpack.c.l.b16 %v79
  %v390 = vunpack.c.h.b16 %v79
  %v391 = vunpack.c.l.b16 %v80
  %v392 = vunpack.c.h.b16 %v80
  %v393 = vunpack.c.l.b16 %v81
  %v394 = vunpack.c.l.b16 %v82
  %v395 = vunpack.c.h.b16 %v82
  %v396 = vunpack.c.l.b16 %v83
  %v397 = vunpack.c.h.b16 %v83
  %v398 = vunpack.c.l.b16 %v84
  %v399 = vunpack.c.h.b16 %v84
  %v400 = vunpack.c.l.b16 %v85
  %v401 = vunpack.c.h.b16 %v85
  %v402 = vunpack.c.l.b16 %v86
  %v403 = vunpack.c.l.b16 %v87
  %v404 = vunpack.c.h.b16 %v87
  %v405 = vunpack.c.l.b16 %v88
  %v406 = vunpack.c.h.b16 %v88
  %v407 = vunpack.c.l.b16 %v89
  %v408 = vunpack.c.h.b16 %v89
  %v409 = vunpack.c.l.b16 %v90
  %v410 = vunpack.c.h.b16 %v90
  %v411 = vunpack.c.l.b16 %v91
  %v412 = vunpack.c.l.b16 %v92
  %v413 = vunpack.c.h.b16 %v92
  %v414 = vunpack.c.l.b16 %v93
  %v415 = vunpack.c.h.b16 %v93
  %v416 = vunpack.c.l.b16 %v94
  %v417 = vunpack.c.h.b16 %v94
  %v418 = vunpack.c.l.b16 %v95
  %v419 = vunpack.c.h.b16 %v95
  %v420 = vunpack.c.l.b16 %v96
  %v421 = vunpack.c.l.b16 %v97
  %v422 = vunpack.c.h.b16 %v97
  %v423 = vunpack.c.l.b16 %v98
  %v424 = vunpack.c.h.b16 %v98
  %v425 = vunpack.c.l.b16 %v99
  %v426 = vunpack.c.h.b16 %v99
  %v427 = vunpack.c.l.b16 %v100
  %v428 = vunpack.c.h.b16 %v100
  %v429 = vunpack.c.l.b16 %v101
  %v430 = vunpack.c.l.b16 %v102
  %v431 = vunpack.c.h.b16 %v102
  %v432 = vunpack.c.l.b16 %v103
  %v433 = vunpack.c.h.b16 %v103
  %v434 = vunpack.c.l.b16 %v104
  %v435 = vunpack.c.h.b16 %v104
  %v436 = vunpack.c.l.b16 %v105
  %v437 = vunpack.c.h.b16 %v105
  %v438 = vunpack.c.l.b16 %v106
  %v439 = vunpack.c.l.b16 %v107
  %v440 = vunpack.c.h.b16 %v107
  %v441 = vunpack.c.l.b16 %v108
  %v442 = vunpack.c.h.b16 %v108
  %v443 = vunpack.c.l.b16 %v109
  %v444 = vunpack.c.h.b16 %v109
  %v445 = vunpack.c.l.b16 %v110
  %v446 = vunpack.c.h.b16 %v110
  %v447 = vunpack.c.l.b16 %v111
  %v448 = vunpack.c.l.b16 %v112
  %v449 = vunpack.c.h.b16 %v112
  %v450 = vunpack.c.l.b16 %v113
  %v451 = vunpack.c.h.b16 %v113
  %v452 = vunpack.c.l.b16 %v114
  %v453 = vunpack.c.h.b16 %v114
  %v454 = vunpack.c.l.b16 %v115
  %v455 = vunpack.c.h.b16 %v115
  %v456 = vunpack.c.l.b16 %v116
  %v457 = vpack.c.b16 %v340, %v331
  %v458 = vpack.c.b16 %v341, %v332
  %v459 = vpack.c.b16 %v342, %v333
  %v460 = vpack.c.b16 %v343, %v334
  %v461 = vpack.c.b16 %v344, %v335
  %v462 = vpack.c.b16 %v345, %v336
  %v463 = vpack.c.b16 %v346, %v337
  %v464 = vpack.c.b16 %v347, %v338
  %v465 = vpack.c.b16 %v348, %v339
  %v466 = vpack.c.b16 %v358, %v349
  %v467 = vpack.c.b16 %v359, %v350
  %v468 = vpack.c.b16 %v360, %v351
  %v469 = vpack.c.b16 %v361, %v352
  %v470 = vpack.c.b16 %v362, %v353
  %v471 = vpack.c.b16 %v363, %v354
  %v472 = vpack.c.b16 %v364, %v355
  %v473 = vpack.c.b16 %v365, %v356
  %v474 = vpack.c.b16 %v366, %v357
  %v475 = vpack.c.b16 %v376, %v367
  %v476 = vpack.c.b16 %v377, %v368
  %v477 = vpack.c.b16 %v378, %v369
  %v478 = vpack.c.b16 %v379, %v370
  %v479 = vpack.c.b16 %v380, %v371
  %v480 = vpack.c.b16 %v381, %v372
  %v481 = vpack.c.b16 %v382, %v373
  %v482 = vpack.c.b16 %v383, %v374
  %v483 = vpack.c.b16 %v384, %v375
  %v484 = vpack.c.b16 %v394, %v385
  %v485 = vpack.c.b16 %v395, %v386
  %v486 = vpack.c.b16 %v396, %v387
  %v487 = vpack.c.b16 %v397, %v388
  %v488 = vpack.c.b16 %v398, %v389
  %v489 = vpack.c.b16 %v399, %v390
  %v490 = vpack.c.b16 %v400, %v391
  %v491 = vpack.c.b16 %v401, %v392
  %v492 = vpack.c.b16 %v402, %v393
  %v493 = vpack.c.b16 %v412, %v403
  %v494 = vpack.c.b16 %v413, %v404
  %v495 = vpack.c.b16 %v414, %v405
  %v496 = vpack.c.b16 %v415, %v406
  %v497 = vpack.c.b16 %v416, %v407
  %v498 = vpack.c.b16 %v417, %v408
  %v499 = vpack.c.b16 %v418, %v409
  %v500 = vpack.c.b16 %v419, %v410
  %v501 = vpack.c.b16 %v420, %v411
  %v502 = vpack.c.b16 %v430, %v421
  %v503 = vpack.c.b16 %v431, %v422
  %v504 = vpack.c.b16 %v432, %v423
  %v505 = vpack.c.b16 %v433, %v424
  %v506 = vpack.c.b16 %v434, %v425
  %v507 = vpack.c.b16 %v435, %v426
  %v508 = vpack.c.b16 %v436, %v427
  %v509 = vpack.c.b16 %v437, %v428
  %v510 = vpack.c.b16 %v438, %v429
  %v511 = vpack.c.b16 %v448, %v439
  %v512 = vpack.c.b16 %v449, %v440
  %v513 = vpack.c.b16 %v450, %v441
  %v514 = vpack.c.b16 %v451, %v442
  %v515 = vpack.c.b16 %v452, %v443
  %v516 = vpack.c.b16 %v453, %v444
  %v517 = vpack.c.b16 %v454, %v445
  %v518 = vpack.c.b16 %v455, %v446
  %v519 = vpack.c.b16 %v456, %v447
  %v727 = vunpack.c.l.b16 %v117
  %v728 = vunpack.c.l.b16 %v118
  %v729 = vunpack.c.l.b16 %v119
  %v730 = vunpack.c.l.b16 %v120
  %v731 = vunpack.c.l.b16 %v121
  %v732 = vunpack.c.l.b16 %v122
  %v733 = vunpack.c.l.b16 %v123
  %v734 = vunpack.c.l.b16 %v124
  %v735 = vunpack.c.l.b16 %v125
  %v736 = vunpack.c.l.b16 %v126
  %v737 = vunpack.c.l.b16 %v127
  %v738 = vunpack.c.l.b16 %v128
  %v739 = vunpack.c.l.b16 %v129
  %v740 = vunpack.c.l.b16 %v130
  %v741 = vunpack.c.l.b16 %v131
  %v742 = vunpack.c.l.b16 %v132
  %v743 = vunpack.c.l.b16 %v133
  %v744 = vunpack.c.l.b16 %v134
  %v745 = vunpack.c.l.b16 %v135
  %v746 = vunpack.c.l.b16 %v136
  %v747 = vunpack.c.l.b16 %v137
  %v748 = vunpack.c.l.b16 %v138
  %v749 = vunpack.c.l.b16 %v139
  %v750 = vunpack.c.l.b16 %v140
  %v751 = vunpack.c.l.b16 %v141
  %v752 = vunpack.c.l.b16 %v142
  %v753 = vunpack.c.l.b16 %v143
  %v754 = vunpack.c.l.b16 %v144
  %v755 = vunpack.c.l.b16 %v145
  %v756 = vunpack.c.l.b16 %v146
  %v757 = vunpack.c.l.b16 %v147
  %v758 = vunpack.c.l.b16 %v148
  %v759 = vunpack.c.l.b16 %v149
  %v760 = vunpack.c.l.b16 %v150
  %v761 = vunpack.c.l.b16 %v151
  %v762 = vunpack.c.l.b16 %v152
  %v763 = vunpack.c.l.b16 %v153
  %v764 = vunpack.c.l.b16 %v154
  %v765 = vunpack.c.l.b16 %v155
  %v766 = vunpack.c.l.b16 %v156
  %v767 = vunpack.c.l.b16 %v157
  %v768 = vunpack.c.l.b16 %v158
  %v769 = vunpack.c.l.b16 %v159
  %v770 = vunpack.c.l.b16 %v160
  %v771 = vunpack.c.l.b16 %v161
  %v772 = vunpack.c.l.b16 %v162
  %v773 = vunpack.c.l.b16 %v163
  %v774 = vunpack.c.l.b16 %v164
  %v775 = vunpack.c.l.b16 %v165
  %v776 = vunpack.c.l.b16 %v166
  %v777 = vunpack.c.l.b16 %v167
  %v778 = vunpack.c.l.b16 %v168
  %v779 = vunpack.c.l.b16 %v169
  %v780 = vunpack.c.l.b16 %v170
  %v781 = vunpack.c.l.b16 %v171
  %v782 = vunpack.c.l.b16 %v172
  %v783 = vunpack.c.l.b16 %v173
  %v784 = vunpack.c.l.b16 %v174
  %v785 = vunpack.c.l.b16 %v175
  %v786 = vunpack.c.l.b16 %v176
  %v787 = vunpack.c.l.b16 %v177
  %v788 = vunpack.c.l.b16 %v178
  %v789 = vunpack.c.l.b16 %v179
  %v790 = vunpack.c.l.b16 %v180
  %v791 = vunpack.c.l.b16 %v181
  %v792 = vunpack.c.l.b16 %v182
  %v793 = vunpack.c.l.b16 %v183
  %v794 = vunpack.c.l.b16 %v184
  %v795 = vunpack.c.l.b16 %v185
  %v796 = vunpack.c.l.b16 %v186
  %v797 = vunpack.c.l.b16 %v187
  %v798 = vunpack.c.l.b16 %v188
  %v799 = vunpack.c.l.b16 %v189
  %v800 = vunpack.c.l.b16 %v190
  %v801 = vunpack.c.l.b16 %v191
  %v802 = vunpack.c.l.b16 %v192
  %v803 = vunpack.c.l.b16 %v193
  %v804 = vunpack.c.l.b16 %v194
  %v805 = vunpack.c.l.b16 %v195
  %v806 = vunpack.c.l.b16 %v196
  %v807 = vunpack.c.l.b16 %v197
  %v808 = vunpack.c.l.b16 %v198
  %v809 = vunpack.c.l.b16 %v199
  %v810 = vunpack.c.l.b16 %v200
  %v811 = vunpack.c.l.b16 %v201
  %v812 = vunpack.c.l.b16 %v202
  %v813 = vunpack.c.l.b16 %v203
  %v814 = vunpack.c.l.b16 %v204
  %v815 = vunpack.c.l.b16 %v205
  %v816 = vunpack.c.l.b16 %v206
  %v817 = vunpack.c.l.b16 %v207
  %v818 = vunpack.c.l.b16 %v208
  %v819 = vunpack.c.l.b16 %v209
  %v820 = vunpack.c.l.b16 %v210
  %v821 = vunpack.c.l.b16 %v211
  %v822 = vunpack.c.l.b16 %v212
  %v823 = vunpack.c.l.b16 %v213
  %v824 = vunpack.c.l.b16 %v214
  %v825 = vunpack.c.l.b16 %v215
  %v826 = vunpack.c.l.b16 %v216
  %v827 = vunpack.c.l.b16 %v217
  %v828 = vunpack.c.l.b16 %v218
  %v829 = vunpack.c.l.b16 %v219
  %v830 = vunpack.c.l.b16 %v220
  %v831 = vunpack.c.l.b16 %v221
  %v832 = vunpack.c.l.b16 %v222
  %v833 = vunpack.c.l.b16 %v223
  %v834 = vunpack.c.l.b16 %v224
  %v835 = vunpack.c.l.b16 %v225
  %v836 = vunpack.c.l.b16 %v226
  %v837 = vunpack.c.l.b16 %v227
  %v838 = vunpack.c.l.b16 %v228
  %v839 = vunpack.c.l.b16 %v229
  %v840 = vunpack.c.l.b16 %v230
  %v841 = vunpack.c.l.b16 %v231
  %v842 = vunpack.c.l.b16 %v232
  %v843 = vunpack.c.l.b16 %v233
  %v844 = vunpack.c.l.b16 %v234
  %v845 = vunpack.c.l.b16 %v235
  %v846 = vunpack.c.l.b16 %v236
  %v847 = vunpack.c.l.b16 %v237
  %v848 = vunpack.c.l.b16 %v238
  %v849 = vunpack.c.l.b16 %v239
  %v850 = vunpack.c.l.b16 %v240
  %v851 = vunpack.c.l.b16 %v241
  %v852 = vunpack.c.l.b16 %v242
  %v853 = vunpack.c.l.b16 %v243
  %v854 = vunpack.c.l.b16 %v244
  %v855 = vunpack.c.l.b16 %v245
  %v856 = vunpack.c.l.b16 %v246
  %v857 = vunpack.c.l.b16 %v247
  %v858 = vunpack.c.l.b16 %v248
  %v859 = vunpack.c.l.b16 %v249
  %v860 = vunpack.c.l.b16 %v250
  %v861 = vunpack.c.l.b16 %v251
  %v862 = vunpack.c.l.b16 %v252
  %v863 = vunpack.c.l.b16 %v253
  %v864 = vunpack.c.l.b16 %v254
  %v865 = vunpack.c.l.b16 %v255
  %v866 = vunpack.c.l.b16 %v256
  %v867 = vunpack.c.l.b16 %v257
  %v868 = vunpack.c.l.b16 %v258
  %v869 = vunpack.c.l.b16 %v259
  %v870 = vunpack.c.l.b16 %v260
  %v871 = vpack.c.b16 %v728, %v727
  %v872 = vpack.c.b16 %v730, %v729
  %v873 = vpack.c.b16 %v732, %v731
  %v874 = vpack.c.b16 %v734, %v733
  %v875 = vpack.c.b16 %v736, %v735
  %v876 = vpack.c.b16 %v738, %v737
  %v877 = vpack.c.b16 %v740, %v739
  %v878 = vpack.c.b16 %v742, %v741
  %v879 = vpack.c.b16 %v744, %v743
  %v880 = vpack.c.b16 %v746, %v745
  %v881 = vpack.c.b16 %v748, %v747
  %v882 = vpack.c.b16 %v750, %v749
  %v883 = vpack.c.b16 %v752, %v751
  %v884 = vpack.c.b16 %v754, %v753
  %v885 = vpack.c.b16 %v756, %v755
  %v886 = vpack.c.b16 %v758, %v757
  %v887 = vpack.c.b16 %v760, %v759
  %v888 = vpack.c.b16 %v762, %v761
  %v889 = vpack.c.b16 %v764, %v763
  %v890 = vpack.c.b16 %v766, %v765
  %v891 = vpack.c.b16 %v768, %v767
  %v892 = vpack.c.b16 %v770, %v769
  %v893 = vpack.c.b16 %v772, %v771
  %v894 = vpack.c.b16 %v774, %v773
  %v895 = vpack.c.b16 %v776, %v775
  %v896 = vpack.c.b16 %v778, %v777
  %v897 = vpack.c.b16 %v780, %v779
  %v898 = vpack.c.b16 %v782, %v781
  %v899 = vpack.c.b16 %v784, %v783
  %v900 = vpack.c.b16 %v786, %v785
  %v901 = vpack.c.b16 %v788, %v787
  %v902 = vpack.c.b16 %v790, %v789
  %v903 = vpack.c.b16 %v792, %v791
  %v904 = vpack.c.b16 %v794, %v793
  %v905 = vpack.c.b16 %v796, %v795
  %v906 = vpack.c.b16 %v798, %v797
  %v907 = vpack.c.b16 %v800, %v799
  %v908 = vpack.c.b16 %v802, %v801
  %v909 = vpack.c.b16 %v804, %v803
  %v910 = vpack.c.b16 %v806, %v805
  %v911 = vpack.c.b16 %v808, %v807
  %v912 = vpack.c.b16 %v810, %v809
  %v913 = vpack.c.b16 %v812, %v811
  %v914 = vpack.c.b16 %v814, %v813
  %v915 = vpack.c.b16 %v816, %v815
  %v916 = vpack.c.b16 %v818, %v817
  %v917 = vpack.c.b16 %v820, %v819
  %v918 = vpack.c.b16 %v822, %v821
  %v919 = vpack.c.b16 %v824, %v823
  %v920 = vpack.c.b16 %v826, %v825
  %v921 = vpack.c.b16 %v828, %v827
  %v922 = vpack.c.b16 %v830, %v829
  %v923 = vpack.c.b16 %v832, %v831
  %v924 = vpack.c.b16 %v834, %v833
  %v925 = vpack.c.b16 %v836, %v835
  %v926 = vpack.c.b16 %v838, %v837
  %v927 = vpack.c.b16 %v840, %v839
  %v928 = vpack.c.b16 %v842, %v841
  %v929 = vpack.c.b16 %v844, %v843
  %v930 = vpack.c.b16 %v846, %v845
  %v931 = vpack.c.b16 %v848, %v847
  %v932 = vpack.c.b16 %v850, %v849
  %v933 = vpack.c.b16 %v852, %v851
  %v934 = vpack.c.b16 %v854, %v853
  %v935 = vpack.c.b16 %v856, %v855
  %v936 = vpack.c.b16 %v858, %v857
  %v937 = vpack.c.b16 %v860, %v859
  %v938 = vpack.c.b16 %v862, %v861
  %v939 = vpack.c.b16 %v864, %v863
  %v940 = vpack.c.b16 %v866, %v865
  %v941 = vpack.c.b16 %v868, %v867
  %v942 = vpack.c.b16 %v870, %v869
  %1015 = vmatprep.subr.bf16.mxu0 0
  %1016 = vmatpush1.bf16.msra.mxu0 %v871
  %1017 = vmatprep.subr.bf16.mxu0 0
  %1018 = vmatpush1.bf16.msra.mxu0 %v872
  %1019 = vmatprep.subr.bf16.mxu0 0
  %1020 = vmatpush1.bf16.msra.mxu0 %v873
  %1021 = vmatprep.subr.bf16.mxu0 0
  %1022 = vmatpush1.bf16.msra.mxu0 %v874
  %1023 = vmatprep.subr.bf16.mxu0 0
  %1024 = vmatpush1.bf16.msra.mxu0 %v875
  %1025 = vmatprep.subr.bf16.mxu0 0
  %1026 = vmatpush1.bf16.msra.mxu0 %v876
  %1027 = vmatprep.subr.bf16.mxu0 0
  %1028 = vmatpush1.bf16.msra.mxu0 %v877
  %1029 = vmatprep.subr.bf16.mxu0 0
  %1030 = vmatpush1.bf16.msra.mxu0 %v878
  %1031 = vmatprep.subr.bf16.mxu0 0
  %1032 = vmatpush1.bf16.msra.mxu0 %v879
  %1033 = vmatprep.subr.bf16.mxu0 0
  %1034 = vmatpush1.bf16.msra.mxu0 %v880
  %1035 = vmatprep.subr.bf16.mxu0 0
  %1036 = vmatpush1.bf16.msra.mxu0 %v881
  %1037 = vmatprep.subr.bf16.mxu0 0
  %1038 = vmatpush1.bf16.msra.mxu0 %v882
  %1039 = vmatprep.subr.bf16.mxu0 0
  %1040 = vmatpush1.bf16.msra.mxu0 %v883
  %1041 = vmatprep.subr.bf16.mxu0 0
  %1042 = vmatpush1.bf16.msra.mxu0 %v884
  %1043 = vmatprep.subr.bf16.mxu0 0
  %1044 = vmatpush1.bf16.msra.mxu0 %v885
  %1045 = vmatprep.subr.bf16.mxu0 0
  %1046 = vmatpush1.bf16.msra.mxu0 %v886
  %1047 = vmatprep.mubr.bf16.mxu0 %v458
  %1048 = vmatmul.mubr.bf16.gmra.mrb[0].mxu0 %v457
  %v1049 = vpop.f32.mrb[0].mxu0
  %v1050 = vadd.f32 0.0, %v1049
  %v1051 = vpop.f32.mrb[0].mxu0
  %v1052 = vpop.f32.mrb[0].mxu0
  %v1053 = vadd.f32 0.0, %v1052
  %v1054 = vpop.f32.mrb[0].mxu0
  %1055 = vmatprep.mubr.bf16.mxu0 %v467
  %1056 = vmatmul.mubr.bf16.gmra.mrb[0].mxu0 %v466
  %v1057 = vpop.f32.mrb[0].mxu0
  %v1058 = vadd.f32 0.0, %v1057
  %v1059 = vpop.f32.mrb[0].mxu0
  %v1060 = vpop.f32.mrb[0].mxu0
  %v1061 = vadd.f32 0.0, %v1060
  %v1062 = vpop.f32.mrb[0].mxu0
  %1063 = vmatprep.mubr.bf16.mxu0 %v476
  %1064 = vmatmul.mubr.bf16.gmra.mrb[0].mxu0 %v475
  %v1065 = vpop.f32.mrb[0].mxu0
  %v1066 = vadd.f32 0.0, %v1065
  %v1067 = vpop.f32.mrb[0].mxu0
  %v1068 = vpop.f32.mrb[0].mxu0
  %v1069 = vadd.f32 0.0, %v1068
  %v1070 = vpop.f32.mrb[0].mxu0
  %1071 = vmatprep.mubr.bf16.mxu0 %v485
  %1072 = vmatmul.mubr.bf16.gmra.mrb[0].mxu0 %v484
  %v1073 = vpop.f32.mrb[0].mxu0
  %v1074 = vadd.f32 0.0, %v1073
  %v1075 = vpop.f32.mrb[0].mxu0
  %v1076 = vpop.f32.mrb[0].mxu0
  %v1077 = vadd.f32 0.0, %v1076
  %v1078 = vpop.f32.mrb[0].mxu0
  %1079 = vmatprep.mubr.bf16.mxu0 %v494
  %1080 = vmatmul.mubr.bf16.gmra.mrb[0].mxu0 %v493
  %v1081 = vpop.f32.mrb[0].mxu0
  %v1082 = vadd.f32 0.0, %v1081
  %v1083 = vpop.f32.mrb[0].mxu0
  %v1084 = vpop.f32.mrb[0].mxu0
  %v1085 = vadd.f32 0.0, %v1084
  %v1086 = vpop.f32.mrb[0].mxu0
  %1087 = vmatprep.mubr.bf16.mxu0 %v503
  %1088 = vmatmul.mubr.bf16.gmra.mrb[0].mxu0 %v502
  %v1089 = vpop.f32.mrb[0].mxu0
  %v1090 = vadd.f32 0.0, %v1089
  %v1091 = vpop.f32.mrb[0].mxu0
  %v1092 = vpop.f32.mrb[0].mxu0
  %v1093 = vadd.f32 0.0, %v1092
  %v1094 = vpop.f32.mrb[0].mxu0
  %1095 = vmatprep.mubr.bf16.mxu0 %v512
  %1096 = vmatmul.mubr.bf16.gmra.mrb[0].mxu0 %v511
  %v1097 = vpop.f32.mrb[0].mxu0
  %v1098 = vadd.f32 0.0, %v1097
  %v1099 = vpop.f32.mrb[0].mxu0
  %v1100 = vpop.f32.mrb[0].mxu0
  %v1101 = vadd.f32 0.0, %v1100
  %v1102 = vpop.f32.mrb[0].mxu0
  %1103 = vdwg.mxu0
  %1104 = vmatprep.subr.bf16.mxu0 0
  %1105 = vmatpush1.bf16.msra.mxu0 %v887
  %1106 = vmatprep.subr.bf16.mxu0 0
  %1107 = vmatpush1.bf16.msra.mxu0 %v888
  %1108 = vmatprep.subr.bf16.mxu0 0
  %1109 = vmatpush1.bf16.msra.mxu0 %v889
  %1110 = vmatprep.subr.bf16.mxu0 0
  %1111 = vmatpush1.bf16.msra.mxu0 %v890
  %1112 = vmatprep.subr.bf16.mxu0 0
  %1113 = vmatpush1.bf16.msra.mxu0 %v891
  %1114 = vmatprep.subr.bf16.mxu0 0
  %1115 = vmatpush1.bf16.msra.mxu0 %v892
  %1116 = vmatprep.subr.bf16.mxu0 0
  %1117 = vmatpush1.bf16.msra.mxu0 %v893
  %1118 = vmatprep.subr.bf16.mxu0 0
  %1119 = vmatpush1.bf16.msra.mxu0 %v894
  %1120 = vmatprep.subr.bf16.mxu0 0
  %1121 = vmatpush1.bf16.msra.mxu0 %v895
  %1122 = vmatprep.subr.bf16.mxu0 0
  %1123 = vmatpush1.bf16.msra.mxu0 %v896
  %1124 = vmatprep.subr.bf16.mxu0 0
  %1125 = vmatpush1.bf16.msra.mxu0 %v897
  %1126 = vmatprep.subr.bf16.mxu0 0
  %1127 = vmatpush1.bf16.msra.mxu0 %v898
  %1128 = vmatprep.subr.bf16.mxu0 0
  %1129 = vmatpush1.bf16.msra.mxu0 %v899
  %1130 = vmatprep.subr.bf16.mxu0 0
  %1131 = vmatpush1.bf16.msra.mxu0 %v900
  %1132 = vmatprep.subr.bf16.mxu0 0
  %1133 = vmatpush1.bf16.msra.mxu0 %v901
  %1134 = vmatprep.subr.bf16.mxu0 0
  %1135 = vmatpush1.bf16.msra.mxu0 %v902
  %1136 = vmatprep.mubr.bf16.mxu0 %v460
  %1137 = vmatmul.mubr.bf16.gmra.mrb[0].mxu0 %v459
  %v1138 = vpop.f32.mrb[0].mxu0
  %v1139 = vadd.f32 %v1050, %v1138
  %v1140 = vpop.f32.mrb[0].mxu0
  %v1141 = vpop.f32.mrb[0].mxu0
  %v1142 = vadd.f32 %v1053, %v1141
  %v1143 = vpop.f32.mrb[0].mxu0
  %1144 = vmatprep.mubr.bf16.mxu0 %v469
  %1145 = vmatmul.mubr.bf16.gmra.mrb[0].mxu0 %v468
  %v1146 = vpop.f32.mrb[0].mxu0
  %v1147 = vadd.f32 %v1058, %v1146
  %v1148 = vpop.f32.mrb[0].mxu0
  %v1149 = vpop.f32.mrb[0].mxu0
  %v1150 = vadd.f32 %v1061, %v1149
  %v1151 = vpop.f32.mrb[0].mxu0
  %1152 = vmatprep.mubr.bf16.mxu0 %v478
  %1153 = vmatmul.mubr.bf16.gmra.mrb[0].mxu0 %v477
  %v1154 = vpop.f32.mrb[0].mxu0
  %v1155 = vadd.f32 %v1066, %v1154
  %v1156 = vpop.f32.mrb[0].mxu0
  %v1157 = vpop.f32.mrb[0].mxu0
  %v1158 = vadd.f32 %v1069, %v1157
  %v1159 = vpop.f32.mrb[0].mxu0
  %1160 = vmatprep.mubr.bf16.mxu0 %v487
  %1161 = vmatmul.mubr.bf16.gmra.mrb[0].mxu0 %v486
  %v1162 = vpop.f32.mrb[0].mxu0
  %v1163 = vadd.f32 %v1074, %v1162
  %v1164 = vpop.f32.mrb[0].mxu0
  %v1165 = vpop.f32.mrb[0].mxu0
  %v1166 = vadd.f32 %v1077, %v1165
  %v1167 = vpop.f32.mrb[0].mxu0
  %1168 = vmatprep.mubr.bf16.mxu0 %v496
  %1169 = vmatmul.mubr.bf16.gmra.mrb[0].mxu0 %v495
  %v1170 = vpop.f32.mrb[0].mxu0
  %v1171 = vadd.f32 %v1082, %v1170
  %v1172 = vpop.f32.mrb[0].mxu0
  %v1173 = vpop.f32.mrb[0].mxu0
  %v1174 = vadd.f32 %v1085, %v1173
  %v1175 = vpop.f32.mrb[0].mxu0
  %1176 = vmatprep.mubr.bf16.mxu0 %v505
  %1177 = vmatmul.mubr.bf16.gmra.mrb[0].mxu0 %v504
  %v1178 = vpop.f32.mrb[0].mxu0
  %v1179 = vadd.f32 %v1090, %v1178
  %v1180 = vpop.f32.mrb[0].mxu0
  %v1181 = vpop.f32.mrb[0].mxu0
  %v1182 = vadd.f32 %v1093, %v1181
  %v1183 = vpop.f32.mrb[0].mxu0
  %1184 = vmatprep.mubr.bf16.mxu0 %v514
  %1185 = vmatmul.mubr.bf16.gmra.mrb[0].mxu0 %v513
  %v1186 = vpop.f32.mrb[0].mxu0
  %v1187 = vadd.f32 %v1098, %v1186
  %v1188 = vpop.f32.mrb[0].mxu0
  %v1189 = vpop.f32.mrb[0].mxu0
  %v1190 = vadd.f32 %v1101, %v1189
  %v1191 = vpop.f32.mrb[0].mxu0
  %1192 = vdwg.mxu0
  %1193 = vmatprep.subr.bf16.mxu0 0
  %1194 = vmatpush1.bf16.msra.mxu0 %v903
  %1195 = vmatprep.subr.bf16.mxu0 0
  %1196 = vmatpush1.bf16.msra.mxu0 %v904
  %1197 = vmatprep.subr.bf16.mxu0 0
  %1198 = vmatpush1.bf16.msra.mxu0 %v905
  %1199 = vmatprep.subr.bf16.mxu0 0
  %1200 = vmatpush1.bf16.msra.mxu0 %v906
  %1201 = vmatprep.subr.bf16.mxu0 0
  %1202 = vmatpush1.bf16.msra.mxu0 %v907
  %1203 = vmatprep.subr.bf16.mxu0 0
  %1204 = vmatpush1.bf16.msra.mxu0 %v908
  %1205 = vmatprep.subr.bf16.mxu0 0
  %1206 = vmatpush1.bf16.msra.mxu0 %v909
  %1207 = vmatprep.subr.bf16.mxu0 0
  %1208 = vmatpush1.bf16.msra.mxu0 %v910
  %1209 = vmatprep.subr.bf16.mxu0 0
  %1210 = vmatpush1.bf16.msra.mxu0 %v911
  %1211 = vmatprep.subr.bf16.mxu0 0
  %1212 = vmatpush1.bf16.msra.mxu0 %v912
  %1213 = vmatprep.subr.bf16.mxu0 0
  %1214 = vmatpush1.bf16.msra.mxu0 %v913
  %1215 = vmatprep.subr.bf16.mxu0 0
  %1216 = vmatpush1.bf16.msra.mxu0 %v914
  %1217 = vmatprep.subr.bf16.mxu0 0
  %1218 = vmatpush1.bf16.msra.mxu0 %v915
  %1219 = vmatprep.subr.bf16.mxu0 0
  %1220 = vmatpush1.bf16.msra.mxu0 %v916
  %1221 = vmatprep.subr.bf16.mxu0 0
  %1222 = vmatpush1.bf16.msra.mxu0 %v917
  %1223 = vmatprep.subr.bf16.mxu0 0
  %1224 = vmatpush1.bf16.msra.mxu0 %v918
  %1225 = vmatprep.mubr.bf16.mxu0 %v462
  %1226 = vmatmul.mubr.bf16.gmra.mrb[0].mxu0 %v461
  %v1227 = vpop.f32.mrb[0].mxu0
  %v1228 = vadd.f32 %v1139, %v1227
  %v1229 = vpop.f32.mrb[0].mxu0
  %v1230 = vpop.f32.mrb[0].mxu0
  %v1231 = vadd.f32 %v1142, %v1230
  %v1232 = vpop.f32.mrb[0].mxu0
  %1233 = vmatprep.mubr.bf16.mxu0 %v471
  %1234 = vmatmul.mubr.bf16.gmra.mrb[0].mxu0 %v470
  %v1235 = vpop.f32.mrb[0].mxu0
  %v1236 = vadd.f32 %v1147, %v1235
  %v1237 = vpop.f32.mrb[0].mxu0
  %v1238 = vpop.f32.mrb[0].mxu0
  %v1239 = vadd.f32 %v1150, %v1238
  %v1240 = vpop.f32.mrb[0].mxu0
  %1241 = vmatprep.mubr.bf16.mxu0 %v480
  %1242 = vmatmul.mubr.bf16.gmra.mrb[0].mxu0 %v479
  %v1243 = vpop.f32.mrb[0].mxu0
  %v1244 = vadd.f32 %v1155, %v1243
  %v1245 = vpop.f32.mrb[0].mxu0
  %v1246 = vpop.f32.mrb[0].mxu0
  %v1247 = vadd.f32 %v1158, %v1246
  %v1248 = vpop.f32.mrb[0].mxu0
  %1249 = vmatprep.mubr.bf16.mxu0 %v489
  %1250 = vmatmul.mubr.bf16.gmra.mrb[0].mxu0 %v488
  %v1251 = vpop.f32.mrb[0].mxu0
  %v1252 = vadd.f32 %v1163, %v1251
  %v1253 = vpop.f32.mrb[0].mxu0
  %v1254 = vpop.f32.mrb[0].mxu0
  %v1255 = vadd.f32 %v1166, %v1254
  %v1256 = vpop.f32.mrb[0].mxu0
  %1257 = vmatprep.mubr.bf16.mxu0 %v498
  %1258 = vmatmul.mubr.bf16.gmra.mrb[0].mxu0 %v497
  %v1259 = vpop.f32.mrb[0].mxu0
  %v1260 = vadd.f32 %v1171, %v1259
  %v1261 = vpop.f32.mrb[0].mxu0
  %v1262 = vpop.f32.mrb[0].mxu0
  %v1263 = vadd.f32 %v1174, %v1262
  %v1264 = vpop.f32.mrb[0].mxu0
  %1265 = vmatprep.mubr.bf16.mxu0 %v507
  %1266 = vmatmul.mubr.bf16.gmra.mrb[0].mxu0 %v506
  %v1267 = vpop.f32.mrb[0].mxu0
  %v1268 = vadd.f32 %v1179, %v1267
  %v1269 = vpop.f32.mrb[0].mxu0
  %v1270 = vpop.f32.mrb[0].mxu0
  %v1271 = vadd.f32 %v1182, %v1270
  %v1272 = vpop.f32.mrb[0].mxu0
  %1273 = vmatprep.mubr.bf16.mxu0 %v516
  %1274 = vmatmul.mubr.bf16.gmra.mrb[0].mxu0 %v515
  %v1275 = vpop.f32.mrb[0].mxu0
  %v1276 = vadd.f32 %v1187, %v1275
  %v1277 = vpop.f32.mrb[0].mxu0
  %v1278 = vpop.f32.mrb[0].mxu0
  %v1279 = vadd.f32 %v1190, %v1278
  %v1280 = vpop.f32.mrb[0].mxu0
  %1281 = vdwg.mxu0
  %1282 = vmatprep.subr.bf16.mxu0 0
  %1283 = vmatpush1.bf16.msra.mxu0 %v919
  %1284 = vmatprep.subr.bf16.mxu0 0
  %1285 = vmatpush1.bf16.msra.mxu0 %v920
  %1286 = vmatprep.subr.bf16.mxu0 0
  %1287 = vmatpush1.bf16.msra.mxu0 %v921
  %1288 = vmatprep.subr.bf16.mxu0 0
  %1289 = vmatpush1.bf16.msra.mxu0 %v922
  %1290 = vmatprep.subr.bf16.mxu0 0
  %1291 = vmatpush1.bf16.msra.mxu0 %v923
  %1292 = vmatprep.subr.bf16.mxu0 0
  %1293 = vmatpush1.bf16.msra.mxu0 %v924
  %1294 = vmatprep.subr.bf16.mxu0 0
  %1295 = vmatpush1.bf16.msra.mxu0 %v925
  %1296 = vmatprep.subr.bf16.mxu0 0
  %1297 = vmatpush1.bf16.msra.mxu0 %v926
  %1298 = vmatprep.subr.bf16.mxu0 0
  %1299 = vmatpush1.bf16.msra.mxu0 %v927
  %1300 = vmatprep.subr.bf16.mxu0 0
  %1301 = vmatpush1.bf16.msra.mxu0 %v928
  %1302 = vmatprep.subr.bf16.mxu0 0
  %1303 = vmatpush1.bf16.msra.mxu0 %v929
  %1304 = vmatprep.subr.bf16.mxu0 0
  %1305 = vmatpush1.bf16.msra.mxu0 %v930
  %1306 = vmatprep.subr.bf16.mxu0 0
  %1307 = vmatpush1.bf16.msra.mxu0 %v931
  %1308 = vmatprep.subr.bf16.mxu0 0
  %1309 = vmatpush1.bf16.msra.mxu0 %v932
  %1310 = vmatprep.subr.bf16.mxu0 0
  %1311 = vmatpush1.bf16.msra.mxu0 %v933
  %1312 = vmatprep.subr.bf16.mxu0 0
  %1313 = vmatpush1.bf16.msra.mxu0 %v934
  %1314 = vmatprep.mubr.bf16.mxu0 %v464
  %1315 = vmatmul.mubr.bf16.gmra.mrb[0].mxu0 %v463
  %v1316 = vpop.f32.mrb[0].mxu0
  %v1317 = vadd.f32 %v1228, %v1316
  %v1318 = vpop.f32.mrb[0].mxu0
  %v1319 = vpop.f32.mrb[0].mxu0
  %v1320 = vadd.f32 %v1231, %v1319
  %v1321 = vpop.f32.mrb[0].mxu0
  %1322 = vmatprep.mubr.bf16.mxu0 %v473
  %1323 = vmatmul.mubr.bf16.gmra.mrb[0].mxu0 %v472
  %v1324 = vpop.f32.mrb[0].mxu0
  %v1325 = vadd.f32 %v1236, %v1324
  %v1326 = vpop.f32.mrb[0].mxu0
  %v1327 = vpop.f32.mrb[0].mxu0
  %v1328 = vadd.f32 %v1239, %v1327
  %v1329 = vpop.f32.mrb[0].mxu0
  %1330 = vmatprep.mubr.bf16.mxu0 %v482
  %1331 = vmatmul.mubr.bf16.gmra.mrb[0].mxu0 %v481
  %v1332 = vpop.f32.mrb[0].mxu0
  %v1333 = vadd.f32 %v1244, %v1332
  %v1334 = vpop.f32.mrb[0].mxu0
  %v1335 = vpop.f32.mrb[0].mxu0
  %v1336 = vadd.f32 %v1247, %v1335
  %v1337 = vpop.f32.mrb[0].mxu0
  %1338 = vmatprep.mubr.bf16.mxu0 %v491
  %1339 = vmatmul.mubr.bf16.gmra.mrb[0].mxu0 %v490
  %v1340 = vpop.f32.mrb[0].mxu0
  %v1341 = vadd.f32 %v1252, %v1340
  %v1342 = vpop.f32.mrb[0].mxu0
  %v1343 = vpop.f32.mrb[0].mxu0
  %v1344 = vadd.f32 %v1255, %v1343
  %v1345 = vpop.f32.mrb[0].mxu0
  %1346 = vmatprep.mubr.bf16.mxu0 %v500
  %1347 = vmatmul.mubr.bf16.gmra.mrb[0].mxu0 %v499
  %v1348 = vpop.f32.mrb[0].mxu0
  %v1349 = vadd.f32 %v1260, %v1348
  %v1350 = vpop.f32.mrb[0].mxu0
  %v1351 = vpop.f32.mrb[0].mxu0
  %v1352 = vadd.f32 %v1263, %v1351
  %v1353 = vpop.f32.mrb[0].mxu0
  %1354 = vmatprep.mubr.bf16.mxu0 %v509
  %1355 = vmatmul.mubr.bf16.gmra.mrb[0].mxu0 %v508
  %v1356 = vpop.f32.mrb[0].mxu0
  %v1357 = vadd.f32 %v1268, %v1356
  %v1358 = vpop.f32.mrb[0].mxu0
  %v1359 = vpop.f32.mrb[0].mxu0
  %v1360 = vadd.f32 %v1271, %v1359
  %v1361 = vpop.f32.mrb[0].mxu0
  %1362 = vmatprep.mubr.bf16.mxu0 %v518
  %1363 = vmatmul.mubr.bf16.gmra.mrb[0].mxu0 %v517
  %v1364 = vpop.f32.mrb[0].mxu0
  %v1365 = vadd.f32 %v1276, %v1364
  %v1366 = vpop.f32.mrb[0].mxu0
  %v1367 = vpop.f32.mrb[0].mxu0
  %v1368 = vadd.f32 %v1279, %v1367
  %v1369 = vpop.f32.mrb[0].mxu0
  %1370 = vdwg.mxu0
  %1371 = vmatprep.subr.bf16.mxu0 0
  %1372 = vmatpush1.bf16.msra.mxu0 %v935
  %1373 = vmatprep.subr.bf16.mxu0 0
  %1374 = vmatpush1.bf16.msra.mxu0 %v936
  %1375 = vmatprep.subr.bf16.mxu0 0
  %1376 = vmatpush1.bf16.msra.mxu0 %v937
  %1377 = vmatprep.subr.bf16.mxu0 0
  %1378 = vmatpush1.bf16.msra.mxu0 %v938
  %1379 = vmatprep.subr.bf16.mxu0 0
  %1380 = vmatpush1.bf16.msra.mxu0 %v939
  %1381 = vmatprep.subr.bf16.mxu0 0
  %1382 = vmatpush1.bf16.msra.mxu0 %v940
  %1383 = vmatprep.subr.bf16.mxu0 0
  %1384 = vmatpush1.bf16.msra.mxu0 %v941
  %1385 = vmatprep.subr.bf16.mxu0 0
  %1386 = vmatpush1.bf16.msra.mxu0 %v942
  %1387 = vmatprep.subr.bf16.mxu0 0
  %1388 = vmatpush1.bf16.msra.mxu0 0
  %1389 = vmatprep.subr.bf16.mxu0 0
  %1390 = vmatpush1.bf16.msra.mxu0 0
  %1391 = vmatprep.subr.bf16.mxu0 0
  %1392 = vmatpush1.bf16.msra.mxu0 0
  %1393 = vmatprep.subr.bf16.mxu0 0
  %1394 = vmatpush1.bf16.msra.mxu0 0
  %1395 = vmatprep.subr.bf16.mxu0 0
  %1396 = vmatpush1.bf16.msra.mxu0 0
  %1397 = vmatprep.subr.bf16.mxu0 0
  %1398 = vmatpush1.bf16.msra.mxu0 0
  %1399 = vmatprep.subr.bf16.mxu0 0
  %1400 = vmatpush1.bf16.msra.mxu0 0
  %1401 = vmatprep.subr.bf16.mxu0 0
  %1402 = vmatpush1.bf16.msra.mxu0 0
  %1403 = vmatprep.mubr.bf16.mxu0 0
  %1404 = vmatmul.mubr.bf16.gmra.mrb[0].mxu0 %v465
  %v1405 = vpop.f32.mrb[0].mxu0
  %v1406 = vadd.f32 %v1317, %v1405
  %v1407 = vpop.f32.mrb[0].mxu0
  %v1408 = vpop.f32.mrb[0].mxu0
  %v1409 = vadd.f32 %v1320, %v1408
  %v1410 = vpop.f32.mrb[0].mxu0
  %1411 = vmatprep.mubr.bf16.mxu0 0
  %1412 = vmatmul.mubr.bf16.gmra.mrb[0].mxu0 %v474
  %v1413 = vpop.f32.mrb[0].mxu0
  %v1414 = vadd.f32 %v1325, %v1413
  %v1415 = vpop.f32.mrb[0].mxu0
  %v1416 = vpop.f32.mrb[0].mxu0
  %v1417 = vadd.f32 %v1328, %v1416
  %v1418 = vpop.f32.mrb[0].mxu0
  %1419 = vmatprep.mubr.bf16.mxu0 0
  %1420 = vmatmul.mubr.bf16.gmra.mrb[0].mxu0 %v483
  %v1421 = vpop.f32.mrb[0].mxu0
  %v1422 = vadd.f32 %v1333, %v1421
  %v1423 = vpop.f32.mrb[0].mxu0
  %v1424 = vpop.f32.mrb[0].mxu0
  %v1425 = vadd.f32 %v1336, %v1424
  %v1426 = vpop.f32.mrb[0].mxu0
  %1427 = vmatprep.mubr.bf16.mxu0 0
  %1428 = vmatmul.mubr.bf16.gmra.mrb[0].mxu0 %v492
  %v1429 = vpop.f32.mrb[0].mxu0
  %v1430 = vadd.f32 %v1341, %v1429
  %v1431 = vpop.f32.mrb[0].mxu0
  %v1432 = vpop.f32.mrb[0].mxu0
  %v1433 = vadd.f32 %v1344, %v1432
  %v1434 = vpop.f32.mrb[0].mxu0
  %1435 = vmatprep.mubr.bf16.mxu0 0
  %1436 = vmatmul.mubr.bf16.gmra.mrb[0].mxu0 %v501
  %v1437 = vpop.f32.mrb[0].mxu0
  %v1438 = vadd.f32 %v1349, %v1437
  %v1439 = vpop.f32.mrb[0].mxu0
  %v1440 = vpop.f32.mrb[0].mxu0
  %v1441 = vadd.f32 %v1352, %v1440
  %v1442 = vpop.f32.mrb[0].mxu0
  %1443 = vmatprep.mubr.bf16.mxu0 0
  %1444 = vmatmul.mubr.bf16.gmra.mrb[0].mxu0 %v510
  %v1445 = vpop.f32.mrb[0].mxu0
  %v1446 = vadd.f32 %v1357, %v1445
  %v1447 = vpop.f32.mrb[0].mxu0
  %v1448 = vpop.f32.mrb[0].mxu0
  %v1449 = vadd.f32 %v1360, %v1448
  %v1450 = vpop.f32.mrb[0].mxu0
  %1451 = vmatprep.mubr.bf16.mxu0 0
  %1452 = vmatmul.mubr.bf16.gmra.mrb[0].mxu0 %v519
  %v1453 = vpop.f32.mrb[0].mxu0
  %v1454 = vadd.f32 %v1365, %v1453
  %v1455 = vpop.f32.mrb[0].mxu0
  %v1456 = vpop.f32.mrb[0].mxu0
  %v1457 = vadd.f32 %v1368, %v1456
  %v1458 = vpop.f32.mrb[0].mxu0
  %1459 = vdwg.mxu0
  %v1460 = vadd.f32 %v33, %v1406
  %v1461 = vadd.f32 %v34, %v1409
  %v1462 = vadd.f32 %v35, %v1414
  %v1463 = vadd.f32 %v36, %v1417
  %v1464 = vadd.f32 %v37, %v1422
  %v1465 = vadd.f32 %v38, %v1425
  %v1466 = vadd.f32 %v39, %v1430
  %v1467 = vadd.f32 %v40, %v1433
  %v1468 = vadd.f32 %v41, %v1438
  %v1469 = vadd.f32 %v42, %v1441
  %v1470 = vadd.f32 %v43, %v1446
  %v1471 = vadd.f32 %v44, %v1449
  %v1472 = vadd.f32 %v45, %v1454
  %v1473 = vadd.f32 %v46, %v1457
  %1474 = vst [vmem:[#allocation2] sm:$0xff] %v1460
  %1475 = vst [vmem:[#allocation2 + $0x8] sm:$0xff] %v1461
  %1476 = vst [vmem:[#allocation2 + $0x10] sm:$0xff] %v1462
  %1477 = vst [vmem:[#allocation2 + $0x18] sm:$0xff] %v1463
  %1478 = vst [vmem:[#allocation2 + $0x20] sm:$0xff] %v1464
  %1479 = vst [vmem:[#allocation2 + $0x28] sm:$0xff] %v1465
  %1480 = vst [vmem:[#allocation2 + $0x30] sm:$0xff] %v1466
  %1481 = vst [vmem:[#allocation2 + $0x38] sm:$0xff] %v1467
  %1482 = vst [vmem:[#allocation2 + $0x40] sm:$0xff] %v1468
  %1483 = vst [vmem:[#allocation2 + $0x48] sm:$0xff] %v1469
  %1484 = vst [vmem:[#allocation2 + $0x50] sm:$0xff] %v1470
  %1485 = vst [vmem:[#allocation2 + $0x58] sm:$0xff] %v1471
  %1486 = vst [vmem:[#allocation2 + $0x60] sm:$0xff] %v1472
  %1487 = vst [vmem:[#allocation2 + $0x68] sm:$0xff] %v1473
  // Predicated region
  $region18: #{_lambda_.7} parent=0 // pred_check
    %p1488 = pneg %p15
  $region19: #{_lambda_.7} parent=0 // pred_check_branch
    %1490 = sbr.rel (%p1488) target = $region21
  $region20: #{_lambda_.7} parent=0 // pred_region
    %v1491 = vld [vmem:[#allocation2] sm:$0xff]
    %v1492 = vld [vmem:[#allocation2 + $0x8] sm:$0xff]
    %v1493 = vld [vmem:[#allocation2 + $0x10] sm:$0xff]
    %v1494 = vld [vmem:[#allocation2 + $0x18] sm:$0xff]
    %v1495 = vld [vmem:[#allocation2 + $0x20] sm:$0xff]
    %v1496 = vld [vmem:[#allocation2 + $0x28] sm:$0xff]
    %v1497 = vld [vmem:[#allocation2 + $0x30] sm:$0xff]
    %v1498 = vld [vmem:[#allocation2 + $0x38] sm:$0xff]
    %v1499 = vld [vmem:[#allocation2 + $0x40] sm:$0xff]
    %v1500 = vld [vmem:[#allocation2 + $0x48] sm:$0xff]
    %v1501 = vld [vmem:[#allocation2 + $0x50] sm:$0xff]
    %v1502 = vld [vmem:[#allocation2 + $0x58] sm:$0xff]
    %v1503 = vld [vmem:[#allocation2 + $0x60] sm:$0xff]
    %v1504 = vld [vmem:[#allocation2 + $0x68] sm:$0xff]
    %v1505 = vld [vmem:[%s2] sm:$0x1]
    %v1507 = vlaneseq
    %v1508 = vshrl.u32 %v1507, 7
    %v1509 = vsub.s32 0, %v1508
    %v1510 = vrot.slane %v1505, %v1509
    %v1512 = vadd.f32 %v1491, %v1510
    %v1513 = vadd.f32 %v1492, %v1510
    %v1514 = vadd.f32 %v1493, %v1510
    %v1515 = vadd.f32 %v1494, %v1510
    %v1516 = vadd.f32 %v1495, %v1510
    %v1517 = vadd.f32 %v1496, %v1510
    %v1518 = vadd.f32 %v1497, %v1510
    %v1519 = vadd.f32 %v1498, %v1510
    %v1520 = vadd.f32 %v1499, %v1510
    %v1521 = vadd.f32 %v1500, %v1510
    %v1522 = vadd.f32 %v1501, %v1510
    %v1523 = vadd.f32 %v1502, %v1510
    %v1524 = vadd.f32 %v1503, %v1510
    %v1525 = vadd.f32 %v1504, %v1510
    %v1526 = vmax.f32 %v1512, 0.0
    %v1527 = vmax.f32 %v1513, 0.0
    %v1528 = vmax.f32 %v1514, 0.0
    %v1529 = vmax.f32 %v1515, 0.0
    %v1530 = vmax.f32 %v1516, 0.0
    %v1531 = vmax.f32 %v1517, 0.0
    %v1532 = vmax.f32 %v1518, 0.0
    %v1533 = vmax.f32 %v1519, 0.0
    %v1534 = vmax.f32 %v1520, 0.0
    %v1535 = vmax.f32 %v1521, 0.0
    %v1536 = vmax.f32 %v1522, 0.0
    %v1537 = vmax.f32 %v1523, 0.0
    %v1538 = vmax.f32 %v1524, 0.0
    %v1539 = vmax.f32 %v1525, 0.0
    %1540 = vst [vmem:[%s3] sm:$0xff] %v1526
    %1541 = vst [vmem:[%s3 + $0x8] sm:$0xff] %v1527
    %1542 = vst [vmem:[%s3 + $0x10] sm:$0xff] %v1528
    %1543 = vst [vmem:[%s3 + $0x18] sm:$0xff] %v1529
    %1544 = vst [vmem:[%s3 + $0x20] sm:$0xff] %v1530
    %1545 = vst [vmem:[%s3 + $0x28] sm:$0xff] %v1531
    %1546 = vst [vmem:[%s3 + $0x30] sm:$0xff] %v1532
    %1547 = vst [vmem:[%s3 + $0x38] sm:$0xff] %v1533
    %1548 = vst [vmem:[%s3 + $0x40] sm:$0xff] %v1534
    %1549 = vst [vmem:[%s3 + $0x48] sm:$0xff] %v1535
    %1550 = vst [vmem:[%s3 + $0x50] sm:$0xff] %v1536
    %1551 = vst [vmem:[%s3 + $0x58] sm:$0xff] %v1537
    %1552 = vst [vmem:[%s3 + $0x60] sm:$0xff] %v1538
    %1553 = vst [vmem:[%s3 + $0x68] sm:$0xff] %v1539
  $region21: #{_lambda_.7} parent=0 // pred_fallthru
    _
  // Predicated region
  $region22: #{_lambda_.7} parent=0 // pred_check
    _
  $region23: #{_lambda_.7} parent=0 // pred_check_branch
    %1555 = sbr.rel (0) target = $region25
  $region24: #{_lambda_.7} parent=0 // pred_region
    _
  $region25: #{_lambda_.7} parent=0 // pred_fallthru
    _
  // Predicated region
  $region26: #{_lambda_.7} parent=0 // pred_check
    _
  $region27: #{_lambda_.7} parent=0 // pred_check_branch
    %1557 = sbr.rel (0) target = $region29
  $region28: #{_lambda_.7} parent=0 // pred_region
    _
  $region29: #{_lambda_.7} parent=0 // pred_fallthru
    _

// kernel: _lambda_.9
$region0: #{_lambda_.9}
  #allocation0 [shape = 'u32[]', space=smem, size = 0x4, offset = 0x4, fixed_abs, tag = 'smem constant byte address 0x4 - core index']
  #allocation1 [shape = 'u32[144,128]{1,0:T(1,128)}', space=vmem, size = 0x12000, scoped, tag = 'internal scratch']
  #allocation2 [shape = 'f32[512,128]{1,0:T(8,128)}', space=vmem, size = 0x40000, scoped, tag = 'scratch operand']
  %s0 = inlined_call_operand.vmem [shape: bf16[512,1152], index: 0, kind: input, shape index: {}]
  %s1 = inlined_call_operand.vmem [shape: bf16[1152,128], index: 1, kind: input, shape index: {}]
  %s2 = inlined_call_operand.vmem [shape: f32[1,128], index: 2, kind: input, shape index: {}]
  %s3 = inlined_call_operand.vmem [shape: bf16[512,128], index: 3, kind: output, shape index: {}]
  %s4 = sld [smem:[#allocation0]]
  $region30: #{_lambda_.9} parent=0
    _
  %s6 = ssub.s32 1, %s4
  %s7 = scalar_select 0, %s6, %s4
  // Predicated region
  $region2: #{_lambda_.9} parent=0 // pred_check
    _
  $region3: #{_lambda_.9} parent=0 // pred_check_branch
    %9 = sbr.rel (0) target = $region5
  $region4: #{_lambda_.9} parent=0 // pred_region
    _
  $region5: #{_lambda_.9} parent=0 // pred_fallthru
    _
  // Predicated region
  $region6: #{_lambda_.9} parent=0 // pred_check
    _
  $region7: #{_lambda_.9} parent=0 // pred_check_branch
    %11 = sbr.rel (0) target = $region9
  $region8: #{_lambda_.9} parent=0 // pred_region
    _
  $region9: #{_lambda_.9} parent=0 // pred_fallthru
    _
  // Predicated region
  $region10: #{_lambda_.9} parent=0 // pred_check
    _
  $region11: #{_lambda_.9} parent=0 // pred_check_branch
    %13 = sbr.rel (0) target = $region13
  $region12: #{_lambda_.9} parent=0 // pred_region
    _
  $region13: #{_lambda_.9} parent=0 // pred_fallthru
    _
  %p15 = scmp.eq.s32.totalorder 0, 0
  // Predicated region
  $region14: #{_lambda_.9} parent=0 // pred_check
    %p16 = pneg %p15
  $region15: #{_lambda_.9} parent=0 // pred_check_branch
    %18 = sbr.rel (%p16) target = $region17
  $region16: #{_lambda_.9} parent=0 // pred_region
    %19 = vst [vmem:[#allocation2] sm:$0xff] 0.0
    %20 = vst [vmem:[#allocation2 + $0x8] sm:$0xff] 0.0
    %21 = vst [vmem:[#allocation2 + $0x10] sm:$0xff] 0.0
    %22 = vst [vmem:[#allocation2 + $0x18] sm:$0xff] 0.0
    %23 = vst [vmem:[#allocation2 + $0x20] sm:$0xff] 0.0
    %24 = vst [vmem:[#allocation2 + $0x28] sm:$0xff] 0.0
    %25 = vst [vmem:[#allocation2 + $0x30] sm:$0xff] 0.0
    %26 = vst [vmem:[#allocation2 + $0x38] sm:$0xff] 0.0
    %27 = vst [vmem:[#allocation2 + $0x40] sm:$0xff] 0.0
    %28 = vst [vmem:[#allocation2 + $0x48] sm:$0xff] 0.0
    %29 = vst [vmem:[#allocation2 + $0x50] sm:$0xff] 0.0
    %30 = vst [vmem:[#allocation2 + $0x58] sm:$0xff] 0.0
    %31 = vst [vmem:[#allocation2 + $0x60] sm:$0xff] 0.0
    %32 = vst [vmem:[#allocation2 + $0x68] sm:$0xff] 0.0
    %33 = vst [vmem:[#allocation2 + $0x70] sm:$0xff] 0.0
    %34 = vst [vmem:[#allocation2 + $0x78] sm:$0xff] 0.0
    %35 = vst [vmem:[#allocation2 + $0x80] sm:$0xff] 0.0
    %36 = vst [vmem:[#allocation2 + $0x88] sm:$0xff] 0.0
    %37 = vst [vmem:[#allocation2 + $0x90] sm:$0xff] 0.0
    %38 = vst [vmem:[#allocation2 + $0x98] sm:$0xff] 0.0
    %39 = vst [vmem:[#allocation2 + $0xa0] sm:$0xff] 0.0
    %40 = vst [vmem:[#allocation2 + $0xa8] sm:$0xff] 0.0
    %41 = vst [vmem:[#allocation2 + $0xb0] sm:$0xff] 0.0
    %42 = vst [vmem:[#allocation2 + $0xb8] sm:$0xff] 0.0
    %43 = vst [vmem:[#allocation2 + $0xc0] sm:$0xff] 0.0
    %44 = vst [vmem:[#allocation2 + $0xc8] sm:$0xff] 0.0
    %45 = vst [vmem:[#allocation2 + $0xd0] sm:$0xff] 0.0
    %46 = vst [vmem:[#allocation2 + $0xd8] sm:$0xff] 0.0
    %47 = vst [vmem:[#allocation2 + $0xe0] sm:$0xff] 0.0
    %48 = vst [vmem:[#allocation2 + $0xe8] sm:$0xff] 0.0
    %49 = vst [vmem:[#allocation2 + $0xf0] sm:$0xff] 0.0
    %50 = vst [vmem:[#allocation2 + $0xf8] sm:$0xff] 0.0
    %51 = vst [vmem:[#allocation2 + $0x100] sm:$0xff] 0.0
    %52 = vst [vmem:[#allocation2 + $0x108] sm:$0xff] 0.0
    %53 = vst [vmem:[#allocation2 + $0x110] sm:$0xff] 0.0
    %54 = vst [vmem:[#allocation2 + $0x118] sm:$0xff] 0.0
    %55 = vst [vmem:[#allocation2 + $0x120] sm:$0xff] 0.0
    %56 = vst [vmem:[#allocation2 + $0x128] sm:$0xff] 0.0
    %57 = vst [vmem:[#allocation2 + $0x130] sm:$0xff] 0.0
    %58 = vst [vmem:[#allocation2 + $0x138] sm:$0xff] 0.0
    %59 = vst [vmem:[#allocation2 + $0x140] sm:$0xff] 0.0
    %60 = vst [vmem:[#allocation2 + $0x148] sm:$0xff] 0.0
    %61 = vst [vmem:[#allocation2 + $0x150] sm:$0xff] 0.0
    %62 = vst [vmem:[#allocation2 + $0x158] sm:$0xff] 0.0
    %63 = vst [vmem:[#allocation2 + $0x160] sm:$0xff] 0.0
    %64 = vst [vmem:[#allocation2 + $0x168] sm:$0xff] 0.0
    %65 = vst [vmem:[#allocation2 + $0x170] sm:$0xff] 0.0
    %66 = vst [vmem:[#allocation2 + $0x178] sm:$0xff] 0.0
    %67 = vst [vmem:[#allocation2 + $0x180] sm:$0xff] 0.0
    %68 = vst [vmem:[#allocation2 + $0x188] sm:$0xff] 0.0
    %69 = vst [vmem:[#allocation2 + $0x190] sm:$0xff] 0.0
    %70 = vst [vmem:[#allocation2 + $0x198] sm:$0xff] 0.0
    %71 = vst [vmem:[#allocation2 + $0x1a0] sm:$0xff] 0.0
    %72 = vst [vmem:[#allocation2 + $0x1a8] sm:$0xff] 0.0
    %73 = vst [vmem:[#allocation2 + $0x1b0] sm:$0xff] 0.0
    %74 = vst [vmem:[#allocation2 + $0x1b8] sm:$0xff] 0.0
    %75 = vst [vmem:[#allocation2 + $0x1c0] sm:$0xff] 0.0
    %76 = vst [vmem:[#allocation2 + $0x1c8] sm:$0xff] 0.0
    %77 = vst [vmem:[#allocation2 + $0x1d0] sm:$0xff] 0.0
    %78 = vst [vmem:[#allocation2 + $0x1d8] sm:$0xff] 0.0
    %79 = vst [vmem:[#allocation2 + $0x1e0] sm:$0xff] 0.0
    %80 = vst [vmem:[#allocation2 + $0x1e8] sm:$0xff] 0.0
    %81 = vst [vmem:[#allocation2 + $0x1f0] sm:$0xff] 0.0
    %82 = vst [vmem:[#allocation2 + $0x1f8] sm:$0xff] 0.0
  $region17: #{_lambda_.9} parent=0 // pred_fallthru
    _
  %v83 = vld [vmem:[#allocation2] sm:$0xff]
  %v84 = vld [vmem:[#allocation2 + $0x8] sm:$0xff]
  %v85 = vld [vmem:[#allocation2 + $0x10] sm:$0xff]
  %v86 = vld [vmem:[#allocation2 + $0x18] sm:$0xff]
  %v87 = vld [vmem:[#allocation2 + $0x20] sm:$0xff]
  %v88 = vld [vmem:[#allocation2 + $0x28] sm:$0xff]
  %v89 = vld [vmem:[#allocation2 + $0x30] sm:$0xff]
  %v90 = vld [vmem:[#allocation2 + $0x38] sm:$0xff]
  %v91 = vld [vmem:[#allocation2 + $0x40] sm:$0xff]
  %v92 = vld [vmem:[#allocation2 + $0x48] sm:$0xff]
  %v93 = vld [vmem:[#allocation2 + $0x50] sm:$0xff]
  %v94 = vld [vmem:[#allocation2 + $0x58] sm:$0xff]
  %v95 = vld [vmem:[#allocation2 + $0x60] sm:$0xff]
  %v96 = vld [vmem:[#allocation2 + $0x68] sm:$0xff]
  %v97 = vld [vmem:[#allocation2 + $0x70] sm:$0xff]
  %v98 = vld [vmem:[#allocation2 + $0x78] sm:$0xff]
  %v99 = vld [vmem:[#allocation2 + $0x80] sm:$0xff]
  %v100 = vld [vmem:[#allocation2 + $0x88] sm:$0xff]
  %v101 = vld [vmem:[#allocation2 + $0x90] sm:$0xff]
  %v102 = vld [vmem:[#allocation2 + $0x98] sm:$0xff]
  %v103 = vld [vmem:[#allocation2 + $0xa0] sm:$0xff]
  %v104 = vld [vmem:[#allocation2 + $0xa8] sm:$0xff]
  %v105 = vld [vmem:[#allocation2 + $0xb0] sm:$0xff]
  %v106 = vld [vmem:[#allocation2 + $0xb8] sm:$0xff]
  %v107 = vld [vmem:[#allocation2 + $0xc0] sm:$0xff]
  %v108 = vld [vmem:[#allocation2 + $0xc8] sm:$0xff]
  %v109 = vld [vmem:[#allocation2 + $0xd0] sm:$0xff]
  %v110 = vld [vmem:[#allocation2 + $0xd8] sm:$0xff]
  %v111 = vld [vmem:[#allocation2 + $0xe0] sm:$0xff]
  %v112 = vld [vmem:[#allocation2 + $0xe8] sm:$0xff]
  %v113 = vld [vmem:[#allocation2 + $0xf0] sm:$0xff]
  %v114 = vld [vmem:[#allocation2 + $0xf8] sm:$0xff]
  %v115 = vld [vmem:[#allocation2 + $0x100] sm:$0xff]
  %v116 = vld [vmem:[#allocation2 + $0x108] sm:$0xff]
  %v117 = vld [vmem:[#allocation2 + $0x110] sm:$0xff]
  %v118 = vld [vmem:[#allocation2 + $0x118] sm:$0xff]
  %v119 = vld [vmem:[#allocation2 + $0x120] sm:$0xff]
  %v120 = vld [vmem:[#allocation2 + $0x128] sm:$0xff]
  %v121 = vld [vmem:[#allocation2 + $0x130] sm:$0xff]
  %v122 = vld [vmem:[#allocation2 + $0x138] sm:$0xff]
  %v123 = vld [vmem:[#allocation2 + $0x140] sm:$0xff]
  %v124 = vld [vmem:[#allocation2 + $0x148] sm:$0xff]
  %v125 = vld [vmem:[#allocation2 + $0x150] sm:$0xff]
  %v126 = vld [vmem:[#allocation2 + $0x158] sm:$0xff]
  %v127 = vld [vmem:[#allocation2 + $0x160] sm:$0xff]
  %v128 = vld [vmem:[#allocation2 + $0x168] sm:$0xff]
  %v129 = vld [vmem:[#allocation2 + $0x170] sm:$0xff]
  %v130 = vld [vmem:[#allocation2 + $0x178] sm:$0xff]
  %v131 = vld [vmem:[#allocation2 + $0x180] sm:$0xff]
  %v132 = vld [vmem:[#allocation2 + $0x188] sm:$0xff]
  %v133 = vld [vmem:[#allocation2 + $0x190] sm:$0xff]
  %v134 = vld [vmem:[#allocation2 + $0x198] sm:$0xff]
  %v135 = vld [vmem:[#allocation2 + $0x1a0] sm:$0xff]
  %v136 = vld [vmem:[#allocation2 + $0x1a8] sm:$0xff]
  %v137 = vld [vmem:[#allocation2 + $0x1b0] sm:$0xff]
  %v138 = vld [vmem:[#allocation2 + $0x1b8] sm:$0xff]
  %v139 = vld [vmem:[#allocation2 + $0x1c0] sm:$0xff]
  %v140 = vld [vmem:[#allocation2 + $0x1c8] sm:$0xff]
  %v141 = vld [vmem:[#allocation2 + $0x1d0] sm:$0xff]
  %v142 = vld [vmem:[#allocation2 + $0x1d8] sm:$0xff]
  %v143 = vld [vmem:[#allocation2 + $0x1e0] sm:$0xff]
  %v144 = vld [vmem:[#allocation2 + $0x1e8] sm:$0xff]
  %v145 = vld [vmem:[#allocation2 + $0x1f0] sm:$0xff]
  %v146 = vld [vmem:[#allocation2 + $0x1f8] sm:$0xff]
  %v147 = vld [vmem:[%s0] sm:$0xff]
  %v148 = vld [vmem:[%s0 + $0x8] sm:$0xff]
  %v149 = vld [vmem:[%s0 + $0x10] sm:$0xff]
  %v150 = vld [vmem:[%s0 + $0x18] sm:$0xff]
  %v151 = vld [vmem:[%s0 + $0x20] sm:$0xf]
  %v152 = vld [vmem:[%s0 + $0x24] sm:$0xff]
  %v153 = vld [vmem:[%s0 + $0x2c] sm:$0xff]
  %v154 = vld [vmem:[%s0 + $0x34] sm:$0xff]
  %v155 = vld [vmem:[%s0 + $0x3c] sm:$0xff]
  %v156 = vld [vmem:[%s0 + $0x44] sm:$0xf]
  %v157 = vld [vmem:[%s0 + $0x48] sm:$0xff]
  %v158 = vld [vmem:[%s0 + $0x50] sm:$0xff]
  %v159 = vld [vmem:[%s0 + $0x58] sm:$0xff]
  %v160 = vld [vmem:[%s0 + $0x60] sm:$0xff]
  %v161 = vld [vmem:[%s0 + $0x68] sm:$0xf]
  %v162 = vld [vmem:[%s0 + $0x6c] sm:$0xff]
  %v163 = vld [vmem:[%s0 + $0x74] sm:$0xff]
  %v164 = vld [vmem:[%s0 + $0x7c] sm:$0xff]
  %v165 = vld [vmem:[%s0 + $0x84] sm:$0xff]
  %v166 = vld [vmem:[%s0 + $0x8c] sm:$0xf]
  %v167 = vld [vmem:[%s0 + $0x90] sm:$0xff]
  %v168 = vld [vmem:[%s0 + $0x98] sm:$0xff]
  %v169 = vld [vmem:[%s0 + $0xa0] sm:$0xff]
  %v170 = vld [vmem:[%s0 + $0xa8] sm:$0xff]
  %v171 = vld [vmem:[%s0 + $0xb0] sm:$0xf]
  %v172 = vld [vmem:[%s0 + $0xb4] sm:$0xff]
  %v173 = vld [vmem:[%s0 + $0xbc] sm:$0xff]
  %v174 = vld [vmem:[%s0 + $0xc4] sm:$0xff]
  %v175 = vld [vmem:[%s0 + $0xcc] sm:$0xff]
  %v176 = vld [vmem:[%s0 + $0xd4] sm:$0xf]
  %v177 = vld [vmem:[%s0 + $0xd8] sm:$0xff]
  %v178 = vld [vmem:[%s0 + $0xe0] sm:$0xff]
  %v179 = vld [vmem:[%s0 + $0xe8] sm:$0xff]
  %v180 = vld [vmem:[%s0 + $0xf0] sm:$0xff]
  %v181 = vld [vmem:[%s0 + $0xf8] sm:$0xf]
  %v182 = vld [vmem:[%s0 + $0xfc] sm:$0xff]
  %v183 = vld [vmem:[%s0 + $0x104] sm:$0xff]
  %v184 = vld [vmem:[%s0 + $0x10c] sm:$0xff]
  %v185 = vld [vmem:[%s0 + $0x114] sm:$0xff]
  %v186 = vld [vmem:[%s0 + $0x11c] sm:$0xf]
  %v187 = vld [vmem:[%s0 + $0x120] sm:$0xff]
  %v188 = vld [vmem:[%s0 + $0x128] sm:$0xff]
  %v189 = vld [vmem:[%s0 + $0x130] sm:$0xff]
  %v190 = vld [vmem:[%s0 + $0x138] sm:$0xff]
  %v191 = vld [vmem:[%s0 + $0x140] sm:$0xf]
  %v192 = vld [vmem:[%s0 + $0x144] sm:$0xff]
  %v193 = vld [vmem:[%s0 + $0x14c] sm:$0xff]
  %v194 = vld [vmem:[%s0 + $0x154] sm:$0xff]
  %v195 = vld [vmem:[%s0 + $0x15c] sm:$0xff]
  %v196 = vld [vmem:[%s0 + $0x164] sm:$0xf]
  %v197 = vld [vmem:[%s0 + $0x168] sm:$0xff]
  %v198 = vld [vmem:[%s0 + $0x170] sm:$0xff]
  %v199 = vld [vmem:[%s0 + $0x178] sm:$0xff]
  %v200 = vld [vmem:[%s0 + $0x180] sm:$0xff]
  %v201 = vld [vmem:[%s0 + $0x188] sm:$0xf]
  %v202 = vld [vmem:[%s0 + $0x18c] sm:$0xff]
  %v203 = vld [vmem:[%s0 + $0x194] sm:$0xff]
  %v204 = vld [vmem:[%s0 + $0x19c] sm:$0xff]
  %v205 = vld [vmem:[%s0 + $0x1a4] sm:$0xff]
  %v206 = vld [vmem:[%s0 + $0x1ac] sm:$0xf]
  %v207 = vld [vmem:[%s0 + $0x1b0] sm:$0xff]
  %v208 = vld [vmem:[%s0 + $0x1b8] sm:$0xff]
  %v209 = vld [vmem:[%s0 + $0x1c0] sm:$0xff]
  %v210 = vld [vmem:[%s0 + $0x1c8] sm:$0xff]
  %v211 = vld [vmem:[%s0 + $0x1d0] sm:$0xf]
  %v212 = vld [vmem:[%s0 + $0x1d4] sm:$0xff]
  %v213 = vld [vmem:[%s0 + $0x1dc] sm:$0xff]
  %v214 = vld [vmem:[%s0 + $0x1e4] sm:$0xff]
  %v215 = vld [vmem:[%s0 + $0x1ec] sm:$0xff]
  %v216 = vld [vmem:[%s0 + $0x1f4] sm:$0xf]
  %v217 = vld [vmem:[%s0 + $0x1f8] sm:$0xff]
  %v218 = vld [vmem:[%s0 + $0x200] sm:$0xff]
  %v219 = vld [vmem:[%s0 + $0x208] sm:$0xff]
  %v220 = vld [vmem:[%s0 + $0x210] sm:$0xff]
  %v221 = vld [vmem:[%s0 + $0x218] sm:$0xf]
  %v222 = vld [vmem:[%s0 + $0x21c] sm:$0xff]
  %v223 = vld [vmem:[%s0 + $0x224] sm:$0xff]
  %v224 = vld [vmem:[%s0 + $0x22c] sm:$0xff]
  %v225 = vld [vmem:[%s0 + $0x234] sm:$0xff]
  %v226 = vld [vmem:[%s0 + $0x23c] sm:$0xf]
  %v227 = vld [vmem:[%s0 + $0x240] sm:$0xff]
  %v228 = vld [vmem:[%s0 + $0x248] sm:$0xff]
  %v229 = vld [vmem:[%s0 + $0x250] sm:$0xff]
  %v230 = vld [vmem:[%s0 + $0x258] sm:$0xff]
  %v231 = vld [vmem:[%s0 + $0x260] sm:$0xf]
  %v232 = vld [vmem:[%s0 + $0x264] sm:$0xff]
  %v233 = vld [vmem:[%s0 + $0x26c] sm:$0xff]
  %v234 = vld [vmem:[%s0 + $0x274] sm:$0xff]
  %v235 = vld [vmem:[%s0 + $0x27c] sm:$0xff]
  %v236 = vld [vmem:[%s0 + $0x284] sm:$0xf]
  %v237 = vld [vmem:[%s0 + $0x288] sm:$0xff]
  %v238 = vld [vmem:[%s0 + $0x290] sm:$0xff]
  %v239 = vld [vmem:[%s0 + $0x298] sm:$0xff]
  %v240 = vld [vmem:[%s0 + $0x2a0] sm:$0xff]
  %v241 = vld [vmem:[%s0 + $0x2a8] sm:$0xf]
  %v242 = vld [vmem:[%s0 + $0x2ac] sm:$0xff]
  %v243 = vld [vmem:[%s0 + $0x2b4] sm:$0xff]
  %v244 = vld [vmem:[%s0 + $0x2bc] sm:$0xff]
  %v245 = vld [vmem:[%s0 + $0x2c4] sm:$0xff]
  %v246 = vld [vmem:[%s0 + $0x2cc] sm:$0xf]
  %v247 = vld [vmem:[%s0 + $0x2d0] sm:$0xff]
  %v248 = vld [vmem:[%s0 + $0x2d8] sm:$0xff]
  %v249 = vld [vmem:[%s0 + $0x2e0] sm:$0xff]
  %v250 = vld [vmem:[%s0 + $0x2e8] sm:$0xff]
  %v251 = vld [vmem:[%s0 + $0x2f0] sm:$0xf]
  %v252 = vld [vmem:[%s0 + $0x2f4] sm:$0xff]
  %v253 = vld [vmem:[%s0 + $0x2fc] sm:$0xff]
  %v254 = vld [vmem:[%s0 + $0x304] sm:$0xff]
  %v255 = vld [vmem:[%s0 + $0x30c] sm:$0xff]
  %v256 = vld [vmem:[%s0 + $0x314] sm:$0xf]
  %v257 = vld [vmem:[%s0 + $0x318] sm:$0xff]
  %v258 = vld [vmem:[%s0 + $0x320] sm:$0xff]
  %v259 = vld [vmem:[%s0 + $0x328] sm:$0xff]
  %v260 = vld [vmem:[%s0 + $0x330] sm:$0xff]
  %v261 = vld [vmem:[%s0 + $0x338] sm:$0xf]
  %v262 = vld [vmem:[%s0 + $0x33c] sm:$0xff]
  %v263 = vld [vmem:[%s0 + $0x344] sm:$0xff]
  %v264 = vld [vmem:[%s0 + $0x34c] sm:$0xff]
  %v265 = vld [vmem:[%s0 + $0x354] sm:$0xff]
  %v266 = vld [vmem:[%s0 + $0x35c] sm:$0xf]
  %v267 = vld [vmem:[%s0 + $0x360] sm:$0xff]
  %v268 = vld [vmem:[%s0 + $0x368] sm:$0xff]
  %v269 = vld [vmem:[%s0 + $0x370] sm:$0xff]
  %v270 = vld [vmem:[%s0 + $0x378] sm:$0xff]
  %v271 = vld [vmem:[%s0 + $0x380] sm:$0xf]
  %v272 = vld [vmem:[%s0 + $0x384] sm:$0xff]
  %v273 = vld [vmem:[%s0 + $0x38c] sm:$0xff]
  %v274 = vld [vmem:[%s0 + $0x394] sm:$0xff]
  %v275 = vld [vmem:[%s0 + $0x39c] sm:$0xff]
  %v276 = vld [vmem:[%s0 + $0x3a4] sm:$0xf]
  %v277 = vld [vmem:[%s0 + $0x3a8] sm:$0xff]
  %v278 = vld [vmem:[%s0 + $0x3b0] sm:$0xff]
  %v279 = vld [vmem:[%s0 + $0x3b8] sm:$0xff]
  %v280 = vld [vmem:[%s0 + $0x3c0] sm:$0xff]
  %v281 = vld [vmem:[%s0 + $0x3c8] sm:$0xf]
  %v282 = vld [vmem:[%s0 + $0x3cc] sm:$0xff]
  %v283 = vld [vmem:[%s0 + $0x3d4] sm:$0xff]
  %v284 = vld [vmem:[%s0 + $0x3dc] sm:$0xff]
  %v285 = vld [vmem:[%s0 + $0x3e4] sm:$0xff]
  %v286 = vld [vmem:[%s0 + $0x3ec] sm:$0xf]
  %v287 = vld [vmem:[%s0 + $0x3f0] sm:$0xff]
  %v288 = vld [vmem:[%s0 + $0x3f8] sm:$0xff]
  %v289 = vld [vmem:[%s0 + $0x400] sm:$0xff]
  %v290 = vld [vmem:[%s0 + $0x408] sm:$0xff]
  %v291 = vld [vmem:[%s0 + $0x410] sm:$0xf]
  %v292 = vld [vmem:[%s0 + $0x414] sm:$0xff]
  %v293 = vld [vmem:[%s0 + $0x41c] sm:$0xff]
  %v294 = vld [vmem:[%s0 + $0x424] sm:$0xff]
  %v295 = vld [vmem:[%s0 + $0x42c] sm:$0xff]
  %v296 = vld [vmem:[%s0 + $0x434] sm:$0xf]
  %v297 = vld [vmem:[%s0 + $0x438] sm:$0xff]
  %v298 = vld [vmem:[%s0 + $0x440] sm:$0xff]
  %v299 = vld [vmem:[%s0 + $0x448] sm:$0xff]
  %v300 = vld [vmem:[%s0 + $0x450] sm:$0xff]
  %v301 = vld [vmem:[%s0 + $0x458] sm:$0xf]
  %v302 = vld [vmem:[%s0 + $0x45c] sm:$0xff]
  %v303 = vld [vmem:[%s0 + $0x464] sm:$0xff]
  %v304 = vld [vmem:[%s0 + $0x46c] sm:$0xff]
  %v305 = vld [vmem:[%s0 + $0x474] sm:$0xff]
  %v306 = vld [vmem:[%s0 + $0x47c] sm:$0xf]
  %v307 = vld [vmem:[%s0 + $0x480] sm:$0xff]
  %v308 = vld [vmem:[%s0 + $0x488] sm:$0xff]
  %v309 = vld [vmem:[%s0 + $0x490] sm:$0xff]
  %v310 = vld [vmem:[%s0 + $0x498] sm:$0xff]
  %v311 = vld [vmem:[%s0 + $0x4a0] sm:$0xf]
  %v312 = vld [vmem:[%s0 + $0x4a4] sm:$0xff]
  %v313 = vld [vmem:[%s0 + $0x4ac] sm:$0xff]
  %v314 = vld [vmem:[%s0 + $0x4b4] sm:$0xff]
  %v315 = vld [vmem:[%s0 + $0x4bc] sm:$0xff]
  %v316 = vld [vmem:[%s0 + $0x4c4] sm:$0xf]
  %v317 = vld [vmem:[%s0 + $0x4c8] sm:$0xff]
  %v318 = vld [vmem:[%s0 + $0x4d0] sm:$0xff]
  %v319 = vld [vmem:[%s0 + $0x4d8] sm:$0xff]
  %v320 = vld [vmem:[%s0 + $0x4e0] sm:$0xff]
  %v321 = vld [vmem:[%s0 + $0x4e8] sm:$0xf]
  %v322 = vld [vmem:[%s0 + $0x4ec] sm:$0xff]
  %v323 = vld [vmem:[%s0 + $0x4f4] sm:$0xff]
  %v324 = vld [vmem:[%s0 + $0x4fc] sm:$0xff]
  %v325 = vld [vmem:[%s0 + $0x504] sm:$0xff]
  %v326 = vld [vmem:[%s0 + $0x50c] sm:$0xf]
  %v327 = vld [vmem:[%s0 + $0x510] sm:$0xff]
  %v328 = vld [vmem:[%s0 + $0x518] sm:$0xff]
  %v329 = vld [vmem:[%s0 + $0x520] sm:$0xff]
  %v330 = vld [vmem:[%s0 + $0x528] sm:$0xff]
  %v331 = vld [vmem:[%s0 + $0x530] sm:$0xf]
  %v332 = vld [vmem:[%s0 + $0x534] sm:$0xff]
  %v333 = vld [vmem:[%s0 + $0x53c] sm:$0xff]
  %v334 = vld [vmem:[%s0 + $0x544] sm:$0xff]
  %v335 = vld [vmem:[%s0 + $0x54c] sm:$0xff]
  %v336 = vld [vmem:[%s0 + $0x554] sm:$0xf]
  %v337 = vld [vmem:[%s0 + $0x558] sm:$0xff]
  %v338 = vld [vmem:[%s0 + $0x560] sm:$0xff]
  %v339 = vld [vmem:[%s0 + $0x568] sm:$0xff]
  %v340 = vld [vmem:[%s0 + $0x570] sm:$0xff]
  %v341 = vld [vmem:[%s0 + $0x578] sm:$0xf]
  %v342 = vld [vmem:[%s0 + $0x57c] sm:$0xff]
  %v343 = vld [vmem:[%s0 + $0x584] sm:$0xff]
  %v344 = vld [vmem:[%s0 + $0x58c] sm:$0xff]
  %v345 = vld [vmem:[%s0 + $0x594] sm:$0xff]
  %v346 = vld [vmem:[%s0 + $0x59c] sm:$0xf]
  %v347 = vld [vmem:[%s0 + $0x5a0] sm:$0xff]
  %v348 = vld [vmem:[%s0 + $0x5a8] sm:$0xff]
  %v349 = vld [vmem:[%s0 + $0x5b0] sm:$0xff]
  %v350 = vld [vmem:[%s0 + $0x5b8] sm:$0xff]
  %v351 = vld [vmem:[%s0 + $0x5c0] sm:$0xf]
  %v352 = vld [vmem:[%s0 + $0x5c4] sm:$0xff]
  %v353 = vld [vmem:[%s0 + $0x5cc] sm:$0xff]
  %v354 = vld [vmem:[%s0 + $0x5d4] sm:$0xff]
  %v355 = vld [vmem:[%s0 + $0x5dc] sm:$0xff]
  %v356 = vld [vmem:[%s0 + $0x5e4] sm:$0xf]
  %v357 = vld [vmem:[%s0 + $0x5e8] sm:$0xff]
  %v358 = vld [vmem:[%s0 + $0x5f0] sm:$0xff]
  %v359 = vld [vmem:[%s0 + $0x5f8] sm:$0xff]
  %v360 = vld [vmem:[%s0 + $0x600] sm:$0xff]
  %v361 = vld [vmem:[%s0 + $0x608] sm:$0xf]
  %v362 = vld [vmem:[%s0 + $0x60c] sm:$0xff]
  %v363 = vld [vmem:[%s0 + $0x614] sm:$0xff]
  %v364 = vld [vmem:[%s0 + $0x61c] sm:$0xff]
  %v365 = vld [vmem:[%s0 + $0x624] sm:$0xff]
  %v366 = vld [vmem:[%s0 + $0x62c] sm:$0xf]
  %v367 = vld [vmem:[%s0 + $0x630] sm:$0xff]
  %v368 = vld [vmem:[%s0 + $0x638] sm:$0xff]
  %v369 = vld [vmem:[%s0 + $0x640] sm:$0xff]
  %v370 = vld [vmem:[%s0 + $0x648] sm:$0xff]
  %v371 = vld [vmem:[%s0 + $0x650] sm:$0xf]
  %v372 = vld [vmem:[%s0 + $0x654] sm:$0xff]
  %v373 = vld [vmem:[%s0 + $0x65c] sm:$0xff]
  %v374 = vld [vmem:[%s0 + $0x664] sm:$0xff]
  %v375 = vld [vmem:[%s0 + $0x66c] sm:$0xff]
  %v376 = vld [vmem:[%s0 + $0x674] sm:$0xf]
  %v377 = vld [vmem:[%s0 + $0x678] sm:$0xff]
  %v378 = vld [vmem:[%s0 + $0x680] sm:$0xff]
  %v379 = vld [vmem:[%s0 + $0x688] sm:$0xff]
  %v380 = vld [vmem:[%s0 + $0x690] sm:$0xff]
  %v381 = vld [vmem:[%s0 + $0x698] sm:$0xf]
  %v382 = vld [vmem:[%s0 + $0x69c] sm:$0xff]
  %v383 = vld [vmem:[%s0 + $0x6a4] sm:$0xff]
  %v384 = vld [vmem:[%s0 + $0x6ac] sm:$0xff]
  %v385 = vld [vmem:[%s0 + $0x6b4] sm:$0xff]
  %v386 = vld [vmem:[%s0 + $0x6bc] sm:$0xf]
  %v387 = vld [vmem:[%s0 + $0x6c0] sm:$0xff]
  %v388 = vld [vmem:[%s0 + $0x6c8] sm:$0xff]
  %v389 = vld [vmem:[%s0 + $0x6d0] sm:$0xff]
  %v390 = vld [vmem:[%s0 + $0x6d8] sm:$0xff]
  %v391 = vld [vmem:[%s0 + $0x6e0] sm:$0xf]
  %v392 = vld [vmem:[%s0 + $0x6e4] sm:$0xff]
  %v393 = vld [vmem:[%s0 + $0x6ec] sm:$0xff]
  %v394 = vld [vmem:[%s0 + $0x6f4] sm:$0xff]
  %v395 = vld [vmem:[%s0 + $0x6fc] sm:$0xff]
  %v396 = vld [vmem:[%s0 + $0x704] sm:$0xf]
  %v397 = vld [vmem:[%s0 + $0x708] sm:$0xff]
  %v398 = vld [vmem:[%s0 + $0x710] sm:$0xff]
  %v399 = vld [vmem:[%s0 + $0x718] sm:$0xff]
  %v400 = vld [vmem:[%s0 + $0x720] sm:$0xff]
  %v401 = vld [vmem:[%s0 + $0x728] sm:$0xf]
  %v402 = vld [vmem:[%s0 + $0x72c] sm:$0xff]
  %v403 = vld [vmem:[%s0 + $0x734] sm:$0xff]
  %v404 = vld [vmem:[%s0 + $0x73c] sm:$0xff]
  %v405 = vld [vmem:[%s0 + $0x744] sm:$0xff]
  %v406 = vld [vmem:[%s0 + $0x74c] sm:$0xf]
  %v407 = vld [vmem:[%s0 + $0x750] sm:$0xff]
  %v408 = vld [vmem:[%s0 + $0x758] sm:$0xff]
  %v409 = vld [vmem:[%s0 + $0x760] sm:$0xff]
  %v410 = vld [vmem:[%s0 + $0x768] sm:$0xff]
  %v411 = vld [vmem:[%s0 + $0x770] sm:$0xf]
  %v412 = vld [vmem:[%s0 + $0x774] sm:$0xff]
  %v413 = vld [vmem:[%s0 + $0x77c] sm:$0xff]
  %v414 = vld [vmem:[%s0 + $0x784] sm:$0xff]
  %v415 = vld [vmem:[%s0 + $0x78c] sm:$0xff]
  %v416 = vld [vmem:[%s0 + $0x794] sm:$0xf]
  %v417 = vld [vmem:[%s0 + $0x798] sm:$0xff]
  %v418 = vld [vmem:[%s0 + $0x7a0] sm:$0xff]
  %v419 = vld [vmem:[%s0 + $0x7a8] sm:$0xff]
  %v420 = vld [vmem:[%s0 + $0x7b0] sm:$0xff]
  %v421 = vld [vmem:[%s0 + $0x7b8] sm:$0xf]
  %v422 = vld [vmem:[%s0 + $0x7bc] sm:$0xff]
  %v423 = vld [vmem:[%s0 + $0x7c4] sm:$0xff]
  %v424 = vld [vmem:[%s0 + $0x7cc] sm:$0xff]
  %v425 = vld [vmem:[%s0 + $0x7d4] sm:$0xff]
  %v426 = vld [vmem:[%s0 + $0x7dc] sm:$0xf]
  %v427 = vld [vmem:[%s0 + $0x7e0] sm:$0xff]
  %v428 = vld [vmem:[%s0 + $0x7e8] sm:$0xff]
  %v429 = vld [vmem:[%s0 + $0x7f0] sm:$0xff]
  %v430 = vld [vmem:[%s0 + $0x7f8] sm:$0xff]
  %v431 = vld [vmem:[%s0 + $0x800] sm:$0xf]
  %v432 = vld [vmem:[%s0 + $0x804] sm:$0xff]
  %v433 = vld [vmem:[%s0 + $0x80c] sm:$0xff]
  %v434 = vld [vmem:[%s0 + $0x814] sm:$0xff]
  %v435 = vld [vmem:[%s0 + $0x81c] sm:$0xff]
  %v436 = vld [vmem:[%s0 + $0x824] sm:$0xf]
  %v437 = vld [vmem:[%s0 + $0x828] sm:$0xff]
  %v438 = vld [vmem:[%s0 + $0x830] sm:$0xff]
  %v439 = vld [vmem:[%s0 + $0x838] sm:$0xff]
  %v440 = vld [vmem:[%s0 + $0x840] sm:$0xff]
  %v441 = vld [vmem:[%s0 + $0x848] sm:$0xf]
  %v442 = vld [vmem:[%s0 + $0x84c] sm:$0xff]
  %v443 = vld [vmem:[%s0 + $0x854] sm:$0xff]
  %v444 = vld [vmem:[%s0 + $0x85c] sm:$0xff]
  %v445 = vld [vmem:[%s0 + $0x864] sm:$0xff]
  %v446 = vld [vmem:[%s0 + $0x86c] sm:$0xf]
  %v447 = vld [vmem:[%s0 + $0x870] sm:$0xff]
  %v448 = vld [vmem:[%s0 + $0x878] sm:$0xff]
  %v449 = vld [vmem:[%s0 + $0x880] sm:$0xff]
  %v450 = vld [vmem:[%s0 + $0x888] sm:$0xff]
  %v451 = vld [vmem:[%s0 + $0x890] sm:$0xf]
  %v452 = vld [vmem:[%s0 + $0x894] sm:$0xff]
  %v453 = vld [vmem:[%s0 + $0x89c] sm:$0xff]
  %v454 = vld [vmem:[%s0 + $0x8a4] sm:$0xff]
  %v455 = vld [vmem:[%s0 + $0x8ac] sm:$0xff]
  %v456 = vld [vmem:[%s0 + $0x8b4] sm:$0xf]
  %v457 = vld [vmem:[%s0 + $0x8b8] sm:$0xff]
  %v458 = vld [vmem:[%s0 + $0x8c0] sm:$0xff]
  %v459 = vld [vmem:[%s0 + $0x8c8] sm:$0xff]
  %v460 = vld [vmem:[%s0 + $0x8d0] sm:$0xff]
  %v461 = vld [vmem:[%s0 + $0x8d8] sm:$0xf]
  %v462 = vld [vmem:[%s0 + $0x8dc] sm:$0xff]
  %v463 = vld [vmem:[%s0 + $0x8e4] sm:$0xff]
  %v464 = vld [vmem:[%s0 + $0x8ec] sm:$0xff]
  %v465 = vld [vmem:[%s0 + $0x8f4] sm:$0xff]
  %v466 = vld [vmem:[%s0 + $0x8fc] sm:$0xf]
  %v467 = vld [vmem:[%s1] sm:$0xf]
  %v468 = vld [vmem:[%s1 + $0x4] sm:$0xf]
  %v469 = vld [vmem:[%s1 + $0x8] sm:$0xf]
  %v470 = vld [vmem:[%s1 + $0xc] sm:$0xf]
  %v471 = vld [vmem:[%s1 + $0x10] sm:$0xf]
  %v472 = vld [vmem:[%s1 + $0x14] sm:$0xf]
  %v473 = vld [vmem:[%s1 + $0x18] sm:$0xf]
  %v474 = vld [vmem:[%s1 + $0x1c] sm:$0xf]
  %v475 = vld [vmem:[%s1 + $0x20] sm:$0xf]
  %v476 = vld [vmem:[%s1 + $0x24] sm:$0xf]
  %v477 = vld [vmem:[%s1 + $0x28] sm:$0xf]
  %v478 = vld [vmem:[%s1 + $0x2c] sm:$0xf]
  %v479 = vld [vmem:[%s1 + $0x30] sm:$0xf]
  %v480 = vld [vmem:[%s1 + $0x34] sm:$0xf]
  %v481 = vld [vmem:[%s1 + $0x38] sm:$0xf]
  %v482 = vld [vmem:[%s1 + $0x3c] sm:$0xf]
  %v483 = vld [vmem:[%s1 + $0x40] sm:$0xf]
  %v484 = vld [vmem:[%s1 + $0x44] sm:$0xf]
  %v485 = vld [vmem:[%s1 + $0x48] sm:$0xf]
  %v486 = vld [vmem:[%s1 + $0x4c] sm:$0xf]
  %v487 = vld [vmem:[%s1 + $0x50] sm:$0xf]
  %v488 = vld [vmem:[%s1 + $0x54] sm:$0xf]
  %v489 = vld [vmem:[%s1 + $0x58] sm:$0xf]
  %v490 = vld [vmem:[%s1 + $0x5c] sm:$0xf]
  %v491 = vld [vmem:[%s1 + $0x60] sm:$0xf]
  %v492 = vld [vmem:[%s1 + $0x64] sm:$0xf]
  %v493 = vld [vmem:[%s1 + $0x68] sm:$0xf]
  %v494 = vld [vmem:[%s1 + $0x6c] sm:$0xf]
  %v495 = vld [vmem:[%s1 + $0x70] sm:$0xf]
  %v496 = vld [vmem:[%s1 + $0x74] sm:$0xf]
  %v497 = vld [vmem:[%s1 + $0x78] sm:$0xf]
  %v498 = vld [vmem:[%s1 + $0x7c] sm:$0xf]
  %v499 = vld [vmem:[%s1 + $0x80] sm:$0xf]
  %v500 = vld [vmem:[%s1 + $0x84] sm:$0xf]
  %v501 = vld [vmem:[%s1 + $0x88] sm:$0xf]
  %v502 = vld [vmem:[%s1 + $0x8c] sm:$0xf]
  %v503 = vld [vmem:[%s1 + $0x90] sm:$0xf]
  %v504 = vld [vmem:[%s1 + $0x94] sm:$0xf]
  %v505 = vld [vmem:[%s1 + $0x98] sm:$0xf]
  %v506 = vld [vmem:[%s1 + $0x9c] sm:$0xf]
  %v507 = vld [vmem:[%s1 + $0xa0] sm:$0xf]
  %v508 = vld [vmem:[%s1 + $0xa4] sm:$0xf]
  %v509 = vld [vmem:[%s1 + $0xa8] sm:$0xf]
  %v510 = vld [vmem:[%s1 + $0xac] sm:$0xf]
  %v511 = vld [vmem:[%s1 + $0xb0] sm:$0xf]
  %v512 = vld [vmem:[%s1 + $0xb4] sm:$0xf]
  %v513 = vld [vmem:[%s1 + $0xb8] sm:$0xf]
  %v514 = vld [vmem:[%s1 + $0xbc] sm:$0xf]
  %v515 = vld [vmem:[%s1 + $0xc0] sm:$0xf]
  %v516 = vld [vmem:[%s1 + $0xc4] sm:$0xf]
  %v517 = vld [vmem:[%s1 + $0xc8] sm:$0xf]
  %v518 = vld [vmem:[%s1 + $0xcc] sm:$0xf]
  %v519 = vld [vmem:[%s1 + $0xd0] sm:$0xf]
  %v520 = vld [vmem:[%s1 + $0xd4] sm:$0xf]
  %v521 = vld [vmem:[%s1 + $0xd8] sm:$0xf]
  %v522 = vld [vmem:[%s1 + $0xdc] sm:$0xf]
  %v523 = vld [vmem:[%s1 + $0xe0] sm:$0xf]
  %v524 = vld [vmem:[%s1 + $0xe4] sm:$0xf]
  %v525 = vld [vmem:[%s1 + $0xe8] sm:$0xf]
  %v526 = vld [vmem:[%s1 + $0xec] sm:$0xf]
  %v527 = vld [vmem:[%s1 + $0xf0] sm:$0xf]
  %v528 = vld [vmem:[%s1 + $0xf4] sm:$0xf]
  %v529 = vld [vmem:[%s1 + $0xf8] sm:$0xf]
  %v530 = vld [vmem:[%s1 + $0xfc] sm:$0xf]
  %v531 = vld [vmem:[%s1 + $0x100] sm:$0xf]
  %v532 = vld [vmem:[%s1 + $0x104] sm:$0xf]
  %v533 = vld [vmem:[%s1 + $0x108] sm:$0xf]
  %v534 = vld [vmem:[%s1 + $0x10c] sm:$0xf]
  %v535 = vld [vmem:[%s1 + $0x110] sm:$0xf]
  %v536 = vld [vmem:[%s1 + $0x114] sm:$0xf]
  %v537 = vld [vmem:[%s1 + $0x118] sm:$0xf]
  %v538 = vld [vmem:[%s1 + $0x11c] sm:$0xf]
  %v539 = vld [vmem:[%s1 + $0x120] sm:$0xf]
  %v540 = vld [vmem:[%s1 + $0x124] sm:$0xf]
  %v541 = vld [vmem:[%s1 + $0x128] sm:$0xf]
  %v542 = vld [vmem:[%s1 + $0x12c] sm:$0xf]
  %v543 = vld [vmem:[%s1 + $0x130] sm:$0xf]
  %v544 = vld [vmem:[%s1 + $0x134] sm:$0xf]
  %v545 = vld [vmem:[%s1 + $0x138] sm:$0xf]
  %v546 = vld [vmem:[%s1 + $0x13c] sm:$0xf]
  %v547 = vld [vmem:[%s1 + $0x140] sm:$0xf]
  %v548 = vld [vmem:[%s1 + $0x144] sm:$0xf]
  %v549 = vld [vmem:[%s1 + $0x148] sm:$0xf]
  %v550 = vld [vmem:[%s1 + $0x14c] sm:$0xf]
  %v551 = vld [vmem:[%s1 + $0x150] sm:$0xf]
  %v552 = vld [vmem:[%s1 + $0x154] sm:$0xf]
  %v553 = vld [vmem:[%s1 + $0x158] sm:$0xf]
  %v554 = vld [vmem:[%s1 + $0x15c] sm:$0xf]
  %v555 = vld [vmem:[%s1 + $0x160] sm:$0xf]
  %v556 = vld [vmem:[%s1 + $0x164] sm:$0xf]
  %v557 = vld [vmem:[%s1 + $0x168] sm:$0xf]
  %v558 = vld [vmem:[%s1 + $0x16c] sm:$0xf]
  %v559 = vld [vmem:[%s1 + $0x170] sm:$0xf]
  %v560 = vld [vmem:[%s1 + $0x174] sm:$0xf]
  %v561 = vld [vmem:[%s1 + $0x178] sm:$0xf]
  %v562 = vld [vmem:[%s1 + $0x17c] sm:$0xf]
  %v563 = vld [vmem:[%s1 + $0x180] sm:$0xf]
  %v564 = vld [vmem:[%s1 + $0x184] sm:$0xf]
  %v565 = vld [vmem:[%s1 + $0x188] sm:$0xf]
  %v566 = vld [vmem:[%s1 + $0x18c] sm:$0xf]
  %v567 = vld [vmem:[%s1 + $0x190] sm:$0xf]
  %v568 = vld [vmem:[%s1 + $0x194] sm:$0xf]
  %v569 = vld [vmem:[%s1 + $0x198] sm:$0xf]
  %v570 = vld [vmem:[%s1 + $0x19c] sm:$0xf]
  %v571 = vld [vmem:[%s1 + $0x1a0] sm:$0xf]
  %v572 = vld [vmem:[%s1 + $0x1a4] sm:$0xf]
  %v573 = vld [vmem:[%s1 + $0x1a8] sm:$0xf]
  %v574 = vld [vmem:[%s1 + $0x1ac] sm:$0xf]
  %v575 = vld [vmem:[%s1 + $0x1b0] sm:$0xf]
  %v576 = vld [vmem:[%s1 + $0x1b4] sm:$0xf]
  %v577 = vld [vmem:[%s1 + $0x1b8] sm:$0xf]
  %v578 = vld [vmem:[%s1 + $0x1bc] sm:$0xf]
  %v579 = vld [vmem:[%s1 + $0x1c0] sm:$0xf]
  %v580 = vld [vmem:[%s1 + $0x1c4] sm:$0xf]
  %v581 = vld [vmem:[%s1 + $0x1c8] sm:$0xf]
  %v582 = vld [vmem:[%s1 + $0x1cc] sm:$0xf]
  %v583 = vld [vmem:[%s1 + $0x1d0] sm:$0xf]
  %v584 = vld [vmem:[%s1 + $0x1d4] sm:$0xf]
  %v585 = vld [vmem:[%s1 + $0x1d8] sm:$0xf]
  %v586 = vld [vmem:[%s1 + $0x1dc] sm:$0xf]
  %v587 = vld [vmem:[%s1 + $0x1e0] sm:$0xf]
  %v588 = vld [vmem:[%s1 + $0x1e4] sm:$0xf]
  %v589 = vld [vmem:[%s1 + $0x1e8] sm:$0xf]
  %v590 = vld [vmem:[%s1 + $0x1ec] sm:$0xf]
  %v591 = vld [vmem:[%s1 + $0x1f0] sm:$0xf]
  %v592 = vld [vmem:[%s1 + $0x1f4] sm:$0xf]
  %v593 = vld [vmem:[%s1 + $0x1f8] sm:$0xf]
  %v594 = vld [vmem:[%s1 + $0x1fc] sm:$0xf]
  %v595 = vld [vmem:[%s1 + $0x200] sm:$0xf]
  %v596 = vld [vmem:[%s1 + $0x204] sm:$0xf]
  %v597 = vld [vmem:[%s1 + $0x208] sm:$0xf]
  %v598 = vld [vmem:[%s1 + $0x20c] sm:$0xf]
  %v599 = vld [vmem:[%s1 + $0x210] sm:$0xf]
  %v600 = vld [vmem:[%s1 + $0x214] sm:$0xf]
  %v601 = vld [vmem:[%s1 + $0x218] sm:$0xf]
  %v602 = vld [vmem:[%s1 + $0x21c] sm:$0xf]
  %v603 = vld [vmem:[%s1 + $0x220] sm:$0xf]
  %v604 = vld [vmem:[%s1 + $0x224] sm:$0xf]
  %v605 = vld [vmem:[%s1 + $0x228] sm:$0xf]
  %v606 = vld [vmem:[%s1 + $0x22c] sm:$0xf]
  %v607 = vld [vmem:[%s1 + $0x230] sm:$0xf]
  %v608 = vld [vmem:[%s1 + $0x234] sm:$0xf]
  %v609 = vld [vmem:[%s1 + $0x238] sm:$0xf]
  %v610 = vld [vmem:[%s1 + $0x23c] sm:$0xf]
  %v931 = vunpack.c.l.b16 %v147
  %v932 = vunpack.c.h.b16 %v147
  %v933 = vunpack.c.l.b16 %v148
  %v934 = vunpack.c.h.b16 %v148
  %v935 = vunpack.c.l.b16 %v149
  %v936 = vunpack.c.h.b16 %v149
  %v937 = vunpack.c.l.b16 %v150
  %v938 = vunpack.c.h.b16 %v150
  %v939 = vunpack.c.l.b16 %v151
  %v940 = vunpack.c.l.b16 %v152
  %v941 = vunpack.c.h.b16 %v152
  %v942 = vunpack.c.l.b16 %v153
  %v943 = vunpack.c.h.b16 %v153
  %v944 = vunpack.c.l.b16 %v154
  %v945 = vunpack.c.h.b16 %v154
  %v946 = vunpack.c.l.b16 %v155
  %v947 = vunpack.c.h.b16 %v155
  %v948 = vunpack.c.l.b16 %v156
  %v949 = vunpack.c.l.b16 %v157
  %v950 = vunpack.c.h.b16 %v157
  %v951 = vunpack.c.l.b16 %v158
  %v952 = vunpack.c.h.b16 %v158
  %v953 = vunpack.c.l.b16 %v159
  %v954 = vunpack.c.h.b16 %v159
  %v955 = vunpack.c.l.b16 %v160
  %v956 = vunpack.c.h.b16 %v160
  %v957 = vunpack.c.l.b16 %v161
  %v958 = vunpack.c.l.b16 %v162
  %v959 = vunpack.c.h.b16 %v162
  %v960 = vunpack.c.l.b16 %v163
  %v961 = vunpack.c.h.b16 %v163
  %v962 = vunpack.c.l.b16 %v164
  %v963 = vunpack.c.h.b16 %v164
  %v964 = vunpack.c.l.b16 %v165
  %v965 = vunpack.c.h.b16 %v165
  %v966 = vunpack.c.l.b16 %v166
  %v967 = vunpack.c.l.b16 %v167
  %v968 = vunpack.c.h.b16 %v167
  %v969 = vunpack.c.l.b16 %v168
  %v970 = vunpack.c.h.b16 %v168
  %v971 = vunpack.c.l.b16 %v169
  %v972 = vunpack.c.h.b16 %v169
  %v973 = vunpack.c.l.b16 %v170
  %v974 = vunpack.c.h.b16 %v170
  %v975 = vunpack.c.l.b16 %v171
  %v976 = vunpack.c.l.b16 %v172
  %v977 = vunpack.c.h.b16 %v172
  %v978 = vunpack.c.l.b16 %v173
  %v979 = vunpack.c.h.b16 %v173
  %v980 = vunpack.c.l.b16 %v174
  %v981 = vunpack.c.h.b16 %v174
  %v982 = vunpack.c.l.b16 %v175
  %v983 = vunpack.c.h.b16 %v175
  %v984 = vunpack.c.l.b16 %v176
  %v985 = vunpack.c.l.b16 %v177
  %v986 = vunpack.c.h.b16 %v177
  %v987 = vunpack.c.l.b16 %v178
  %v988 = vunpack.c.h.b16 %v178
  %v989 = vunpack.c.l.b16 %v179
  %v990 = vunpack.c.h.b16 %v179
  %v991 = vunpack.c.l.b16 %v180
  %v992 = vunpack.c.h.b16 %v180
  %v993 = vunpack.c.l.b16 %v181
  %v994 = vunpack.c.l.b16 %v182
  %v995 = vunpack.c.h.b16 %v182
  %v996 = vunpack.c.l.b16 %v183
  %v997 = vunpack.c.h.b16 %v183
  %v998 = vunpack.c.l.b16 %v184
  %v999 = vunpack.c.h.b16 %v184
  %v1000 = vunpack.c.l.b16 %v185
  %v1001 = vunpack.c.h.b16 %v185
  %v1002 = vunpack.c.l.b16 %v186
  %v1003 = vunpack.c.l.b16 %v187
  %v1004 = vunpack.c.h.b16 %v187
  %v1005 = vunpack.c.l.b16 %v188
  %v1006 = vunpack.c.h.b16 %v188
  %v1007 = vunpack.c.l.b16 %v189
  %v1008 = vunpack.c.h.b16 %v189
  %v1009 = vunpack.c.l.b16 %v190
  %v1010 = vunpack.c.h.b16 %v190
  %v1011 = vunpack.c.l.b16 %v191
  %v1012 = vunpack.c.l.b16 %v192
  %v1013 = vunpack.c.h.b16 %v192
  %v1014 = vunpack.c.l.b16 %v193
  %v1015 = vunpack.c.h.b16 %v193
  %v1016 = vunpack.c.l.b16 %v194
  %v1017 = vunpack.c.h.b16 %v194
  %v1018 = vunpack.c.l.b16 %v195
  %v1019 = vunpack.c.h.b16 %v195
  %v1020 = vunpack.c.l.b16 %v196
  %v1021 = vunpack.c.l.b16 %v197
  %v1022 = vunpack.c.h.b16 %v197
  %v1023 = vunpack.c.l.b16 %v198
  %v1024 = vunpack.c.h.b16 %v198
  %v1025 = vunpack.c.l.b16 %v199
  %v1026 = vunpack.c.h.b16 %v199
  %v1027 = vunpack.c.l.b16 %v200
  %v1028 = vunpack.c.h.b16 %v200
  %v1029 = vunpack.c.l.b16 %v201
  %v1030 = vunpack.c.l.b16 %v202
  %v1031 = vunpack.c.h.b16 %v202
  %v1032 = vunpack.c.l.b16 %v203
  %v1033 = vunpack.c.h.b16 %v203
  %v1034 = vunpack.c.l.b16 %v204
  %v1035 = vunpack.c.h.b16 %v204
  %v1036 = vunpack.c.l.b16 %v205
  %v1037 = vunpack.c.h.b16 %v205
  %v1038 = vunpack.c.l.b16 %v206
  %v1039 = vunpack.c.l.b16 %v207
  %v1040 = vunpack.c.h.b16 %v207
  %v1041 = vunpack.c.l.b16 %v208
  %v1042 = vunpack.c.h.b16 %v208
  %v1043 = vunpack.c.l.b16 %v209
  %v1044 = vunpack.c.h.b16 %v209
  %v1045 = vunpack.c.l.b16 %v210
  %v1046 = vunpack.c.h.b16 %v210
  %v1047 = vunpack.c.l.b16 %v211
  %v1048 = vunpack.c.l.b16 %v212
  %v1049 = vunpack.c.h.b16 %v212
  %v1050 = vunpack.c.l.b16 %v213
  %v1051 = vunpack.c.h.b16 %v213
  %v1052 = vunpack.c.l.b16 %v214
  %v1053 = vunpack.c.h.b16 %v214
  %v1054 = vunpack.c.l.b16 %v215
  %v1055 = vunpack.c.h.b16 %v215
  %v1056 = vunpack.c.l.b16 %v216
  %v1057 = vunpack.c.l.b16 %v217
  %v1058 = vunpack.c.h.b16 %v217
  %v1059 = vunpack.c.l.b16 %v218
  %v1060 = vunpack.c.h.b16 %v218
  %v1061 = vunpack.c.l.b16 %v219
  %v1062 = vunpack.c.h.b16 %v219
  %v1063 = vunpack.c.l.b16 %v220
  %v1064 = vunpack.c.h.b16 %v220
  %v1065 = vunpack.c.l.b16 %v221
  %v1066 = vunpack.c.l.b16 %v222
  %v1067 = vunpack.c.h.b16 %v222
  %v1068 = vunpack.c.l.b16 %v223
  %v1069 = vunpack.c.h.b16 %v223
  %v1070 = vunpack.c.l.b16 %v224
  %v1071 = vunpack.c.h.b16 %v224
  %v1072 = vunpack.c.l.b16 %v225
  %v1073 = vunpack.c.h.b16 %v225
  %v1074 = vunpack.c.l.b16 %v226
  %v1075 = vunpack.c.l.b16 %v227
  %v1076 = vunpack.c.h.b16 %v227
  %v1077 = vunpack.c.l.b16 %v228
  %v1078 = vunpack.c.h.b16 %v228
  %v1079 = vunpack.c.l.b16 %v229
  %v1080 = vunpack.c.h.b16 %v229
  %v1081 = vunpack.c.l.b16 %v230
  %v1082 = vunpack.c.h.b16 %v230
  %v1083 = vunpack.c.l.b16 %v231
  %v1084 = vunpack.c.l.b16 %v232
  %v1085 = vunpack.c.h.b16 %v232
  %v1086 = vunpack.c.l.b16 %v233
  %v1087 = vunpack.c.h.b16 %v233
  %v1088 = vunpack.c.l.b16 %v234
  %v1089 = vunpack.c.h.b16 %v234
  %v1090 = vunpack.c.l.b16 %v235
  %v1091 = vunpack.c.h.b16 %v235
  %v1092 = vunpack.c.l.b16 %v236
  %v1093 = vunpack.c.l.b16 %v237
  %v1094 = vunpack.c.h.b16 %v237
  %v1095 = vunpack.c.l.b16 %v238
  %v1096 = vunpack.c.h.b16 %v238
  %v1097 = vunpack.c.l.b16 %v239
  %v1098 = vunpack.c.h.b16 %v239
  %v1099 = vunpack.c.l.b16 %v240
  %v1100 = vunpack.c.h.b16 %v240
  %v1101 = vunpack.c.l.b16 %v241
  %v1102 = vunpack.c.l.b16 %v242
  %v1103 = vunpack.c.h.b16 %v242
  %v1104 = vunpack.c.l.b16 %v243
  %v1105 = vunpack.c.h.b16 %v243
  %v1106 = vunpack.c.l.b16 %v244
  %v1107 = vunpack.c.h.b16 %v244
  %v1108 = vunpack.c.l.b16 %v245
  %v1109 = vunpack.c.h.b16 %v245
  %v1110 = vunpack.c.l.b16 %v246
  %v1111 = vunpack.c.l.b16 %v247
  %v1112 = vunpack.c.h.b16 %v247
  %v1113 = vunpack.c.l.b16 %v248
  %v1114 = vunpack.c.h.b16 %v248
  %v1115 = vunpack.c.l.b16 %v249
  %v1116 = vunpack.c.h.b16 %v249
  %v1117 = vunpack.c.l.b16 %v250
  %v1118 = vunpack.c.h.b16 %v250
  %v1119 = vunpack.c.l.b16 %v251
  %v1120 = vunpack.c.l.b16 %v252
  %v1121 = vunpack.c.h.b16 %v252
  %v1122 = vunpack.c.l.b16 %v253
  %v1123 = vunpack.c.h.b16 %v253
  %v1124 = vunpack.c.l.b16 %v254
  %v1125 = vunpack.c.h.b16 %v254
  %v1126 = vunpack.c.l.b16 %v255
  %v1127 = vunpack.c.h.b16 %v255
  %v1128 = vunpack.c.l.b16 %v256
  %v1129 = vunpack.c.l.b16 %v257
  %v1130 = vunpack.c.h.b16 %v257
  %v1131 = vunpack.c.l.b16 %v258
  %v1132 = vunpack.c.h.b16 %v258
  %v1133 = vunpack.c.l.b16 %v259
  %v1134 = vunpack.c.h.b16 %v259
  %v1135 = vunpack.c.l.b16 %v260
  %v1136 = vunpack.c.h.b16 %v260
  %v1137 = vunpack.c.l.b16 %v261
  %v1138 = vunpack.c.l.b16 %v262
  %v1139 = vunpack.c.h.b16 %v262
  %v1140 = vunpack.c.l.b16 %v263
  %v1141 = vunpack.c.h.b16 %v263
  %v1142 = vunpack.c.l.b16 %v264
  %v1143 = vunpack.c.h.b16 %v264
  %v1144 = vunpack.c.l.b16 %v265
  %v1145 = vunpack.c.h.b16 %v265
  %v1146 = vunpack.c.l.b16 %v266
  %v1147 = vunpack.c.l.b16 %v267
  %v1148 = vunpack.c.h.b16 %v267
  %v1149 = vunpack.c.l.b16 %v268
  %v1150 = vunpack.c.h.b16 %v268
  %v1151 = vunpack.c.l.b16 %v269
  %v1152 = vunpack.c.h.b16 %v269
  %v1153 = vunpack.c.l.b16 %v270
  %v1154 = vunpack.c.h.b16 %v270
  %v1155 = vunpack.c.l.b16 %v271
  %v1156 = vunpack.c.l.b16 %v272
  %v1157 = vunpack.c.h.b16 %v272
  %v1158 = vunpack.c.l.b16 %v273
  %v1159 = vunpack.c.h.b16 %v273
  %v1160 = vunpack.c.l.b16 %v274
  %v1161 = vunpack.c.h.b16 %v274
  %v1162 = vunpack.c.l.b16 %v275
  %v1163 = vunpack.c.h.b16 %v275
  %v1164 = vunpack.c.l.b16 %v276
  %v1165 = vunpack.c.l.b16 %v277
  %v1166 = vunpack.c.h.b16 %v277
  %v1167 = vunpack.c.l.b16 %v278
  %v1168 = vunpack.c.h.b16 %v278
  %v1169 = vunpack.c.l.b16 %v279
  %v1170 = vunpack.c.h.b16 %v279
  %v1171 = vunpack.c.l.b16 %v280
  %v1172 = vunpack.c.h.b16 %v280
  %v1173 = vunpack.c.l.b16 %v281
  %v1174 = vunpack.c.l.b16 %v282
  %v1175 = vunpack.c.h.b16 %v282
  %v1176 = vunpack.c.l.b16 %v283
  %v1177 = vunpack.c.h.b16 %v283
  %v1178 = vunpack.c.l.b16 %v284
  %v1179 = vunpack.c.h.b16 %v284
  %v1180 = vunpack.c.l.b16 %v285
  %v1181 = vunpack.c.h.b16 %v285
  %v1182 = vunpack.c.l.b16 %v286
  %v1183 = vunpack.c.l.b16 %v287
  %v1184 = vunpack.c.h.b16 %v287
  %v1185 = vunpack.c.l.b16 %v288
  %v1186 = vunpack.c.h.b16 %v288
  %v1187 = vunpack.c.l.b16 %v289
  %v1188 = vunpack.c.h.b16 %v289
  %v1189 = vunpack.c.l.b16 %v290
  %v1190 = vunpack.c.h.b16 %v290
  %v1191 = vunpack.c.l.b16 %v291
  %v1192 = vunpack.c.l.b16 %v292
  %v1193 = vunpack.c.h.b16 %v292
  %v1194 = vunpack.c.l.b16 %v293
  %v1195 = vunpack.c.h.b16 %v293
  %v1196 = vunpack.c.l.b16 %v294
  %v1197 = vunpack.c.h.b16 %v294
  %v1198 = vunpack.c.l.b16 %v295
  %v1199 = vunpack.c.h.b16 %v295
  %v1200 = vunpack.c.l.b16 %v296
  %v1201 = vunpack.c.l.b16 %v297
  %v1202 = vunpack.c.h.b16 %v297
  %v1203 = vunpack.c.l.b16 %v298
  %v1204 = vunpack.c.h.b16 %v298
  %v1205 = vunpack.c.l.b16 %v299
  %v1206 = vunpack.c.h.b16 %v299
  %v1207 = vunpack.c.l.b16 %v300
  %v1208 = vunpack.c.h.b16 %v300
  %v1209 = vunpack.c.l.b16 %v301
  %v1210 = vunpack.c.l.b16 %v302
  %v1211 = vunpack.c.h.b16 %v302
  %v1212 = vunpack.c.l.b16 %v303
  %v1213 = vunpack.c.h.b16 %v303
  %v1214 = vunpack.c.l.b16 %v304
  %v1215 = vunpack.c.h.b16 %v304
  %v1216 = vunpack.c.l.b16 %v305
  %v1217 = vunpack.c.h.b16 %v305
  %v1218 = vunpack.c.l.b16 %v306
  %v1219 = vunpack.c.l.b16 %v307
  %v1220 = vunpack.c.h.b16 %v307
  %v1221 = vunpack.c.l.b16 %v308
  %v1222 = vunpack.c.h.b16 %v308
  %v1223 = vunpack.c.l.b16 %v309
  %v1224 = vunpack.c.h.b16 %v309
  %v1225 = vunpack.c.l.b16 %v310
  %v1226 = vunpack.c.h.b16 %v310
  %v1227 = vunpack.c.l.b16 %v311
  %v1228 = vunpack.c.l.b16 %v312
  %v1229 = vunpack.c.h.b16 %v312
  %v1230 = vunpack.c.l.b16 %v313
  %v1231 = vunpack.c.h.b16 %v313
  %v1232 = vunpack.c.l.b16 %v314
  %v1233 = vunpack.c.h.b16 %v314
  %v1234 = vunpack.c.l.b16 %v315
  %v1235 = vunpack.c.h.b16 %v315
  %v1236 = vunpack.c.l.b16 %v316
  %v1237 = vunpack.c.l.b16 %v317
  %v1238 = vunpack.c.h.b16 %v317
  %v1239 = vunpack.c.l.b16 %v318
  %v1240 = vunpack.c.h.b16 %v318
  %v1241 = vunpack.c.l.b16 %v319
  %v1242 = vunpack.c.h.b16 %v319
  %v1243 = vunpack.c.l.b16 %v320
  %v1244 = vunpack.c.h.b16 %v320
  %v1245 = vunpack.c.l.b16 %v321
  %v1246 = vunpack.c.l.b16 %v322
  %v1247 = vunpack.c.h.b16 %v322
  %v1248 = vunpack.c.l.b16 %v323
  %v1249 = vunpack.c.h.b16 %v323
  %v1250 = vunpack.c.l.b16 %v324
  %v1251 = vunpack.c.h.b16 %v324
  %v1252 = vunpack.c.l.b16 %v325
  %v1253 = vunpack.c.h.b16 %v325
  %v1254 = vunpack.c.l.b16 %v326
  %v1255 = vunpack.c.l.b16 %v327
  %v1256 = vunpack.c.h.b16 %v327
  %v1257 = vunpack.c.l.b16 %v328
  %v1258 = vunpack.c.h.b16 %v328
  %v1259 = vunpack.c.l.b16 %v329
  %v1260 = vunpack.c.h.b16 %v329
  %v1261 = vunpack.c.l.b16 %v330
  %v1262 = vunpack.c.h.b16 %v330
  %v1263 = vunpack.c.l.b16 %v331
  %v1264 = vunpack.c.l.b16 %v332
  %v1265 = vunpack.c.h.b16 %v332
  %v1266 = vunpack.c.l.b16 %v333
  %v1267 = vunpack.c.h.b16 %v333
  %v1268 = vunpack.c.l.b16 %v334
  %v1269 = vunpack.c.h.b16 %v334
  %v1270 = vunpack.c.l.b16 %v335
  %v1271 = vunpack.c.h.b16 %v335
  %v1272 = vunpack.c.l.b16 %v336
  %v1273 = vunpack.c.l.b16 %v337
  %v1274 = vunpack.c.h.b16 %v337
  %v1275 = vunpack.c.l.b16 %v338
  %v1276 = vunpack.c.h.b16 %v338
  %v1277 = vunpack.c.l.b16 %v339
  %v1278 = vunpack.c.h.b16 %v339
  %v1279 = vunpack.c.l.b16 %v340
  %v1280 = vunpack.c.h.b16 %v340
  %v1281 = vunpack.c.l.b16 %v341
  %v1282 = vunpack.c.l.b16 %v342
  %v1283 = vunpack.c.h.b16 %v342
  %v1284 = vunpack.c.l.b16 %v343
  %v1285 = vunpack.c.h.b16 %v343
  %v1286 = vunpack.c.l.b16 %v344
  %v1287 = vunpack.c.h.b16 %v344
  %v1288 = vunpack.c.l.b16 %v345
  %v1289 = vunpack.c.h.b16 %v345
  %v1290 = vunpack.c.l.b16 %v346
  %v1291 = vunpack.c.l.b16 %v347
  %v1292 = vunpack.c.h.b16 %v347
  %v1293 = vunpack.c.l.b16 %v348
  %v1294 = vunpack.c.h.b16 %v348
  %v1295 = vunpack.c.l.b16 %v349
  %v1296 = vunpack.c.h.b16 %v349
  %v1297 = vunpack.c.l.b16 %v350
  %v1298 = vunpack.c.h.b16 %v350
  %v1299 = vunpack.c.l.b16 %v351
  %v1300 = vunpack.c.l.b16 %v352
  %v1301 = vunpack.c.h.b16 %v352
  %v1302 = vunpack.c.l.b16 %v353
  %v1303 = vunpack.c.h.b16 %v353
  %v1304 = vunpack.c.l.b16 %v354
  %v1305 = vunpack.c.h.b16 %v354
  %v1306 = vunpack.c.l.b16 %v355
  %v1307 = vunpack.c.h.b16 %v355
  %v1308 = vunpack.c.l.b16 %v356
  %v1309 = vunpack.c.l.b16 %v357
  %v1310 = vunpack.c.h.b16 %v357
  %v1311 = vunpack.c.l.b16 %v358
  %v1312 = vunpack.c.h.b16 %v358
  %v1313 = vunpack.c.l.b16 %v359
  %v1314 = vunpack.c.h.b16 %v359
  %v1315 = vunpack.c.l.b16 %v360
  %v1316 = vunpack.c.h.b16 %v360
  %v1317 = vunpack.c.l.b16 %v361
  %v1318 = vunpack.c.l.b16 %v362
  %v1319 = vunpack.c.h.b16 %v362
  %v1320 = vunpack.c.l.b16 %v363
  %v1321 = vunpack.c.h.b16 %v363
  %v1322 = vunpack.c.l.b16 %v364
  %v1323 = vunpack.c.h.b16 %v364
  %v1324 = vunpack.c.l.b16 %v365
  %v1325 = vunpack.c.h.b16 %v365
  %v1326 = vunpack.c.l.b16 %v366
  %v1327 = vunpack.c.l.b16 %v367
  %v1328 = vunpack.c.h.b16 %v367
  %v1329 = vunpack.c.l.b16 %v368
  %v1330 = vunpack.c.h.b16 %v368
  %v1331 = vunpack.c.l.b16 %v369
  %v1332 = vunpack.c.h.b16 %v369
  %v1333 = vunpack.c.l.b16 %v370
  %v1334 = vunpack.c.h.b16 %v370
  %v1335 = vunpack.c.l.b16 %v371
  %v1336 = vunpack.c.l.b16 %v372
  %v1337 = vunpack.c.h.b16 %v372
  %v1338 = vunpack.c.l.b16 %v373
  %v1339 = vunpack.c.h.b16 %v373
  %v1340 = vunpack.c.l.b16 %v374
  %v1341 = vunpack.c.h.b16 %v374
  %v1342 = vunpack.c.l.b16 %v375
  %v1343 = vunpack.c.h.b16 %v375
  %v1344 = vunpack.c.l.b16 %v376
  %v1345 = vunpack.c.l.b16 %v377
  %v1346 = vunpack.c.h.b16 %v377
  %v1347 = vunpack.c.l.b16 %v378
  %v1348 = vunpack.c.h.b16 %v378
  %v1349 = vunpack.c.l.b16 %v379
  %v1350 = vunpack.c.h.b16 %v379
  %v1351 = vunpack.c.l.b16 %v380
  %v1352 = vunpack.c.h.b16 %v380
  %v1353 = vunpack.c.l.b16 %v381
  %v1354 = vunpack.c.l.b16 %v382
  %v1355 = vunpack.c.h.b16 %v382
  %v1356 = vunpack.c.l.b16 %v383
  %v1357 = vunpack.c.h.b16 %v383
  %v1358 = vunpack.c.l.b16 %v384
  %v1359 = vunpack.c.h.b16 %v384
  %v1360 = vunpack.c.l.b16 %v385
  %v1361 = vunpack.c.h.b16 %v385
  %v1362 = vunpack.c.l.b16 %v386
  %v1363 = vunpack.c.l.b16 %v387
  %v1364 = vunpack.c.h.b16 %v387
  %v1365 = vunpack.c.l.b16 %v388
  %v1366 = vunpack.c.h.b16 %v388
  %v1367 = vunpack.c.l.b16 %v389
  %v1368 = vunpack.c.h.b16 %v389
  %v1369 = vunpack.c.l.b16 %v390
  %v1370 = vunpack.c.h.b16 %v390
  %v1371 = vunpack.c.l.b16 %v391
  %v1372 = vunpack.c.l.b16 %v392
  %v1373 = vunpack.c.h.b16 %v392
  %v1374 = vunpack.c.l.b16 %v393
  %v1375 = vunpack.c.h.b16 %v393
  %v1376 = vunpack.c.l.b16 %v394
  %v1377 = vunpack.c.h.b16 %v394
  %v1378 = vunpack.c.l.b16 %v395
  %v1379 = vunpack.c.h.b16 %v395
  %v1380 = vunpack.c.l.b16 %v396
  %v1381 = vunpack.c.l.b16 %v397
  %v1382 = vunpack.c.h.b16 %v397
  %v1383 = vunpack.c.l.b16 %v398
  %v1384 = vunpack.c.h.b16 %v398
  %v1385 = vunpack.c.l.b16 %v399
  %v1386 = vunpack.c.h.b16 %v399
  %v1387 = vunpack.c.l.b16 %v400
  %v1388 = vunpack.c.h.b16 %v400
  %v1389 = vunpack.c.l.b16 %v401
  %v1390 = vunpack.c.l.b16 %v402
  %v1391 = vunpack.c.h.b16 %v402
  %v1392 = vunpack.c.l.b16 %v403
  %v1393 = vunpack.c.h.b16 %v403
  %v1394 = vunpack.c.l.b16 %v404
  %v1395 = vunpack.c.h.b16 %v404
  %v1396 = vunpack.c.l.b16 %v405
  %v1397 = vunpack.c.h.b16 %v405
  %v1398 = vunpack.c.l.b16 %v406
  %v1399 = vunpack.c.l.b16 %v407
  %v1400 = vunpack.c.h.b16 %v407
  %v1401 = vunpack.c.l.b16 %v408
  %v1402 = vunpack.c.h.b16 %v408
  %v1403 = vunpack.c.l.b16 %v409
  %v1404 = vunpack.c.h.b16 %v409
  %v1405 = vunpack.c.l.b16 %v410
  %v1406 = vunpack.c.h.b16 %v410
  %v1407 = vunpack.c.l.b16 %v411
  %v1408 = vunpack.c.l.b16 %v412
  %v1409 = vunpack.c.h.b16 %v412
  %v1410 = vunpack.c.l.b16 %v413
  %v1411 = vunpack.c.h.b16 %v413
  %v1412 = vunpack.c.l.b16 %v414
  %v1413 = vunpack.c.h.b16 %v414
  %v1414 = vunpack.c.l.b16 %v415
  %v1415 = vunpack.c.h.b16 %v415
  %v1416 = vunpack.c.l.b16 %v416
  %v1417 = vunpack.c.l.b16 %v417
  %v1418 = vunpack.c.h.b16 %v417
  %v1419 = vunpack.c.l.b16 %v418
  %v1420 = vunpack.c.h.b16 %v418
  %v1421 = vunpack.c.l.b16 %v419
  %v1422 = vunpack.c.h.b16 %v419
  %v1423 = vunpack.c.l.b16 %v420
  %v1424 = vunpack.c.h.b16 %v420
  %v1425 = vunpack.c.l.b16 %v421
  %v1426 = vunpack.c.l.b16 %v422
  %v1427 = vunpack.c.h.b16 %v422
  %v1428 = vunpack.c.l.b16 %v423
  %v1429 = vunpack.c.h.b16 %v423
  %v1430 = vunpack.c.l.b16 %v424
  %v1431 = vunpack.c.h.b16 %v424
  %v1432 = vunpack.c.l.b16 %v425
  %v1433 = vunpack.c.h.b16 %v425
  %v1434 = vunpack.c.l.b16 %v426
  %v1435 = vunpack.c.l.b16 %v427
  %v1436 = vunpack.c.h.b16 %v427
  %v1437 = vunpack.c.l.b16 %v428
  %v1438 = vunpack.c.h.b16 %v428
  %v1439 = vunpack.c.l.b16 %v429
  %v1440 = vunpack.c.h.b16 %v429
  %v1441 = vunpack.c.l.b16 %v430
  %v1442 = vunpack.c.h.b16 %v430
  %v1443 = vunpack.c.l.b16 %v431
  %v1444 = vunpack.c.l.b16 %v432
  %v1445 = vunpack.c.h.b16 %v432
  %v1446 = vunpack.c.l.b16 %v433
  %v1447 = vunpack.c.h.b16 %v433
  %v1448 = vunpack.c.l.b16 %v434
  %v1449 = vunpack.c.h.b16 %v434
  %v1450 = vunpack.c.l.b16 %v435
  %v1451 = vunpack.c.h.b16 %v435
  %v1452 = vunpack.c.l.b16 %v436
  %v1453 = vunpack.c.l.b16 %v437
  %v1454 = vunpack.c.h.b16 %v437
  %v1455 = vunpack.c.l.b16 %v438
  %v1456 = vunpack.c.h.b16 %v438
  %v1457 = vunpack.c.l.b16 %v439
  %v1458 = vunpack.c.h.b16 %v439
  %v1459 = vunpack.c.l.b16 %v440
  %v1460 = vunpack.c.h.b16 %v440
  %v1461 = vunpack.c.l.b16 %v441
  %v1462 = vunpack.c.l.b16 %v442
  %v1463 = vunpack.c.h.b16 %v442
  %v1464 = vunpack.c.l.b16 %v443
  %v1465 = vunpack.c.h.b16 %v443
  %v1466 = vunpack.c.l.b16 %v444
  %v1467 = vunpack.c.h.b16 %v444
  %v1468 = vunpack.c.l.b16 %v445
  %v1469 = vunpack.c.h.b16 %v445
  %v1470 = vunpack.c.l.b16 %v446
  %v1471 = vunpack.c.l.b16 %v447
  %v1472 = vunpack.c.h.b16 %v447
  %v1473 = vunpack.c.l.b16 %v448
  %v1474 = vunpack.c.h.b16 %v448
  %v1475 = vunpack.c.l.b16 %v449
  %v1476 = vunpack.c.h.b16 %v449
  %v1477 = vunpack.c.l.b16 %v450
  %v1478 = vunpack.c.h.b16 %v450
  %v1479 = vunpack.c.l.b16 %v451
  %v1480 = vunpack.c.l.b16 %v452
  %v1481 = vunpack.c.h.b16 %v452
  %v1482 = vunpack.c.l.b16 %v453
  %v1483 = vunpack.c.h.b16 %v453
  %v1484 = vunpack.c.l.b16 %v454
  %v1485 = vunpack.c.h.b16 %v454
  %v1486 = vunpack.c.l.b16 %v455
  %v1487 = vunpack.c.h.b16 %v455
  %v1488 = vunpack.c.l.b16 %v456
  %v1489 = vunpack.c.l.b16 %v457
  %v1490 = vunpack.c.h.b16 %v457
  %v1491 = vunpack.c.l.b16 %v458
  %v1492 = vunpack.c.h.b16 %v458
  %v1493 = vunpack.c.l.b16 %v459
  %v1494 = vunpack.c.h.b16 %v459
  %v1495 = vunpack.c.l.b16 %v460
  %v1496 = vunpack.c.h.b16 %v460
  %v1497 = vunpack.c.l.b16 %v461
  %v1498 = vunpack.c.l.b16 %v462
  %v1499 = vunpack.c.h.b16 %v462
  %v1500 = vunpack.c.l.b16 %v463
  %v1501 = vunpack.c.h.b16 %v463
  %v1502 = vunpack.c.l.b16 %v464
  %v1503 = vunpack.c.h.b16 %v464
  %v1504 = vunpack.c.l.b16 %v465
  %v1505 = vunpack.c.h.b16 %v465
  %v1506 = vunpack.c.l.b16 %v466
  %v1507 = vpack.c.b16 %v940, %v931
  %v1508 = vpack.c.b16 %v941, %v932
  %v1509 = vpack.c.b16 %v942, %v933
  %v1510 = vpack.c.b16 %v943, %v934
  %v1511 = vpack.c.b16 %v944, %v935
  %v1512 = vpack.c.b16 %v945, %v936
  %v1513 = vpack.c.b16 %v946, %v937
  %v1514 = vpack.c.b16 %v947, %v938
  %v1515 = vpack.c.b16 %v948, %v939
  %v1516 = vpack.c.b16 %v958, %v949
  %v1517 = vpack.c.b16 %v959, %v950
  %v1518 = vpack.c.b16 %v960, %v951
  %v1519 = vpack.c.b16 %v961, %v952
  %v1520 = vpack.c.b16 %v962, %v953
  %v1521 = vpack.c.b16 %v963, %v954
  %v1522 = vpack.c.b16 %v964, %v955
  %v1523 = vpack.c.b16 %v965, %v956
  %v1524 = vpack.c.b16 %v966, %v957
  %v1525 = vpack.c.b16 %v976, %v967
  %v1526 = vpack.c.b16 %v977, %v968
  %v1527 = vpack.c.b16 %v978, %v969
  %v1528 = vpack.c.b16 %v979, %v970
  %v1529 = vpack.c.b16 %v980, %v971
  %v1530 = vpack.c.b16 %v981, %v972
  %v1531 = vpack.c.b16 %v982, %v973
  %v1532 = vpack.c.b16 %v983, %v974
  %v1533 = vpack.c.b16 %v984, %v975
  %v1534 = vpack.c.b16 %v994, %v985
  %v1535 = vpack.c.b16 %v995, %v986
  %v1536 = vpack.c.b16 %v996, %v987
  %v1537 = vpack.c.b16 %v997, %v988
  %v1538 = vpack.c.b16 %v998, %v989
  %v1539 = vpack.c.b16 %v999, %v990
  %v1540 = vpack.c.b16 %v1000, %v991
  %v1541 = vpack.c.b16 %v1001, %v992
  %v1542 = vpack.c.b16 %v1002, %v993
  %v1543 = vpack.c.b16 %v1012, %v1003
  %v1544 = vpack.c.b16 %v1013, %v1004
  %v1545 = vpack.c.b16 %v1014, %v1005
  %v1546 = vpack.c.b16 %v1015, %v1006
  %v1547 = vpack.c.b16 %v1016, %v1007
  %v1548 = vpack.c.b16 %v1017, %v1008
  %v1549 = vpack.c.b16 %v1018, %v1009
  %v1550 = vpack.c.b16 %v1019, %v1010
  %v1551 = vpack.c.b16 %v1020, %v1011
  %v1552 = vpack.c.b16 %v1030, %v1021
  %v1553 = vpack.c.b16 %v1031, %v1022
  %v1554 = vpack.c.b16 %v1032, %v1023
  %v1555 = vpack.c.b16 %v1033, %v1024
  %v1556 = vpack.c.b16 %v1034, %v1025
  %v1557 = vpack.c.b16 %v1035, %v1026
  %v1558 = vpack.c.b16 %v1036, %v1027
  %v1559 = vpack.c.b16 %v1037, %v1028
  %v1560 = vpack.c.b16 %v1038, %v1029
  %v1561 = vpack.c.b16 %v1048, %v1039
  %v1562 = vpack.c.b16 %v1049, %v1040
  %v1563 = vpack.c.b16 %v1050, %v1041
  %v1564 = vpack.c.b16 %v1051, %v1042
  %v1565 = vpack.c.b16 %v1052, %v1043
  %v1566 = vpack.c.b16 %v1053, %v1044
  %v1567 = vpack.c.b16 %v1054, %v1045
  %v1568 = vpack.c.b16 %v1055, %v1046
  %v1569 = vpack.c.b16 %v1056, %v1047
  %v1570 = vpack.c.b16 %v1066, %v1057
  %v1571 = vpack.c.b16 %v1067, %v1058
  %v1572 = vpack.c.b16 %v1068, %v1059
  %v1573 = vpack.c.b16 %v1069, %v1060
  %v1574 = vpack.c.b16 %v1070, %v1061
  %v1575 = vpack.c.b16 %v1071, %v1062
  %v1576 = vpack.c.b16 %v1072, %v1063
  %v1577 = vpack.c.b16 %v1073, %v1064
  %v1578 = vpack.c.b16 %v1074, %v1065
  %v1579 = vpack.c.b16 %v1084, %v1075
  %v1580 = vpack.c.b16 %v1085, %v1076
  %v1581 = vpack.c.b16 %v1086, %v1077
  %v1582 = vpack.c.b16 %v1087, %v1078
  %v1583 = vpack.c.b16 %v1088, %v1079
  %v1584 = vpack.c.b16 %v1089, %v1080
  %v1585 = vpack.c.b16 %v1090, %v1081
  %v1586 = vpack.c.b16 %v1091, %v1082
  %v1587 = vpack.c.b16 %v1092, %v1083
  %v1588 = vpack.c.b16 %v1102, %v1093
  %v1589 = vpack.c.b16 %v1103, %v1094
  %v1590 = vpack.c.b16 %v1104, %v1095
  %v1591 = vpack.c.b16 %v1105, %v1096
  %v1592 = vpack.c.b16 %v1106, %v1097
  %v1593 = vpack.c.b16 %v1107, %v1098
  %v1594 = vpack.c.b16 %v1108, %v1099
  %v1595 = vpack.c.b16 %v1109, %v1100
  %v1596 = vpack.c.b16 %v1110, %v1101
  %v1597 = vpack.c.b16 %v1120, %v1111
  %v1598 = vpack.c.b16 %v1121, %v1112
  %v1599 = vpack.c.b16 %v1122, %v1113
  %v1600 = vpack.c.b16 %v1123, %v1114
  %v1601 = vpack.c.b16 %v1124, %v1115
  %v1602 = vpack.c.b16 %v1125, %v1116
  %v1603 = vpack.c.b16 %v1126, %v1117
  %v1604 = vpack.c.b16 %v1127, %v1118
  %v1605 = vpack.c.b16 %v1128, %v1119
  %v1606 = vpack.c.b16 %v1138, %v1129
  %v1607 = vpack.c.b16 %v1139, %v1130
  %v1608 = vpack.c.b16 %v1140, %v1131
  %v1609 = vpack.c.b16 %v1141, %v1132
  %v1610 = vpack.c.b16 %v1142, %v1133
  %v1611 = vpack.c.b16 %v1143, %v1134
  %v1612 = vpack.c.b16 %v1144, %v1135
  %v1613 = vpack.c.b16 %v1145, %v1136
  %v1614 = vpack.c.b16 %v1146, %v1137
  %v1615 = vpack.c.b16 %v1156, %v1147
  %v1616 = vpack.c.b16 %v1157, %v1148
  %v1617 = vpack.c.b16 %v1158, %v1149
  %v1618 = vpack.c.b16 %v1159, %v1150
  %v1619 = vpack.c.b16 %v1160, %v1151
  %v1620 = vpack.c.b16 %v1161, %v1152
  %v1621 = vpack.c.b16 %v1162, %v1153
  %v1622 = vpack.c.b16 %v1163, %v1154
  %v1623 = vpack.c.b16 %v1164, %v1155
  %v1624 = vpack.c.b16 %v1174, %v1165
  %v1625 = vpack.c.b16 %v1175, %v1166
  %v1626 = vpack.c.b16 %v1176, %v1167
  %v1627 = vpack.c.b16 %v1177, %v1168
  %v1628 = vpack.c.b16 %v1178, %v1169
  %v1629 = vpack.c.b16 %v1179, %v1170
  %v1630 = vpack.c.b16 %v1180, %v1171
  %v1631 = vpack.c.b16 %v1181, %v1172
  %v1632 = vpack.c.b16 %v1182, %v1173
  %v1633 = vpack.c.b16 %v1192, %v1183
  %v1634 = vpack.c.b16 %v1193, %v1184
  %v1635 = vpack.c.b16 %v1194, %v1185
  %v1636 = vpack.c.b16 %v1195, %v1186
  %v1637 = vpack.c.b16 %v1196, %v1187
  %v1638 = vpack.c.b16 %v1197, %v1188
  %v1639 = vpack.c.b16 %v1198, %v1189
  %v1640 = vpack.c.b16 %v1199, %v1190
  %v1641 = vpack.c.b16 %v1200, %v1191
  %v1642 = vpack.c.b16 %v1210, %v1201
  %v1643 = vpack.c.b16 %v1211, %v1202
  %v1644 = vpack.c.b16 %v1212, %v1203
  %v1645 = vpack.c.b16 %v1213, %v1204
  %v1646 = vpack.c.b16 %v1214, %v1205
  %v1647 = vpack.c.b16 %v1215, %v1206
  %v1648 = vpack.c.b16 %v1216, %v1207
  %v1649 = vpack.c.b16 %v1217, %v1208
  %v1650 = vpack.c.b16 %v1218, %v1209
  %v1651 = vpack.c.b16 %v1228, %v1219
  %v1652 = vpack.c.b16 %v1229, %v1220
  %v1653 = vpack.c.b16 %v1230, %v1221
  %v1654 = vpack.c.b16 %v1231, %v1222
  %v1655 = vpack.c.b16 %v1232, %v1223
  %v1656 = vpack.c.b16 %v1233, %v1224
  %v1657 = vpack.c.b16 %v1234, %v1225
  %v1658 = vpack.c.b16 %v1235, %v1226
  %v1659 = vpack.c.b16 %v1236, %v1227
  %v1660 = vpack.c.b16 %v1246, %v1237
  %v1661 = vpack.c.b16 %v1247, %v1238
  %v1662 = vpack.c.b16 %v1248, %v1239
  %v1663 = vpack.c.b16 %v1249, %v1240
  %v1664 = vpack.c.b16 %v1250, %v1241
  %v1665 = vpack.c.b16 %v1251, %v1242
  %v1666 = vpack.c.b16 %v1252, %v1243
  %v1667 = vpack.c.b16 %v1253, %v1244
  %v1668 = vpack.c.b16 %v1254, %v1245
  %v1669 = vpack.c.b16 %v1264, %v1255
  %v1670 = vpack.c.b16 %v1265, %v1256
  %v1671 = vpack.c.b16 %v1266, %v1257
  %v1672 = vpack.c.b16 %v1267, %v1258
  %v1673 = vpack.c.b16 %v1268, %v1259
  %v1674 = vpack.c.b16 %v1269, %v1260
  %v1675 = vpack.c.b16 %v1270, %v1261
  %v1676 = vpack.c.b16 %v1271, %v1262
  %v1677 = vpack.c.b16 %v1272, %v1263
  %v1678 = vpack.c.b16 %v1282, %v1273
  %v1679 = vpack.c.b16 %v1283, %v1274
  %v1680 = vpack.c.b16 %v1284, %v1275
  %v1681 = vpack.c.b16 %v1285, %v1276
  %v1682 = vpack.c.b16 %v1286, %v1277
  %v1683 = vpack.c.b16 %v1287, %v1278
  %v1684 = vpack.c.b16 %v1288, %v1279
  %v1685 = vpack.c.b16 %v1289, %v1280
  %v1686 = vpack.c.b16 %v1290, %v1281
  %v1687 = vpack.c.b16 %v1300, %v1291
  %v1688 = vpack.c.b16 %v1301, %v1292
  %v1689 = vpack.c.b16 %v1302, %v1293
  %v1690 = vpack.c.b16 %v1303, %v1294
  %v1691 = vpack.c.b16 %v1304, %v1295
  %v1692 = vpack.c.b16 %v1305, %v1296
  %v1693 = vpack.c.b16 %v1306, %v1297
  %v1694 = vpack.c.b16 %v1307, %v1298
  %v1695 = vpack.c.b16 %v1308, %v1299
  %v1696 = vpack.c.b16 %v1318, %v1309
  %v1697 = vpack.c.b16 %v1319, %v1310
  %v1698 = vpack.c.b16 %v1320, %v1311
  %v1699 = vpack.c.b16 %v1321, %v1312
  %v1700 = vpack.c.b16 %v1322, %v1313
  %v1701 = vpack.c.b16 %v1323, %v1314
  %v1702 = vpack.c.b16 %v1324, %v1315
  %v1703 = vpack.c.b16 %v1325, %v1316
  %v1704 = vpack.c.b16 %v1326, %v1317
  %v1705 = vpack.c.b16 %v1336, %v1327
  %v1706 = vpack.c.b16 %v1337, %v1328
  %v1707 = vpack.c.b16 %v1338, %v1329
  %v1708 = vpack.c.b16 %v1339, %v1330
  %v1709 = vpack.c.b16 %v1340, %v1331
  %v1710 = vpack.c.b16 %v1341, %v1332
  %v1711 = vpack.c.b16 %v1342, %v1333
  %v1712 = vpack.c.b16 %v1343, %v1334
  %v1713 = vpack.c.b16 %v1344, %v1335
  %v1714 = vpack.c.b16 %v1354, %v1345
  %v1715 = vpack.c.b16 %v1355, %v1346
  %v1716 = vpack.c.b16 %v1356, %v1347
  %v1717 = vpack.c.b16 %v1357, %v1348
  %v1718 = vpack.c.b16 %v1358, %v1349
  %v1719 = vpack.c.b16 %v1359, %v1350
  %v1720 = vpack.c.b16 %v1360, %v1351
  %v1721 = vpack.c.b16 %v1361, %v1352
  %v1722 = vpack.c.b16 %v1362, %v1353
  %v1723 = vpack.c.b16 %v1372, %v1363
  %v1724 = vpack.c.b16 %v1373, %v1364
  %v1725 = vpack.c.b16 %v1374, %v1365
  %v1726 = vpack.c.b16 %v1375, %v1366
  %v1727 = vpack.c.b16 %v1376, %v1367
  %v1728 = vpack.c.b16 %v1377, %v1368
  %v1729 = vpack.c.b16 %v1378, %v1369
  %v1730 = vpack.c.b16 %v1379, %v1370
  %v1731 = vpack.c.b16 %v1380, %v1371
  %v1732 = vpack.c.b16 %v1390, %v1381
  %v1733 = vpack.c.b16 %v1391, %v1382
  %v1734 = vpack.c.b16 %v1392, %v1383
  %v1735 = vpack.c.b16 %v1393, %v1384
  %v1736 = vpack.c.b16 %v1394, %v1385
  %v1737 = vpack.c.b16 %v1395, %v1386
  %v1738 = vpack.c.b16 %v1396, %v1387
  %v1739 = vpack.c.b16 %v1397, %v1388
  %v1740 = vpack.c.b16 %v1398, %v1389
  %v1741 = vpack.c.b16 %v1408, %v1399
  %v1742 = vpack.c.b16 %v1409, %v1400
  %v1743 = vpack.c.b16 %v1410, %v1401
  %v1744 = vpack.c.b16 %v1411, %v1402
  %v1745 = vpack.c.b16 %v1412, %v1403
  %v1746 = vpack.c.b16 %v1413, %v1404
  %v1747 = vpack.c.b16 %v1414, %v1405
  %v1748 = vpack.c.b16 %v1415, %v1406
  %v1749 = vpack.c.b16 %v1416, %v1407
  %v1750 = vpack.c.b16 %v1426, %v1417
  %v1751 = vpack.c.b16 %v1427, %v1418
  %v1752 = vpack.c.b16 %v1428, %v1419
  %v1753 = vpack.c.b16 %v1429, %v1420
  %v1754 = vpack.c.b16 %v1430, %v1421
  %v1755 = vpack.c.b16 %v1431, %v1422
  %v1756 = vpack.c.b16 %v1432, %v1423
  %v1757 = vpack.c.b16 %v1433, %v1424
  %v1758 = vpack.c.b16 %v1434, %v1425
  %v1759 = vpack.c.b16 %v1444, %v1435
  %v1760 = vpack.c.b16 %v1445, %v1436
  %v1761 = vpack.c.b16 %v1446, %v1437
  %v1762 = vpack.c.b16 %v1447, %v1438
  %v1763 = vpack.c.b16 %v1448, %v1439
  %v1764 = vpack.c.b16 %v1449, %v1440
  %v1765 = vpack.c.b16 %v1450, %v1441
  %v1766 = vpack.c.b16 %v1451, %v1442
  %v1767 = vpack.c.b16 %v1452, %v1443
  %v1768 = vpack.c.b16 %v1462, %v1453
  %v1769 = vpack.c.b16 %v1463, %v1454
  %v1770 = vpack.c.b16 %v1464, %v1455
  %v1771 = vpack.c.b16 %v1465, %v1456
  %v1772 = vpack.c.b16 %v1466, %v1457
  %v1773 = vpack.c.b16 %v1467, %v1458
  %v1774 = vpack.c.b16 %v1468, %v1459
  %v1775 = vpack.c.b16 %v1469, %v1460
  %v1776 = vpack.c.b16 %v1470, %v1461
  %v1777 = vpack.c.b16 %v1480, %v1471
  %v1778 = vpack.c.b16 %v1481, %v1472
  %v1779 = vpack.c.b16 %v1482, %v1473
  %v1780 = vpack.c.b16 %v1483, %v1474
  %v1781 = vpack.c.b16 %v1484, %v1475
  %v1782 = vpack.c.b16 %v1485, %v1476
  %v1783 = vpack.c.b16 %v1486, %v1477
  %v1784 = vpack.c.b16 %v1487, %v1478
  %v1785 = vpack.c.b16 %v1488, %v1479
  %v1786 = vpack.c.b16 %v1498, %v1489
  %v1787 = vpack.c.b16 %v1499, %v1490
  %v1788 = vpack.c.b16 %v1500, %v1491
  %v1789 = vpack.c.b16 %v1501, %v1492
  %v1790 = vpack.c.b16 %v1502, %v1493
  %v1791 = vpack.c.b16 %v1503, %v1494
  %v1792 = vpack.c.b16 %v1504, %v1495
  %v1793 = vpack.c.b16 %v1505, %v1496
  %v1794 = vpack.c.b16 %v1506, %v1497
  %v2227 = vunpack.c.l.b16 %v467
  %v2228 = vunpack.c.l.b16 %v468
  %v2229 = vunpack.c.l.b16 %v469
  %v2230 = vunpack.c.l.b16 %v470
  %v2231 = vunpack.c.l.b16 %v471
  %v2232 = vunpack.c.l.b16 %v472
  %v2233 = vunpack.c.l.b16 %v473
  %v2234 = vunpack.c.l.b16 %v474
  %v2235 = vunpack.c.l.b16 %v475
  %v2236 = vunpack.c.l.b16 %v476
  %v2237 = vunpack.c.l.b16 %v477
  %v2238 = vunpack.c.l.b16 %v478
  %v2239 = vunpack.c.l.b16 %v479
  %v2240 = vunpack.c.l.b16 %v480
  %v2241 = vunpack.c.l.b16 %v481
  %v2242 = vunpack.c.l.b16 %v482
  %v2243 = vunpack.c.l.b16 %v483
  %v2244 = vunpack.c.l.b16 %v484
  %v2245 = vunpack.c.l.b16 %v485
  %v2246 = vunpack.c.l.b16 %v486
  %v2247 = vunpack.c.l.b16 %v487
  %v2248 = vunpack.c.l.b16 %v488
  %v2249 = vunpack.c.l.b16 %v489
  %v2250 = vunpack.c.l.b16 %v490
  %v2251 = vunpack.c.l.b16 %v491
  %v2252 = vunpack.c.l.b16 %v492
  %v2253 = vunpack.c.l.b16 %v493
  %v2254 = vunpack.c.l.b16 %v494
  %v2255 = vunpack.c.l.b16 %v495
  %v2256 = vunpack.c.l.b16 %v496
  %v2257 = vunpack.c.l.b16 %v497
  %v2258 = vunpack.c.l.b16 %v498
  %v2259 = vunpack.c.l.b16 %v499
  %v2260 = vunpack.c.l.b16 %v500
  %v2261 = vunpack.c.l.b16 %v501
  %v2262 = vunpack.c.l.b16 %v502
  %v2263 = vunpack.c.l.b16 %v503
  %v2264 = vunpack.c.l.b16 %v504
  %v2265 = vunpack.c.l.b16 %v505
  %v2266 = vunpack.c.l.b16 %v506
  %v2267 = vunpack.c.l.b16 %v507
  %v2268 = vunpack.c.l.b16 %v508
  %v2269 = vunpack.c.l.b16 %v509
  %v2270 = vunpack.c.l.b16 %v510
  %v2271 = vunpack.c.l.b16 %v511
  %v2272 = vunpack.c.l.b16 %v512
  %v2273 = vunpack.c.l.b16 %v513
  %v2274 = vunpack.c.l.b16 %v514
  %v2275 = vunpack.c.l.b16 %v515
  %v2276 = vunpack.c.l.b16 %v516
  %v2277 = vunpack.c.l.b16 %v517
  %v2278 = vunpack.c.l.b16 %v518
  %v2279 = vunpack.c.l.b16 %v519
  %v2280 = vunpack.c.l.b16 %v520
  %v2281 = vunpack.c.l.b16 %v521
  %v2282 = vunpack.c.l.b16 %v522
  %v2283 = vunpack.c.l.b16 %v523
  %v2284 = vunpack.c.l.b16 %v524
  %v2285 = vunpack.c.l.b16 %v525
  %v2286 = vunpack.c.l.b16 %v526
  %v2287 = vunpack.c.l.b16 %v527
  %v2288 = vunpack.c.l.b16 %v528
  %v2289 = vunpack.c.l.b16 %v529
  %v2290 = vunpack.c.l.b16 %v530
  %v2291 = vunpack.c.l.b16 %v531
  %v2292 = vunpack.c.l.b16 %v532
  %v2293 = vunpack.c.l.b16 %v533
  %v2294 = vunpack.c.l.b16 %v534
  %v2295 = vunpack.c.l.b16 %v535
  %v2296 = vunpack.c.l.b16 %v536
  %v2297 = vunpack.c.l.b16 %v537
  %v2298 = vunpack.c.l.b16 %v538
  %v2299 = vunpack.c.l.b16 %v539
  %v2300 = vunpack.c.l.b16 %v540
  %v2301 = vunpack.c.l.b16 %v541
  %v2302 = vunpack.c.l.b16 %v542
  %v2303 = vunpack.c.l.b16 %v543
  %v2304 = vunpack.c.l.b16 %v544
  %v2305 = vunpack.c.l.b16 %v545
  %v2306 = vunpack.c.l.b16 %v546
  %v2307 = vunpack.c.l.b16 %v547
  %v2308 = vunpack.c.l.b16 %v548
  %v2309 = vunpack.c.l.b16 %v549
  %v2310 = vunpack.c.l.b16 %v550
  %v2311 = vunpack.c.l.b16 %v551
  %v2312 = vunpack.c.l.b16 %v552
  %v2313 = vunpack.c.l.b16 %v553
  %v2314 = vunpack.c.l.b16 %v554
  %v2315 = vunpack.c.l.b16 %v555
  %v2316 = vunpack.c.l.b16 %v556
  %v2317 = vunpack.c.l.b16 %v557
  %v2318 = vunpack.c.l.b16 %v558
  %v2319 = vunpack.c.l.b16 %v559
  %v2320 = vunpack.c.l.b16 %v560
  %v2321 = vunpack.c.l.b16 %v561
  %v2322 = vunpack.c.l.b16 %v562
  %v2323 = vunpack.c.l.b16 %v563
  %v2324 = vunpack.c.l.b16 %v564
  %v2325 = vunpack.c.l.b16 %v565
  %v2326 = vunpack.c.l.b16 %v566
  %v2327 = vunpack.c.l.b16 %v567
  %v2328 = vunpack.c.l.b16 %v568
  %v2329 = vunpack.c.l.b16 %v569
  %v2330 = vunpack.c.l.b16 %v570
  %v2331 = vunpack.c.l.b16 %v571
  %v2332 = vunpack.c.l.b16 %v572
  %v2333 = vunpack.c.l.b16 %v573
  %v2334 = vunpack.c.l.b16 %v574
  %v2335 = vunpack.c.l.b16 %v575
  %v2336 = vunpack.c.l.b16 %v576
  %v2337 = vunpack.c.l.b16 %v577
  %v2338 = vunpack.c.l.b16 %v578
  %v2339 = vunpack.c.l.b16 %v579
  %v2340 = vunpack.c.l.b16 %v580
  %v2341 = vunpack.c.l.b16 %v581
  %v2342 = vunpack.c.l.b16 %v582
  %v2343 = vunpack.c.l.b16 %v583
  %v2344 = vunpack.c.l.b16 %v584
  %v2345 = vunpack.c.l.b16 %v585
  %v2346 = vunpack.c.l.b16 %v586
  %v2347 = vunpack.c.l.b16 %v587
  %v2348 = vunpack.c.l.b16 %v588
  %v2349 = vunpack.c.l.b16 %v589
  %v2350 = vunpack.c.l.b16 %v590
  %v2351 = vunpack.c.l.b16 %v591
  %v2352 = vunpack.c.l.b16 %v592
  %v2353 = vunpack.c.l.b16 %v593
  %v2354 = vunpack.c.l.b16 %v594
  %v2355 = vunpack.c.l.b16 %v595
  %v2356 = vunpack.c.l.b16 %v596
  %v2357 = vunpack.c.l.b16 %v597
  %v2358 = vunpack.c.l.b16 %v598
  %v2359 = vunpack.c.l.b16 %v599
  %v2360 = vunpack.c.l.b16 %v600
  %v2361 = vunpack.c.l.b16 %v601
  %v2362 = vunpack.c.l.b16 %v602
  %v2363 = vunpack.c.l.b16 %v603
  %v2364 = vunpack.c.l.b16 %v604
  %v2365 = vunpack.c.l.b16 %v605
  %v2366 = vunpack.c.l.b16 %v606
  %v2367 = vunpack.c.l.b16 %v607
  %v2368 = vunpack.c.l.b16 %v608
  %v2369 = vunpack.c.l.b16 %v609
  %v2370 = vunpack.c.l.b16 %v610
  %v2371 = vpack.c.b16 %v2228, %v2227
  %v2372 = vpack.c.b16 %v2230, %v2229
  %v2373 = vpack.c.b16 %v2232, %v2231
  %v2374 = vpack.c.b16 %v2234, %v2233
  %v2375 = vpack.c.b16 %v2236, %v2235
  %v2376 = vpack.c.b16 %v2238, %v2237
  %v2377 = vpack.c.b16 %v2240, %v2239
  %v2378 = vpack.c.b16 %v2242, %v2241
  %v2379 = vpack.c.b16 %v2244, %v2243
  %v2380 = vpack.c.b16 %v2246, %v2245
  %v2381 = vpack.c.b16 %v2248, %v2247
  %v2382 = vpack.c.b16 %v2250, %v2249
  %v2383 = vpack.c.b16 %v2252, %v2251
  %v2384 = vpack.c.b16 %v2254, %v2253
  %v2385 = vpack.c.b16 %v2256, %v2255
  %v2386 = vpack.c.b16 %v2258, %v2257
  %v2387 = vpack.c.b16 %v2260, %v2259
  %v2388 = vpack.c.b16 %v2262, %v2261
  %v2389 = vpack.c.b16 %v2264, %v2263
  %v2390 = vpack.c.b16 %v2266, %v2265
  %v2391 = vpack.c.b16 %v2268, %v2267
  %v2392 = vpack.c.b16 %v2270, %v2269
  %v2393 = vpack.c.b16 %v2272, %v2271
  %v2394 = vpack.c.b16 %v2274, %v2273
  %v2395 = vpack.c.b16 %v2276, %v2275
  %v2396 = vpack.c.b16 %v2278, %v2277
  %v2397 = vpack.c.b16 %v2280, %v2279
  %v2398 = vpack.c.b16 %v2282, %v2281
  %v2399 = vpack.c.b16 %v2284, %v2283
  %v2400 = vpack.c.b16 %v2286, %v2285
  %v2401 = vpack.c.b16 %v2288, %v2287
  %v2402 = vpack.c.b16 %v2290, %v2289
  %v2403 = vpack.c.b16 %v2292, %v2291
  %v2404 = vpack.c.b16 %v2294, %v2293
  %v2405 = vpack.c.b16 %v2296, %v2295
  %v2406 = vpack.c.b16 %v2298, %v2297
  %v2407 = vpack.c.b16 %v2300, %v2299
  %v2408 = vpack.c.b16 %v2302, %v2301
  %v2409 = vpack.c.b16 %v2304, %v2303
  %v2410 = vpack.c.b16 %v2306, %v2305
  %v2411 = vpack.c.b16 %v2308, %v2307
  %v2412 = vpack.c.b16 %v2310, %v2309
  %v2413 = vpack.c.b16 %v2312, %v2311
  %v2414 = vpack.c.b16 %v2314, %v2313
  %v2415 = vpack.c.b16 %v2316, %v2315
  %v2416 = vpack.c.b16 %v2318, %v2317
  %v2417 = vpack.c.b16 %v2320, %v2319
  %v2418 = vpack.c.b16 %v2322, %v2321
  %v2419 = vpack.c.b16 %v2324, %v2323
  %v2420 = vpack.c.b16 %v2326, %v2325
  %v2421 = vpack.c.b16 %v2328, %v2327
  %v2422 = vpack.c.b16 %v2330, %v2329
  %v2423 = vpack.c.b16 %v2332, %v2331
  %v2424 = vpack.c.b16 %v2334, %v2333
  %v2425 = vpack.c.b16 %v2336, %v2335
  %v2426 = vpack.c.b16 %v2338, %v2337
  %v2427 = vpack.c.b16 %v2340, %v2339
  %v2428 = vpack.c.b16 %v2342, %v2341
  %v2429 = vpack.c.b16 %v2344, %v2343
  %v2430 = vpack.c.b16 %v2346, %v2345
  %v2431 = vpack.c.b16 %v2348, %v2347
  %v2432 = vpack.c.b16 %v2350, %v2349
  %v2433 = vpack.c.b16 %v2352, %v2351
  %v2434 = vpack.c.b16 %v2354, %v2353
  %v2435 = vpack.c.b16 %v2356, %v2355
  %v2436 = vpack.c.b16 %v2358, %v2357
  %v2437 = vpack.c.b16 %v2360, %v2359
  %v2438 = vpack.c.b16 %v2362, %v2361
  %v2439 = vpack.c.b16 %v2364, %v2363
  %v2440 = vpack.c.b16 %v2366, %v2365
  %v2441 = vpack.c.b16 %v2368, %v2367
  %v2442 = vpack.c.b16 %v2370, %v2369
  %2515 = vmatprep.subr.bf16.mxu0 0
  %2516 = vmatpush1.bf16.msra.mxu0 %v2371
  %2517 = vmatprep.subr.bf16.mxu0 0
  %2518 = vmatpush1.bf16.msra.mxu0 %v2372
  %2519 = vmatprep.subr.bf16.mxu0 0
  %2520 = vmatpush1.bf16.msra.mxu0 %v2373
  %2521 = vmatprep.subr.bf16.mxu0 0
  %2522 = vmatpush1.bf16.msra.mxu0 %v2374
  %2523 = vmatprep.subr.bf16.mxu0 0
  %2524 = vmatpush1.bf16.msra.mxu0 %v2375
  %2525 = vmatprep.subr.bf16.mxu0 0
  %2526 = vmatpush1.bf16.msra.mxu0 %v2376
  %2527 = vmatprep.subr.bf16.mxu0 0
  %2528 = vmatpush1.bf16.msra.mxu0 %v2377
  %2529 = vmatprep.subr.bf16.mxu0 0
  %2530 = vmatpush1.bf16.msra.mxu0 %v2378
  %2531 = vmatprep.subr.bf16.mxu0 0
  %2532 = vmatpush1.bf16.msra.mxu0 %v2379
  %2533 = vmatprep.subr.bf16.mxu0 0
  %2534 = vmatpush1.bf16.msra.mxu0 %v2380
  %2535 = vmatprep.subr.bf16.mxu0 0
  %2536 = vmatpush1.bf16.msra.mxu0 %v2381
  %2537 = vmatprep.subr.bf16.mxu0 0
  %2538 = vmatpush1.bf16.msra.mxu0 %v2382
  %2539 = vmatprep.subr.bf16.mxu0 0
  %2540 = vmatpush1.bf16.msra.mxu0 %v2383
  %2541 = vmatprep.subr.bf16.mxu0 0
  %2542 = vmatpush1.bf16.msra.mxu0 %v2384
  %2543 = vmatprep.subr.bf16.mxu0 0
  %2544 = vmatpush1.bf16.msra.mxu0 %v2385
  %2545 = vmatprep.subr.bf16.mxu0 0
  %2546 = vmatpush1.bf16.msra.mxu0 %v2386
  %2547 = vmatprep.mubr.bf16.mxu0 %v1508
  %2548 = vmatmul.mubr.bf16.gmra.mrb[0].mxu0 %v1507
  %v2549 = vpop.f32.mrb[0].mxu0
  %v2550 = vadd.f32 0.0, %v2549
  %v2551 = vpop.f32.mrb[0].mxu0
  %v2552 = vpop.f32.mrb[0].mxu0
  %v2553 = vadd.f32 0.0, %v2552
  %v2554 = vpop.f32.mrb[0].mxu0
  %2555 = vmatprep.mubr.bf16.mxu0 %v1517
  %2556 = vmatmul.mubr.bf16.gmra.mrb[0].mxu0 %v1516
  %v2557 = vpop.f32.mrb[0].mxu0
  %v2558 = vadd.f32 0.0, %v2557
  %v2559 = vpop.f32.mrb[0].mxu0
  %v2560 = vpop.f32.mrb[0].mxu0
  %v2561 = vadd.f32 0.0, %v2560
  %v2562 = vpop.f32.mrb[0].mxu0
  %2563 = vmatprep.mubr.bf16.mxu0 %v1526
  %2564 = vmatmul.mubr.bf16.gmra.mrb[0].mxu0 %v1525
  %v2565 = vpop.f32.mrb[0].mxu0
  %v2566 = vadd.f32 0.0, %v2565
  %v2567 = vpop.f32.mrb[0].mxu0
  %v2568 = vpop.f32.mrb[0].mxu0
  %v2569 = vadd.f32 0.0, %v2568
  %v2570 = vpop.f32.mrb[0].mxu0
  %2571 = vmatprep.mubr.bf16.mxu0 %v1535
  %2572 = vmatmul.mubr.bf16.gmra.mrb[0].mxu0 %v1534
  %v2573 = vpop.f32.mrb[0].mxu0
  %v2574 = vadd.f32 0.0, %v2573
  %v2575 = vpop.f32.mrb[0].mxu0
  %v2576 = vpop.f32.mrb[0].mxu0
  %v2577 = vadd.f32 0.0, %v2576
  %v2578 = vpop.f32.mrb[0].mxu0
  %2579 = vmatprep.mubr.bf16.mxu0 %v1544
  %2580 = vmatmul.mubr.bf16.gmra.mrb[0].mxu0 %v1543
  %v2581 = vpop.f32.mrb[0].mxu0
  %v2582 = vadd.f32 0.0, %v2581
  %v2583 = vpop.f32.mrb[0].mxu0
  %v2584 = vpop.f32.mrb[0].mxu0
  %v2585 = vadd.f32 0.0, %v2584
  %v2586 = vpop.f32.mrb[0].mxu0
  %2587 = vmatprep.mubr.bf16.mxu0 %v1553
  %2588 = vmatmul.mubr.bf16.gmra.mrb[0].mxu0 %v1552
  %v2589 = vpop.f32.mrb[0].mxu0
  %v2590 = vadd.f32 0.0, %v2589
  %v2591 = vpop.f32.mrb[0].mxu0
  %v2592 = vpop.f32.mrb[0].mxu0
  %v2593 = vadd.f32 0.0, %v2592
  %v2594 = vpop.f32.mrb[0].mxu0
  %2595 = vmatprep.mubr.bf16.mxu0 %v1562
  %2596 = vmatmul.mubr.bf16.gmra.mrb[0].mxu0 %v1561
  %v2597 = vpop.f32.mrb[0].mxu0
  %v2598 = vadd.f32 0.0, %v2597
  %v2599 = vpop.f32.mrb[0].mxu0
  %v2600 = vpop.f32.mrb[0].mxu0
  %v2601 = vadd.f32 0.0, %v2600
  %v2602 = vpop.f32.mrb[0].mxu0
  %2603 = vmatprep.mubr.bf16.mxu0 %v1571
  %2604 = vmatmul.mubr.bf16.gmra.mrb[0].mxu0 %v1570
  %v2605 = vpop.f32.mrb[0].mxu0
  %v2606 = vadd.f32 0.0, %v2605
  %v2607 = vpop.f32.mrb[0].mxu0
  %v2608 = vpop.f32.mrb[0].mxu0
  %v2609 = vadd.f32 0.0, %v2608
  %v2610 = vpop.f32.mrb[0].mxu0
  %2611 = vmatprep.mubr.bf16.mxu0 %v1580
  %2612 = vmatmul.mubr.bf16.gmra.mrb[0].mxu0 %v1579
  %v2613 = vpop.f32.mrb[0].mxu0
  %v2614 = vadd.f32 0.0, %v2613
  %v2615 = vpop.f32.mrb[0].mxu0
  %v2616 = vpop.f32.mrb[0].mxu0
  %v2617 = vadd.f32 0.0, %v2616
  %v2618 = vpop.f32.mrb[0].mxu0
  %2619 = vmatprep.mubr.bf16.mxu0 %v1589
  %2620 = vmatmul.mubr.bf16.gmra.mrb[0].mxu0 %v1588
  %v2621 = vpop.f32.mrb[0].mxu0
  %v2622 = vadd.f32 0.0, %v2621
  %v2623 = vpop.f32.mrb[0].mxu0
  %v2624 = vpop.f32.mrb[0].mxu0
  %v2625 = vadd.f32 0.0, %v2624
  %v2626 = vpop.f32.mrb[0].mxu0
  %2627 = vmatprep.mubr.bf16.mxu0 %v1598
  %2628 = vmatmul.mubr.bf16.gmra.mrb[0].mxu0 %v1597
  %v2629 = vpop.f32.mrb[0].mxu0
  %v2630 = vadd.f32 0.0, %v2629
  %v2631 = vpop.f32.mrb[0].mxu0
  %v2632 = vpop.f32.mrb[0].mxu0
  %v2633 = vadd.f32 0.0, %v2632
  %v2634 = vpop.f32.mrb[0].mxu0
  %2635 = vmatprep.mubr.bf16.mxu0 %v1607
  %2636 = vmatmul.mubr.bf16.gmra.mrb[0].mxu0 %v1606
  %v2637 = vpop.f32.mrb[0].mxu0
  %v2638 = vadd.f32 0.0, %v2637
  %v2639 = vpop.f32.mrb[0].mxu0
  %v2640 = vpop.f32.mrb[0].mxu0
  %v2641 = vadd.f32 0.0, %v2640
  %v2642 = vpop.f32.mrb[0].mxu0
  %2643 = vmatprep.mubr.bf16.mxu0 %v1616
  %2644 = vmatmul.mubr.bf16.gmra.mrb[0].mxu0 %v1615
  %v2645 = vpop.f32.mrb[0].mxu0
  %v2646 = vadd.f32 0.0, %v2645
  %v2647 = vpop.f32.mrb[0].mxu0
  %v2648 = vpop.f32.mrb[0].mxu0
  %v2649 = vadd.f32 0.0, %v2648
  %v2650 = vpop.f32.mrb[0].mxu0
  %2651 = vmatprep.mubr.bf16.mxu0 %v1625
  %2652 = vmatmul.mubr.bf16.gmra.mrb[0].mxu0 %v1624
  %v2653 = vpop.f32.mrb[0].mxu0
  %v2654 = vadd.f32 0.0, %v2653
  %v2655 = vpop.f32.mrb[0].mxu0
  %v2656 = vpop.f32.mrb[0].mxu0
  %v2657 = vadd.f32 0.0, %v2656
  %v2658 = vpop.f32.mrb[0].mxu0
  %2659 = vmatprep.mubr.bf16.mxu0 %v1634
  %2660 = vmatmul.mubr.bf16.gmra.mrb[0].mxu0 %v1633
  %v2661 = vpop.f32.mrb[0].mxu0
  %v2662 = vadd.f32 0.0, %v2661
  %v2663 = vpop.f32.mrb[0].mxu0
  %v2664 = vpop.f32.mrb[0].mxu0
  %v2665 = vadd.f32 0.0, %v2664
  %v2666 = vpop.f32.mrb[0].mxu0
  %2667 = vmatprep.mubr.bf16.mxu0 %v1643
  %2668 = vmatmul.mubr.bf16.gmra.mrb[0].mxu0 %v1642
  %v2669 = vpop.f32.mrb[0].mxu0
  %v2670 = vadd.f32 0.0, %v2669
  %v2671 = vpop.f32.mrb[0].mxu0
  %v2672 = vpop.f32.mrb[0].mxu0
  %v2673 = vadd.f32 0.0, %v2672
  %v2674 = vpop.f32.mrb[0].mxu0
  %2675 = vmatprep.mubr.bf16.mxu0 %v1652
  %2676 = vmatmul.mubr.bf16.gmra.mrb[0].mxu0 %v1651
  %v2677 = vpop.f32.mrb[0].mxu0
  %v2678 = vadd.f32 0.0, %v2677
  %v2679 = vpop.f32.mrb[0].mxu0
  %v2680 = vpop.f32.mrb[0].mxu0
  %v2681 = vadd.f32 0.0, %v2680
  %v2682 = vpop.f32.mrb[0].mxu0
  %2683 = vmatprep.mubr.bf16.mxu0 %v1661
  %2684 = vmatmul.mubr.bf16.gmra.mrb[0].mxu0 %v1660
  %v2685 = vpop.f32.mrb[0].mxu0
  %v2686 = vadd.f32 0.0, %v2685
  %v2687 = vpop.f32.mrb[0].mxu0
  %v2688 = vpop.f32.mrb[0].mxu0
  %v2689 = vadd.f32 0.0, %v2688
  %v2690 = vpop.f32.mrb[0].mxu0
  %2691 = vmatprep.mubr.bf16.mxu0 %v1670
  %2692 = vmatmul.mubr.bf16.gmra.mrb[0].mxu0 %v1669
  %v2693 = vpop.f32.mrb[0].mxu0
  %v2694 = vadd.f32 0.0, %v2693
  %v2695 = vpop.f32.mrb[0].mxu0
  %v2696 = vpop.f32.mrb[0].mxu0
  %v2697 = vadd.f32 0.0, %v2696
  %v2698 = vpop.f32.mrb[0].mxu0
  %2699 = vmatprep.mubr.bf16.mxu0 %v1679
  %2700 = vmatmul.mubr.bf16.gmra.mrb[0].mxu0 %v1678
  %v2701 = vpop.f32.mrb[0].mxu0
  %v2702 = vadd.f32 0.0, %v2701
  %v2703 = vpop.f32.mrb[0].mxu0
  %v2704 = vpop.f32.mrb[0].mxu0
  %v2705 = vadd.f32 0.0, %v2704
  %v2706 = vpop.f32.mrb[0].mxu0
  %2707 = vmatprep.mubr.bf16.mxu0 %v1688
  %2708 = vmatmul.mubr.bf16.gmra.mrb[0].mxu0 %v1687
  %v2709 = vpop.f32.mrb[0].mxu0
  %v2710 = vadd.f32 0.0, %v2709
  %v2711 = vpop.f32.mrb[0].mxu0
  %v2712 = vpop.f32.mrb[0].mxu0
  %v2713 = vadd.f32 0.0, %v2712
  %v2714 = vpop.f32.mrb[0].mxu0
  %2715 = vmatprep.mubr.bf16.mxu0 %v1697
  %2716 = vmatmul.mubr.bf16.gmra.mrb[0].mxu0 %v1696
  %v2717 = vpop.f32.mrb[0].mxu0
  %v2718 = vadd.f32 0.0, %v2717
  %v2719 = vpop.f32.mrb[0].mxu0
  %v2720 = vpop.f32.mrb[0].mxu0
  %v2721 = vadd.f32 0.0, %v2720
  %v2722 = vpop.f32.mrb[0].mxu0
  %2723 = vmatprep.mubr.bf16.mxu0 %v1706
  %2724 = vmatmul.mubr.bf16.gmra.mrb[0].mxu0 %v1705
  %v2725 = vpop.f32.mrb[0].mxu0
  %v2726 = vadd.f32 0.0, %v2725
  %v2727 = vpop.f32.mrb[0].mxu0
  %v2728 = vpop.f32.mrb[0].mxu0
  %v2729 = vadd.f32 0.0, %v2728
  %v2730 = vpop.f32.mrb[0].mxu0
  %2731 = vmatprep.mubr.bf16.mxu0 %v1715
  %2732 = vmatmul.mubr.bf16.gmra.mrb[0].mxu0 %v1714
  %v2733 = vpop.f32.mrb[0].mxu0
  %v2734 = vadd.f32 0.0, %v2733
  %v2735 = vpop.f32.mrb[0].mxu0
  %v2736 = vpop.f32.mrb[0].mxu0
  %v2737 = vadd.f32 0.0, %v2736
  %v2738 = vpop.f32.mrb[0].mxu0
  %2739 = vmatprep.mubr.bf16.mxu0 %v1724
  %2740 = vmatmul.mubr.bf16.gmra.mrb[0].mxu0 %v1723
  %v2741 = vpop.f32.mrb[0].mxu0
  %v2742 = vadd.f32 0.0, %v2741
  %v2743 = vpop.f32.mrb[0].mxu0
  %v2744 = vpop.f32.mrb[0].mxu0
  %v2745 = vadd.f32 0.0, %v2744
  %v2746 = vpop.f32.mrb[0].mxu0
  %2747 = vmatprep.mubr.bf16.mxu0 %v1733
  %2748 = vmatmul.mubr.bf16.gmra.mrb[0].mxu0 %v1732
  %v2749 = vpop.f32.mrb[0].mxu0
  %v2750 = vadd.f32 0.0, %v2749
  %v2751 = vpop.f32.mrb[0].mxu0
  %v2752 = vpop.f32.mrb[0].mxu0
  %v2753 = vadd.f32 0.0, %v2752
  %v2754 = vpop.f32.mrb[0].mxu0
  %2755 = vmatprep.mubr.bf16.mxu0 %v1742
  %2756 = vmatmul.mubr.bf16.gmra.mrb[0].mxu0 %v1741
  %v2757 = vpop.f32.mrb[0].mxu0
  %v2758 = vadd.f32 0.0, %v2757
  %v2759 = vpop.f32.mrb[0].mxu0
  %v2760 = vpop.f32.mrb[0].mxu0
  %v2761 = vadd.f32 0.0, %v2760
  %v2762 = vpop.f32.mrb[0].mxu0
  %2763 = vmatprep.mubr.bf16.mxu0 %v1751
  %2764 = vmatmul.mubr.bf16.gmra.mrb[0].mxu0 %v1750
  %v2765 = vpop.f32.mrb[0].mxu0
  %v2766 = vadd.f32 0.0, %v2765
  %v2767 = vpop.f32.mrb[0].mxu0
  %v2768 = vpop.f32.mrb[0].mxu0
  %v2769 = vadd.f32 0.0, %v2768
  %v2770 = vpop.f32.mrb[0].mxu0
  %2771 = vmatprep.mubr.bf16.mxu0 %v1760
  %2772 = vmatmul.mubr.bf16.gmra.mrb[0].mxu0 %v1759
  %v2773 = vpop.f32.mrb[0].mxu0
  %v2774 = vadd.f32 0.0, %v2773
  %v2775 = vpop.f32.mrb[0].mxu0
  %v2776 = vpop.f32.mrb[0].mxu0
  %v2777 = vadd.f32 0.0, %v2776
  %v2778 = vpop.f32.mrb[0].mxu0
  %2779 = vmatprep.mubr.bf16.mxu0 %v1769
  %2780 = vmatmul.mubr.bf16.gmra.mrb[0].mxu0 %v1768
  %v2781 = vpop.f32.mrb[0].mxu0
  %v2782 = vadd.f32 0.0, %v2781
  %v2783 = vpop.f32.mrb[0].mxu0
  %v2784 = vpop.f32.mrb[0].mxu0
  %v2785 = vadd.f32 0.0, %v2784
  %v2786 = vpop.f32.mrb[0].mxu0
  %2787 = vmatprep.mubr.bf16.mxu0 %v1778
  %2788 = vmatmul.mubr.bf16.gmra.mrb[0].mxu0 %v1777
  %v2789 = vpop.f32.mrb[0].mxu0
  %v2790 = vadd.f32 0.0, %v2789
  %v2791 = vpop.f32.mrb[0].mxu0
  %v2792 = vpop.f32.mrb[0].mxu0
  %v2793 = vadd.f32 0.0, %v2792
  %v2794 = vpop.f32.mrb[0].mxu0
  %2795 = vmatprep.mubr.bf16.mxu0 %v1787
  %2796 = vmatmul.mubr.bf16.gmra.mrb[0].mxu0 %v1786
  %v2797 = vpop.f32.mrb[0].mxu0
  %v2798 = vadd.f32 0.0, %v2797
  %v2799 = vpop.f32.mrb[0].mxu0
  %v2800 = vpop.f32.mrb[0].mxu0
  %v2801 = vadd.f32 0.0, %v2800
  %v2802 = vpop.f32.mrb[0].mxu0
  %2803 = vdwg.mxu0
  %2804 = vmatprep.subr.bf16.mxu0 0
  %2805 = vmatpush1.bf16.msra.mxu0 %v2387
  %2806 = vmatprep.subr.bf16.mxu0 0
  %2807 = vmatpush1.bf16.msra.mxu0 %v2388
  %2808 = vmatprep.subr.bf16.mxu0 0
  %2809 = vmatpush1.bf16.msra.mxu0 %v2389
  %2810 = vmatprep.subr.bf16.mxu0 0
  %2811 = vmatpush1.bf16.msra.mxu0 %v2390
  %2812 = vmatprep.subr.bf16.mxu0 0
  %2813 = vmatpush1.bf16.msra.mxu0 %v2391
  %2814 = vmatprep.subr.bf16.mxu0 0
  %2815 = vmatpush1.bf16.msra.mxu0 %v2392
  %2816 = vmatprep.subr.bf16.mxu0 0
  %2817 = vmatpush1.bf16.msra.mxu0 %v2393
  %2818 = vmatprep.subr.bf16.mxu0 0
  %2819 = vmatpush1.bf16.msra.mxu0 %v2394
  %2820 = vmatprep.subr.bf16.mxu0 0
  %2821 = vmatpush1.bf16.msra.mxu0 %v2395
  %2822 = vmatprep.subr.bf16.mxu0 0
  %2823 = vmatpush1.bf16.msra.mxu0 %v2396
  %2824 = vmatprep.subr.bf16.mxu0 0
  %2825 = vmatpush1.bf16.msra.mxu0 %v2397
  %2826 = vmatprep.subr.bf16.mxu0 0
  %2827 = vmatpush1.bf16.msra.mxu0 %v2398
  %2828 = vmatprep.subr.bf16.mxu0 0
  %2829 = vmatpush1.bf16.msra.mxu0 %v2399
  %2830 = vmatprep.subr.bf16.mxu0 0
  %2831 = vmatpush1.bf16.msra.mxu0 %v2400
  %2832 = vmatprep.subr.bf16.mxu0 0
  %2833 = vmatpush1.bf16.msra.mxu0 %v2401
  %2834 = vmatprep.subr.bf16.mxu0 0
  %2835 = vmatpush1.bf16.msra.mxu0 %v2402
  %2836 = vmatprep.mubr.bf16.mxu0 %v1510
  %2837 = vmatmul.mubr.bf16.gmra.mrb[0].mxu0 %v1509
  %v2838 = vpop.f32.mrb[0].mxu0
  %v2839 = vadd.f32 %v2550, %v2838
  %v2840 = vpop.f32.mrb[0].mxu0
  %v2841 = vpop.f32.mrb[0].mxu0
  %v2842 = vadd.f32 %v2553, %v2841
  %v2843 = vpop.f32.mrb[0].mxu0
  %2844 = vmatprep.mubr.bf16.mxu0 %v1519
  %2845 = vmatmul.mubr.bf16.gmra.mrb[0].mxu0 %v1518
  %v2846 = vpop.f32.mrb[0].mxu0
  %v2847 = vadd.f32 %v2558, %v2846
  %v2848 = vpop.f32.mrb[0].mxu0
  %v2849 = vpop.f32.mrb[0].mxu0
  %v2850 = vadd.f32 %v2561, %v2849
  %v2851 = vpop.f32.mrb[0].mxu0
  %2852 = vmatprep.mubr.bf16.mxu0 %v1528
  %2853 = vmatmul.mubr.bf16.gmra.mrb[0].mxu0 %v1527
  %v2854 = vpop.f32.mrb[0].mxu0
  %v2855 = vadd.f32 %v2566, %v2854
  %v2856 = vpop.f32.mrb[0].mxu0
  %v2857 = vpop.f32.mrb[0].mxu0
  %v2858 = vadd.f32 %v2569, %v2857
  %v2859 = vpop.f32.mrb[0].mxu0
  %2860 = vmatprep.mubr.bf16.mxu0 %v1537
  %2861 = vmatmul.mubr.bf16.gmra.mrb[0].mxu0 %v1536
  %v2862 = vpop.f32.mrb[0].mxu0
  %v2863 = vadd.f32 %v2574, %v2862
  %v2864 = vpop.f32.mrb[0].mxu0
  %v2865 = vpop.f32.mrb[0].mxu0
  %v2866 = vadd.f32 %v2577, %v2865
  %v2867 = vpop.f32.mrb[0].mxu0
  %2868 = vmatprep.mubr.bf16.mxu0 %v1546
  %2869 = vmatmul.mubr.bf16.gmra.mrb[0].mxu0 %v1545
  %v2870 = vpop.f32.mrb[0].mxu0
  %v2871 = vadd.f32 %v2582, %v2870
  %v2872 = vpop.f32.mrb[0].mxu0
  %v2873 = vpop.f32.mrb[0].mxu0
  %v2874 = vadd.f32 %v2585, %v2873
  %v2875 = vpop.f32.mrb[0].mxu0
  %2876 = vmatprep.mubr.bf16.mxu0 %v1555
  %2877 = vmatmul.mubr.bf16.gmra.mrb[0].mxu0 %v1554
  %v2878 = vpop.f32.mrb[0].mxu0
  %v2879 = vadd.f32 %v2590, %v2878
  %v2880 = vpop.f32.mrb[0].mxu0
  %v2881 = vpop.f32.mrb[0].mxu0
  %v2882 = vadd.f32 %v2593, %v2881
  %v2883 = vpop.f32.mrb[0].mxu0
  %2884 = vmatprep.mubr.bf16.mxu0 %v1564
  %2885 = vmatmul.mubr.bf16.gmra.mrb[0].mxu0 %v1563
  %v2886 = vpop.f32.mrb[0].mxu0
  %v2887 = vadd.f32 %v2598, %v2886
  %v2888 = vpop.f32.mrb[0].mxu0
  %v2889 = vpop.f32.mrb[0].mxu0
  %v2890 = vadd.f32 %v2601, %v2889
  %v2891 = vpop.f32.mrb[0].mxu0
  %2892 = vmatprep.mubr.bf16.mxu0 %v1573
  %2893 = vmatmul.mubr.bf16.gmra.mrb[0].mxu0 %v1572
  %v2894 = vpop.f32.mrb[0].mxu0
  %v2895 = vadd.f32 %v2606, %v2894
  %v2896 = vpop.f32.mrb[0].mxu0
  %v2897 = vpop.f32.mrb[0].mxu0
  %v2898 = vadd.f32 %v2609, %v2897
  %v2899 = vpop.f32.mrb[0].mxu0
  %2900 = vmatprep.mubr.bf16.mxu0 %v1582
  %2901 = vmatmul.mubr.bf16.gmra.mrb[0].mxu0 %v1581
  %v2902 = vpop.f32.mrb[0].mxu0
  %v2903 = vadd.f32 %v2614, %v2902
  %v2904 = vpop.f32.mrb[0].mxu0
  %v2905 = vpop.f32.mrb[0].mxu0
  %v2906 = vadd.f32 %v2617, %v2905
  %v2907 = vpop.f32.mrb[0].mxu0
  %2908 = vmatprep.mubr.bf16.mxu0 %v1591
  %2909 = vmatmul.mubr.bf16.gmra.mrb[0].mxu0 %v1590
  %v2910 = vpop.f32.mrb[0].mxu0
  %v2911 = vadd.f32 %v2622, %v2910
  %v2912 = vpop.f32.mrb[0].mxu0
  %v2913 = vpop.f32.mrb[0].mxu0
  %v2914 = vadd.f32 %v2625, %v2913
  %v2915 = vpop.f32.mrb[0].mxu0
  %2916 = vmatprep.mubr.bf16.mxu0 %v1600
  %2917 = vmatmul.mubr.bf16.gmra.mrb[0].mxu0 %v1599
  %v2918 = vpop.f32.mrb[0].mxu0
  %v2919 = vadd.f32 %v2630, %v2918
  %v2920 = vpop.f32.mrb[0].mxu0
  %v2921 = vpop.f32.mrb[0].mxu0
  %v2922 = vadd.f32 %v2633, %v2921
  %v2923 = vpop.f32.mrb[0].mxu0
  %2924 = vmatprep.mubr.bf16.mxu0 %v1609
  %2925 = vmatmul.mubr.bf16.gmra.mrb[0].mxu0 %v1608
  %v2926 = vpop.f32.mrb[0].mxu0
  %v2927 = vadd.f32 %v2638, %v2926
  %v2928 = vpop.f32.mrb[0].mxu0
  %v2929 = vpop.f32.mrb[0].mxu0
  %v2930 = vadd.f32 %v2641, %v2929
  %v2931 = vpop.f32.mrb[0].mxu0
  %2932 = vmatprep.mubr.bf16.mxu0 %v1618
  %2933 = vmatmul.mubr.bf16.gmra.mrb[0].mxu0 %v1617
  %v2934 = vpop.f32.mrb[0].mxu0
  %v2935 = vadd.f32 %v2646, %v2934
  %v2936 = vpop.f32.mrb[0].mxu0
  %v2937 = vpop.f32.mrb[0].mxu0
  %v2938 = vadd.f32 %v2649, %v2937
  %v2939 = vpop.f32.mrb[0].mxu0
  %2940 = vmatprep.mubr.bf16.mxu0 %v1627
  %2941 = vmatmul.mubr.bf16.gmra.mrb[0].mxu0 %v1626
  %v2942 = vpop.f32.mrb[0].mxu0
  %v2943 = vadd.f32 %v2654, %v2942
  %v2944 = vpop.f32.mrb[0].mxu0
  %v2945 = vpop.f32.mrb[0].mxu0
  %v2946 = vadd.f32 %v2657, %v2945
  %v2947 = vpop.f32.mrb[0].mxu0
  %2948 = vmatprep.mubr.bf16.mxu0 %v1636
  %2949 = vmatmul.mubr.bf16.gmra.mrb[0].mxu0 %v1635
  %v2950 = vpop.f32.mrb[0].mxu0
  %v2951 = vadd.f32 %v2662, %v2950
  %v2952 = vpop.f32.mrb[0].mxu0
  %v2953 = vpop.f32.mrb[0].mxu0
  %v2954 = vadd.f32 %v2665, %v2953
  %v2955 = vpop.f32.mrb[0].mxu0
  %2956 = vmatprep.mubr.bf16.mxu0 %v1645
  %2957 = vmatmul.mubr.bf16.gmra.mrb[0].mxu0 %v1644
  %v2958 = vpop.f32.mrb[0].mxu0
  %v2959 = vadd.f32 %v2670, %v2958
  %v2960 = vpop.f32.mrb[0].mxu0
  %v2961 = vpop.f32.mrb[0].mxu0
  %v2962 = vadd.f32 %v2673, %v2961
  %v2963 = vpop.f32.mrb[0].mxu0
  %2964 = vmatprep.mubr.bf16.mxu0 %v1654
  %2965 = vmatmul.mubr.bf16.gmra.mrb[0].mxu0 %v1653
  %v2966 = vpop.f32.mrb[0].mxu0
  %v2967 = vadd.f32 %v2678, %v2966
  %v2968 = vpop.f32.mrb[0].mxu0
  %v2969 = vpop.f32.mrb[0].mxu0
  %v2970 = vadd.f32 %v2681, %v2969
  %v2971 = vpop.f32.mrb[0].mxu0
  %2972 = vmatprep.mubr.bf16.mxu0 %v1663
  %2973 = vmatmul.mubr.bf16.gmra.mrb[0].mxu0 %v1662
  %v2974 = vpop.f32.mrb[0].mxu0
  %v2975 = vadd.f32 %v2686, %v2974
  %v2976 = vpop.f32.mrb[0].mxu0
  %v2977 = vpop.f32.mrb[0].mxu0
  %v2978 = vadd.f32 %v2689, %v2977
  %v2979 = vpop.f32.mrb[0].mxu0
  %2980 = vmatprep.mubr.bf16.mxu0 %v1672
  %2981 = vmatmul.mubr.bf16.gmra.mrb[0].mxu0 %v1671
  %v2982 = vpop.f32.mrb[0].mxu0
  %v2983 = vadd.f32 %v2694, %v2982
  %v2984 = vpop.f32.mrb[0].mxu0
  %v2985 = vpop.f32.mrb[0].mxu0
  %v2986 = vadd.f32 %v2697, %v2985
  %v2987 = vpop.f32.mrb[0].mxu0
  %2988 = vmatprep.mubr.bf16.mxu0 %v1681
  %2989 = vmatmul.mubr.bf16.gmra.mrb[0].mxu0 %v1680
  %v2990 = vpop.f32.mrb[0].mxu0
  %v2991 = vadd.f32 %v2702, %v2990
  %v2992 = vpop.f32.mrb[0].mxu0
  %v2993 = vpop.f32.mrb[0].mxu0
  %v2994 = vadd.f32 %v2705, %v2993
  %v2995 = vpop.f32.mrb[0].mxu0
  %2996 = vmatprep.mubr.bf16.mxu0 %v1690
  %2997 = vmatmul.mubr.bf16.gmra.mrb[0].mxu0 %v1689
  %v2998 = vpop.f32.mrb[0].mxu0
  %v2999 = vadd.f32 %v2710, %v2998
  %v3000 = vpop.f32.mrb[0].mxu0
  %v3001 = vpop.f32.mrb[0].mxu0
  %v3002 = vadd.f32 %v2713, %v3001
  %v3003 = vpop.f32.mrb[0].mxu0
  %3004 = vmatprep.mubr.bf16.mxu0 %v1699
  %3005 = vmatmul.mubr.bf16.gmra.mrb[0].mxu0 %v1698
  %v3006 = vpop.f32.mrb[0].mxu0
  %v3007 = vadd.f32 %v2718, %v3006
  %v3008 = vpop.f32.mrb[0].mxu0
  %v3009 = vpop.f32.mrb[0].mxu0
  %v3010 = vadd.f32 %v2721, %v3009
  %v3011 = vpop.f32.mrb[0].mxu0
  %3012 = vmatprep.mubr.bf16.mxu0 %v1708
  %3013 = vmatmul.mubr.bf16.gmra.mrb[0].mxu0 %v1707
  %v3014 = vpop.f32.mrb[0].mxu0
  %v3015 = vadd.f32 %v2726, %v3014
  %v3016 = vpop.f32.mrb[0].mxu0
  %v3017 = vpop.f32.mrb[0].mxu0
  %v3018 = vadd.f32 %v2729, %v3017
  %v3019 = vpop.f32.mrb[0].mxu0
  %3020 = vmatprep.mubr.bf16.mxu0 %v1717
  %3021 = vmatmul.mubr.bf16.gmra.mrb[0].mxu0 %v1716
  %v3022 = vpop.f32.mrb[0].mxu0
  %v3023 = vadd.f32 %v2734, %v3022
  %v3024 = vpop.f32.mrb[0].mxu0
  %v3025 = vpop.f32.mrb[0].mxu0
  %v3026 = vadd.f32 %v2737, %v3025
  %v3027 = vpop.f32.mrb[0].mxu0
  %3028 = vmatprep.mubr.bf16.mxu0 %v1726
  %3029 = vmatmul.mubr.bf16.gmra.mrb[0].mxu0 %v1725
  %v3030 = vpop.f32.mrb[0].mxu0
  %v3031 = vadd.f32 %v2742, %v3030
  %v3032 = vpop.f32.mrb[0].mxu0
  %v3033 = vpop.f32.mrb[0].mxu0
  %v3034 = vadd.f32 %v2745, %v3033
  %v3035 = vpop.f32.mrb[0].mxu0
  %3036 = vmatprep.mubr.bf16.mxu0 %v1735
  %3037 = vmatmul.mubr.bf16.gmra.mrb[0].mxu0 %v1734
  %v3038 = vpop.f32.mrb[0].mxu0
  %v3039 = vadd.f32 %v2750, %v3038
  %v3040 = vpop.f32.mrb[0].mxu0
  %v3041 = vpop.f32.mrb[0].mxu0
  %v3042 = vadd.f32 %v2753, %v3041
  %v3043 = vpop.f32.mrb[0].mxu0
  %3044 = vmatprep.mubr.bf16.mxu0 %v1744
  %3045 = vmatmul.mubr.bf16.gmra.mrb[0].mxu0 %v1743
  %v3046 = vpop.f32.mrb[0].mxu0
  %v3047 = vadd.f32 %v2758, %v3046
  %v3048 = vpop.f32.mrb[0].mxu0
  %v3049 = vpop.f32.mrb[0].mxu0
  %v3050 = vadd.f32 %v2761, %v3049
  %v3051 = vpop.f32.mrb[0].mxu0
  %3052 = vmatprep.mubr.bf16.mxu0 %v1753
  %3053 = vmatmul.mubr.bf16.gmra.mrb[0].mxu0 %v1752
  %v3054 = vpop.f32.mrb[0].mxu0
  %v3055 = vadd.f32 %v2766, %v3054
  %v3056 = vpop.f32.mrb[0].mxu0
  %v3057 = vpop.f32.mrb[0].mxu0
  %v3058 = vadd.f32 %v2769, %v3057
  %v3059 = vpop.f32.mrb[0].mxu0
  %3060 = vmatprep.mubr.bf16.mxu0 %v1762
  %3061 = vmatmul.mubr.bf16.gmra.mrb[0].mxu0 %v1761
  %v3062 = vpop.f32.mrb[0].mxu0
  %v3063 = vadd.f32 %v2774, %v3062
  %v3064 = vpop.f32.mrb[0].mxu0
  %v3065 = vpop.f32.mrb[0].mxu0
  %v3066 = vadd.f32 %v2777, %v3065
  %v3067 = vpop.f32.mrb[0].mxu0
  %3068 = vmatprep.mubr.bf16.mxu0 %v1771
  %3069 = vmatmul.mubr.bf16.gmra.mrb[0].mxu0 %v1770
  %v3070 = vpop.f32.mrb[0].mxu0
  %v3071 = vadd.f32 %v2782, %v3070
  %v3072 = vpop.f32.mrb[0].mxu0
  %v3073 = vpop.f32.mrb[0].mxu0
  %v3074 = vadd.f32 %v2785, %v3073
  %v3075 = vpop.f32.mrb[0].mxu0
  %3076 = vmatprep.mubr.bf16.mxu0 %v1780
  %3077 = vmatmul.mubr.bf16.gmra.mrb[0].mxu0 %v1779
  %v3078 = vpop.f32.mrb[0].mxu0
  %v3079 = vadd.f32 %v2790, %v3078
  %v3080 = vpop.f32.mrb[0].mxu0
  %v3081 = vpop.f32.mrb[0].mxu0
  %v3082 = vadd.f32 %v2793, %v3081
  %v3083 = vpop.f32.mrb[0].mxu0
  %3084 = vmatprep.mubr.bf16.mxu0 %v1789
  %3085 = vmatmul.mubr.bf16.gmra.mrb[0].mxu0 %v1788
  %v3086 = vpop.f32.mrb[0].mxu0
  %v3087 = vadd.f32 %v2798, %v3086
  %v3088 = vpop.f32.mrb[0].mxu0
  %v3089 = vpop.f32.mrb[0].mxu0
  %v3090 = vadd.f32 %v2801, %v3089
  %v3091 = vpop.f32.mrb[0].mxu0
  %3092 = vdwg.mxu0
  %3093 = vmatprep.subr.bf16.mxu0 0
  %3094 = vmatpush1.bf16.msra.mxu0 %v2403
  %3095 = vmatprep.subr.bf16.mxu0 0
  %3096 = vmatpush1.bf16.msra.mxu0 %v2404
  %3097 = vmatprep.subr.bf16.mxu0 0
  %3098 = vmatpush1.bf16.msra.mxu0 %v2405
  %3099 = vmatprep.subr.bf16.mxu0 0
  %3100 = vmatpush1.bf16.msra.mxu0 %v2406
  %3101 = vmatprep.subr.bf16.mxu0 0
  %3102 = vmatpush1.bf16.msra.mxu0 %v2407
  %3103 = vmatprep.subr.bf16.mxu0 0
  %3104 = vmatpush1.bf16.msra.mxu0 %v2408
  %3105 = vmatprep.subr.bf16.mxu0 0
  %3106 = vmatpush1.bf16.msra.mxu0 %v2409
  %3107 = vmatprep.subr.bf16.mxu0 0
  %3108 = vmatpush1.bf16.msra.mxu0 %v2410
  %3109 = vmatprep.subr.bf16.mxu0 0
  %3110 = vmatpush1.bf16.msra.mxu0 %v2411
  %3111 = vmatprep.subr.bf16.mxu0 0
  %3112 = vmatpush1.bf16.msra.mxu0 %v2412
  %3113 = vmatprep.subr.bf16.mxu0 0
  %3114 = vmatpush1.bf16.msra.mxu0 %v2413
  %3115 = vmatprep.subr.bf16.mxu0 0
  %3116 = vmatpush1.bf16.msra.mxu0 %v2414
  %3117 = vmatprep.subr.bf16.mxu0 0
  %3118 = vmatpush1.bf16.msra.mxu0 %v2415
  %3119 = vmatprep.subr.bf16.mxu0 0
  %3120 = vmatpush1.bf16.msra.mxu0 %v2416
  %3121 = vmatprep.subr.bf16.mxu0 0
  %3122 = vmatpush1.bf16.msra.mxu0 %v2417
  %3123 = vmatprep.subr.bf16.mxu0 0
  %3124 = vmatpush1.bf16.msra.mxu0 %v2418
  %3125 = vmatprep.mubr.bf16.mxu0 %v1512
  %3126 = vmatmul.mubr.bf16.gmra.mrb[0].mxu0 %v1511
  %v3127 = vpop.f32.mrb[0].mxu0
  %v3128 = vadd.f32 %v2839, %v3127
  %v3129 = vpop.f32.mrb[0].mxu0
  %v3130 = vpop.f32.mrb[0].mxu0
  %v3131 = vadd.f32 %v2842, %v3130
  %v3132 = vpop.f32.mrb[0].mxu0
  %3133 = vmatprep.mubr.bf16.mxu0 %v1521
  %3134 = vmatmul.mubr.bf16.gmra.mrb[0].mxu0 %v1520
  %v3135 = vpop.f32.mrb[0].mxu0
  %v3136 = vadd.f32 %v2847, %v3135
  %v3137 = vpop.f32.mrb[0].mxu0
  %v3138 = vpop.f32.mrb[0].mxu0
  %v3139 = vadd.f32 %v2850, %v3138
  %v3140 = vpop.f32.mrb[0].mxu0
  %3141 = vmatprep.mubr.bf16.mxu0 %v1530
  %3142 = vmatmul.mubr.bf16.gmra.mrb[0].mxu0 %v1529
  %v3143 = vpop.f32.mrb[0].mxu0
  %v3144 = vadd.f32 %v2855, %v3143
  %v3145 = vpop.f32.mrb[0].mxu0
  %v3146 = vpop.f32.mrb[0].mxu0
  %v3147 = vadd.f32 %v2858, %v3146
  %v3148 = vpop.f32.mrb[0].mxu0
  %3149 = vmatprep.mubr.bf16.mxu0 %v1539
  %3150 = vmatmul.mubr.bf16.gmra.mrb[0].mxu0 %v1538
  %v3151 = vpop.f32.mrb[0].mxu0
  %v3152 = vadd.f32 %v2863, %v3151
  %v3153 = vpop.f32.mrb[0].mxu0
  %v3154 = vpop.f32.mrb[0].mxu0
  %v3155 = vadd.f32 %v2866, %v3154
  %v3156 = vpop.f32.mrb[0].mxu0
  %3157 = vmatprep.mubr.bf16.mxu0 %v1548
  %3158 = vmatmul.mubr.bf16.gmra.mrb[0].mxu0 %v1547
  %v3159 = vpop.f32.mrb[0].mxu0
  %v3160 = vadd.f32 %v2871, %v3159
  %v3161 = vpop.f32.mrb[0].mxu0
  %v3162 = vpop.f32.mrb[0].mxu0
  %v3163 = vadd.f32 %v2874, %v3162
  %v3164 = vpop.f32.mrb[0].mxu0
  %3165 = vmatprep.mubr.bf16.mxu0 %v1557
  %3166 = vmatmul.mubr.bf16.gmra.mrb[0].mxu0 %v1556
  %v3167 = vpop.f32.mrb[0].mxu0
  %v3168 = vadd.f32 %v2879, %v3167
  %v3169 = vpop.f32.mrb[0].mxu0
  %v3170 = vpop.f32.mrb[0].mxu0
  %v3171 = vadd.f32 %v2882, %v3170
  %v3172 = vpop.f32.mrb[0].mxu0
  %3173 = vmatprep.mubr.bf16.mxu0 %v1566
  %3174 = vmatmul.mubr.bf16.gmra.mrb[0].mxu0 %v1565
  %v3175 = vpop.f32.mrb[0].mxu0
  %v3176 = vadd.f32 %v2887, %v3175
  %v3177 = vpop.f32.mrb[0].mxu0
  %v3178 = vpop.f32.mrb[0].mxu0
  %v3179 = vadd.f32 %v2890, %v3178
  %v3180 = vpop.f32.mrb[0].mxu0
  %3181 = vmatprep.mubr.bf16.mxu0 %v1575
  %3182 = vmatmul.mubr.bf16.gmra.mrb[0].mxu0 %v1574
  %v3183 = vpop.f32.mrb[0].mxu0
  %v3184 = vadd.f32 %v2895, %v3183
  %v3185 = vpop.f32.mrb[0].mxu0
  %v3186 = vpop.f32.mrb[0].mxu0
  %v3187 = vadd.f32 %v2898, %v3186
  %v3188 = vpop.f32.mrb[0].mxu0
  %3189 = vmatprep.mubr.bf16.mxu0 %v1584
  %3190 = vmatmul.mubr.bf16.gmra.mrb[0].mxu0 %v1583
  %v3191 = vpop.f32.mrb[0].mxu0
  %v3192 = vadd.f32 %v2903, %v3191
  %v3193 = vpop.f32.mrb[0].mxu0
  %v3194 = vpop.f32.mrb[0].mxu0
  %v3195 = vadd.f32 %v2906, %v3194
  %v3196 = vpop.f32.mrb[0].mxu0
  %3197 = vmatprep.mubr.bf16.mxu0 %v1593
  %3198 = vmatmul.mubr.bf16.gmra.mrb[0].mxu0 %v1592
  %v3199 = vpop.f32.mrb[0].mxu0
  %v3200 = vadd.f32 %v2911, %v3199
  %v3201 = vpop.f32.mrb[0].mxu0
  %v3202 = vpop.f32.mrb[0].mxu0
  %v3203 = vadd.f32 %v2914, %v3202
  %v3204 = vpop.f32.mrb[0].mxu0
  %3205 = vmatprep.mubr.bf16.mxu0 %v1602
  %3206 = vmatmul.mubr.bf16.gmra.mrb[0].mxu0 %v1601
  %v3207 = vpop.f32.mrb[0].mxu0
  %v3208 = vadd.f32 %v2919, %v3207
  %v3209 = vpop.f32.mrb[0].mxu0
  %v3210 = vpop.f32.mrb[0].mxu0
  %v3211 = vadd.f32 %v2922, %v3210
  %v3212 = vpop.f32.mrb[0].mxu0
  %3213 = vmatprep.mubr.bf16.mxu0 %v1611
  %3214 = vmatmul.mubr.bf16.gmra.mrb[0].mxu0 %v1610
  %v3215 = vpop.f32.mrb[0].mxu0
  %v3216 = vadd.f32 %v2927, %v3215
  %v3217 = vpop.f32.mrb[0].mxu0
  %v3218 = vpop.f32.mrb[0].mxu0
  %v3219 = vadd.f32 %v2930, %v3218
  %v3220 = vpop.f32.mrb[0].mxu0
  %3221 = vmatprep.mubr.bf16.mxu0 %v1620
  %3222 = vmatmul.mubr.bf16.gmra.mrb[0].mxu0 %v1619
  %v3223 = vpop.f32.mrb[0].mxu0
  %v3224 = vadd.f32 %v2935, %v3223
  %v3225 = vpop.f32.mrb[0].mxu0
  %v3226 = vpop.f32.mrb[0].mxu0
  %v3227 = vadd.f32 %v2938, %v3226
  %v3228 = vpop.f32.mrb[0].mxu0
  %3229 = vmatprep.mubr.bf16.mxu0 %v1629
  %3230 = vmatmul.mubr.bf16.gmra.mrb[0].mxu0 %v1628
  %v3231 = vpop.f32.mrb[0].mxu0
  %v3232 = vadd.f32 %v2943, %v3231
  %v3233 = vpop.f32.mrb[0].mxu0
  %v3234 = vpop.f32.mrb[0].mxu0
  %v3235 = vadd.f32 %v2946, %v3234
  %v3236 = vpop.f32.mrb[0].mxu0
  %3237 = vmatprep.mubr.bf16.mxu0 %v1638
  %3238 = vmatmul.mubr.bf16.gmra.mrb[0].mxu0 %v1637
  %v3239 = vpop.f32.mrb[0].mxu0
  %v3240 = vadd.f32 %v2951, %v3239
  %v3241 = vpop.f32.mrb[0].mxu0
  %v3242 = vpop.f32.mrb[0].mxu0
  %v3243 = vadd.f32 %v2954, %v3242
  %v3244 = vpop.f32.mrb[0].mxu0
  %3245 = vmatprep.mubr.bf16.mxu0 %v1647
  %3246 = vmatmul.mubr.bf16.gmra.mrb[0].mxu0 %v1646
  %v3247 = vpop.f32.mrb[0].mxu0
  %v3248 = vadd.f32 %v2959, %v3247
  %v3249 = vpop.f32.mrb[0].mxu0
  %v3250 = vpop.f32.mrb[0].mxu0
  %v3251 = vadd.f32 %v2962, %v3250
  %v3252 = vpop.f32.mrb[0].mxu0
  %3253 = vmatprep.mubr.bf16.mxu0 %v1656
  %3254 = vmatmul.mubr.bf16.gmra.mrb[0].mxu0 %v1655
  %v3255 = vpop.f32.mrb[0].mxu0
  %v3256 = vadd.f32 %v2967, %v3255
  %v3257 = vpop.f32.mrb[0].mxu0
  %v3258 = vpop.f32.mrb[0].mxu0
  %v3259 = vadd.f32 %v2970, %v3258
  %v3260 = vpop.f32.mrb[0].mxu0
  %3261 = vmatprep.mubr.bf16.mxu0 %v1665
  %3262 = vmatmul.mubr.bf16.gmra.mrb[0].mxu0 %v1664
  %v3263 = vpop.f32.mrb[0].mxu0
  %v3264 = vadd.f32 %v2975, %v3263
  %v3265 = vpop.f32.mrb[0].mxu0
  %v3266 = vpop.f32.mrb[0].mxu0
  %v3267 = vadd.f32 %v2978, %v3266
  %v3268 = vpop.f32.mrb[0].mxu0
  %3269 = vmatprep.mubr.bf16.mxu0 %v1674
  %3270 = vmatmul.mubr.bf16.gmra.mrb[0].mxu0 %v1673
  %v3271 = vpop.f32.mrb[0].mxu0
  %v3272 = vadd.f32 %v2983, %v3271
  %v3273 = vpop.f32.mrb[0].mxu0
  %v3274 = vpop.f32.mrb[0].mxu0
  %v3275 = vadd.f32 %v2986, %v3274
  %v3276 = vpop.f32.mrb[0].mxu0
  %3277 = vmatprep.mubr.bf16.mxu0 %v1683
  %3278 = vmatmul.mubr.bf16.gmra.mrb[0].mxu0 %v1682
  %v3279 = vpop.f32.mrb[0].mxu0
  %v3280 = vadd.f32 %v2991, %v3279
  %v3281 = vpop.f32.mrb[0].mxu0
  %v3282 = vpop.f32.mrb[0].mxu0
  %v3283 = vadd.f32 %v2994, %v3282
  %v3284 = vpop.f32.mrb[0].mxu0
  %3285 = vmatprep.mubr.bf16.mxu0 %v1692
  %3286 = vmatmul.mubr.bf16.gmra.mrb[0].mxu0 %v1691
  %v3287 = vpop.f32.mrb[0].mxu0
  %v3288 = vadd.f32 %v2999, %v3287
  %v3289 = vpop.f32.mrb[0].mxu0
  %v3290 = vpop.f32.mrb[0].mxu0
  %v3291 = vadd.f32 %v3002, %v3290
  %v3292 = vpop.f32.mrb[0].mxu0
  %3293 = vmatprep.mubr.bf16.mxu0 %v1701
  %3294 = vmatmul.mubr.bf16.gmra.mrb[0].mxu0 %v1700
  %v3295 = vpop.f32.mrb[0].mxu0
  %v3296 = vadd.f32 %v3007, %v3295
  %v3297 = vpop.f32.mrb[0].mxu0
  %v3298 = vpop.f32.mrb[0].mxu0
  %v3299 = vadd.f32 %v3010, %v3298
  %v3300 = vpop.f32.mrb[0].mxu0
  %3301 = vmatprep.mubr.bf16.mxu0 %v1710
  %3302 = vmatmul.mubr.bf16.gmra.mrb[0].mxu0 %v1709
  %v3303 = vpop.f32.mrb[0].mxu0
  %v3304 = vadd.f32 %v3015, %v3303
  %v3305 = vpop.f32.mrb[0].mxu0
  %v3306 = vpop.f32.mrb[0].mxu0
  %v3307 = vadd.f32 %v3018, %v3306
  %v3308 = vpop.f32.mrb[0].mxu0
  %3309 = vmatprep.mubr.bf16.mxu0 %v1719
  %3310 = vmatmul.mubr.bf16.gmra.mrb[0].mxu0 %v1718
  %v3311 = vpop.f32.mrb[0].mxu0
  %v3312 = vadd.f32 %v3023, %v3311
  %v3313 = vpop.f32.mrb[0].mxu0
  %v3314 = vpop.f32.mrb[0].mxu0
  %v3315 = vadd.f32 %v3026, %v3314
  %v3316 = vpop.f32.mrb[0].mxu0
  %3317 = vmatprep.mubr.bf16.mxu0 %v1728
  %3318 = vmatmul.mubr.bf16.gmra.mrb[0].mxu0 %v1727
  %v3319 = vpop.f32.mrb[0].mxu0
  %v3320 = vadd.f32 %v3031, %v3319
  %v3321 = vpop.f32.mrb[0].mxu0
  %v3322 = vpop.f32.mrb[0].mxu0
  %v3323 = vadd.f32 %v3034, %v3322
  %v3324 = vpop.f32.mrb[0].mxu0
  %3325 = vmatprep.mubr.bf16.mxu0 %v1737
  %3326 = vmatmul.mubr.bf16.gmra.mrb[0].mxu0 %v1736
  %v3327 = vpop.f32.mrb[0].mxu0
  %v3328 = vadd.f32 %v3039, %v3327
  %v3329 = vpop.f32.mrb[0].mxu0
  %v3330 = vpop.f32.mrb[0].mxu0
  %v3331 = vadd.f32 %v3042, %v3330
  %v3332 = vpop.f32.mrb[0].mxu0
  %3333 = vmatprep.mubr.bf16.mxu0 %v1746
  %3334 = vmatmul.mubr.bf16.gmra.mrb[0].mxu0 %v1745
  %v3335 = vpop.f32.mrb[0].mxu0
  %v3336 = vadd.f32 %v3047, %v3335
  %v3337 = vpop.f32.mrb[0].mxu0
  %v3338 = vpop.f32.mrb[0].mxu0
  %v3339 = vadd.f32 %v3050, %v3338
  %v3340 = vpop.f32.mrb[0].mxu0
  %3341 = vmatprep.mubr.bf16.mxu0 %v1755
  %3342 = vmatmul.mubr.bf16.gmra.mrb[0].mxu0 %v1754
  %v3343 = vpop.f32.mrb[0].mxu0
  %v3344 = vadd.f32 %v3055, %v3343
  %v3345 = vpop.f32.mrb[0].mxu0
  %v3346 = vpop.f32.mrb[0].mxu0
  %v3347 = vadd.f32 %v3058, %v3346
  %v3348 = vpop.f32.mrb[0].mxu0
  %3349 = vmatprep.mubr.bf16.mxu0 %v1764
  %3350 = vmatmul.mubr.bf16.gmra.mrb[0].mxu0 %v1763
  %v3351 = vpop.f32.mrb[0].mxu0
  %v3352 = vadd.f32 %v3063, %v3351
  %v3353 = vpop.f32.mrb[0].mxu0
  %v3354 = vpop.f32.mrb[0].mxu0
  %v3355 = vadd.f32 %v3066, %v3354
  %v3356 = vpop.f32.mrb[0].mxu0
  %3357 = vmatprep.mubr.bf16.mxu0 %v1773
  %3358 = vmatmul.mubr.bf16.gmra.mrb[0].mxu0 %v1772
  %v3359 = vpop.f32.mrb[0].mxu0
  %v3360 = vadd.f32 %v3071, %v3359
  %v3361 = vpop.f32.mrb[0].mxu0
  %v3362 = vpop.f32.mrb[0].mxu0
  %v3363 = vadd.f32 %v3074, %v3362
  %v3364 = vpop.f32.mrb[0].mxu0
  %3365 = vmatprep.mubr.bf16.mxu0 %v1782
  %3366 = vmatmul.mubr.bf16.gmra.mrb[0].mxu0 %v1781
  %v3367 = vpop.f32.mrb[0].mxu0
  %v3368 = vadd.f32 %v3079, %v3367
  %v3369 = vpop.f32.mrb[0].mxu0
  %v3370 = vpop.f32.mrb[0].mxu0
  %v3371 = vadd.f32 %v3082, %v3370
  %v3372 = vpop.f32.mrb[0].mxu0
  %3373 = vmatprep.mubr.bf16.mxu0 %v1791
  %3374 = vmatmul.mubr.bf16.gmra.mrb[0].mxu0 %v1790
  %v3375 = vpop.f32.mrb[0].mxu0
  %v3376 = vadd.f32 %v3087, %v3375
  %v3377 = vpop.f32.mrb[0].mxu0
  %v3378 = vpop.f32.mrb[0].mxu0
  %v3379 = vadd.f32 %v3090, %v3378
  %v3380 = vpop.f32.mrb[0].mxu0
  %3381 = vdwg.mxu0
  %3382 = vmatprep.subr.bf16.mxu0 0
  %3383 = vmatpush1.bf16.msra.mxu0 %v2419
  %3384 = vmatprep.subr.bf16.mxu0 0
  %3385 = vmatpush1.bf16.msra.mxu0 %v2420
  %3386 = vmatprep.subr.bf16.mxu0 0
  %3387 = vmatpush1.bf16.msra.mxu0 %v2421
  %3388 = vmatprep.subr.bf16.mxu0 0
  %3389 = vmatpush1.bf16.msra.mxu0 %v2422
  %3390 = vmatprep.subr.bf16.mxu0 0
  %3391 = vmatpush1.bf16.msra.mxu0 %v2423
  %3392 = vmatprep.subr.bf16.mxu0 0
  %3393 = vmatpush1.bf16.msra.mxu0 %v2424
  %3394 = vmatprep.subr.bf16.mxu0 0
  %3395 = vmatpush1.bf16.msra.mxu0 %v2425
  %3396 = vmatprep.subr.bf16.mxu0 0
  %3397 = vmatpush1.bf16.msra.mxu0 %v2426
  %3398 = vmatprep.subr.bf16.mxu0 0
  %3399 = vmatpush1.bf16.msra.mxu0 %v2427
  %3400 = vmatprep.subr.bf16.mxu0 0
  %3401 = vmatpush1.bf16.msra.mxu0 %v2428
  %3402 = vmatprep.subr.bf16.mxu0 0
  %3403 = vmatpush1.bf16.msra.mxu0 %v2429
  %3404 = vmatprep.subr.bf16.mxu0 0
  %3405 = vmatpush1.bf16.msra.mxu0 %v2430
  %3406 = vmatprep.subr.bf16.mxu0 0
  %3407 = vmatpush1.bf16.msra.mxu0 %v2431
  %3408 = vmatprep.subr.bf16.mxu0 0
  %3409 = vmatpush1.bf16.msra.mxu0 %v2432
  %3410 = vmatprep.subr.bf16.mxu0 0
  %3411 = vmatpush1.bf16.msra.mxu0 %v2433
  %3412 = vmatprep.subr.bf16.mxu0 0
  %3413 = vmatpush1.bf16.msra.mxu0 %v2434
  %3414 = vmatprep.mubr.bf16.mxu0 %v1514
  %3415 = vmatmul.mubr.bf16.gmra.mrb[0].mxu0 %v1513
  %v3416 = vpop.f32.mrb[0].mxu0
  %v3417 = vadd.f32 %v3128, %v3416
  %v3418 = vpop.f32.mrb[0].mxu0
  %v3419 = vpop.f32.mrb[0].mxu0
  %v3420 = vadd.f32 %v3131, %v3419
  %v3421 = vpop.f32.mrb[0].mxu0
  %3422 = vmatprep.mubr.bf16.mxu0 %v1523
  %3423 = vmatmul.mubr.bf16.gmra.mrb[0].mxu0 %v1522
  %v3424 = vpop.f32.mrb[0].mxu0
  %v3425 = vadd.f32 %v3136, %v3424
  %v3426 = vpop.f32.mrb[0].mxu0
  %v3427 = vpop.f32.mrb[0].mxu0
  %v3428 = vadd.f32 %v3139, %v3427
  %v3429 = vpop.f32.mrb[0].mxu0
  %3430 = vmatprep.mubr.bf16.mxu0 %v1532
  %3431 = vmatmul.mubr.bf16.gmra.mrb[0].mxu0 %v1531
  %v3432 = vpop.f32.mrb[0].mxu0
  %v3433 = vadd.f32 %v3144, %v3432
  %v3434 = vpop.f32.mrb[0].mxu0
  %v3435 = vpop.f32.mrb[0].mxu0
  %v3436 = vadd.f32 %v3147, %v3435
  %v3437 = vpop.f32.mrb[0].mxu0
  %3438 = vmatprep.mubr.bf16.mxu0 %v1541
  %3439 = vmatmul.mubr.bf16.gmra.mrb[0].mxu0 %v1540
  %v3440 = vpop.f32.mrb[0].mxu0
  %v3441 = vadd.f32 %v3152, %v3440
  %v3442 = vpop.f32.mrb[0].mxu0
  %v3443 = vpop.f32.mrb[0].mxu0
  %v3444 = vadd.f32 %v3155, %v3443
  %v3445 = vpop.f32.mrb[0].mxu0
  %3446 = vmatprep.mubr.bf16.mxu0 %v1550
  %3447 = vmatmul.mubr.bf16.gmra.mrb[0].mxu0 %v1549
  %v3448 = vpop.f32.mrb[0].mxu0
  %v3449 = vadd.f32 %v3160, %v3448
  %v3450 = vpop.f32.mrb[0].mxu0
  %v3451 = vpop.f32.mrb[0].mxu0
  %v3452 = vadd.f32 %v3163, %v3451
  %v3453 = vpop.f32.mrb[0].mxu0
  %3454 = vmatprep.mubr.bf16.mxu0 %v1559
  %3455 = vmatmul.mubr.bf16.gmra.mrb[0].mxu0 %v1558
  %v3456 = vpop.f32.mrb[0].mxu0
  %v3457 = vadd.f32 %v3168, %v3456
  %v3458 = vpop.f32.mrb[0].mxu0
  %v3459 = vpop.f32.mrb[0].mxu0
  %v3460 = vadd.f32 %v3171, %v3459
  %v3461 = vpop.f32.mrb[0].mxu0
  %3462 = vmatprep.mubr.bf16.mxu0 %v1568
  %3463 = vmatmul.mubr.bf16.gmra.mrb[0].mxu0 %v1567
  %v3464 = vpop.f32.mrb[0].mxu0
  %v3465 = vadd.f32 %v3176, %v3464
  %v3466 = vpop.f32.mrb[0].mxu0
  %v3467 = vpop.f32.mrb[0].mxu0
  %v3468 = vadd.f32 %v3179, %v3467
  %v3469 = vpop.f32.mrb[0].mxu0
  %3470 = vmatprep.mubr.bf16.mxu0 %v1577
  %3471 = vmatmul.mubr.bf16.gmra.mrb[0].mxu0 %v1576
  %v3472 = vpop.f32.mrb[0].mxu0
  %v3473 = vadd.f32 %v3184, %v3472
  %v3474 = vpop.f32.mrb[0].mxu0
  %v3475 = vpop.f32.mrb[0].mxu0
  %v3476 = vadd.f32 %v3187, %v3475
  %v3477 = vpop.f32.mrb[0].mxu0
  %3478 = vmatprep.mubr.bf16.mxu0 %v1586
  %3479 = vmatmul.mubr.bf16.gmra.mrb[0].mxu0 %v1585
  %v3480 = vpop.f32.mrb[0].mxu0
  %v3481 = vadd.f32 %v3192, %v3480
  %v3482 = vpop.f32.mrb[0].mxu0
  %v3483 = vpop.f32.mrb[0].mxu0
  %v3484 = vadd.f32 %v3195, %v3483
  %v3485 = vpop.f32.mrb[0].mxu0
  %3486 = vmatprep.mubr.bf16.mxu0 %v1595
  %3487 = vmatmul.mubr.bf16.gmra.mrb[0].mxu0 %v1594
  %v3488 = vpop.f32.mrb[0].mxu0
  %v3489 = vadd.f32 %v3200, %v3488
  %v3490 = vpop.f32.mrb[0].mxu0
  %v3491 = vpop.f32.mrb[0].mxu0
  %v3492 = vadd.f32 %v3203, %v3491
  %v3493 = vpop.f32.mrb[0].mxu0
  %3494 = vmatprep.mubr.bf16.mxu0 %v1604
  %3495 = vmatmul.mubr.bf16.gmra.mrb[0].mxu0 %v1603
  %v3496 = vpop.f32.mrb[0].mxu0
  %v3497 = vadd.f32 %v3208, %v3496
  %v3498 = vpop.f32.mrb[0].mxu0
  %v3499 = vpop.f32.mrb[0].mxu0
  %v3500 = vadd.f32 %v3211, %v3499
  %v3501 = vpop.f32.mrb[0].mxu0
  %3502 = vmatprep.mubr.bf16.mxu0 %v1613
  %3503 = vmatmul.mubr.bf16.gmra.mrb[0].mxu0 %v1612
  %v3504 = vpop.f32.mrb[0].mxu0
  %v3505 = vadd.f32 %v3216, %v3504
  %v3506 = vpop.f32.mrb[0].mxu0
  %v3507 = vpop.f32.mrb[0].mxu0
  %v3508 = vadd.f32 %v3219, %v3507
  %v3509 = vpop.f32.mrb[0].mxu0
  %3510 = vmatprep.mubr.bf16.mxu0 %v1622
  %3511 = vmatmul.mubr.bf16.gmra.mrb[0].mxu0 %v1621
  %v3512 = vpop.f32.mrb[0].mxu0
  %v3513 = vadd.f32 %v3224, %v3512
  %v3514 = vpop.f32.mrb[0].mxu0
  %v3515 = vpop.f32.mrb[0].mxu0
  %v3516 = vadd.f32 %v3227, %v3515
  %v3517 = vpop.f32.mrb[0].mxu0
  %3518 = vmatprep.mubr.bf16.mxu0 %v1631
  %3519 = vmatmul.mubr.bf16.gmra.mrb[0].mxu0 %v1630
  %v3520 = vpop.f32.mrb[0].mxu0
  %v3521 = vadd.f32 %v3232, %v3520
  %v3522 = vpop.f32.mrb[0].mxu0
  %v3523 = vpop.f32.mrb[0].mxu0
  %v3524 = vadd.f32 %v3235, %v3523
  %v3525 = vpop.f32.mrb[0].mxu0
  %3526 = vmatprep.mubr.bf16.mxu0 %v1640
  %3527 = vmatmul.mubr.bf16.gmra.mrb[0].mxu0 %v1639
  %v3528 = vpop.f32.mrb[0].mxu0
  %v3529 = vadd.f32 %v3240, %v3528
  %v3530 = vpop.f32.mrb[0].mxu0
  %v3531 = vpop.f32.mrb[0].mxu0
  %v3532 = vadd.f32 %v3243, %v3531
  %v3533 = vpop.f32.mrb[0].mxu0
  %3534 = vmatprep.mubr.bf16.mxu0 %v1649
  %3535 = vmatmul.mubr.bf16.gmra.mrb[0].mxu0 %v1648
  %v3536 = vpop.f32.mrb[0].mxu0
  %v3537 = vadd.f32 %v3248, %v3536
  %v3538 = vpop.f32.mrb[0].mxu0
  %v3539 = vpop.f32.mrb[0].mxu0
  %v3540 = vadd.f32 %v3251, %v3539
  %v3541 = vpop.f32.mrb[0].mxu0
  %3542 = vmatprep.mubr.bf16.mxu0 %v1658
  %3543 = vmatmul.mubr.bf16.gmra.mrb[0].mxu0 %v1657
  %v3544 = vpop.f32.mrb[0].mxu0
  %v3545 = vadd.f32 %v3256, %v3544
  %v3546 = vpop.f32.mrb[0].mxu0
  %v3547 = vpop.f32.mrb[0].mxu0
  %v3548 = vadd.f32 %v3259, %v3547
  %v3549 = vpop.f32.mrb[0].mxu0
  %3550 = vmatprep.mubr.bf16.mxu0 %v1667
  %3551 = vmatmul.mubr.bf16.gmra.mrb[0].mxu0 %v1666
  %v3552 = vpop.f32.mrb[0].mxu0
  %v3553 = vadd.f32 %v3264, %v3552
  %v3554 = vpop.f32.mrb[0].mxu0
  %v3555 = vpop.f32.mrb[0].mxu0
  %v3556 = vadd.f32 %v3267, %v3555
  %v3557 = vpop.f32.mrb[0].mxu0
  %3558 = vmatprep.mubr.bf16.mxu0 %v1676
  %3559 = vmatmul.mubr.bf16.gmra.mrb[0].mxu0 %v1675
  %v3560 = vpop.f32.mrb[0].mxu0
  %v3561 = vadd.f32 %v3272, %v3560
  %v3562 = vpop.f32.mrb[0].mxu0
  %v3563 = vpop.f32.mrb[0].mxu0
  %v3564 = vadd.f32 %v3275, %v3563
  %v3565 = vpop.f32.mrb[0].mxu0
  %3566 = vmatprep.mubr.bf16.mxu0 %v1685
  %3567 = vmatmul.mubr.bf16.gmra.mrb[0].mxu0 %v1684
  %v3568 = vpop.f32.mrb[0].mxu0
  %v3569 = vadd.f32 %v3280, %v3568
  %v3570 = vpop.f32.mrb[0].mxu0
  %v3571 = vpop.f32.mrb[0].mxu0
  %v3572 = vadd.f32 %v3283, %v3571
  %v3573 = vpop.f32.mrb[0].mxu0
  %3574 = vmatprep.mubr.bf16.mxu0 %v1694
  %3575 = vmatmul.mubr.bf16.gmra.mrb[0].mxu0 %v1693
  %v3576 = vpop.f32.mrb[0].mxu0
  %v3577 = vadd.f32 %v3288, %v3576
  %v3578 = vpop.f32.mrb[0].mxu0
  %v3579 = vpop.f32.mrb[0].mxu0
  %v3580 = vadd.f32 %v3291, %v3579
  %v3581 = vpop.f32.mrb[0].mxu0
  %3582 = vmatprep.mubr.bf16.mxu0 %v1703
  %3583 = vmatmul.mubr.bf16.gmra.mrb[0].mxu0 %v1702
  %v3584 = vpop.f32.mrb[0].mxu0
  %v3585 = vadd.f32 %v3296, %v3584
  %v3586 = vpop.f32.mrb[0].mxu0
  %v3587 = vpop.f32.mrb[0].mxu0
  %v3588 = vadd.f32 %v3299, %v3587
  %v3589 = vpop.f32.mrb[0].mxu0
  %3590 = vmatprep.mubr.bf16.mxu0 %v1712
  %3591 = vmatmul.mubr.bf16.gmra.mrb[0].mxu0 %v1711
  %v3592 = vpop.f32.mrb[0].mxu0
  %v3593 = vadd.f32 %v3304, %v3592
  %v3594 = vpop.f32.mrb[0].mxu0
  %v3595 = vpop.f32.mrb[0].mxu0
  %v3596 = vadd.f32 %v3307, %v3595
  %v3597 = vpop.f32.mrb[0].mxu0
  %3598 = vmatprep.mubr.bf16.mxu0 %v1721
  %3599 = vmatmul.mubr.bf16.gmra.mrb[0].mxu0 %v1720
  %v3600 = vpop.f32.mrb[0].mxu0
  %v3601 = vadd.f32 %v3312, %v3600
  %v3602 = vpop.f32.mrb[0].mxu0
  %v3603 = vpop.f32.mrb[0].mxu0
  %v3604 = vadd.f32 %v3315, %v3603
  %v3605 = vpop.f32.mrb[0].mxu0
  %3606 = vmatprep.mubr.bf16.mxu0 %v1730
  %3607 = vmatmul.mubr.bf16.gmra.mrb[0].mxu0 %v1729
  %v3608 = vpop.f32.mrb[0].mxu0
  %v3609 = vadd.f32 %v3320, %v3608
  %v3610 = vpop.f32.mrb[0].mxu0
  %v3611 = vpop.f32.mrb[0].mxu0
  %v3612 = vadd.f32 %v3323, %v3611
  %v3613 = vpop.f32.mrb[0].mxu0
  %3614 = vmatprep.mubr.bf16.mxu0 %v1739
  %3615 = vmatmul.mubr.bf16.gmra.mrb[0].mxu0 %v1738
  %v3616 = vpop.f32.mrb[0].mxu0
  %v3617 = vadd.f32 %v3328, %v3616
  %v3618 = vpop.f32.mrb[0].mxu0
  %v3619 = vpop.f32.mrb[0].mxu0
  %v3620 = vadd.f32 %v3331, %v3619
  %v3621 = vpop.f32.mrb[0].mxu0
  %3622 = vmatprep.mubr.bf16.mxu0 %v1748
  %3623 = vmatmul.mubr.bf16.gmra.mrb[0].mxu0 %v1747
  %v3624 = vpop.f32.mrb[0].mxu0
  %v3625 = vadd.f32 %v3336, %v3624
  %v3626 = vpop.f32.mrb[0].mxu0
  %v3627 = vpop.f32.mrb[0].mxu0
  %v3628 = vadd.f32 %v3339, %v3627
  %v3629 = vpop.f32.mrb[0].mxu0
  %3630 = vmatprep.mubr.bf16.mxu0 %v1757
  %3631 = vmatmul.mubr.bf16.gmra.mrb[0].mxu0 %v1756
  %v3632 = vpop.f32.mrb[0].mxu0
  %v3633 = vadd.f32 %v3344, %v3632
  %v3634 = vpop.f32.mrb[0].mxu0
  %v3635 = vpop.f32.mrb[0].mxu0
  %v3636 = vadd.f32 %v3347, %v3635
  %v3637 = vpop.f32.mrb[0].mxu0
  %3638 = vmatprep.mubr.bf16.mxu0 %v1766
  %3639 = vmatmul.mubr.bf16.gmra.mrb[0].mxu0 %v1765
  %v3640 = vpop.f32.mrb[0].mxu0
  %v3641 = vadd.f32 %v3352, %v3640
  %v3642 = vpop.f32.mrb[0].mxu0
  %v3643 = vpop.f32.mrb[0].mxu0
  %v3644 = vadd.f32 %v3355, %v3643
  %v3645 = vpop.f32.mrb[0].mxu0
  %3646 = vmatprep.mubr.bf16.mxu0 %v1775
  %3647 = vmatmul.mubr.bf16.gmra.mrb[0].mxu0 %v1774
  %v3648 = vpop.f32.mrb[0].mxu0
  %v3649 = vadd.f32 %v3360, %v3648
  %v3650 = vpop.f32.mrb[0].mxu0
  %v3651 = vpop.f32.mrb[0].mxu0
  %v3652 = vadd.f32 %v3363, %v3651
  %v3653 = vpop.f32.mrb[0].mxu0
  %3654 = vmatprep.mubr.bf16.mxu0 %v1784
  %3655 = vmatmul.mubr.bf16.gmra.mrb[0].mxu0 %v1783
  %v3656 = vpop.f32.mrb[0].mxu0
  %v3657 = vadd.f32 %v3368, %v3656
  %v3658 = vpop.f32.mrb[0].mxu0
  %v3659 = vpop.f32.mrb[0].mxu0
  %v3660 = vadd.f32 %v3371, %v3659
  %v3661 = vpop.f32.mrb[0].mxu0
  %3662 = vmatprep.mubr.bf16.mxu0 %v1793
  %3663 = vmatmul.mubr.bf16.gmra.mrb[0].mxu0 %v1792
  %v3664 = vpop.f32.mrb[0].mxu0
  %v3665 = vadd.f32 %v3376, %v3664
  %v3666 = vpop.f32.mrb[0].mxu0
  %v3667 = vpop.f32.mrb[0].mxu0
  %v3668 = vadd.f32 %v3379, %v3667
  %v3669 = vpop.f32.mrb[0].mxu0
  %3670 = vdwg.mxu0
  %3671 = vmatprep.subr.bf16.mxu0 0
  %3672 = vmatpush1.bf16.msra.mxu0 %v2435
  %3673 = vmatprep.subr.bf16.mxu0 0
  %3674 = vmatpush1.bf16.msra.mxu0 %v2436
  %3675 = vmatprep.subr.bf16.mxu0 0
  %3676 = vmatpush1.bf16.msra.mxu0 %v2437
  %3677 = vmatprep.subr.bf16.mxu0 0
  %3678 = vmatpush1.bf16.msra.mxu0 %v2438
  %3679 = vmatprep.subr.bf16.mxu0 0
  %3680 = vmatpush1.bf16.msra.mxu0 %v2439
  %3681 = vmatprep.subr.bf16.mxu0 0
  %3682 = vmatpush1.bf16.msra.mxu0 %v2440
  %3683 = vmatprep.subr.bf16.mxu0 0
  %3684 = vmatpush1.bf16.msra.mxu0 %v2441
  %3685 = vmatprep.subr.bf16.mxu0 0
  %3686 = vmatpush1.bf16.msra.mxu0 %v2442
  %3687 = vmatprep.subr.bf16.mxu0 0
  %3688 = vmatpush1.bf16.msra.mxu0 0
  %3689 = vmatprep.subr.bf16.mxu0 0
  %3690 = vmatpush1.bf16.msra.mxu0 0
  %3691 = vmatprep.subr.bf16.mxu0 0
  %3692 = vmatpush1.bf16.msra.mxu0 0
  %3693 = vmatprep.subr.bf16.mxu0 0
  %3694 = vmatpush1.bf16.msra.mxu0 0
  %3695 = vmatprep.subr.bf16.mxu0 0
  %3696 = vmatpush1.bf16.msra.mxu0 0
  %3697 = vmatprep.subr.bf16.mxu0 0
  %3698 = vmatpush1.bf16.msra.mxu0 0
  %3699 = vmatprep.subr.bf16.mxu0 0
  %3700 = vmatpush1.bf16.msra.mxu0 0
  %3701 = vmatprep.subr.bf16.mxu0 0
  %3702 = vmatpush1.bf16.msra.mxu0 0
  %3703 = vmatprep.mubr.bf16.mxu0 0
  %3704 = vmatmul.mubr.bf16.gmra.mrb[0].mxu0 %v1515
  %v3705 = vpop.f32.mrb[0].mxu0
  %v3706 = vadd.f32 %v3417, %v3705
  %v3707 = vpop.f32.mrb[0].mxu0
  %v3708 = vpop.f32.mrb[0].mxu0
  %v3709 = vadd.f32 %v3420, %v3708
  %v3710 = vpop.f32.mrb[0].mxu0
  %3711 = vmatprep.mubr.bf16.mxu0 0
  %3712 = vmatmul.mubr.bf16.gmra.mrb[0].mxu0 %v1524
  %v3713 = vpop.f32.mrb[0].mxu0
  %v3714 = vadd.f32 %v3425, %v3713
  %v3715 = vpop.f32.mrb[0].mxu0
  %v3716 = vpop.f32.mrb[0].mxu0
  %v3717 = vadd.f32 %v3428, %v3716
  %v3718 = vpop.f32.mrb[0].mxu0
  %3719 = vmatprep.mubr.bf16.mxu0 0
  %3720 = vmatmul.mubr.bf16.gmra.mrb[0].mxu0 %v1533
  %v3721 = vpop.f32.mrb[0].mxu0
  %v3722 = vadd.f32 %v3433, %v3721
  %v3723 = vpop.f32.mrb[0].mxu0
  %v3724 = vpop.f32.mrb[0].mxu0
  %v3725 = vadd.f32 %v3436, %v3724
  %v3726 = vpop.f32.mrb[0].mxu0
  %3727 = vmatprep.mubr.bf16.mxu0 0
  %3728 = vmatmul.mubr.bf16.gmra.mrb[0].mxu0 %v1542
  %v3729 = vpop.f32.mrb[0].mxu0
  %v3730 = vadd.f32 %v3441, %v3729
  %v3731 = vpop.f32.mrb[0].mxu0
  %v3732 = vpop.f32.mrb[0].mxu0
  %v3733 = vadd.f32 %v3444, %v3732
  %v3734 = vpop.f32.mrb[0].mxu0
  %3735 = vmatprep.mubr.bf16.mxu0 0
  %3736 = vmatmul.mubr.bf16.gmra.mrb[0].mxu0 %v1551
  %v3737 = vpop.f32.mrb[0].mxu0
  %v3738 = vadd.f32 %v3449, %v3737
  %v3739 = vpop.f32.mrb[0].mxu0
  %v3740 = vpop.f32.mrb[0].mxu0
  %v3741 = vadd.f32 %v3452, %v3740
  %v3742 = vpop.f32.mrb[0].mxu0
  %3743 = vmatprep.mubr.bf16.mxu0 0
  %3744 = vmatmul.mubr.bf16.gmra.mrb[0].mxu0 %v1560
  %v3745 = vpop.f32.mrb[0].mxu0
  %v3746 = vadd.f32 %v3457, %v3745
  %v3747 = vpop.f32.mrb[0].mxu0
  %v3748 = vpop.f32.mrb[0].mxu0
  %v3749 = vadd.f32 %v3460, %v3748
  %v3750 = vpop.f32.mrb[0].mxu0
  %3751 = vmatprep.mubr.bf16.mxu0 0
  %3752 = vmatmul.mubr.bf16.gmra.mrb[0].mxu0 %v1569
  %v3753 = vpop.f32.mrb[0].mxu0
  %v3754 = vadd.f32 %v3465, %v3753
  %v3755 = vpop.f32.mrb[0].mxu0
  %v3756 = vpop.f32.mrb[0].mxu0
  %v3757 = vadd.f32 %v3468, %v3756
  %v3758 = vpop.f32.mrb[0].mxu0
  %3759 = vmatprep.mubr.bf16.mxu0 0
  %3760 = vmatmul.mubr.bf16.gmra.mrb[0].mxu0 %v1578
  %v3761 = vpop.f32.mrb[0].mxu0
  %v3762 = vadd.f32 %v3473, %v3761
  %v3763 = vpop.f32.mrb[0].mxu0
  %v3764 = vpop.f32.mrb[0].mxu0
  %v3765 = vadd.f32 %v3476, %v3764
  %v3766 = vpop.f32.mrb[0].mxu0
  %3767 = vmatprep.mubr.bf16.mxu0 0
  %3768 = vmatmul.mubr.bf16.gmra.mrb[0].mxu0 %v1587
  %v3769 = vpop.f32.mrb[0].mxu0
  %v3770 = vadd.f32 %v3481, %v3769
  %v3771 = vpop.f32.mrb[0].mxu0
  %v3772 = vpop.f32.mrb[0].mxu0
  %v3773 = vadd.f32 %v3484, %v3772
  %v3774 = vpop.f32.mrb[0].mxu0
  %3775 = vmatprep.mubr.bf16.mxu0 0
  %3776 = vmatmul.mubr.bf16.gmra.mrb[0].mxu0 %v1596
  %v3777 = vpop.f32.mrb[0].mxu0
  %v3778 = vadd.f32 %v3489, %v3777
  %v3779 = vpop.f32.mrb[0].mxu0
  %v3780 = vpop.f32.mrb[0].mxu0
  %v3781 = vadd.f32 %v3492, %v3780
  %v3782 = vpop.f32.mrb[0].mxu0
  %3783 = vmatprep.mubr.bf16.mxu0 0
  %3784 = vmatmul.mubr.bf16.gmra.mrb[0].mxu0 %v1605
  %v3785 = vpop.f32.mrb[0].mxu0
  %v3786 = vadd.f32 %v3497, %v3785
  %v3787 = vpop.f32.mrb[0].mxu0
  %v3788 = vpop.f32.mrb[0].mxu0
  %v3789 = vadd.f32 %v3500, %v3788
  %v3790 = vpop.f32.mrb[0].mxu0
  %3791 = vmatprep.mubr.bf16.mxu0 0
  %3792 = vmatmul.mubr.bf16.gmra.mrb[0].mxu0 %v1614
  %v3793 = vpop.f32.mrb[0].mxu0
  %v3794 = vadd.f32 %v3505, %v3793
  %v3795 = vpop.f32.mrb[0].mxu0
  %v3796 = vpop.f32.mrb[0].mxu0
  %v3797 = vadd.f32 %v3508, %v3796
  %v3798 = vpop.f32.mrb[0].mxu0
  %3799 = vmatprep.mubr.bf16.mxu0 0
  %3800 = vmatmul.mubr.bf16.gmra.mrb[0].mxu0 %v1623
  %v3801 = vpop.f32.mrb[0].mxu0
  %v3802 = vadd.f32 %v3513, %v3801
  %v3803 = vpop.f32.mrb[0].mxu0
  %v3804 = vpop.f32.mrb[0].mxu0
  %v3805 = vadd.f32 %v3516, %v3804
  %v3806 = vpop.f32.mrb[0].mxu0
  %3807 = vmatprep.mubr.bf16.mxu0 0
  %3808 = vmatmul.mubr.bf16.gmra.mrb[0].mxu0 %v1632
  %v3809 = vpop.f32.mrb[0].mxu0
  %v3810 = vadd.f32 %v3521, %v3809
  %v3811 = vpop.f32.mrb[0].mxu0
  %v3812 = vpop.f32.mrb[0].mxu0
  %v3813 = vadd.f32 %v3524, %v3812
  %v3814 = vpop.f32.mrb[0].mxu0
  %3815 = vmatprep.mubr.bf16.mxu0 0
  %3816 = vmatmul.mubr.bf16.gmra.mrb[0].mxu0 %v1641
  %v3817 = vpop.f32.mrb[0].mxu0
  %v3818 = vadd.f32 %v3529, %v3817
  %v3819 = vpop.f32.mrb[0].mxu0
  %v3820 = vpop.f32.mrb[0].mxu0
  %v3821 = vadd.f32 %v3532, %v3820
  %v3822 = vpop.f32.mrb[0].mxu0
  %3823 = vmatprep.mubr.bf16.mxu0 0
  %3824 = vmatmul.mubr.bf16.gmra.mrb[0].mxu0 %v1650
  %v3825 = vpop.f32.mrb[0].mxu0
  %v3826 = vadd.f32 %v3537, %v3825
  %v3827 = vpop.f32.mrb[0].mxu0
  %v3828 = vpop.f32.mrb[0].mxu0
  %v3829 = vadd.f32 %v3540, %v3828
  %v3830 = vpop.f32.mrb[0].mxu0
  %3831 = vmatprep.mubr.bf16.mxu0 0
  %3832 = vmatmul.mubr.bf16.gmra.mrb[0].mxu0 %v1659
  %v3833 = vpop.f32.mrb[0].mxu0
  %v3834 = vadd.f32 %v3545, %v3833
  %v3835 = vpop.f32.mrb[0].mxu0
  %v3836 = vpop.f32.mrb[0].mxu0
  %v3837 = vadd.f32 %v3548, %v3836
  %v3838 = vpop.f32.mrb[0].mxu0
  %3839 = vmatprep.mubr.bf16.mxu0 0
  %3840 = vmatmul.mubr.bf16.gmra.mrb[0].mxu0 %v1668
  %v3841 = vpop.f32.mrb[0].mxu0
  %v3842 = vadd.f32 %v3553, %v3841
  %v3843 = vpop.f32.mrb[0].mxu0
  %v3844 = vpop.f32.mrb[0].mxu0
  %v3845 = vadd.f32 %v3556, %v3844
  %v3846 = vpop.f32.mrb[0].mxu0
  %3847 = vmatprep.mubr.bf16.mxu0 0
  %3848 = vmatmul.mubr.bf16.gmra.mrb[0].mxu0 %v1677
  %v3849 = vpop.f32.mrb[0].mxu0
  %v3850 = vadd.f32 %v3561, %v3849
  %v3851 = vpop.f32.mrb[0].mxu0
  %v3852 = vpop.f32.mrb[0].mxu0
  %v3853 = vadd.f32 %v3564, %v3852
  %v3854 = vpop.f32.mrb[0].mxu0
  %3855 = vmatprep.mubr.bf16.mxu0 0
  %3856 = vmatmul.mubr.bf16.gmra.mrb[0].mxu0 %v1686
  %v3857 = vpop.f32.mrb[0].mxu0
  %v3858 = vadd.f32 %v3569, %v3857
  %v3859 = vpop.f32.mrb[0].mxu0
  %v3860 = vpop.f32.mrb[0].mxu0
  %v3861 = vadd.f32 %v3572, %v3860
  %v3862 = vpop.f32.mrb[0].mxu0
  %3863 = vmatprep.mubr.bf16.mxu0 0
  %3864 = vmatmul.mubr.bf16.gmra.mrb[0].mxu0 %v1695
  %v3865 = vpop.f32.mrb[0].mxu0
  %v3866 = vadd.f32 %v3577, %v3865
  %v3867 = vpop.f32.mrb[0].mxu0
  %v3868 = vpop.f32.mrb[0].mxu0
  %v3869 = vadd.f32 %v3580, %v3868
  %v3870 = vpop.f32.mrb[0].mxu0
  %3871 = vmatprep.mubr.bf16.mxu0 0
  %3872 = vmatmul.mubr.bf16.gmra.mrb[0].mxu0 %v1704
  %v3873 = vpop.f32.mrb[0].mxu0
  %v3874 = vadd.f32 %v3585, %v3873
  %v3875 = vpop.f32.mrb[0].mxu0
  %v3876 = vpop.f32.mrb[0].mxu0
  %v3877 = vadd.f32 %v3588, %v3876
  %v3878 = vpop.f32.mrb[0].mxu0
  %3879 = vmatprep.mubr.bf16.mxu0 0
  %3880 = vmatmul.mubr.bf16.gmra.mrb[0].mxu0 %v1713
  %v3881 = vpop.f32.mrb[0].mxu0
  %v3882 = vadd.f32 %v3593, %v3881
  %v3883 = vpop.f32.mrb[0].mxu0
  %v3884 = vpop.f32.mrb[0].mxu0
  %v3885 = vadd.f32 %v3596, %v3884
  %v3886 = vpop.f32.mrb[0].mxu0
  %3887 = vmatprep.mubr.bf16.mxu0 0
  %3888 = vmatmul.mubr.bf16.gmra.mrb[0].mxu0 %v1722
  %v3889 = vpop.f32.mrb[0].mxu0
  %v3890 = vadd.f32 %v3601, %v3889
  %v3891 = vpop.f32.mrb[0].mxu0
  %v3892 = vpop.f32.mrb[0].mxu0
  %v3893 = vadd.f32 %v3604, %v3892
  %v3894 = vpop.f32.mrb[0].mxu0
  %3895 = vmatprep.mubr.bf16.mxu0 0
  %3896 = vmatmul.mubr.bf16.gmra.mrb[0].mxu0 %v1731
  %v3897 = vpop.f32.mrb[0].mxu0
  %v3898 = vadd.f32 %v3609, %v3897
  %v3899 = vpop.f32.mrb[0].mxu0
  %v3900 = vpop.f32.mrb[0].mxu0
  %v3901 = vadd.f32 %v3612, %v3900
  %v3902 = vpop.f32.mrb[0].mxu0
  %3903 = vmatprep.mubr.bf16.mxu0 0
  %3904 = vmatmul.mubr.bf16.gmra.mrb[0].mxu0 %v1740
  %v3905 = vpop.f32.mrb[0].mxu0
  %v3906 = vadd.f32 %v3617, %v3905
  %v3907 = vpop.f32.mrb[0].mxu0
  %v3908 = vpop.f32.mrb[0].mxu0
  %v3909 = vadd.f32 %v3620, %v3908
  %v3910 = vpop.f32.mrb[0].mxu0
  %3911 = vmatprep.mubr.bf16.mxu0 0
  %3912 = vmatmul.mubr.bf16.gmra.mrb[0].mxu0 %v1749
  %v3913 = vpop.f32.mrb[0].mxu0
  %v3914 = vadd.f32 %v3625, %v3913
  %v3915 = vpop.f32.mrb[0].mxu0
  %v3916 = vpop.f32.mrb[0].mxu0
  %v3917 = vadd.f32 %v3628, %v3916
  %v3918 = vpop.f32.mrb[0].mxu0
  %3919 = vmatprep.mubr.bf16.mxu0 0
  %3920 = vmatmul.mubr.bf16.gmra.mrb[0].mxu0 %v1758
  %v3921 = vpop.f32.mrb[0].mxu0
  %v3922 = vadd.f32 %v3633, %v3921
  %v3923 = vpop.f32.mrb[0].mxu0
  %v3924 = vpop.f32.mrb[0].mxu0
  %v3925 = vadd.f32 %v3636, %v3924
  %v3926 = vpop.f32.mrb[0].mxu0
  %3927 = vmatprep.mubr.bf16.mxu0 0
  %3928 = vmatmul.mubr.bf16.gmra.mrb[0].mxu0 %v1767
  %v3929 = vpop.f32.mrb[0].mxu0
  %v3930 = vadd.f32 %v3641, %v3929
  %v3931 = vpop.f32.mrb[0].mxu0
  %v3932 = vpop.f32.mrb[0].mxu0
  %v3933 = vadd.f32 %v3644, %v3932
  %v3934 = vpop.f32.mrb[0].mxu0
  %3935 = vmatprep.mubr.bf16.mxu0 0
  %3936 = vmatmul.mubr.bf16.gmra.mrb[0].mxu0 %v1776
  %v3937 = vpop.f32.mrb[0].mxu0
  %v3938 = vadd.f32 %v3649, %v3937
  %v3939 = vpop.f32.mrb[0].mxu0
  %v3940 = vpop.f32.mrb[0].mxu0
  %v3941 = vadd.f32 %v3652, %v3940
  %v3942 = vpop.f32.mrb[0].mxu0
  %3943 = vmatprep.mubr.bf16.mxu0 0
  %3944 = vmatmul.mubr.bf16.gmra.mrb[0].mxu0 %v1785
  %v3945 = vpop.f32.mrb[0].mxu0
  %v3946 = vadd.f32 %v3657, %v3945
  %v3947 = vpop.f32.mrb[0].mxu0
  %v3948 = vpop.f32.mrb[0].mxu0
  %v3949 = vadd.f32 %v3660, %v3948
  %v3950 = vpop.f32.mrb[0].mxu0
  %3951 = vmatprep.mubr.bf16.mxu0 0
  %3952 = vmatmul.mubr.bf16.gmra.mrb[0].mxu0 %v1794
  %v3953 = vpop.f32.mrb[0].mxu0
  %v3954 = vadd.f32 %v3665, %v3953
  %v3955 = vpop.f32.mrb[0].mxu0
  %v3956 = vpop.f32.mrb[0].mxu0
  %v3957 = vadd.f32 %v3668, %v3956
  %v3958 = vpop.f32.mrb[0].mxu0
  %3959 = vdwg.mxu0
  %v3960 = vadd.f32 %v83, %v3706
  %v3961 = vadd.f32 %v84, %v3709
  %v3962 = vadd.f32 %v85, %v3714
  %v3963 = vadd.f32 %v86, %v3717
  %v3964 = vadd.f32 %v87, %v3722
  %v3965 = vadd.f32 %v88, %v3725
  %v3966 = vadd.f32 %v89, %v3730
  %v3967 = vadd.f32 %v90, %v3733
  %v3968 = vadd.f32 %v91, %v3738
  %v3969 = vadd.f32 %v92, %v3741
  %v3970 = vadd.f32 %v93, %v3746
  %v3971 = vadd.f32 %v94, %v3749
  %v3972 = vadd.f32 %v95, %v3754
  %v3973 = vadd.f32 %v96, %v3757
  %v3974 = vadd.f32 %v97, %v3762
  %v3975 = vadd.f32 %v98, %v3765
  %v3976 = vadd.f32 %v99, %v3770
  %v3977 = vadd.f32 %v100, %v3773
  %v3978 = vadd.f32 %v101, %v3778
  %v3979 = vadd.f32 %v102, %v3781
  %v3980 = vadd.f32 %v103, %v3786
  %v3981 = vadd.f32 %v104, %v3789
  %v3982 = vadd.f32 %v105, %v3794
  %v3983 = vadd.f32 %v106, %v3797
  %v3984 = vadd.f32 %v107, %v3802
  %v3985 = vadd.f32 %v108, %v3805
  %v3986 = vadd.f32 %v109, %v3810
  %v3987 = vadd.f32 %v110, %v3813
  %v3988 = vadd.f32 %v111, %v3818
  %v3989 = vadd.f32 %v112, %v3821
  %v3990 = vadd.f32 %v113, %v3826
  %v3991 = vadd.f32 %v114, %v3829
  %v3992 = vadd.f32 %v115, %v3834
  %v3993 = vadd.f32 %v116, %v3837
  %v3994 = vadd.f32 %v117, %v3842
  %v3995 = vadd.f32 %v118, %v3845
  %v3996 = vadd.f32 %v119, %v3850
  %v3997 = vadd.f32 %v120, %v3853
  %v3998 = vadd.f32 %v121, %v3858
  %v3999 = vadd.f32 %v122, %v3861
  %v4000 = vadd.f32 %v123, %v3866
  %v4001 = vadd.f32 %v124, %v3869
  %v4002 = vadd.f32 %v125, %v3874
  %v4003 = vadd.f32 %v126, %v3877
  %v4004 = vadd.f32 %v127, %v3882
  %v4005 = vadd.f32 %v128, %v3885
  %v4006 = vadd.f32 %v129, %v3890
  %v4007 = vadd.f32 %v130, %v3893
  %v4008 = vadd.f32 %v131, %v3898
  %v4009 = vadd.f32 %v132, %v3901
  %v4010 = vadd.f32 %v133, %v3906
  %v4011 = vadd.f32 %v134, %v3909
  %v4012 = vadd.f32 %v135, %v3914
  %v4013 = vadd.f32 %v136, %v3917
  %v4014 = vadd.f32 %v137, %v3922
  %v4015 = vadd.f32 %v138, %v3925
  %v4016 = vadd.f32 %v139, %v3930
  %v4017 = vadd.f32 %v140, %v3933
  %v4018 = vadd.f32 %v141, %v3938
  %v4019 = vadd.f32 %v142, %v3941
  %v4020 = vadd.f32 %v143, %v3946
  %v4021 = vadd.f32 %v144, %v3949
  %v4022 = vadd.f32 %v145, %v3954
  %v4023 = vadd.f32 %v146, %v3957
  %4024 = vst [vmem:[#allocation2] sm:$0xff] %v3960
  %4025 = vst [vmem:[#allocation2 + $0x8] sm:$0xff] %v3961
  %4026 = vst [vmem:[#allocation2 + $0x10] sm:$0xff] %v3962
  %4027 = vst [vmem:[#allocation2 + $0x18] sm:$0xff] %v3963
  %4028 = vst [vmem:[#allocation2 + $0x20] sm:$0xff] %v3964
  %4029 = vst [vmem:[#allocation2 + $0x28] sm:$0xff] %v3965
  %4030 = vst [vmem:[#allocation2 + $0x30] sm:$0xff] %v3966
  %4031 = vst [vmem:[#allocation2 + $0x38] sm:$0xff] %v3967
  %4032 = vst [vmem:[#allocation2 + $0x40] sm:$0xff] %v3968
  %4033 = vst [vmem:[#allocation2 + $0x48] sm:$0xff] %v3969
  %4034 = vst [vmem:[#allocation2 + $0x50] sm:$0xff] %v3970
  %4035 = vst [vmem:[#allocation2 + $0x58] sm:$0xff] %v3971
  %4036 = vst [vmem:[#allocation2 + $0x60] sm:$0xff] %v3972
  %4037 = vst [vmem:[#allocation2 + $0x68] sm:$0xff] %v3973
  %4038 = vst [vmem:[#allocation2 + $0x70] sm:$0xff] %v3974
  %4039 = vst [vmem:[#allocation2 + $0x78] sm:$0xff] %v3975
  %4040 = vst [vmem:[#allocation2 + $0x80] sm:$0xff] %v3976
  %4041 = vst [vmem:[#allocation2 + $0x88] sm:$0xff] %v3977
  %4042 = vst [vmem:[#allocation2 + $0x90] sm:$0xff] %v3978
  %4043 = vst [vmem:[#allocation2 + $0x98] sm:$0xff] %v3979
  %4044 = vst [vmem:[#allocation2 + $0xa0] sm:$0xff] %v3980
  %4045 = vst [vmem:[#allocation2 + $0xa8] sm:$0xff] %v3981
  %4046 = vst [vmem:[#allocation2 + $0xb0] sm:$0xff] %v3982
  %4047 = vst [vmem:[#allocation2 + $0xb8] sm:$0xff] %v3983
  %4048 = vst [vmem:[#allocation2 + $0xc0] sm:$0xff] %v3984
  %4049 = vst [vmem:[#allocation2 + $0xc8] sm:$0xff] %v3985
  %4050 = vst [vmem:[#allocation2 + $0xd0] sm:$0xff] %v3986
  %4051 = vst [vmem:[#allocation2 + $0xd8] sm:$0xff] %v3987
  %4052 = vst [vmem:[#allocation2 + $0xe0] sm:$0xff] %v3988
  %4053 = vst [vmem:[#allocation2 + $0xe8] sm:$0xff] %v3989
  %4054 = vst [vmem:[#allocation2 + $0xf0] sm:$0xff] %v3990
  %4055 = vst [vmem:[#allocation2 + $0xf8] sm:$0xff] %v3991
  %4056 = vst [vmem:[#allocation2 + $0x100] sm:$0xff] %v3992
  %4057 = vst [vmem:[#allocation2 + $0x108] sm:$0xff] %v3993
  %4058 = vst [vmem:[#allocation2 + $0x110] sm:$0xff] %v3994
  %4059 = vst [vmem:[#allocation2 + $0x118] sm:$0xff] %v3995
  %4060 = vst [vmem:[#allocation2 + $0x120] sm:$0xff] %v3996
  %4061 = vst [vmem:[#allocation2 + $0x128] sm:$0xff] %v3997
  %4062 = vst [vmem:[#allocation2 + $0x130] sm:$0xff] %v3998
  %4063 = vst [vmem:[#allocation2 + $0x138] sm:$0xff] %v3999
  %4064 = vst [vmem:[#allocation2 + $0x140] sm:$0xff] %v4000
  %4065 = vst [vmem:[#allocation2 + $0x148] sm:$0xff] %v4001
  %4066 = vst [vmem:[#allocation2 + $0x150] sm:$0xff] %v4002
  %4067 = vst [vmem:[#allocation2 + $0x158] sm:$0xff] %v4003
  %4068 = vst [vmem:[#allocation2 + $0x160] sm:$0xff] %v4004
  %4069 = vst [vmem:[#allocation2 + $0x168] sm:$0xff] %v4005
  %4070 = vst [vmem:[#allocation2 + $0x170] sm:$0xff] %v4006
  %4071 = vst [vmem:[#allocation2 + $0x178] sm:$0xff] %v4007
  %4072 = vst [vmem:[#allocation2 + $0x180] sm:$0xff] %v4008
  %4073 = vst [vmem:[#allocation2 + $0x188] sm:$0xff] %v4009
  %4074 = vst [vmem:[#allocation2 + $0x190] sm:$0xff] %v4010
  %4075 = vst [vmem:[#allocation2 + $0x198] sm:$0xff] %v4011
  %4076 = vst [vmem:[#allocation2 + $0x1a0] sm:$0xff] %v4012
  %4077 = vst [vmem:[#allocation2 + $0x1a8] sm:$0xff] %v4013
  %4078 = vst [vmem:[#allocation2 + $0x1b0] sm:$0xff] %v4014
  %4079 = vst [vmem:[#allocation2 + $0x1b8] sm:$0xff] %v4015
  %4080 = vst [vmem:[#allocation2 + $0x1c0] sm:$0xff] %v4016
  %4081 = vst [vmem:[#allocation2 + $0x1c8] sm:$0xff] %v4017
  %4082 = vst [vmem:[#allocation2 + $0x1d0] sm:$0xff] %v4018
  %4083 = vst [vmem:[#allocation2 + $0x1d8] sm:$0xff] %v4019
  %4084 = vst [vmem:[#allocation2 + $0x1e0] sm:$0xff] %v4020
  %4085 = vst [vmem:[#allocation2 + $0x1e8] sm:$0xff] %v4021
  %4086 = vst [vmem:[#allocation2 + $0x1f0] sm:$0xff] %v4022
  %4087 = vst [vmem:[#allocation2 + $0x1f8] sm:$0xff] %v4023
  // Predicated region
  $region18: #{_lambda_.9} parent=0 // pred_check
    %p4088 = pneg %p15
  $region19: #{_lambda_.9} parent=0 // pred_check_branch
    %4090 = sbr.rel (%p4088) target = $region21
  $region20: #{_lambda_.9} parent=0 // pred_region
    %v4091 = vld [vmem:[#allocation2] sm:$0xff]
    %v4092 = vld [vmem:[#allocation2 + $0x8] sm:$0xff]
    %v4093 = vld [vmem:[#allocation2 + $0x10] sm:$0xff]
    %v4094 = vld [vmem:[#allocation2 + $0x18] sm:$0xff]
    %v4095 = vld [vmem:[#allocation2 + $0x20] sm:$0xff]
    %v4096 = vld [vmem:[#allocation2 + $0x28] sm:$0xff]
    %v4097 = vld [vmem:[#allocation2 + $0x30] sm:$0xff]
    %v4098 = vld [vmem:[#allocation2 + $0x38] sm:$0xff]
    %v4099 = vld [vmem:[#allocation2 + $0x40] sm:$0xff]
    %v4100 = vld [vmem:[#allocation2 + $0x48] sm:$0xff]
    %v4101 = vld [vmem:[#allocation2 + $0x50] sm:$0xff]
    %v4102 = vld [vmem:[#allocation2 + $0x58] sm:$0xff]
    %v4103 = vld [vmem:[#allocation2 + $0x60] sm:$0xff]
    %v4104 = vld [vmem:[#allocation2 + $0x68] sm:$0xff]
    %v4105 = vld [vmem:[#allocation2 + $0x70] sm:$0xff]
    %v4106 = vld [vmem:[#allocation2 + $0x78] sm:$0xff]
    %v4107 = vld [vmem:[#allocation2 + $0x80] sm:$0xff]
    %v4108 = vld [vmem:[#allocation2 + $0x88] sm:$0xff]
    %v4109 = vld [vmem:[#allocation2 + $0x90] sm:$0xff]
    %v4110 = vld [vmem:[#allocation2 + $0x98] sm:$0xff]
    %v4111 = vld [vmem:[#allocation2 + $0xa0] sm:$0xff]
    %v4112 = vld [vmem:[#allocation2 + $0xa8] sm:$0xff]
    %v4113 = vld [vmem:[#allocation2 + $0xb0] sm:$0xff]
    %v4114 = vld [vmem:[#allocation2 + $0xb8] sm:$0xff]
    %v4115 = vld [vmem:[#allocation2 + $0xc0] sm:$0xff]
    %v4116 = vld [vmem:[#allocation2 + $0xc8] sm:$0xff]
    %v4117 = vld [vmem:[#allocation2 + $0xd0] sm:$0xff]
    %v4118 = vld [vmem:[#allocation2 + $0xd8] sm:$0xff]
    %v4119 = vld [vmem:[#allocation2 + $0xe0] sm:$0xff]
    %v4120 = vld [vmem:[#allocation2 + $0xe8] sm:$0xff]
    %v4121 = vld [vmem:[#allocation2 + $0xf0] sm:$0xff]
    %v4122 = vld [vmem:[#allocation2 + $0xf8] sm:$0xff]
    %v4123 = vld [vmem:[#allocation2 + $0x100] sm:$0xff]
    %v4124 = vld [vmem:[#allocation2 + $0x108] sm:$0xff]
    %v4125 = vld [vmem:[#allocation2 + $0x110] sm:$0xff]
    %v4126 = vld [vmem:[#allocation2 + $0x118] sm:$0xff]
    %v4127 = vld [vmem:[#allocation2 + $0x120] sm:$0xff]
    %v4128 = vld [vmem:[#allocation2 + $0x128] sm:$0xff]
    %v4129 = vld [vmem:[#allocation2 + $0x130] sm:$0xff]
    %v4130 = vld [vmem:[#allocation2 + $0x138] sm:$0xff]
    %v4131 = vld [vmem:[#allocation2 + $0x140] sm:$0xff]
    %v4132 = vld [vmem:[#allocation2 + $0x148] sm:$0xff]
    %v4133 = vld [vmem:[#allocation2 + $0x150] sm:$0xff]
    %v4134 = vld [vmem:[#allocation2 + $0x158] sm:$0xff]
    %v4135 = vld [vmem:[#allocation2 + $0x160] sm:$0xff]
    %v4136 = vld [vmem:[#allocation2 + $0x168] sm:$0xff]
    %v4137 = vld [vmem:[#allocation2 + $0x170] sm:$0xff]
    %v4138 = vld [vmem:[#allocation2 + $0x178] sm:$0xff]
    %v4139 = vld [vmem:[#allocation2 + $0x180] sm:$0xff]
    %v4140 = vld [vmem:[#allocation2 + $0x188] sm:$0xff]
    %v4141 = vld [vmem:[#allocation2 + $0x190] sm:$0xff]
    %v4142 = vld [vmem:[#allocation2 + $0x198] sm:$0xff]
    %v4143 = vld [vmem:[#allocation2 + $0x1a0] sm:$0xff]
    %v4144 = vld [vmem:[#allocation2 + $0x1a8] sm:$0xff]
    %v4145 = vld [vmem:[#allocation2 + $0x1b0] sm:$0xff]
    %v4146 = vld [vmem:[#allocation2 + $0x1b8] sm:$0xff]
    %v4147 = vld [vmem:[#allocation2 + $0x1c0] sm:$0xff]
    %v4148 = vld [vmem:[#allocation2 + $0x1c8] sm:$0xff]
    %v4149 = vld [vmem:[#allocation2 + $0x1d0] sm:$0xff]
    %v4150 = vld [vmem:[#allocation2 + $0x1d8] sm:$0xff]
    %v4151 = vld [vmem:[#allocation2 + $0x1e0] sm:$0xff]
    %v4152 = vld [vmem:[#allocation2 + $0x1e8] sm:$0xff]
    %v4153 = vld [vmem:[#allocation2 + $0x1f0] sm:$0xff]
    %v4154 = vld [vmem:[#allocation2 + $0x1f8] sm:$0xff]
    %v4155 = vld [vmem:[%s2] sm:$0x1]
    %v4157 = vlaneseq
    %v4158 = vshrl.u32 %v4157, 7
    %v4159 = vsub.s32 0, %v4158
    %v4160 = vrot.slane %v4155, %v4159
    %v4162 = vadd.f32 %v4091, %v4160
    %v4163 = vadd.f32 %v4092, %v4160
    %v4164 = vadd.f32 %v4093, %v4160
    %v4165 = vadd.f32 %v4094, %v4160
    %v4166 = vadd.f32 %v4095, %v4160
    %v4167 = vadd.f32 %v4096, %v4160
    %v4168 = vadd.f32 %v4097, %v4160
    %v4169 = vadd.f32 %v4098, %v4160
    %v4170 = vadd.f32 %v4099, %v4160
    %v4171 = vadd.f32 %v4100, %v4160
    %v4172 = vadd.f32 %v4101, %v4160
    %v4173 = vadd.f32 %v4102, %v4160
    %v4174 = vadd.f32 %v4103, %v4160
    %v4175 = vadd.f32 %v4104, %v4160
    %v4176 = vadd.f32 %v4105, %v4160
    %v4177 = vadd.f32 %v4106, %v4160
    %v4178 = vadd.f32 %v4107, %v4160
    %v4179 = vadd.f32 %v4108, %v4160
    %v4180 = vadd.f32 %v4109, %v4160
    %v4181 = vadd.f32 %v4110, %v4160
    %v4182 = vadd.f32 %v4111, %v4160
    %v4183 = vadd.f32 %v4112, %v4160
    %v4184 = vadd.f32 %v4113, %v4160
    %v4185 = vadd.f32 %v4114, %v4160
    %v4186 = vadd.f32 %v4115, %v4160
    %v4187 = vadd.f32 %v4116, %v4160
    %v4188 = vadd.f32 %v4117, %v4160
    %v4189 = vadd.f32 %v4118, %v4160
    %v4190 = vadd.f32 %v4119, %v4160
    %v4191 = vadd.f32 %v4120, %v4160
    %v4192 = vadd.f32 %v4121, %v4160
    %v4193 = vadd.f32 %v4122, %v4160
    %v4194 = vadd.f32 %v4123, %v4160
    %v4195 = vadd.f32 %v4124, %v4160
    %v4196 = vadd.f32 %v4125, %v4160
    %v4197 = vadd.f32 %v4126, %v4160
    %v4198 = vadd.f32 %v4127, %v4160
    %v4199 = vadd.f32 %v4128, %v4160
    %v4200 = vadd.f32 %v4129, %v4160
    %v4201 = vadd.f32 %v4130, %v4160
    %v4202 = vadd.f32 %v4131, %v4160
    %v4203 = vadd.f32 %v4132, %v4160
    %v4204 = vadd.f32 %v4133, %v4160
    %v4205 = vadd.f32 %v4134, %v4160
    %v4206 = vadd.f32 %v4135, %v4160
    %v4207 = vadd.f32 %v4136, %v4160
    %v4208 = vadd.f32 %v4137, %v4160
    %v4209 = vadd.f32 %v4138, %v4160
    %v4210 = vadd.f32 %v4139, %v4160
    %v4211 = vadd.f32 %v4140, %v4160
    %v4212 = vadd.f32 %v4141, %v4160
    %v4213 = vadd.f32 %v4142, %v4160
    %v4214 = vadd.f32 %v4143, %v4160
    %v4215 = vadd.f32 %v4144, %v4160
    %v4216 = vadd.f32 %v4145, %v4160
    %v4217 = vadd.f32 %v4146, %v4160
    %v4218 = vadd.f32 %v4147, %v4160
    %v4219 = vadd.f32 %v4148, %v4160
    %v4220 = vadd.f32 %v4149, %v4160
    %v4221 = vadd.f32 %v4150, %v4160
    %v4222 = vadd.f32 %v4151, %v4160
    %v4223 = vadd.f32 %v4152, %v4160
    %v4224 = vadd.f32 %v4153, %v4160
    %v4225 = vadd.f32 %v4154, %v4160
    %v4226 = vmax.f32 %v4162, 0.0
    %v4227 = vmax.f32 %v4163, 0.0
    %v4228 = vmax.f32 %v4164, 0.0
    %v4229 = vmax.f32 %v4165, 0.0
    %v4230 = vmax.f32 %v4166, 0.0
    %v4231 = vmax.f32 %v4167, 0.0
    %v4232 = vmax.f32 %v4168, 0.0
    %v4233 = vmax.f32 %v4169, 0.0
    %v4234 = vmax.f32 %v4170, 0.0
    %v4235 = vmax.f32 %v4171, 0.0
    %v4236 = vmax.f32 %v4172, 0.0
    %v4237 = vmax.f32 %v4173, 0.0
    %v4238 = vmax.f32 %v4174, 0.0
    %v4239 = vmax.f32 %v4175, 0.0
    %v4240 = vmax.f32 %v4176, 0.0
    %v4241 = vmax.f32 %v4177, 0.0
    %v4242 = vmax.f32 %v4178, 0.0
    %v4243 = vmax.f32 %v4179, 0.0
    %v4244 = vmax.f32 %v4180, 0.0
    %v4245 = vmax.f32 %v4181, 0.0
    %v4246 = vmax.f32 %v4182, 0.0
    %v4247 = vmax.f32 %v4183, 0.0
    %v4248 = vmax.f32 %v4184, 0.0
    %v4249 = vmax.f32 %v4185, 0.0
    %v4250 = vmax.f32 %v4186, 0.0
    %v4251 = vmax.f32 %v4187, 0.0
    %v4252 = vmax.f32 %v4188, 0.0
    %v4253 = vmax.f32 %v4189, 0.0
    %v4254 = vmax.f32 %v4190, 0.0
    %v4255 = vmax.f32 %v4191, 0.0
    %v4256 = vmax.f32 %v4192, 0.0
    %v4257 = vmax.f32 %v4193, 0.0
    %v4258 = vmax.f32 %v4194, 0.0
    %v4259 = vmax.f32 %v4195, 0.0
    %v4260 = vmax.f32 %v4196, 0.0
    %v4261 = vmax.f32 %v4197, 0.0
    %v4262 = vmax.f32 %v4198, 0.0
    %v4263 = vmax.f32 %v4199, 0.0
    %v4264 = vmax.f32 %v4200, 0.0
    %v4265 = vmax.f32 %v4201, 0.0
    %v4266 = vmax.f32 %v4202, 0.0
    %v4267 = vmax.f32 %v4203, 0.0
    %v4268 = vmax.f32 %v4204, 0.0
    %v4269 = vmax.f32 %v4205, 0.0
    %v4270 = vmax.f32 %v4206, 0.0
    %v4271 = vmax.f32 %v4207, 0.0
    %v4272 = vmax.f32 %v4208, 0.0
    %v4273 = vmax.f32 %v4209, 0.0
    %v4274 = vmax.f32 %v4210, 0.0
    %v4275 = vmax.f32 %v4211, 0.0
    %v4276 = vmax.f32 %v4212, 0.0
    %v4277 = vmax.f32 %v4213, 0.0
    %v4278 = vmax.f32 %v4214, 0.0
    %v4279 = vmax.f32 %v4215, 0.0
    %v4280 = vmax.f32 %v4216, 0.0
    %v4281 = vmax.f32 %v4217, 0.0
    %v4282 = vmax.f32 %v4218, 0.0
    %v4283 = vmax.f32 %v4219, 0.0
    %v4284 = vmax.f32 %v4220, 0.0
    %v4285 = vmax.f32 %v4221, 0.0
    %v4286 = vmax.f32 %v4222, 0.0
    %v4287 = vmax.f32 %v4223, 0.0
    %v4288 = vmax.f32 %v4224, 0.0
    %v4289 = vmax.f32 %v4225, 0.0
    %v4290 = vpack.c.bf16 %v4227, %v4226
    %v4291 = vpack.c.bf16 %v4229, %v4228
    %v4292 = vpack.c.bf16 %v4231, %v4230
    %v4293 = vpack.c.bf16 %v4233, %v4232
    %v4294 = vpack.c.bf16 %v4235, %v4234
    %v4295 = vpack.c.bf16 %v4237, %v4236
    %v4296 = vpack.c.bf16 %v4239, %v4238
    %v4297 = vpack.c.bf16 %v4241, %v4240
    %v4298 = vpack.c.bf16 %v4243, %v4242
    %v4299 = vpack.c.bf16 %v4245, %v4244
    %v4300 = vpack.c.bf16 %v4247, %v4246
    %v4301 = vpack.c.bf16 %v4249, %v4248
    %v4302 = vpack.c.bf16 %v4251, %v4250
    %v4303 = vpack.c.bf16 %v4253, %v4252
    %v4304 = vpack.c.bf16 %v4255, %v4254
    %v4305 = vpack.c.bf16 %v4257, %v4256
    %v4306 = vpack.c.bf16 %v4259, %v4258
    %v4307 = vpack.c.bf16 %v4261, %v4260
    %v4308 = vpack.c.bf16 %v4263, %v4262
    %v4309 = vpack.c.bf16 %v4265, %v4264
    %v4310 = vpack.c.bf16 %v4267, %v4266
    %v4311 = vpack.c.bf16 %v4269, %v4268
    %v4312 = vpack.c.bf16 %v4271, %v4270
    %v4313 = vpack.c.bf16 %v4273, %v4272
    %v4314 = vpack.c.bf16 %v4275, %v4274
    %v4315 = vpack.c.bf16 %v4277, %v4276
    %v4316 = vpack.c.bf16 %v4279, %v4278
    %v4317 = vpack.c.bf16 %v4281, %v4280
    %v4318 = vpack.c.bf16 %v4283, %v4282
    %v4319 = vpack.c.bf16 %v4285, %v4284
    %v4320 = vpack.c.bf16 %v4287, %v4286
    %v4321 = vpack.c.bf16 %v4289, %v4288
    %v4354 = vunpack.c.l.b16 %v4290
    %v4355 = vunpack.c.h.b16 %v4290
    %v4356 = vunpack.c.l.b16 %v4291
    %v4357 = vunpack.c.h.b16 %v4291
    %v4358 = vunpack.c.l.b16 %v4292
    %v4359 = vunpack.c.h.b16 %v4292
    %v4360 = vunpack.c.l.b16 %v4293
    %v4361 = vunpack.c.h.b16 %v4293
    %v4362 = vunpack.c.l.b16 %v4294
    %v4363 = vunpack.c.h.b16 %v4294
    %v4364 = vunpack.c.l.b16 %v4295
    %v4365 = vunpack.c.h.b16 %v4295
    %v4366 = vunpack.c.l.b16 %v4296
    %v4367 = vunpack.c.h.b16 %v4296
    %v4368 = vunpack.c.l.b16 %v4297
    %v4369 = vunpack.c.h.b16 %v4297
    %v4370 = vunpack.c.l.b16 %v4298
    %v4371 = vunpack.c.h.b16 %v4298
    %v4372 = vunpack.c.l.b16 %v4299
    %v4373 = vunpack.c.h.b16 %v4299
    %v4374 = vunpack.c.l.b16 %v4300
    %v4375 = vunpack.c.h.b16 %v4300
    %v4376 = vunpack.c.l.b16 %v4301
    %v4377 = vunpack.c.h.b16 %v4301
    %v4378 = vunpack.c.l.b16 %v4302
    %v4379 = vunpack.c.h.b16 %v4302
    %v4380 = vunpack.c.l.b16 %v4303
    %v4381 = vunpack.c.h.b16 %v4303
    %v4382 = vunpack.c.l.b16 %v4304
    %v4383 = vunpack.c.h.b16 %v4304
    %v4384 = vunpack.c.l.b16 %v4305
    %v4385 = vunpack.c.h.b16 %v4305
    %v4386 = vunpack.c.l.b16 %v4306
    %v4387 = vunpack.c.h.b16 %v4306
    %v4388 = vunpack.c.l.b16 %v4307
    %v4389 = vunpack.c.h.b16 %v4307
    %v4390 = vunpack.c.l.b16 %v4308
    %v4391 = vunpack.c.h.b16 %v4308
    %v4392 = vunpack.c.l.b16 %v4309
    %v4393 = vunpack.c.h.b16 %v4309
    %v4394 = vunpack.c.l.b16 %v4310
    %v4395 = vunpack.c.h.b16 %v4310
    %v4396 = vunpack.c.l.b16 %v4311
    %v4397 = vunpack.c.h.b16 %v4311
    %v4398 = vunpack.c.l.b16 %v4312
    %v4399 = vunpack.c.h.b16 %v4312
    %v4400 = vunpack.c.l.b16 %v4313
    %v4401 = vunpack.c.h.b16 %v4313
    %v4402 = vunpack.c.l.b16 %v4314
    %v4403 = vunpack.c.h.b16 %v4314
    %v4404 = vunpack.c.l.b16 %v4315
    %v4405 = vunpack.c.h.b16 %v4315
    %v4406 = vunpack.c.l.b16 %v4316
    %v4407 = vunpack.c.h.b16 %v4316
    %v4408 = vunpack.c.l.b16 %v4317
    %v4409 = vunpack.c.h.b16 %v4317
    %v4410 = vunpack.c.l.b16 %v4318
    %v4411 = vunpack.c.h.b16 %v4318
    %v4412 = vunpack.c.l.b16 %v4319
    %v4413 = vunpack.c.h.b16 %v4319
    %v4414 = vunpack.c.l.b16 %v4320
    %v4415 = vunpack.c.h.b16 %v4320
    %v4416 = vunpack.c.l.b16 %v4321
    %v4417 = vunpack.c.h.b16 %v4321
    %v4418 = vpack.c.b16 %v4354, %v4354
    %v4419 = vpack.c.b16 %v4355, %v4355
    %v4420 = vpack.c.b16 %v4356, %v4356
    %v4421 = vpack.c.b16 %v4357, %v4357
    %v4422 = vpack.c.b16 %v4358, %v4358
    %v4423 = vpack.c.b16 %v4359, %v4359
    %v4424 = vpack.c.b16 %v4360, %v4360
    %v4425 = vpack.c.b16 %v4361, %v4361
    %v4426 = vpack.c.b16 %v4362, %v4362
    %v4427 = vpack.c.b16 %v4363, %v4363
    %v4428 = vpack.c.b16 %v4364, %v4364
    %v4429 = vpack.c.b16 %v4365, %v4365
    %v4430 = vpack.c.b16 %v4366, %v4366
    %v4431 = vpack.c.b16 %v4367, %v4367
    %v4432 = vpack.c.b16 %v4368, %v4368
    %v4433 = vpack.c.b16 %v4369, %v4369
    %v4434 = vpack.c.b16 %v4370, %v4370
    %v4435 = vpack.c.b16 %v4371, %v4371
    %v4436 = vpack.c.b16 %v4372, %v4372
    %v4437 = vpack.c.b16 %v4373, %v4373
    %v4438 = vpack.c.b16 %v4374, %v4374
    %v4439 = vpack.c.b16 %v4375, %v4375
    %v4440 = vpack.c.b16 %v4376, %v4376
    %v4441 = vpack.c.b16 %v4377, %v4377
    %v4442 = vpack.c.b16 %v4378, %v4378
    %v4443 = vpack.c.b16 %v4379, %v4379
    %v4444 = vpack.c.b16 %v4380, %v4380
    %v4445 = vpack.c.b16 %v4381, %v4381
    %v4446 = vpack.c.b16 %v4382, %v4382
    %v4447 = vpack.c.b16 %v4383, %v4383
    %v4448 = vpack.c.b16 %v4384, %v4384
    %v4449 = vpack.c.b16 %v4385, %v4385
    %v4450 = vpack.c.b16 %v4386, %v4386
    %v4451 = vpack.c.b16 %v4387, %v4387
    %v4452 = vpack.c.b16 %v4388, %v4388
    %v4453 = vpack.c.b16 %v4389, %v4389
    %v4454 = vpack.c.b16 %v4390, %v4390
    %v4455 = vpack.c.b16 %v4391, %v4391
    %v4456 = vpack.c.b16 %v4392, %v4392
    %v4457 = vpack.c.b16 %v4393, %v4393
    %v4458 = vpack.c.b16 %v4394, %v4394
    %v4459 = vpack.c.b16 %v4395, %v4395
    %v4460 = vpack.c.b16 %v4396, %v4396
    %v4461 = vpack.c.b16 %v4397, %v4397
    %v4462 = vpack.c.b16 %v4398, %v4398
    %v4463 = vpack.c.b16 %v4399, %v4399
    %v4464 = vpack.c.b16 %v4400, %v4400
    %v4465 = vpack.c.b16 %v4401, %v4401
    %v4466 = vpack.c.b16 %v4402, %v4402
    %v4467 = vpack.c.b16 %v4403, %v4403
    %v4468 = vpack.c.b16 %v4404, %v4404
    %v4469 = vpack.c.b16 %v4405, %v4405
    %v4470 = vpack.c.b16 %v4406, %v4406
    %v4471 = vpack.c.b16 %v4407, %v4407
    %v4472 = vpack.c.b16 %v4408, %v4408
    %v4473 = vpack.c.b16 %v4409, %v4409
    %v4474 = vpack.c.b16 %v4410, %v4410
    %v4475 = vpack.c.b16 %v4411, %v4411
    %v4476 = vpack.c.b16 %v4412, %v4412
    %v4477 = vpack.c.b16 %v4413, %v4413
    %v4478 = vpack.c.b16 %v4414, %v4414
    %v4479 = vpack.c.b16 %v4415, %v4415
    %v4480 = vpack.c.b16 %v4416, %v4416
    %v4481 = vpack.c.b16 %v4417, %v4417
    %4546 = vst [vmem:[%s3] sm:$0xf] %v4418
    %4547 = vst [vmem:[%s3 + $0x4] sm:$0xf] %v4419
    %4548 = vst [vmem:[%s3 + $0x8] sm:$0xf] %v4420
    %4549 = vst [vmem:[%s3 + $0xc] sm:$0xf] %v4421
    %4550 = vst [vmem:[%s3 + $0x10] sm:$0xf] %v4422
    %4551 = vst [vmem:[%s3 + $0x14] sm:$0xf] %v4423
    %4552 = vst [vmem:[%s3 + $0x18] sm:$0xf] %v4424
    %4553 = vst [vmem:[%s3 + $0x1c] sm:$0xf] %v4425
    %4554 = vst [vmem:[%s3 + $0x20] sm:$0xf] %v4426
    %4555 = vst [vmem:[%s3 + $0x24] sm:$0xf] %v4427
    %4556 = vst [vmem:[%s3 + $0x28] sm:$0xf] %v4428
    %4557 = vst [vmem:[%s3 + $0x2c] sm:$0xf] %v4429
    %4558 = vst [vmem:[%s3 + $0x30] sm:$0xf] %v4430
    %4559 = vst [vmem:[%s3 + $0x34] sm:$0xf] %v4431
    %4560 = vst [vmem:[%s3 + $0x38] sm:$0xf] %v4432
    %4561 = vst [vmem:[%s3 + $0x3c] sm:$0xf] %v4433
    %4562 = vst [vmem:[%s3 + $0x40] sm:$0xf] %v4434
    %4563 = vst [vmem:[%s3 + $0x44] sm:$0xf] %v4435
    %4564 = vst [vmem:[%s3 + $0x48] sm:$0xf] %v4436
    %4565 = vst [vmem:[%s3 + $0x4c] sm:$0xf] %v4437
    %4566 = vst [vmem:[%s3 + $0x50] sm:$0xf] %v4438
    %4567 = vst [vmem:[%s3 + $0x54] sm:$0xf] %v4439
    %4568 = vst [vmem:[%s3 + $0x58] sm:$0xf] %v4440
    %4569 = vst [vmem:[%s3 + $0x5c] sm:$0xf] %v4441
    %4570 = vst [vmem:[%s3 + $0x60] sm:$0xf] %v4442
    %4571 = vst [vmem:[%s3 + $0x64] sm:$0xf] %v4443
    %4572 = vst [vmem:[%s3 + $0x68] sm:$0xf] %v4444
    %4573 = vst [vmem:[%s3 + $0x6c] sm:$0xf] %v4445
    %4574 = vst [vmem:[%s3 + $0x70] sm:$0xf] %v4446
    %4575 = vst [vmem:[%s3 + $0x74] sm:$0xf] %v4447
    %4576 = vst [vmem:[%s3 + $0x78] sm:$0xf] %v4448
    %4577 = vst [vmem:[%s3 + $0x7c] sm:$0xf] %v4449
    %4578 = vst [vmem:[%s3 + $0x80] sm:$0xf] %v4450
    %4579 = vst [vmem:[%s3 + $0x84] sm:$0xf] %v4451
    %4580 = vst [vmem:[%s3 + $0x88] sm:$0xf] %v4452
    %4581 = vst [vmem:[%s3 + $0x8c] sm:$0xf] %v4453
    %4582 = vst [vmem:[%s3 + $0x90] sm:$0xf] %v4454
    %4583 = vst [vmem:[%s3 + $0x94] sm:$0xf] %v4455
    %4584 = vst [vmem:[%s3 + $0x98] sm:$0xf] %v4456
    %4585 = vst [vmem:[%s3 + $0x9c] sm:$0xf] %v4457
    %4586 = vst [vmem:[%s3 + $0xa0] sm:$0xf] %v4458
    %4587 = vst [vmem:[%s3 + $0xa4] sm:$0xf] %v4459
    %4588 = vst [vmem:[%s3 + $0xa8] sm:$0xf] %v4460
    %4589 = vst [vmem:[%s3 + $0xac] sm:$0xf] %v4461
    %4590 = vst [vmem:[%s3 + $0xb0] sm:$0xf] %v4462
    %4591 = vst [vmem:[%s3 + $0xb4] sm:$0xf] %v4463
    %4592 = vst [vmem:[%s3 + $0xb8] sm:$0xf] %v4464
    %4593 = vst [vmem:[%s3 + $0xbc] sm:$0xf] %v4465
    %4594 = vst [vmem:[%s3 + $0xc0] sm:$0xf] %v4466
    %4595 = vst [vmem:[%s3 + $0xc4] sm:$0xf] %v4467
    %4596 = vst [vmem:[%s3 + $0xc8] sm:$0xf] %v4468
    %4597 = vst [vmem:[%s3 + $0xcc] sm:$0xf] %v4469
    %4598 = vst [vmem:[%s3 + $0xd0] sm:$0xf] %v4470
    %4599 = vst [vmem:[%s3 + $0xd4] sm:$0xf] %v4471
    %4600 = vst [vmem:[%s3 + $0xd8] sm:$0xf] %v4472
    %4601 = vst [vmem:[%s3 + $0xdc] sm:$0xf] %v4473
    %4602 = vst [vmem:[%s3 + $0xe0] sm:$0xf] %v4474
    %4603 = vst [vmem:[%s3 + $0xe4] sm:$0xf] %v4475
    %4604 = vst [vmem:[%s3 + $0xe8] sm:$0xf] %v4476
    %4605 = vst [vmem:[%s3 + $0xec] sm:$0xf] %v4477
    %4606 = vst [vmem:[%s3 + $0xf0] sm:$0xf] %v4478
    %4607 = vst [vmem:[%s3 + $0xf4] sm:$0xf] %v4479
    %4608 = vst [vmem:[%s3 + $0xf8] sm:$0xf] %v4480
    %4609 = vst [vmem:[%s3 + $0xfc] sm:$0xf] %v4481
  $region21: #{_lambda_.9} parent=0 // pred_fallthru
    _
  // Predicated region
  $region22: #{_lambda_.9} parent=0 // pred_check
    _
  $region23: #{_lambda_.9} parent=0 // pred_check_branch
    %4611 = sbr.rel (0) target = $region25
  $region24: #{_lambda_.9} parent=0 // pred_region
    _
  $region25: #{_lambda_.9} parent=0 // pred_fallthru
    _
  // Predicated region
  $region26: #{_lambda_.9} parent=0 // pred_check
    _
  $region27: #{_lambda_.9} parent=0 // pred_check_branch
    %4613 = sbr.rel (0) target = $region29
  $region28: #{_lambda_.9} parent=0 // pred_region
    _
  $region29: #{_lambda_.9} parent=0 // pred_fallthru
    _

</llo_original>
